<compile_context>
chip_gen: v6e
topology: v6e:2x2x1
jax: 0.10.0
libtpu: 0.0.40
codegen_flags: <defaults>
</compile_context>

<pallas_src>
import functools

import jax
import jax.numpy as jnp
from jax.experimental import pallas as pl
from jax.experimental.pallas import tpu as pltpu

_BN_EPS = 1e-5
_SLOPE = 0.2
_MXU_DTYPE = jnp.bfloat16      # MXU operand dtype (accumulation stays f32)
_INTER_DTYPE = jnp.bfloat16    # HBM dtype of the inter-block activations h1 / h2


# ----------------------------------------------------------------------------
# In-kernel helpers
# ----------------------------------------------------------------------------
def _norm_act(x, scale, shift):
    """Folded BatchNorm (x*scale + shift) followed by LeakyReLU(0.2), f32 math."""
    a = x.astype(jnp.float32) * scale + shift
    return jnp.where(a >= 0, a, _SLOPE * a)


def _build_padded_act(x_ref, xt_ref, xb_ref, scale_ref, shift_ref, pad_ref, *, TH, W, Cin):
    """Normalize+activate the (TH,W,Cin) tile plus its two halo rows and write them into the
    (TH+2, W+2, Cin) padded scratch.  Only the halo strips are zero-filled."""
    i = pl.program_id(1)
    n_i = pl.num_programs(1)
    scale = scale_ref[...]                                    # (1, Cin) f32
    shift = shift_ref[...]

    a_mid = _norm_act(x_ref[0], scale, shift)                 # (TH, W, Cin)
    a_top = _norm_act(xt_ref[0], scale, shift)                # (1, W, Cin) row above this tile
    a_bot = _norm_act(xb_ref[0], scale, shift)                # (1, W, Cin) row below this tile
    # conv zero-padding at the image top / bottom boundaries
    a_top = jnp.where(i == 0, jnp.zeros_like(a_top), a_top)
    a_bot = jnp.where(i == n_i - 1, jnp.zeros_like(a_bot), a_bot)

    # Left/right conv zero-padding columns.  Re-zeroed every step on purpose: the scratch is
    # per-core and not zero-initialised, and with both grid axes "parallel" there is no portable
    # "first iteration on this core" hook under megacore sharding.
    zcol = jnp.zeros((TH + 2, 1, Cin), jnp.float32)
    pad_ref[:, 0:1, :] = zcol
    pad_ref[:, W + 1:W + 2, :] = zcol
    pad_ref[0:1, 1:W + 1, :] = a_top
    pad_ref[TH + 1:TH + 2, 1:W + 1, :] = a_bot
    pad_ref[1:TH + 1, 1:W + 1, :] = a_mid


def _conv3x3(pad_ref, w_ref, *, TH, W, Cin, Cout):
    """3x3 'same' conv over the padded activation scratch: 9 shifted MXU matmuls, f32 acc."""
    acc = jnp.zeros((TH * W, Cout), jnp.float32)
    for ky in range(3):
        for kx in range(3):
            patch = pad_ref[ky:ky + TH, kx:kx + W, :].reshape(TH * W, Cin)
            acc += jnp.dot(patch.astype(_MXU_DTYPE),
                           w_ref[ky, kx * Cin:(kx + 1) * Cin, :],
                           preferred_element_type=jnp.float32)
    return acc                                                # (TH*W, Cout) f32


# ----------------------------------------------------------------------------
# Kernels
# ----------------------------------------------------------------------------
def _block_stats_kernel(x_ref, xt_ref, xb_ref, scale_ref, shift_ref, w_ref,
                        o_ref, stats_ref, pad_ref, *, TH, W):
    """BN -> LeakyReLU -> Conv3x3 for blocks 1 and 2; also emits per-tile BN statistics
    (channel-wise sum and sum-of-squares of the f32 conv output) for the NEXT BatchNorm."""
    Cin = x_ref.shape[-1]
    Cout = o_ref.shape[-1]
    _build_padded_act(x_ref, xt_ref, xb_ref, scale_ref, shift_ref, pad_ref, TH=TH, W=W, Cin=Cin)
    acc = _conv3x3(pad_ref, w_ref, TH=TH, W=W, Cin=Cin, Cout=Cout)
    o_ref[0] = acc.reshape(TH, W, Cout).astype(o_ref.dtype)
    stats_ref[0, 0, 0:1, :] = jnp.sum(acc, axis=0, keepdims=True)
    stats_ref[0, 0, 1:2, :] = jnp.sum(acc * acc, axis=0, keepdims=True)


def _block_last_kernel(h_ref, ht_ref, hb_ref, scale_ref, shift_ref, w_ref,
                       x_ref, wsk_ref, bsk_ref, o_ref, pad_ref, *, TH, W):
    """BN -> LeakyReLU -> Conv3x3 for block 3 with the skip Conv1x1(+bias) fused in-register."""
    Cin = h_ref.shape[-1]
    Cskip = x_ref.shape[-1]
    Cout = o_ref.shape[-1]
    _build_padded_act(h_ref, ht_ref, hb_ref, scale_ref, shift_ref, pad_ref, TH=TH, W=W, Cin=Cin)
    acc = _conv3x3(pad_ref, w_ref, TH=TH, W=W, Cin=Cin, Cout=Cout)
    # Fused skip branch on the RAW (pre-BN) input tile -> no skip tensor HBM round-trip.
    xm = x_ref[0].reshape(TH * W, Cskip).astype(_MXU_DTYPE)
    acc += jnp.dot(xm, wsk_ref[...], preferred_element_type=jnp.float32) + bsk_ref[...]
    o_ref[0] = acc.reshape(TH, W, Cout).astype(o_ref.dtype)


# ----------------------------------------------------------------------------
# pallas_call wrappers
# ----------------------------------------------------------------------------
def _full_spec(shape):
    nd = len(shape)
    return pl.BlockSpec(shape, lambda *_: (0,) * nd)


def _halo_specs(H, TH, W, C):
    main = pl.BlockSpec((1, TH, W, C), lambda n, i: (n, i, 0, 0))
    # halo rows: one row above / below the tile, clamped at the image boundary (zeroed in-kernel)
    top = pl.BlockSpec((1, 1, W, C), lambda n, i: (n, jnp.maximum(i * TH - 1, 0), 0, 0))
    bot = pl.BlockSpec((1, 1, W, C), lambda n, i: (n, jnp.minimum((i + 1) * TH, H - 1), 0, 0))
    return main, top, bot


_COMPILER_PARAMS = pltpu.CompilerParams(
    dimension_semantics=("parallel", "parallel"),
    # Headroom under v7x's 64 MiB physical VMEM; harmless on v5e/v6e (128 MiB).
    vmem_limit_bytes=48 * 1024 * 1024)


def _run_block_stats(h_in, scale, shift, w3, *, TH):
    N, H, W, Cin = h_in.shape
    Cout = w3.shape[-1]
    nH = H // TH
    main, top, bot = _halo_specs(H, TH, W, Cin)
    kernel = functools.partial(_block_stats_kernel, TH=TH, W=W)
    return pl.pallas_call(
        kernel,
        grid=(N, nH),
        in_specs=[main, top, bot,
                  _full_spec((1, Cin)), _full_spec((1, Cin)),
                  _full_spec((3, 3 * Cin, Cout))],
        out_specs=(pl.BlockSpec((1, TH, W, Cout), lambda n, i: (n, i, 0, 0)),
                   pl.BlockSpec((1, 1, 2, Cout), lambda n, i: (n, i, 0, 0))),
        out_shape=(jax.ShapeDtypeStruct((N, H, W, Cout), _INTER_DTYPE),
                   jax.ShapeDtypeStruct((N, nH, 2, Cout), jnp.float32)),
        scratch_shapes=[pltpu.VMEM((TH + 2, W + 2, Cin), jnp.float32)],
        compiler_params=_COMPILER_PARAMS,
    )(h_in, h_in, h_in, scale, shift, w3)


def _run_block_last(h_in, scale, shift, w3, x, wsk, bsk, *, TH):
    N, H, W, Cin = h_in.shape
    Cskip = x.shape[-1]
    Cout = w3.shape[-1]
    nH = H // TH
    main, top, bot = _halo_specs(H, TH, W, Cin)
    x_spec = pl.BlockSpec((1, TH, W, Cskip), lambda n, i: (n, i, 0, 0))
    kernel = functools.partial(_block_last_kernel, TH=TH, W=W)
    return pl.pallas_call(
        kernel,
        grid=(N, nH),
        in_specs=[main, top, bot,
                  _full_spec((1, Cin)), _full_spec((1, Cin)),
                  _full_spec((3, 3 * Cin, Cout)),
                  x_spec, _full_spec((Cskip, Cout)), _full_spec((1, Cout))],
        out_specs=pl.BlockSpec((1, TH, W, Cout), lambda n, i: (n, i, 0, 0)),
        out_shape=jax.ShapeDtypeStruct((N, H, W, Cout), jnp.float32),
        scratch_shapes=[pltpu.VMEM((TH + 2, W + 2, Cin), jnp.float32)],
        compiler_params=_COMPILER_PARAMS,
    )(h_in, h_in, h_in, scale, shift, w3, x, wsk, bsk)


# ----------------------------------------------------------------------------
# ResBlock forward (NCHW in / NCHW out, like PyTorch)
# ----------------------------------------------------------------------------
def _choose_tile_h(H, W, tile_h):
    """Largest divisor of H not exceeding the cap.  Never silently falls back to TH == H for big
    images (that blows the VMEM budget); the default cap targets TH*W ~ 256 (fills the v5e MXU M
    dim, decent on v6e, VMEM-safe on v7x) - pass tile_h explicitly to tune per generation."""
    cap = tile_h if tile_h is not None else max(1, 256 // max(W, 1))
    cap = max(1, min(cap, H))
    best = 1
    for d in range(1, cap + 1):
        if H % d == 0:
            best = d
    return best


def _fold_scale_shift(mean, var, gamma, beta):
    var = jnp.maximum(var, 0.0)
    scale = gamma * jax.lax.rsqrt(var + _BN_EPS)
    shift = beta - mean * scale
    return (scale.reshape(1, -1).astype(jnp.float32),
            shift.reshape(1, -1).astype(jnp.float32))


def _fold_from_tensor(h, gamma, beta):
    # BN1 only: one XLA pass over the external input x (cannot be fused without a 2-pass kernel).
    mean = jnp.mean(h, axis=(0, 1, 2))
    var = jnp.mean(h * h, axis=(0, 1, 2)) - mean * mean
    return _fold_scale_shift(mean, var, gamma, beta)


def _fold_from_stats(stats, count, gamma, beta):
    # stats: (N, nH, 2, C) per-tile [sum, sum_of_squares]; biased (train-mode) variance.
    s = jnp.sum(stats, axis=(0, 1))                       # (2, C)
    mean = s[0] / count
    var = s[1] / count - mean * mean
    return _fold_scale_shift(mean, var, gamma, beta)


def resblock_forward(x_nchw, p, *, tile_h=None):
    N, Cin, H, W = x_nchw.shape
    Cout = p["w1"].shape[0]
    TH = _choose_tile_h(H, W, tile_h)
    x = jnp.transpose(x_nchw, (0, 2, 3, 1)).astype(jnp.float32)           # NHWC
    count = float(N * H * W)

    def conv_w(w_oihw):  # (Cout, Cin, 3, 3) -> (3 [=ky], 3*Cin [kx*Cin+ci], Cout)
        co, ci = w_oihw.shape[0], w_oihw.shape[1]
        return jnp.transpose(w_oihw, (2, 3, 1, 0)).reshape(3, 3 * ci, co).astype(_MXU_DTYPE)

    wsk = jnp.transpose(p["wsk"][:, :, 0, 0], (1, 0)).astype(_MXU_DTYPE)  # (Cin, Cout)
    bsk = p["bsk"].reshape(1, Cout).astype(jnp.float32)

    s1, t1 = _fold_from_tensor(x, p["gamma1"], p["beta1"])
    h1, st1 = _run_block_stats(x, s1, t1, conv_w(p["w1"]), TH=TH)

    s2, t2 = _fold_from_stats(st1, count, p["gamma2"], p["beta2"])
    h2, st2 = _run_block_stats(h1, s2, t2, conv_w(p["w2"]), TH=TH)

    s3, t3 = _fold_from_stats(st2, count, p["gamma3"], p["beta3"])
    out = _run_block_last(h2, s3, t3, conv_w(p["w3"]), x, wsk, bsk, TH=TH)

    return jnp.transpose(out, (0, 3, 1, 2))                               # NCHW


# ----------------------------------------------------------------------------
# Deterministic parameter init (shapes from ResBlock.__init__)
# ----------------------------------------------------------------------------
def init_params(key, nFin, nFout):
    ks = jax.random.split(key, 8)
    f32 = jnp.float32
    return dict(
        gamma1=1.0 + 0.1 * jax.random.normal(ks[0], (nFin,), f32),
        beta1=0.1 * jax.random.normal(ks[1], (nFin,), f32),
        w1=0.1 * jax.random.normal(ks[2], (nFout, nFin, 3, 3), f32),
        gamma2=jnp.ones((nFout,), f32),
        beta2=jnp.zeros((nFout,), f32),
        w2=0.1 * jax.random.normal(ks[3], (nFout, nFout, 3, 3), f32),
        gamma3=1.0 + 0.1 * jax.random.normal(ks[4], (nFout,), f32),
        beta3=0.1 * jax.random.normal(ks[5], (nFout,), f32),
        w3=0.1 * jax.random.normal(ks[6], (nFout, nFout, 3, 3), f32),
        wsk=0.1 * jax.random.normal(ks[7], (nFout, nFin, 1, 1), f32),
        bsk=0.05 * jnp.arange(nFout, dtype=f32),
    )


# ----------------------------------------------------------------------------
# Pure-JAX reference (for correctness check)
# ----------------------------------------------------------------------------
def reference_forward(x, p):
    def bn_lrelu(h, gamma, beta):
        mean = jnp.mean(h, axis=(0, 2, 3), keepdims=True)
        var = jnp.mean((h - mean) ** 2, axis=(0, 2, 3), keepdims=True)
        hn = (h - mean) / jnp.sqrt(var + _BN_EPS)
        hn = hn * gamma.reshape(1, -1, 1, 1) + beta.reshape(1, -1, 1, 1)
        return jnp.where(hn >= 0, hn, _SLOPE * hn)

    def conv(h, w, pad):
        return jax.lax.conv_general_dilated(
            h, w, window_strides=(1, 1), padding=((pad, pad), (pad, pad)),
            dimension_numbers=("NCHW", "OIHW", "NCHW"))

    h = conv(bn_lrelu(x, p["gamma1"], p["beta1"]), p["w1"], 1)
    h = conv(bn_lrelu(h, p["gamma2"], p["beta2"]), p["w2"], 1)
    h = conv(bn_lrelu(h, p["gamma3"], p["beta3"]), p["w3"], 1)
    skip = conv(x, p["wsk"], 0) + p["bsk"].reshape(1, -1, 1, 1)
    return skip + h


if __name__ == "__main__":
    key = jax.random.PRNGKey(0)
    kx_, kp_ = jax.random.split(key)

    nFin, nFout = 4, 8
    N, H, W = 2, 16, 16
    x = jax.random.normal(kx_, (N, nFin, H, W), jnp.float32)      # NCHW, like PyTorch
    params = init_params(kp_, nFin, nFout)

    fwd = jax.jit(functools.partial(resblock_forward, tile_h=8))  # 2 H-tiles -> exercises the halo
    out = jax.block_until_ready(fwd(x, params))

    ref = reference_forward(x, params)
    assert out.shape == (N, nFout, H, W), out.shape
    # Mixed precision (bf16 MXU operands + bf16 inter-block activations) vs. pure-f32 reference.
    max_err = float(jnp.max(jnp.abs(out - ref)))
    assert jnp.allclose(out, ref, atol=1e-1, rtol=1e-1), f"max abs err = {max_err}"

    print("KERNEL_OK")
</pallas_src>

<mosaic_0001>
module attributes {stable_mosaic.version = 11 : i64} {
  func.func @_block_stats_kernel(%arg0: i32, %arg1: i32, %arg2: memref<1x8x16x4xf32, #tpu.memory_space<vmem>>, %arg3: memref<1x1x16x4xf32, #tpu.memory_space<vmem>>, %arg4: memref<1x1x16x4xf32, #tpu.memory_space<vmem>>, %arg5: memref<1x4xf32, #tpu.memory_space<vmem>>, %arg6: memref<1x4xf32, #tpu.memory_space<vmem>>, %arg7: memref<3x12x8xbf16, #tpu.memory_space<vmem>>, %arg8: memref<1x8x16x8xbf16, #tpu.memory_space<vmem>>, %arg9: memref<1x1x2x8xf32, #tpu.memory_space<vmem>>, %arg10: memref<10x18x4xf32, #tpu.memory_space<vmem>>) attributes {dimension_semantics = [#tpu.dimension_semantics<parallel>, #tpu.dimension_semantics<parallel>], iteration_bounds = array<i64: 2, 2>, scalar_prefetch = 0 : i64, scratch_operands = 1 : i64, tpu.core_type = #tpu.core_type<tc>, window_params = [{transform_indices = @transform_0, window_bounds = array<i64: 1, 8, 16, 4>}, {transform_indices = @transform_1, window_bounds = array<i64: 1, 1, 16, 4>}, {transform_indices = @transform_2, window_bounds = array<i64: 1, 1, 16, 4>}, {pipeline_mode = #tpu.pipeline_mode<synchronous>, transform_indices = @transform_3, window_bounds = array<i64: 1, 4>}, {pipeline_mode = #tpu.pipeline_mode<synchronous>, transform_indices = @transform_4, window_bounds = array<i64: 1, 4>}, {pipeline_mode = #tpu.pipeline_mode<synchronous>, transform_indices = @transform_5, window_bounds = array<i64: 3, 12, 8>}, {transform_indices = @transform_6, window_bounds = array<i64: 1, 8, 16, 8>}, {transform_indices = @transform_7, window_bounds = array<i64: 1, 1, 2, 8>}]} {
    %c0 = arith.constant 0 : index
    %c0_0 = arith.constant 0 : index
    %0 = vector.load %arg5[%c0, %c0_0] : memref<1x4xf32, #tpu.memory_space<vmem>>, vector<1x4xf32>
    %c0_1 = arith.constant 0 : index
    %c0_2 = arith.constant 0 : index
    %1 = vector.load %arg6[%c0_1, %c0_2] : memref<1x4xf32, #tpu.memory_space<vmem>>, vector<1x4xf32>
    %c0_3 = arith.constant 0 : index
    %c0_4 = arith.constant 0 : index
    %c0_5 = arith.constant 0 : index
    %c0_6 = arith.constant 0 : index
    %2 = vector.load %arg2[%c0_3, %c0_4, %c0_5, %c0_6] : memref<1x8x16x4xf32, #tpu.memory_space<vmem>>, vector<1x8x16x4xf32>
    %3 = vector.shape_cast %2 : vector<1x8x16x4xf32> to vector<8x16x4xf32>
    %4 = vector.shape_cast %0 : vector<1x4xf32> to vector<1x1x4xf32>
    %5 = vector.broadcast %4 : vector<1x1x4xf32> to vector<8x16x4xf32>
    %6 = arith.mulf %3, %5 : vector<8x16x4xf32>
    %7 = vector.shape_cast %1 : vector<1x4xf32> to vector<1x1x4xf32>
    %8 = vector.broadcast %7 : vector<1x1x4xf32> to vector<8x16x4xf32>
    %9 = arith.addf %6, %8 : vector<8x16x4xf32>
    %cst = arith.constant 0.000000e+00 : f32
    %10 = vector.broadcast %cst : f32 to vector<8x16x4xf32>
    %11 = arith.cmpf oge, %9, %10 : vector<8x16x4xf32>
    %cst_7 = arith.constant 2.000000e-01 : f32
    %12 = vector.broadcast %cst_7 : f32 to vector<8x16x4xf32>
    %13 = arith.mulf %12, %9 : vector<8x16x4xf32>
    %14 = arith.select %11, %9, %13 : vector<8x16x4xi1>, vector<8x16x4xf32>
    %c0_8 = arith.constant 0 : index
    %c0_9 = arith.constant 0 : index
    %c0_10 = arith.constant 0 : index
    %c0_11 = arith.constant 0 : index
    %15 = vector.load %arg3[%c0_8, %c0_9, %c0_10, %c0_11] : memref<1x1x16x4xf32, #tpu.memory_space<vmem>>, vector<1x1x16x4xf32>
    %16 = vector.shape_cast %15 : vector<1x1x16x4xf32> to vector<1x16x4xf32>
    %17 = vector.shape_cast %0 : vector<1x4xf32> to vector<1x1x4xf32>
    %18 = vector.broadcast %17 : vector<1x1x4xf32> to vector<1x16x4xf32>
    %19 = arith.mulf %16, %18 : vector<1x16x4xf32>
    %20 = vector.shape_cast %1 : vector<1x4xf32> to vector<1x1x4xf32>
    %21 = vector.broadcast %20 : vector<1x1x4xf32> to vector<1x16x4xf32>
    %22 = arith.addf %19, %21 : vector<1x16x4xf32>
    %cst_12 = arith.constant 0.000000e+00 : f32
    %23 = vector.broadcast %cst_12 : f32 to vector<1x16x4xf32>
    %24 = arith.cmpf oge, %22, %23 : vector<1x16x4xf32>
    %cst_13 = arith.constant 2.000000e-01 : f32
    %25 = vector.broadcast %cst_13 : f32 to vector<1x16x4xf32>
    %26 = arith.mulf %25, %22 : vector<1x16x4xf32>
    %27 = arith.select %24, %22, %26 : vector<1x16x4xi1>, vector<1x16x4xf32>
    %c0_14 = arith.constant 0 : index
    %c0_15 = arith.constant 0 : index
    %c0_16 = arith.constant 0 : index
    %c0_17 = arith.constant 0 : index
    %28 = vector.load %arg4[%c0_14, %c0_15, %c0_16, %c0_17] : memref<1x1x16x4xf32, #tpu.memory_space<vmem>>, vector<1x1x16x4xf32>
    %29 = vector.shape_cast %28 : vector<1x1x16x4xf32> to vector<1x16x4xf32>
    %30 = vector.shape_cast %0 : vector<1x4xf32> to vector<1x1x4xf32>
    %31 = vector.broadcast %30 : vector<1x1x4xf32> to vector<1x16x4xf32>
    %32 = arith.mulf %29, %31 : vector<1x16x4xf32>
    %33 = vector.shape_cast %1 : vector<1x4xf32> to vector<1x1x4xf32>
    %34 = vector.broadcast %33 : vector<1x1x4xf32> to vector<1x16x4xf32>
    %35 = arith.addf %32, %34 : vector<1x16x4xf32>
    %cst_18 = arith.constant 0.000000e+00 : f32
    %36 = vector.broadcast %cst_18 : f32 to vector<1x16x4xf32>
    %37 = arith.cmpf oge, %35, %36 : vector<1x16x4xf32>
    %cst_19 = arith.constant 2.000000e-01 : f32
    %38 = vector.broadcast %cst_19 : f32 to vector<1x16x4xf32>
    %39 = arith.mulf %38, %35 : vector<1x16x4xf32>
    %40 = arith.select %37, %35, %39 : vector<1x16x4xi1>, vector<1x16x4xf32>
    %c0_i32 = arith.constant 0 : i32
    %41 = arith.cmpi eq, %arg1, %c0_i32 : i32
    %cst_20 = arith.constant 0.000000e+00 : f32
    %42 = vector.broadcast %cst_20 : f32 to vector<1x16x4xf32>
    %43 = arith.select %41, %42, %27 : vector<1x16x4xf32>
    %c1_i32 = arith.constant 1 : i32
    %44 = arith.cmpi eq, %arg1, %c1_i32 : i32
    %cst_21 = arith.constant 0.000000e+00 : f32
    %45 = vector.broadcast %cst_21 : f32 to vector<1x16x4xf32>
    %46 = arith.select %44, %45, %40 : vector<1x16x4xf32>
    %cst_22 = arith.constant 0.000000e+00 : f32
    %47 = vector.broadcast %cst_22 : f32 to vector<10x1x4xf32>
    %c0_23 = arith.constant 0 : index
    %c0_24 = arith.constant 0 : index
    %c0_25 = arith.constant 0 : index
    %48 = vector.load %arg10[%c0_23, %c0_24, %c0_25] : memref<10x18x4xf32, #tpu.memory_space<vmem>>, vector<10x1x4xf32>
    tpu.vector_store %arg10[%c0_23, %c0_24, %c0_25], %47 {strides = array<i32>} : memref<10x18x4xf32, #tpu.memory_space<vmem>>, vector<10x1x4xf32>,
    %c0_26 = arith.constant 0 : index
    %c17 = arith.constant 17 : index
    %c0_27 = arith.constant 0 : index
    %49 = vector.load %arg10[%c0_26, %c17, %c0_27] : memref<10x18x4xf32, #tpu.memory_space<vmem>>, vector<10x1x4xf32>
    tpu.vector_store %arg10[%c0_26, %c17, %c0_27], %47 {strides = array<i32>} : memref<10x18x4xf32, #tpu.memory_space<vmem>>, vector<10x1x4xf32>,
    %c0_28 = arith.constant 0 : index
    %c1 = arith.constant 1 : index
    %c0_29 = arith.constant 0 : index
    %50 = vector.load %arg10[%c0_28, %c1, %c0_29] : memref<10x18x4xf32, #tpu.memory_space<vmem>>, vector<1x16x4xf32>
    tpu.vector_store %arg10[%c0_28, %c1, %c0_29], %43 {strides = array<i32>} : memref<10x18x4xf32, #tpu.memory_space<vmem>>, vector<1x16x4xf32>,
    %c9 = arith.constant 9 : index
    %c1_30 = arith.constant 1 : index
    %c0_31 = arith.constant 0 : index
    %51 = vector.load %arg10[%c9, %c1_30, %c0_31] : memref<10x18x4xf32, #tpu.memory_space<vmem>>, vector<1x16x4xf32>
    tpu.vector_store %arg10[%c9, %c1_30, %c0_31], %46 {strides = array<i32>} : memref<10x18x4xf32, #tpu.memory_space<vmem>>, vector<1x16x4xf32>,
    %c1_32 = arith.constant 1 : index
    %c1_33 = arith.constant 1 : index
    %c0_34 = arith.constant 0 : index
    %52 = vector.load %arg10[%c1_32, %c1_33, %c0_34] : memref<10x18x4xf32, #tpu.memory_space<vmem>>, vector<8x16x4xf32>
    tpu.vector_store %arg10[%c1_32, %c1_33, %c0_34], %14 {strides = array<i32>} : memref<10x18x4xf32, #tpu.memory_space<vmem>>, vector<8x16x4xf32>,
    %cst_35 = arith.constant 0.000000e+00 : f32
    %53 = vector.broadcast %cst_35 : f32 to vector<128x8xf32>
    %c0_36 = arith.constant 0 : index
    %c0_37 = arith.constant 0 : index
    %c0_38 = arith.constant 0 : index
    %54 = vector.load %arg10[%c0_36, %c0_37, %c0_38] : memref<10x18x4xf32, #tpu.memory_space<vmem>>, vector<8x16x4xf32>
    %55 = vector.shape_cast %54 : vector<8x16x4xf32> to vector<128x4xf32>
    %56 = arith.truncf %55 : vector<128x4xf32> to vector<128x4xbf16>
    %c0_39 = arith.constant 0 : index
    %c0_40 = arith.constant 0 : index
    %c0_41 = arith.constant 0 : index
    %57 = vector.load %arg7[%c0_39, %c0_40, %c0_41] : memref<3x12x8xbf16, #tpu.memory_space<vmem>>, vector<1x4x8xbf16>
    %58 = vector.shape_cast %57 : vector<1x4x8xbf16> to vector<4x8xbf16>
    %cst_42 = arith.constant dense<0.000000e+00> : vector<128x8xf32>
    %59 = tpu.matmul %56, %58, %cst_42 {dimension_numbers = #tpu.dot_dimension_numbers<[1], [0], [0], [1], [0, 0, 1, 1], [], []>} : vector<128x4xbf16>, vector<4x8xbf16>, vector<128x8xf32> -> vector<128x8xf32>
    %60 = arith.addf %53, %59 : vector<128x8xf32>
    %c0_43 = arith.constant 0 : index
    %c1_44 = arith.constant 1 : index
    %c0_45 = arith.constant 0 : index
    %61 = vector.load %arg10[%c0_43, %c1_44, %c0_45] : memref<10x18x4xf32, #tpu.memory_space<vmem>>, vector<8x16x4xf32>
    %62 = vector.shape_cast %61 : vector<8x16x4xf32> to vector<128x4xf32>
    %63 = arith.truncf %62 : vector<128x4xf32> to vector<128x4xbf16>
    %c0_46 = arith.constant 0 : index
    %c4 = arith.constant 4 : index
    %c0_47 = arith.constant 0 : index
    %64 = vector.load %arg7[%c0_46, %c4, %c0_47] : memref<3x12x8xbf16, #tpu.memory_space<vmem>>, vector<1x4x8xbf16>
    %65 = vector.shape_cast %64 : vector<1x4x8xbf16> to vector<4x8xbf16>
    %cst_48 = arith.constant dense<0.000000e+00> : vector<128x8xf32>
    %66 = tpu.matmul %63, %65, %cst_48 {dimension_numbers = #tpu.dot_dimension_numbers<[1], [0], [0], [1], [0, 0, 1, 1], [], []>} : vector<128x4xbf16>, vector<4x8xbf16>, vector<128x8xf32> -> vector<128x8xf32>
    %67 = arith.addf %60, %66 : vector<128x8xf32>
    %c0_49 = arith.constant 0 : index
    %c2 = arith.constant 2 : index
    %c0_50 = arith.constant 0 : index
    %68 = vector.load %arg10[%c0_49, %c2, %c0_50] : memref<10x18x4xf32, #tpu.memory_space<vmem>>, vector<8x16x4xf32>
    %69 = vector.shape_cast %68 : vector<8x16x4xf32> to vector<128x4xf32>
    %70 = arith.truncf %69 : vector<128x4xf32> to vector<128x4xbf16>
    %c0_51 = arith.constant 0 : index
    %c8 = arith.constant 8 : index
    %c0_52 = arith.constant 0 : index
    %71 = vector.load %arg7[%c0_51, %c8, %c0_52] : memref<3x12x8xbf16, #tpu.memory_space<vmem>>, vector<1x4x8xbf16>
    %72 = vector.shape_cast %71 : vector<1x4x8xbf16> to vector<4x8xbf16>
    %cst_53 = arith.constant dense<0.000000e+00> : vector<128x8xf32>
    %73 = tpu.matmul %70, %72, %cst_53 {dimension_numbers = #tpu.dot_dimension_numbers<[1], [0], [0], [1], [0, 0, 1, 1], [], []>} : vector<128x4xbf16>, vector<4x8xbf16>, vector<128x8xf32> -> vector<128x8xf32>
    %74 = arith.addf %67, %73 : vector<128x8xf32>
    %c1_54 = arith.constant 1 : index
    %c0_55 = arith.constant 0 : index
    %c0_56 = arith.constant 0 : index
    %75 = vector.load %arg10[%c1_54, %c0_55, %c0_56] : memref<10x18x4xf32, #tpu.memory_space<vmem>>, vector<8x16x4xf32>
    %76 = vector.shape_cast %75 : vector<8x16x4xf32> to vector<128x4xf32>
    %77 = arith.truncf %76 : vector<128x4xf32> to vector<128x4xbf16>
    %c1_57 = arith.constant 1 : index
    %c0_58 = arith.constant 0 : index
    %c0_59 = arith.constant 0 : index
    %78 = vector.load %arg7[%c1_57, %c0_58, %c0_59] : memref<3x12x8xbf16, #tpu.memory_space<vmem>>, vector<1x4x8xbf16>
    %79 = vector.shape_cast %78 : vector<1x4x8xbf16> to vector<4x8xbf16>
    %cst_60 = arith.constant dense<0.000000e+00> : vector<128x8xf32>
    %80 = tpu.matmul %77, %79, %cst_60 {dimension_numbers = #tpu.dot_dimension_numbers<[1], [0], [0], [1], [0, 0, 1, 1], [], []>} : vector<128x4xbf16>, vector<4x8xbf16>, vector<128x8xf32> -> vector<128x8xf32>
    %81 = arith.addf %74, %80 : vector<128x8xf32>
    %c1_61 = arith.constant 1 : index
    %c1_62 = arith.constant 1 : index
    %c0_63 = arith.constant 0 : index
    %82 = vector.load %arg10[%c1_61, %c1_62, %c0_63] : memref<10x18x4xf32, #tpu.memory_space<vmem>>, vector<8x16x4xf32>
    %83 = vector.shape_cast %82 : vector<8x16x4xf32> to vector<128x4xf32>
    %84 = arith.truncf %83 : vector<128x4xf32> to vector<128x4xbf16>
    %c1_64 = arith.constant 1 : index
    %c4_65 = arith.constant 4 : index
    %c0_66 = arith.constant 0 : index
    %85 = vector.load %arg7[%c1_64, %c4_65, %c0_66] : memref<3x12x8xbf16, #tpu.memory_space<vmem>>, vector<1x4x8xbf16>
    %86 = vector.shape_cast %85 : vector<1x4x8xbf16> to vector<4x8xbf16>
    %cst_67 = arith.constant dense<0.000000e+00> : vector<128x8xf32>
    %87 = tpu.matmul %84, %86, %cst_67 {dimension_numbers = #tpu.dot_dimension_numbers<[1], [0], [0], [1], [0, 0, 1, 1], [], []>} : vector<128x4xbf16>, vector<4x8xbf16>, vector<128x8xf32> -> vector<128x8xf32>
    %88 = arith.addf %81, %87 : vector<128x8xf32>
    %c1_68 = arith.constant 1 : index
    %c2_69 = arith.constant 2 : index
    %c0_70 = arith.constant 0 : index
    %89 = vector.load %arg10[%c1_68, %c2_69, %c0_70] : memref<10x18x4xf32, #tpu.memory_space<vmem>>, vector<8x16x4xf32>
    %90 = vector.shape_cast %89 : vector<8x16x4xf32> to vector<128x4xf32>
    %91 = arith.truncf %90 : vector<128x4xf32> to vector<128x4xbf16>
    %c1_71 = arith.constant 1 : index
    %c8_72 = arith.constant 8 : index
    %c0_73 = arith.constant 0 : index
    %92 = vector.load %arg7[%c1_71, %c8_72, %c0_73] : memref<3x12x8xbf16, #tpu.memory_space<vmem>>, vector<1x4x8xbf16>
    %93 = vector.shape_cast %92 : vector<1x4x8xbf16> to vector<4x8xbf16>
    %cst_74 = arith.constant dense<0.000000e+00> : vector<128x8xf32>
    %94 = tpu.matmul %91, %93, %cst_74 {dimension_numbers = #tpu.dot_dimension_numbers<[1], [0], [0], [1], [0, 0, 1, 1], [], []>} : vector<128x4xbf16>, vector<4x8xbf16>, vector<128x8xf32> -> vector<128x8xf32>
    %95 = arith.addf %88, %94 : vector<128x8xf32>
    %c2_75 = arith.constant 2 : index
    %c0_76 = arith.constant 0 : index
    %c0_77 = arith.constant 0 : index
    %96 = vector.load %arg10[%c2_75, %c0_76, %c0_77] : memref<10x18x4xf32, #tpu.memory_space<vmem>>, vector<8x16x4xf32>
    %97 = vector.shape_cast %96 : vector<8x16x4xf32> to vector<128x4xf32>
    %98 = arith.truncf %97 : vector<128x4xf32> to vector<128x4xbf16>
    %c2_78 = arith.constant 2 : index
    %c0_79 = arith.constant 0 : index
    %c0_80 = arith.constant 0 : index
    %99 = vector.load %arg7[%c2_78, %c0_79, %c0_80] : memref<3x12x8xbf16, #tpu.memory_space<vmem>>, vector<1x4x8xbf16>
    %100 = vector.shape_cast %99 : vector<1x4x8xbf16> to vector<4x8xbf16>
    %cst_81 = arith.constant dense<0.000000e+00> : vector<128x8xf32>
    %101 = tpu.matmul %98, %100, %cst_81 {dimension_numbers = #tpu.dot_dimension_numbers<[1], [0], [0], [1], [0, 0, 1, 1], [], []>} : vector<128x4xbf16>, vector<4x8xbf16>, vector<128x8xf32> -> vector<128x8xf32>
    %102 = arith.addf %95, %101 : vector<128x8xf32>
    %c2_82 = arith.constant 2 : index
    %c1_83 = arith.constant 1 : index
    %c0_84 = arith.constant 0 : index
    %103 = vector.load %arg10[%c2_82, %c1_83, %c0_84] : memref<10x18x4xf32, #tpu.memory_space<vmem>>, vector<8x16x4xf32>
    %104 = vector.shape_cast %103 : vector<8x16x4xf32> to vector<128x4xf32>
    %105 = arith.truncf %104 : vector<128x4xf32> to vector<128x4xbf16>
    %c2_85 = arith.constant 2 : index
    %c4_86 = arith.constant 4 : index
    %c0_87 = arith.constant 0 : index
    %106 = vector.load %arg7[%c2_85, %c4_86, %c0_87] : memref<3x12x8xbf16, #tpu.memory_space<vmem>>, vector<1x4x8xbf16>
    %107 = vector.shape_cast %106 : vector<1x4x8xbf16> to vector<4x8xbf16>
    %cst_88 = arith.constant dense<0.000000e+00> : vector<128x8xf32>
    %108 = tpu.matmul %105, %107, %cst_88 {dimension_numbers = #tpu.dot_dimension_numbers<[1], [0], [0], [1], [0, 0, 1, 1], [], []>} : vector<128x4xbf16>, vector<4x8xbf16>, vector<128x8xf32> -> vector<128x8xf32>
    %109 = arith.addf %102, %108 : vector<128x8xf32>
    %c2_89 = arith.constant 2 : index
    %c2_90 = arith.constant 2 : index
    %c0_91 = arith.constant 0 : index
    %110 = vector.load %arg10[%c2_89, %c2_90, %c0_91] : memref<10x18x4xf32, #tpu.memory_space<vmem>>, vector<8x16x4xf32>
    %111 = vector.shape_cast %110 : vector<8x16x4xf32> to vector<128x4xf32>
    %112 = arith.truncf %111 : vector<128x4xf32> to vector<128x4xbf16>
    %c2_92 = arith.constant 2 : index
    %c8_93 = arith.constant 8 : index
    %c0_94 = arith.constant 0 : index
    %113 = vector.load %arg7[%c2_92, %c8_93, %c0_94] : memref<3x12x8xbf16, #tpu.memory_space<vmem>>, vector<1x4x8xbf16>
    %114 = vector.shape_cast %113 : vector<1x4x8xbf16> to vector<4x8xbf16>
    %cst_95 = arith.constant dense<0.000000e+00> : vector<128x8xf32>
    %115 = tpu.matmul %112, %114, %cst_95 {dimension_numbers = #tpu.dot_dimension_numbers<[1], [0], [0], [1], [0, 0, 1, 1], [], []>} : vector<128x4xbf16>, vector<4x8xbf16>, vector<128x8xf32> -> vector<128x8xf32>
    %116 = arith.addf %109, %115 : vector<128x8xf32>
    %117 = vector.shape_cast %116 : vector<128x8xf32> to vector<8x16x8xf32>
    %118 = arith.truncf %117 : vector<8x16x8xf32> to vector<8x16x8xbf16>
    %c0_96 = arith.constant 0 : index
    %c0_97 = arith.constant 0 : index
    %c0_98 = arith.constant 0 : index
    %c0_99 = arith.constant 0 : index
    %119 = vector.load %arg8[%c0_96, %c0_97, %c0_98, %c0_99] : memref<1x8x16x8xbf16, #tpu.memory_space<vmem>>, vector<1x8x16x8xbf16>
    %120 = vector.shape_cast %119 : vector<1x8x16x8xbf16> to vector<8x16x8xbf16>
    %121 = vector.shape_cast %118 : vector<8x16x8xbf16> to vector<1x8x16x8xbf16>
    tpu.vector_store %arg8[%c0_96, %c0_97, %c0_98, %c0_99], %121 {strides = array<i32>} : memref<1x8x16x8xbf16, #tpu.memory_space<vmem>>, vector<1x8x16x8xbf16>,
    %cst_100 = arith.constant dense<0.000000e+00> : vector<8xf32>
    %122 = vector.multi_reduction <add>, %116, %cst_100 [0] : vector<128x8xf32> to vector<8xf32>
    %123 = vector.shape_cast %122 : vector<8xf32> to vector<1x8xf32>
    %c0_101 = arith.constant 0 : index
    %c0_102 = arith.constant 0 : index
    %c0_103 = arith.constant 0 : index
    %c0_104 = arith.constant 0 : index
    %124 = vector.load %arg9[%c0_101, %c0_102, %c0_103, %c0_104] : memref<1x1x2x8xf32, #tpu.memory_space<vmem>>, vector<1x1x1x8xf32>
    %125 = vector.shape_cast %124 : vector<1x1x1x8xf32> to vector<1x8xf32>
    %126 = vector.shape_cast %123 : vector<1x8xf32> to vector<1x1x1x8xf32>
    tpu.vector_store %arg9[%c0_101, %c0_102, %c0_103, %c0_104], %126 {strides = array<i32>} : memref<1x1x2x8xf32, #tpu.memory_space<vmem>>, vector<1x1x1x8xf32>,
    %127 = arith.mulf %116, %116 : vector<128x8xf32>
    %cst_105 = arith.constant dense<0.000000e+00> : vector<8xf32>
    %128 = vector.multi_reduction <add>, %127, %cst_105 [0] : vector<128x8xf32> to vector<8xf32>
    %129 = vector.shape_cast %128 : vector<8xf32> to vector<1x8xf32>
    %c0_106 = arith.constant 0 : index
    %c0_107 = arith.constant 0 : index
    %c1_108 = arith.constant 1 : index
    %c0_109 = arith.constant 0 : index
    %130 = vector.load %arg9[%c0_106, %c0_107, %c1_108, %c0_109] : memref<1x1x2x8xf32, #tpu.memory_space<vmem>>, vector<1x1x1x8xf32>
    %131 = vector.shape_cast %130 : vector<1x1x1x8xf32> to vector<1x8xf32>
    %132 = vector.shape_cast %129 : vector<1x8xf32> to vector<1x1x1x8xf32>
    tpu.vector_store %arg9[%c0_106, %c0_107, %c1_108, %c0_109], %132 {strides = array<i32>} : memref<1x1x2x8xf32, #tpu.memory_space<vmem>>, vector<1x1x1x8xf32>,
    return
  }
  func.func @transform_0(%arg0: i32, %arg1: i32) -> (i32, i32, i32, i32) {
    %c0_i32 = arith.constant 0 : i32
    %c0_i32_0 = arith.constant 0 : i32
    %c0_i32_1 = arith.constant 0 : i32
    return %arg0, %arg1, %c0_i32, %c0_i32_0 : i32, i32, i32, i32
  }
  func.func @transform_1(%arg0: i32, %arg1: i32) -> (i32, i32, i32, i32) {
    %c8_i32 = arith.constant 8 : i32
    %0 = arith.muli %arg1, %c8_i32 : i32
    %c1_i32 = arith.constant 1 : i32
    %1 = arith.subi %0, %c1_i32 : i32
    %c0_i32 = arith.constant 0 : i32
    %2 = arith.maxsi %1, %c0_i32 : i32
    %c0_i32_0 = arith.constant 0 : i32
    %c0_i32_1 = arith.constant 0 : i32
    %c0_i32_2 = arith.constant 0 : i32
    return %arg0, %2, %c0_i32_0, %c0_i32_1 : i32, i32, i32, i32
  }
  func.func @transform_2(%arg0: i32, %arg1: i32) -> (i32, i32, i32, i32) {
    %c1_i32 = arith.constant 1 : i32
    %0 = arith.addi %arg1, %c1_i32 : i32
    %c8_i32 = arith.constant 8 : i32
    %1 = arith.muli %0, %c8_i32 : i32
    %c15_i32 = arith.constant 15 : i32
    %2 = arith.minsi %1, %c15_i32 : i32
    %c0_i32 = arith.constant 0 : i32
    %c0_i32_0 = arith.constant 0 : i32
    %c0_i32_1 = arith.constant 0 : i32
    return %arg0, %2, %c0_i32, %c0_i32_0 : i32, i32, i32, i32
  }
  func.func @transform_3(%arg0: i32, %arg1: i32) -> (i32, i32) {
    %c0_i32 = arith.constant 0 : i32
    %c0_i32_0 = arith.constant 0 : i32
    %c0_i32_1 = arith.constant 0 : i32
    return %c0_i32, %c0_i32_0 : i32, i32
  }
  func.func @transform_4(%arg0: i32, %arg1: i32) -> (i32, i32) {
    %c0_i32 = arith.constant 0 : i32
    %c0_i32_0 = arith.constant 0 : i32
    %c0_i32_1 = arith.constant 0 : i32
    return %c0_i32, %c0_i32_0 : i32, i32
  }
  func.func @transform_5(%arg0: i32, %arg1: i32) -> (i32, i32, i32) {
    %c0_i32 = arith.constant 0 : i32
    %c0_i32_0 = arith.constant 0 : i32
    %c0_i32_1 = arith.constant 0 : i32
    %c0_i32_2 = arith.constant 0 : i32
    return %c0_i32, %c0_i32_0, %c0_i32_1 : i32, i32, i32
  }
  func.func @transform_6(%arg0: i32, %arg1: i32) -> (i32, i32, i32, i32) {
    %c0_i32 = arith.constant 0 : i32
    %c0_i32_0 = arith.constant 0 : i32
    %c0_i32_1 = arith.constant 0 : i32
    return %arg0, %arg1, %c0_i32, %c0_i32_0 : i32, i32, i32, i32
  }
  func.func @transform_7(%arg0: i32, %arg1: i32) -> (i32, i32, i32, i32) {
    %c0_i32 = arith.constant 0 : i32
    %c0_i32_0 = arith.constant 0 : i32
    %c0_i32_1 = arith.constant 0 : i32
    return %arg0, %arg1, %c0_i32, %c0_i32_0 : i32, i32, i32, i32
  }
}

module attributes {stable_mosaic.version = 11 : i64} {
  func.func @_block_stats_kernel(%arg0: i32, %arg1: i32, %arg2: memref<1x8x16x8xbf16, #tpu.memory_space<vmem>>, %arg3: memref<1x1x16x8xbf16, #tpu.memory_space<vmem>>, %arg4: memref<1x1x16x8xbf16, #tpu.memory_space<vmem>>, %arg5: memref<1x8xf32, #tpu.memory_space<vmem>>, %arg6: memref<1x8xf32, #tpu.memory_space<vmem>>, %arg7: memref<3x24x8xbf16, #tpu.memory_space<vmem>>, %arg8: memref<1x8x16x8xbf16, #tpu.memory_space<vmem>>, %arg9: memref<1x1x2x8xf32, #tpu.memory_space<vmem>>, %arg10: memref<10x18x8xf32, #tpu.memory_space<vmem>>) attributes {dimension_semantics = [#tpu.dimension_semantics<parallel>, #tpu.dimension_semantics<parallel>], iteration_bounds = array<i64: 2, 2>, scalar_prefetch = 0 : i64, scratch_operands = 1 : i64, tpu.core_type = #tpu.core_type<tc>, window_params = [{transform_indices = @transform_0, window_bounds = array<i64: 1, 8, 16, 8>}, {transform_indices = @transform_1, window_bounds = array<i64: 1, 1, 16, 8>}, {transform_indices = @transform_2, window_bounds = array<i64: 1, 1, 16, 8>}, {pipeline_mode = #tpu.pipeline_mode<synchronous>, transform_indices = @transform_3, window_bounds = array<i64: 1, 8>}, {pipeline_mode = #tpu.pipeline_mode<synchronous>, transform_indices = @transform_4, window_bounds = array<i64: 1, 8>}, {pipeline_mode = #tpu.pipeline_mode<synchronous>, transform_indices = @transform_5, window_bounds = array<i64: 3, 24, 8>}, {transform_indices = @transform_6, window_bounds = array<i64: 1, 8, 16, 8>}, {transform_indices = @transform_7, window_bounds = array<i64: 1, 1, 2, 8>}]} {
    %c0 = arith.constant 0 : index
    %c0_0 = arith.constant 0 : index
    %0 = vector.load %arg5[%c0, %c0_0] : memref<1x8xf32, #tpu.memory_space<vmem>>, vector<1x8xf32>
    %c0_1 = arith.constant 0 : index
    %c0_2 = arith.constant 0 : index
    %1 = vector.load %arg6[%c0_1, %c0_2] : memref<1x8xf32, #tpu.memory_space<vmem>>, vector<1x8xf32>
    %c0_3 = arith.constant 0 : index
    %c0_4 = arith.constant 0 : index
    %c0_5 = arith.constant 0 : index
    %c0_6 = arith.constant 0 : index
    %2 = vector.load %arg2[%c0_3, %c0_4, %c0_5, %c0_6] : memref<1x8x16x8xbf16, #tpu.memory_space<vmem>>, vector<1x8x16x8xbf16>
    %3 = vector.shape_cast %2 : vector<1x8x16x8xbf16> to vector<8x16x8xbf16>
    %4 = arith.extf %3 : vector<8x16x8xbf16> to vector<8x16x8xf32>
    %5 = vector.shape_cast %0 : vector<1x8xf32> to vector<1x1x8xf32>
    %6 = vector.broadcast %5 : vector<1x1x8xf32> to vector<8x16x8xf32>
    %7 = arith.mulf %4, %6 : vector<8x16x8xf32>
    %8 = vector.shape_cast %1 : vector<1x8xf32> to vector<1x1x8xf32>
    %9 = vector.broadcast %8 : vector<1x1x8xf32> to vector<8x16x8xf32>
    %10 = arith.addf %7, %9 : vector<8x16x8xf32>
    %cst = arith.constant 0.000000e+00 : f32
    %11 = vector.broadcast %cst : f32 to vector<8x16x8xf32>
    %12 = arith.cmpf oge, %10, %11 : vector<8x16x8xf32>
    %cst_7 = arith.constant 2.000000e-01 : f32
    %13 = vector.broadcast %cst_7 : f32 to vector<8x16x8xf32>
    %14 = arith.mulf %13, %10 : vector<8x16x8xf32>
    %15 = arith.select %12, %10, %14 : vector<8x16x8xi1>, vector<8x16x8xf32>
    %c0_8 = arith.constant 0 : index
    %c0_9 = arith.constant 0 : index
    %c0_10 = arith.constant 0 : index
    %c0_11 = arith.constant 0 : index
    %16 = vector.load %arg3[%c0_8, %c0_9, %c0_10, %c0_11] : memref<1x1x16x8xbf16, #tpu.memory_space<vmem>>, vector<1x1x16x8xbf16>
    %17 = vector.shape_cast %16 : vector<1x1x16x8xbf16> to vector<1x16x8xbf16>
    %18 = arith.extf %17 : vector<1x16x8xbf16> to vector<1x16x8xf32>
    %19 = vector.shape_cast %0 : vector<1x8xf32> to vector<1x1x8xf32>
    %20 = vector.broadcast %19 : vector<1x1x8xf32> to vector<1x16x8xf32>
    %21 = arith.mulf %18, %20 : vector<1x16x8xf32>
    %22 = vector.shape_cast %1 : vector<1x8xf32> to vector<1x1x8xf32>
    %23 = vector.broadcast %22 : vector<1x1x8xf32> to vector<1x16x8xf32>
    %24 = arith.addf %21, %23 : vector<1x16x8xf32>
    %cst_12 = arith.constant 0.000000e+00 : f32
    %25 = vector.broadcast %cst_12 : f32 to vector<1x16x8xf32>
    %26 = arith.cmpf oge, %24, %25 : vector<1x16x8xf32>
    %cst_13 = arith.constant 2.000000e-01 : f32
    %27 = vector.broadcast %cst_13 : f32 to vector<1x16x8xf32>
    %28 = arith.mulf %27, %24 : vector<1x16x8xf32>
    %29 = arith.select %26, %24, %28 : vector<1x16x8xi1>, vector<1x16x8xf32>
    %c0_14 = arith.constant 0 : index
    %c0_15 = arith.constant 0 : index
    %c0_16 = arith.constant 0 : index
    %c0_17 = arith.constant 0 : index
    %30 = vector.load %arg4[%c0_14, %c0_15, %c0_16, %c0_17] : memref<1x1x16x8xbf16, #tpu.memory_space<vmem>>, vector<1x1x16x8xbf16>
    %31 = vector.shape_cast %30 : vector<1x1x16x8xbf16> to vector<1x16x8xbf16>
    %32 = arith.extf %31 : vector<1x16x8xbf16> to vector<1x16x8xf32>
    %33 = vector.shape_cast %0 : vector<1x8xf32> to vector<1x1x8xf32>
    %34 = vector.broadcast %33 : vector<1x1x8xf32> to vector<1x16x8xf32>
    %35 = arith.mulf %32, %34 : vector<1x16x8xf32>
    %36 = vector.shape_cast %1 : vector<1x8xf32> to vector<1x1x8xf32>
    %37 = vector.broadcast %36 : vector<1x1x8xf32> to vector<1x16x8xf32>
    %38 = arith.addf %35, %37 : vector<1x16x8xf32>
    %cst_18 = arith.constant 0.000000e+00 : f32
    %39 = vector.broadcast %cst_18 : f32 to vector<1x16x8xf32>
    %40 = arith.cmpf oge, %38, %39 : vector<1x16x8xf32>
    %cst_19 = arith.constant 2.000000e-01 : f32
    %41 = vector.broadcast %cst_19 : f32 to vector<1x16x8xf32>
    %42 = arith.mulf %41, %38 : vector<1x16x8xf32>
    %43 = arith.select %40, %38, %42 : vector<1x16x8xi1>, vector<1x16x8xf32>
    %c0_i32 = arith.constant 0 : i32
    %44 = arith.cmpi eq, %arg1, %c0_i32 : i32
    %cst_20 = arith.constant 0.000000e+00 : f32
    %45 = vector.broadcast %cst_20 : f32 to vector<1x16x8xf32>
    %46 = arith.select %44, %45, %29 : vector<1x16x8xf32>
    %c1_i32 = arith.constant 1 : i32
    %47 = arith.cmpi eq, %arg1, %c1_i32 : i32
    %cst_21 = arith.constant 0.000000e+00 : f32
    %48 = vector.broadcast %cst_21 : f32 to vector<1x16x8xf32>
    %49 = arith.select %47, %48, %43 : vector<1x16x8xf32>
    %cst_22 = arith.constant 0.000000e+00 : f32
    %50 = vector.broadcast %cst_22 : f32 to vector<10x1x8xf32>
    %c0_23 = arith.constant 0 : index
    %c0_24 = arith.constant 0 : index
    %c0_25 = arith.constant 0 : index
    %51 = vector.load %arg10[%c0_23, %c0_24, %c0_25] : memref<10x18x8xf32, #tpu.memory_space<vmem>>, vector<10x1x8xf32>
    tpu.vector_store %arg10[%c0_23, %c0_24, %c0_25], %50 {strides = array<i32>} : memref<10x18x8xf32, #tpu.memory_space<vmem>>, vector<10x1x8xf32>,
    %c0_26 = arith.constant 0 : index
    %c17 = arith.constant 17 : index
    %c0_27 = arith.constant 0 : index
    %52 = vector.load %arg10[%c0_26, %c17, %c0_27] : memref<10x18x8xf32, #tpu.memory_space<vmem>>, vector<10x1x8xf32>
    tpu.vector_store %arg10[%c0_26, %c17, %c0_27], %50 {strides = array<i32>} : memref<10x18x8xf32, #tpu.memory_space<vmem>>, vector<10x1x8xf32>,
    %c0_28 = arith.constant 0 : index
    %c1 = arith.constant 1 : index
    %c0_29 = arith.constant 0 : index
    %53 = vector.load %arg10[%c0_28, %c1, %c0_29] : memref<10x18x8xf32, #tpu.memory_space<vmem>>, vector<1x16x8xf32>
    tpu.vector_store %arg10[%c0_28, %c1, %c0_29], %46 {strides = array<i32>} : memref<10x18x8xf32, #tpu.memory_space<vmem>>, vector<1x16x8xf32>,
    %c9 = arith.constant 9 : index
    %c1_30 = arith.constant 1 : index
    %c0_31 = arith.constant 0 : index
    %54 = vector.load %arg10[%c9, %c1_30, %c0_31] : memref<10x18x8xf32, #tpu.memory_space<vmem>>, vector<1x16x8xf32>
    tpu.vector_store %arg10[%c9, %c1_30, %c0_31], %49 {strides = array<i32>} : memref<10x18x8xf32, #tpu.memory_space<vmem>>, vector<1x16x8xf32>,
    %c1_32 = arith.constant 1 : index
    %c1_33 = arith.constant 1 : index
    %c0_34 = arith.constant 0 : index
    %55 = vector.load %arg10[%c1_32, %c1_33, %c0_34] : memref<10x18x8xf32, #tpu.memory_space<vmem>>, vector<8x16x8xf32>
    tpu.vector_store %arg10[%c1_32, %c1_33, %c0_34], %15 {strides = array<i32>} : memref<10x18x8xf32, #tpu.memory_space<vmem>>, vector<8x16x8xf32>,
    %cst_35 = arith.constant 0.000000e+00 : f32
    %56 = vector.broadcast %cst_35 : f32 to vector<128x8xf32>
    %c0_36 = arith.constant 0 : index
    %c0_37 = arith.constant 0 : index
    %c0_38 = arith.constant 0 : index
    %57 = vector.load %arg10[%c0_36, %c0_37, %c0_38] : memref<10x18x8xf32, #tpu.memory_space<vmem>>, vector<8x16x8xf32>
    %58 = vector.shape_cast %57 : vector<8x16x8xf32> to vector<128x8xf32>
    %59 = arith.truncf %58 : vector<128x8xf32> to vector<128x8xbf16>
    %c0_39 = arith.constant 0 : index
    %c0_40 = arith.constant 0 : index
    %c0_41 = arith.constant 0 : index
    %60 = vector.load %arg7[%c0_39, %c0_40, %c0_41] : memref<3x24x8xbf16, #tpu.memory_space<vmem>>, vector<1x8x8xbf16>
    %61 = vector.shape_cast %60 : vector<1x8x8xbf16> to vector<8x8xbf16>
    %cst_42 = arith.constant dense<0.000000e+00> : vector<128x8xf32>
    %62 = tpu.matmul %59, %61, %cst_42 {dimension_numbers = #tpu.dot_dimension_numbers<[1], [0], [0], [1], [0, 0, 1, 1], [], []>} : vector<128x8xbf16>, vector<8x8xbf16>, vector<128x8xf32> -> vector<128x8xf32>
    %63 = arith.addf %56, %62 : vector<128x8xf32>
    %c0_43 = arith.constant 0 : index
    %c1_44 = arith.constant 1 : index
    %c0_45 = arith.constant 0 : index
    %64 = vector.load %arg10[%c0_43, %c1_44, %c0_45] : memref<10x18x8xf32, #tpu.memory_space<vmem>>, vector<8x16x8xf32>
    %65 = vector.shape_cast %64 : vector<8x16x8xf32> to vector<128x8xf32>
    %66 = arith.truncf %65 : vector<128x8xf32> to vector<128x8xbf16>
    %c0_46 = arith.constant 0 : index
    %c8 = arith.constant 8 : index
    %c0_47 = arith.constant 0 : index
    %67 = vector.load %arg7[%c0_46, %c8, %c0_47] : memref<3x24x8xbf16, #tpu.memory_space<vmem>>, vector<1x8x8xbf16>
    %68 = vector.shape_cast %67 : vector<1x8x8xbf16> to vector<8x8xbf16>
    %cst_48 = arith.constant dense<0.000000e+00> : vector<128x8xf32>
    %69 = tpu.matmul %66, %68, %cst_48 {dimension_numbers = #tpu.dot_dimension_numbers<[1], [0], [0], [1], [0, 0, 1, 1], [], []>} : vector<128x8xbf16>, vector<8x8xbf16>, vector<128x8xf32> -> vector<128x8xf32>
    %70 = arith.addf %63, %69 : vector<128x8xf32>
    %c0_49 = arith.constant 0 : index
    %c2 = arith.constant 2 : index
    %c0_50 = arith.constant 0 : index
    %71 = vector.load %arg10[%c0_49, %c2, %c0_50] : memref<10x18x8xf32, #tpu.memory_space<vmem>>, vector<8x16x8xf32>
    %72 = vector.shape_cast %71 : vector<8x16x8xf32> to vector<128x8xf32>
    %73 = arith.truncf %72 : vector<128x8xf32> to vector<128x8xbf16>
    %c0_51 = arith.constant 0 : index
    %c16 = arith.constant 16 : index
    %c0_52 = arith.constant 0 : index
    %74 = vector.load %arg7[%c0_51, %c16, %c0_52] : memref<3x24x8xbf16, #tpu.memory_space<vmem>>, vector<1x8x8xbf16>
    %75 = vector.shape_cast %74 : vector<1x8x8xbf16> to vector<8x8xbf16>
    %cst_53 = arith.constant dense<0.000000e+00> : vector<128x8xf32>
    %76 = tpu.matmul %73, %75, %cst_53 {dimension_numbers = #tpu.dot_dimension_numbers<[1], [0], [0], [1], [0, 0, 1, 1], [], []>} : vector<128x8xbf16>, vector<8x8xbf16>, vector<128x8xf32> -> vector<128x8xf32>
    %77 = arith.addf %70, %76 : vector<128x8xf32>
    %c1_54 = arith.constant 1 : index
    %c0_55 = arith.constant 0 : index
    %c0_56 = arith.constant 0 : index
    %78 = vector.load %arg10[%c1_54, %c0_55, %c0_56] : memref<10x18x8xf32, #tpu.memory_space<vmem>>, vector<8x16x8xf32>
    %79 = vector.shape_cast %78 : vector<8x16x8xf32> to vector<128x8xf32>
    %80 = arith.truncf %79 : vector<128x8xf32> to vector<128x8xbf16>
    %c1_57 = arith.constant 1 : index
    %c0_58 = arith.constant 0 : index
    %c0_59 = arith.constant 0 : index
    %81 = vector.load %arg7[%c1_57, %c0_58, %c0_59] : memref<3x24x8xbf16, #tpu.memory_space<vmem>>, vector<1x8x8xbf16>
    %82 = vector.shape_cast %81 : vector<1x8x8xbf16> to vector<8x8xbf16>
    %cst_60 = arith.constant dense<0.000000e+00> : vector<128x8xf32>
    %83 = tpu.matmul %80, %82, %cst_60 {dimension_numbers = #tpu.dot_dimension_numbers<[1], [0], [0], [1], [0, 0, 1, 1], [], []>} : vector<128x8xbf16>, vector<8x8xbf16>, vector<128x8xf32> -> vector<128x8xf32>
    %84 = arith.addf %77, %83 : vector<128x8xf32>
    %c1_61 = arith.constant 1 : index
    %c1_62 = arith.constant 1 : index
    %c0_63 = arith.constant 0 : index
    %85 = vector.load %arg10[%c1_61, %c1_62, %c0_63] : memref<10x18x8xf32, #tpu.memory_space<vmem>>, vector<8x16x8xf32>
    %86 = vector.shape_cast %85 : vector<8x16x8xf32> to vector<128x8xf32>
    %87 = arith.truncf %86 : vector<128x8xf32> to vector<128x8xbf16>
    %c1_64 = arith.constant 1 : index
    %c8_65 = arith.constant 8 : index
    %c0_66 = arith.constant 0 : index
    %88 = vector.load %arg7[%c1_64, %c8_65, %c0_66] : memref<3x24x8xbf16, #tpu.memory_space<vmem>>, vector<1x8x8xbf16>
    %89 = vector.shape_cast %88 : vector<1x8x8xbf16> to vector<8x8xbf16>
    %cst_67 = arith.constant dense<0.000000e+00> : vector<128x8xf32>
    %90 = tpu.matmul %87, %89, %cst_67 {dimension_numbers = #tpu.dot_dimension_numbers<[1], [0], [0], [1], [0, 0, 1, 1], [], []>} : vector<128x8xbf16>, vector<8x8xbf16>, vector<128x8xf32> -> vector<128x8xf32>
    %91 = arith.addf %84, %90 : vector<128x8xf32>
    %c1_68 = arith.constant 1 : index
    %c2_69 = arith.constant 2 : index
    %c0_70 = arith.constant 0 : index
    %92 = vector.load %arg10[%c1_68, %c2_69, %c0_70] : memref<10x18x8xf32, #tpu.memory_space<vmem>>, vector<8x16x8xf32>
    %93 = vector.shape_cast %92 : vector<8x16x8xf32> to vector<128x8xf32>
    %94 = arith.truncf %93 : vector<128x8xf32> to vector<128x8xbf16>
    %c1_71 = arith.constant 1 : index
    %c16_72 = arith.constant 16 : index
    %c0_73 = arith.constant 0 : index
    %95 = vector.load %arg7[%c1_71, %c16_72, %c0_73] : memref<3x24x8xbf16, #tpu.memory_space<vmem>>, vector<1x8x8xbf16>
    %96 = vector.shape_cast %95 : vector<1x8x8xbf16> to vector<8x8xbf16>
    %cst_74 = arith.constant dense<0.000000e+00> : vector<128x8xf32>
    %97 = tpu.matmul %94, %96, %cst_74 {dimension_numbers = #tpu.dot_dimension_numbers<[1], [0], [0], [1], [0, 0, 1, 1], [], []>} : vector<128x8xbf16>, vector<8x8xbf16>, vector<128x8xf32> -> vector<128x8xf32>
    %98 = arith.addf %91, %97 : vector<128x8xf32>
    %c2_75 = arith.constant 2 : index
    %c0_76 = arith.constant 0 : index
    %c0_77 = arith.constant 0 : index
    %99 = vector.load %arg10[%c2_75, %c0_76, %c0_77] : memref<10x18x8xf32, #tpu.memory_space<vmem>>, vector<8x16x8xf32>
    %100 = vector.shape_cast %99 : vector<8x16x8xf32> to vector<128x8xf32>
    %101 = arith.truncf %100 : vector<128x8xf32> to vector<128x8xbf16>
    %c2_78 = arith.constant 2 : index
    %c0_79 = arith.constant 0 : index
    %c0_80 = arith.constant 0 : index
    %102 = vector.load %arg7[%c2_78, %c0_79, %c0_80] : memref<3x24x8xbf16, #tpu.memory_space<vmem>>, vector<1x8x8xbf16>
    %103 = vector.shape_cast %102 : vector<1x8x8xbf16> to vector<8x8xbf16>
    %cst_81 = arith.constant dense<0.000000e+00> : vector<128x8xf32>
    %104 = tpu.matmul %101, %103, %cst_81 {dimension_numbers = #tpu.dot_dimension_numbers<[1], [0], [0], [1], [0, 0, 1, 1], [], []>} : vector<128x8xbf16>, vector<8x8xbf16>, vector<128x8xf32> -> vector<128x8xf32>
    %105 = arith.addf %98, %104 : vector<128x8xf32>
    %c2_82 = arith.constant 2 : index
    %c1_83 = arith.constant 1 : index
    %c0_84 = arith.constant 0 : index
    %106 = vector.load %arg10[%c2_82, %c1_83, %c0_84] : memref<10x18x8xf32, #tpu.memory_space<vmem>>, vector<8x16x8xf32>
    %107 = vector.shape_cast %106 : vector<8x16x8xf32> to vector<128x8xf32>
    %108 = arith.truncf %107 : vector<128x8xf32> to vector<128x8xbf16>
    %c2_85 = arith.constant 2 : index
    %c8_86 = arith.constant 8 : index
    %c0_87 = arith.constant 0 : index
    %109 = vector.load %arg7[%c2_85, %c8_86, %c0_87] : memref<3x24x8xbf16, #tpu.memory_space<vmem>>, vector<1x8x8xbf16>
    %110 = vector.shape_cast %109 : vector<1x8x8xbf16> to vector<8x8xbf16>
    %cst_88 = arith.constant dense<0.000000e+00> : vector<128x8xf32>
    %111 = tpu.matmul %108, %110, %cst_88 {dimension_numbers = #tpu.dot_dimension_numbers<[1], [0], [0], [1], [0, 0, 1, 1], [], []>} : vector<128x8xbf16>, vector<8x8xbf16>, vector<128x8xf32> -> vector<128x8xf32>
    %112 = arith.addf %105, %111 : vector<128x8xf32>
    %c2_89 = arith.constant 2 : index
    %c2_90 = arith.constant 2 : index
    %c0_91 = arith.constant 0 : index
    %113 = vector.load %arg10[%c2_89, %c2_90, %c0_91] : memref<10x18x8xf32, #tpu.memory_space<vmem>>, vector<8x16x8xf32>
    %114 = vector.shape_cast %113 : vector<8x16x8xf32> to vector<128x8xf32>
    %115 = arith.truncf %114 : vector<128x8xf32> to vector<128x8xbf16>
    %c2_92 = arith.constant 2 : index
    %c16_93 = arith.constant 16 : index
    %c0_94 = arith.constant 0 : index
    %116 = vector.load %arg7[%c2_92, %c16_93, %c0_94] : memref<3x24x8xbf16, #tpu.memory_space<vmem>>, vector<1x8x8xbf16>
    %117 = vector.shape_cast %116 : vector<1x8x8xbf16> to vector<8x8xbf16>
    %cst_95 = arith.constant dense<0.000000e+00> : vector<128x8xf32>
    %118 = tpu.matmul %115, %117, %cst_95 {dimension_numbers = #tpu.dot_dimension_numbers<[1], [0], [0], [1], [0, 0, 1, 1], [], []>} : vector<128x8xbf16>, vector<8x8xbf16>, vector<128x8xf32> -> vector<128x8xf32>
    %119 = arith.addf %112, %118 : vector<128x8xf32>
    %120 = vector.shape_cast %119 : vector<128x8xf32> to vector<8x16x8xf32>
    %121 = arith.truncf %120 : vector<8x16x8xf32> to vector<8x16x8xbf16>
    %c0_96 = arith.constant 0 : index
    %c0_97 = arith.constant 0 : index
    %c0_98 = arith.constant 0 : index
    %c0_99 = arith.constant 0 : index
    %122 = vector.load %arg8[%c0_96, %c0_97, %c0_98, %c0_99] : memref<1x8x16x8xbf16, #tpu.memory_space<vmem>>, vector<1x8x16x8xbf16>
    %123 = vector.shape_cast %122 : vector<1x8x16x8xbf16> to vector<8x16x8xbf16>
    %124 = vector.shape_cast %121 : vector<8x16x8xbf16> to vector<1x8x16x8xbf16>
    tpu.vector_store %arg8[%c0_96, %c0_97, %c0_98, %c0_99], %124 {strides = array<i32>} : memref<1x8x16x8xbf16, #tpu.memory_space<vmem>>, vector<1x8x16x8xbf16>,
    %cst_100 = arith.constant dense<0.000000e+00> : vector<8xf32>
    %125 = vector.multi_reduction <add>, %119, %cst_100 [0] : vector<128x8xf32> to vector<8xf32>
    %126 = vector.shape_cast %125 : vector<8xf32> to vector<1x8xf32>
    %c0_101 = arith.constant 0 : index
    %c0_102 = arith.constant 0 : index
    %c0_103 = arith.constant 0 : index
    %c0_104 = arith.constant 0 : index
    %127 = vector.load %arg9[%c0_101, %c0_102, %c0_103, %c0_104] : memref<1x1x2x8xf32, #tpu.memory_space<vmem>>, vector<1x1x1x8xf32>
    %128 = vector.shape_cast %127 : vector<1x1x1x8xf32> to vector<1x8xf32>
    %129 = vector.shape_cast %126 : vector<1x8xf32> to vector<1x1x1x8xf32>
    tpu.vector_store %arg9[%c0_101, %c0_102, %c0_103, %c0_104], %129 {strides = array<i32>} : memref<1x1x2x8xf32, #tpu.memory_space<vmem>>, vector<1x1x1x8xf32>,
    %130 = arith.mulf %119, %119 : vector<128x8xf32>
    %cst_105 = arith.constant dense<0.000000e+00> : vector<8xf32>
    %131 = vector.multi_reduction <add>, %130, %cst_105 [0] : vector<128x8xf32> to vector<8xf32>
    %132 = vector.shape_cast %131 : vector<8xf32> to vector<1x8xf32>
    %c0_106 = arith.constant 0 : index
    %c0_107 = arith.constant 0 : index
    %c1_108 = arith.constant 1 : index
    %c0_109 = arith.constant 0 : index
    %133 = vector.load %arg9[%c0_106, %c0_107, %c1_108, %c0_109] : memref<1x1x2x8xf32, #tpu.memory_space<vmem>>, vector<1x1x1x8xf32>
    %134 = vector.shape_cast %133 : vector<1x1x1x8xf32> to vector<1x8xf32>
    %135 = vector.shape_cast %132 : vector<1x8xf32> to vector<1x1x1x8xf32>
    tpu.vector_store %arg9[%c0_106, %c0_107, %c1_108, %c0_109], %135 {strides = array<i32>} : memref<1x1x2x8xf32, #tpu.memory_space<vmem>>, vector<1x1x1x8xf32>,
    return
  }
  func.func @transform_0(%arg0: i32, %arg1: i32) -> (i32, i32, i32, i32) {
    %c0_i32 = arith.constant 0 : i32
    %c0_i32_0 = arith.constant 0 : i32
    %c0_i32_1 = arith.constant 0 : i32
    return %arg0, %arg1, %c0_i32, %c0_i32_0 : i32, i32, i32, i32
  }
  func.func @transform_1(%arg0: i32, %arg1: i32) -> (i32, i32, i32, i32) {
    %c8_i32 = arith.constant 8 : i32
    %0 = arith.muli %arg1, %c8_i32 : i32
    %c1_i32 = arith.constant 1 : i32
    %1 = arith.subi %0, %c1_i32 : i32
    %c0_i32 = arith.constant 0 : i32
    %2 = arith.maxsi %1, %c0_i32 : i32
    %c0_i32_0 = arith.constant 0 : i32
    %c0_i32_1 = arith.constant 0 : i32
    %c0_i32_2 = arith.constant 0 : i32
    return %arg0, %2, %c0_i32_0, %c0_i32_1 : i32, i32, i32, i32
  }
  func.func @transform_2(%arg0: i32, %arg1: i32) -> (i32, i32, i32, i32) {
    %c1_i32 = arith.constant 1 : i32
    %0 = arith.addi %arg1, %c1_i32 : i32
    %c8_i32 = arith.constant 8 : i32
    %1 = arith.muli %0, %c8_i32 : i32
    %c15_i32 = arith.constant 15 : i32
    %2 = arith.minsi %1, %c15_i32 : i32
    %c0_i32 = arith.constant 0 : i32
    %c0_i32_0 = arith.constant 0 : i32
    %c0_i32_1 = arith.constant 0 : i32
    return %arg0, %2, %c0_i32, %c0_i32_0 : i32, i32, i32, i32
  }
  func.func @transform_3(%arg0: i32, %arg1: i32) -> (i32, i32) {
    %c0_i32 = arith.constant 0 : i32
    %c0_i32_0 = arith.constant 0 : i32
    %c0_i32_1 = arith.constant 0 : i32
    return %c0_i32, %c0_i32_0 : i32, i32
  }
  func.func @transform_4(%arg0: i32, %arg1: i32) -> (i32, i32) {
    %c0_i32 = arith.constant 0 : i32
    %c0_i32_0 = arith.constant 0 : i32
    %c0_i32_1 = arith.constant 0 : i32
    return %c0_i32, %c0_i32_0 : i32, i32
  }
  func.func @transform_5(%arg0: i32, %arg1: i32) -> (i32, i32, i32) {
    %c0_i32 = arith.constant 0 : i32
    %c0_i32_0 = arith.constant 0 : i32
    %c0_i32_1 = arith.constant 0 : i32
    %c0_i32_2 = arith.constant 0 : i32
    return %c0_i32, %c0_i32_0, %c0_i32_1 : i32, i32, i32
  }
  func.func @transform_6(%arg0: i32, %arg1: i32) -> (i32, i32, i32, i32) {
    %c0_i32 = arith.constant 0 : i32
    %c0_i32_0 = arith.constant 0 : i32
    %c0_i32_1 = arith.constant 0 : i32
    return %arg0, %arg1, %c0_i32, %c0_i32_0 : i32, i32, i32, i32
  }
  func.func @transform_7(%arg0: i32, %arg1: i32) -> (i32, i32, i32, i32) {
    %c0_i32 = arith.constant 0 : i32
    %c0_i32_0 = arith.constant 0 : i32
    %c0_i32_1 = arith.constant 0 : i32
    return %arg0, %arg1, %c0_i32, %c0_i32_0 : i32, i32, i32, i32
  }
}

module attributes {stable_mosaic.version = 11 : i64} {
  func.func @_block_last_kernel(%arg0: i32, %arg1: i32, %arg2: memref<1x8x16x8xbf16, #tpu.memory_space<vmem>>, %arg3: memref<1x1x16x8xbf16, #tpu.memory_space<vmem>>, %arg4: memref<1x1x16x8xbf16, #tpu.memory_space<vmem>>, %arg5: memref<1x8xf32, #tpu.memory_space<vmem>>, %arg6: memref<1x8xf32, #tpu.memory_space<vmem>>, %arg7: memref<3x24x8xbf16, #tpu.memory_space<vmem>>, %arg8: memref<1x8x16x4xf32, #tpu.memory_space<vmem>>, %arg9: memref<4x8xbf16, #tpu.memory_space<vmem>>, %arg10: memref<1x8xf32, #tpu.memory_space<vmem>>, %arg11: memref<1x8x16x8xf32, #tpu.memory_space<vmem>>, %arg12: memref<10x18x8xf32, #tpu.memory_space<vmem>>) attributes {dimension_semantics = [#tpu.dimension_semantics<parallel>, #tpu.dimension_semantics<parallel>], iteration_bounds = array<i64: 2, 2>, scalar_prefetch = 0 : i64, scratch_operands = 1 : i64, tpu.core_type = #tpu.core_type<tc>, window_params = [{transform_indices = @transform_0, window_bounds = array<i64: 1, 8, 16, 8>}, {transform_indices = @transform_1, window_bounds = array<i64: 1, 1, 16, 8>}, {transform_indices = @transform_2, window_bounds = array<i64: 1, 1, 16, 8>}, {pipeline_mode = #tpu.pipeline_mode<synchronous>, transform_indices = @transform_3, window_bounds = array<i64: 1, 8>}, {pipeline_mode = #tpu.pipeline_mode<synchronous>, transform_indices = @transform_4, window_bounds = array<i64: 1, 8>}, {pipeline_mode = #tpu.pipeline_mode<synchronous>, transform_indices = @transform_5, window_bounds = array<i64: 3, 24, 8>}, {transform_indices = @transform_6, window_bounds = array<i64: 1, 8, 16, 4>}, {pipeline_mode = #tpu.pipeline_mode<synchronous>, transform_indices = @transform_7, window_bounds = array<i64: 4, 8>}, {pipeline_mode = #tpu.pipeline_mode<synchronous>, transform_indices = @transform_8, window_bounds = array<i64: 1, 8>}, {transform_indices = @transform_9, window_bounds = array<i64: 1, 8, 16, 8>}]} {
    %c0 = arith.constant 0 : index
    %c0_0 = arith.constant 0 : index
    %0 = vector.load %arg5[%c0, %c0_0] : memref<1x8xf32, #tpu.memory_space<vmem>>, vector<1x8xf32>
    %c0_1 = arith.constant 0 : index
    %c0_2 = arith.constant 0 : index
    %1 = vector.load %arg6[%c0_1, %c0_2] : memref<1x8xf32, #tpu.memory_space<vmem>>, vector<1x8xf32>
    %c0_3 = arith.constant 0 : index
    %c0_4 = arith.constant 0 : index
    %c0_5 = arith.constant 0 : index
    %c0_6 = arith.constant 0 : index
    %2 = vector.load %arg2[%c0_3, %c0_4, %c0_5, %c0_6] : memref<1x8x16x8xbf16, #tpu.memory_space<vmem>>, vector<1x8x16x8xbf16>
    %3 = vector.shape_cast %2 : vector<1x8x16x8xbf16> to vector<8x16x8xbf16>
    %4 = arith.extf %3 : vector<8x16x8xbf16> to vector<8x16x8xf32>
    %5 = vector.shape_cast %0 : vector<1x8xf32> to vector<1x1x8xf32>
    %6 = vector.broadcast %5 : vector<1x1x8xf32> to vector<8x16x8xf32>
    %7 = arith.mulf %4, %6 : vector<8x16x8xf32>
    %8 = vector.shape_cast %1 : vector<1x8xf32> to vector<1x1x8xf32>
    %9 = vector.broadcast %8 : vector<1x1x8xf32> to vector<8x16x8xf32>
    %10 = arith.addf %7, %9 : vector<8x16x8xf32>
    %cst = arith.constant 0.000000e+00 : f32
    %11 = vector.broadcast %cst : f32 to vector<8x16x8xf32>
    %12 = arith.cmpf oge, %10, %11 : vector<8x16x8xf32>
    %cst_7 = arith.constant 2.000000e-01 : f32
    %13 = vector.broadcast %cst_7 : f32 to vector<8x16x8xf32>
    %14 = arith.mulf %13, %10 : vector<8x16x8xf32>
    %15 = arith.select %12, %10, %14 : vector<8x16x8xi1>, vector<8x16x8xf32>
    %c0_8 = arith.constant 0 : index
    %c0_9 = arith.constant 0 : index
    %c0_10 = arith.constant 0 : index
    %c0_11 = arith.constant 0 : index
    %16 = vector.load %arg3[%c0_8, %c0_9, %c0_10, %c0_11] : memref<1x1x16x8xbf16, #tpu.memory_space<vmem>>, vector<1x1x16x8xbf16>
    %17 = vector.shape_cast %16 : vector<1x1x16x8xbf16> to vector<1x16x8xbf16>
    %18 = arith.extf %17 : vector<1x16x8xbf16> to vector<1x16x8xf32>
    %19 = vector.shape_cast %0 : vector<1x8xf32> to vector<1x1x8xf32>
    %20 = vector.broadcast %19 : vector<1x1x8xf32> to vector<1x16x8xf32>
    %21 = arith.mulf %18, %20 : vector<1x16x8xf32>
    %22 = vector.shape_cast %1 : vector<1x8xf32> to vector<1x1x8xf32>
    %23 = vector.broadcast %22 : vector<1x1x8xf32> to vector<1x16x8xf32>
    %24 = arith.addf %21, %23 : vector<1x16x8xf32>
    %cst_12 = arith.constant 0.000000e+00 : f32
    %25 = vector.broadcast %cst_12 : f32 to vector<1x16x8xf32>
    %26 = arith.cmpf oge, %24, %25 : vector<1x16x8xf32>
    %cst_13 = arith.constant 2.000000e-01 : f32
    %27 = vector.broadcast %cst_13 : f32 to vector<1x16x8xf32>
    %28 = arith.mulf %27, %24 : vector<1x16x8xf32>
    %29 = arith.select %26, %24, %28 : vector<1x16x8xi1>, vector<1x16x8xf32>
    %c0_14 = arith.constant 0 : index
    %c0_15 = arith.constant 0 : index
    %c0_16 = arith.constant 0 : index
    %c0_17 = arith.constant 0 : index
    %30 = vector.load %arg4[%c0_14, %c0_15, %c0_16, %c0_17] : memref<1x1x16x8xbf16, #tpu.memory_space<vmem>>, vector<1x1x16x8xbf16>
    %31 = vector.shape_cast %30 : vector<1x1x16x8xbf16> to vector<1x16x8xbf16>
    %32 = arith.extf %31 : vector<1x16x8xbf16> to vector<1x16x8xf32>
    %33 = vector.shape_cast %0 : vector<1x8xf32> to vector<1x1x8xf32>
    %34 = vector.broadcast %33 : vector<1x1x8xf32> to vector<1x16x8xf32>
    %35 = arith.mulf %32, %34 : vector<1x16x8xf32>
    %36 = vector.shape_cast %1 : vector<1x8xf32> to vector<1x1x8xf32>
    %37 = vector.broadcast %36 : vector<1x1x8xf32> to vector<1x16x8xf32>
    %38 = arith.addf %35, %37 : vector<1x16x8xf32>
    %cst_18 = arith.constant 0.000000e+00 : f32
    %39 = vector.broadcast %cst_18 : f32 to vector<1x16x8xf32>
    %40 = arith.cmpf oge, %38, %39 : vector<1x16x8xf32>
    %cst_19 = arith.constant 2.000000e-01 : f32
    %41 = vector.broadcast %cst_19 : f32 to vector<1x16x8xf32>
    %42 = arith.mulf %41, %38 : vector<1x16x8xf32>
    %43 = arith.select %40, %38, %42 : vector<1x16x8xi1>, vector<1x16x8xf32>
    %c0_i32 = arith.constant 0 : i32
    %44 = arith.cmpi eq, %arg1, %c0_i32 : i32
    %cst_20 = arith.constant 0.000000e+00 : f32
    %45 = vector.broadcast %cst_20 : f32 to vector<1x16x8xf32>
    %46 = arith.select %44, %45, %29 : vector<1x16x8xf32>
    %c1_i32 = arith.constant 1 : i32
    %47 = arith.cmpi eq, %arg1, %c1_i32 : i32
    %cst_21 = arith.constant 0.000000e+00 : f32
    %48 = vector.broadcast %cst_21 : f32 to vector<1x16x8xf32>
    %49 = arith.select %47, %48, %43 : vector<1x16x8xf32>
    %cst_22 = arith.constant 0.000000e+00 : f32
    %50 = vector.broadcast %cst_22 : f32 to vector<10x1x8xf32>
    %c0_23 = arith.constant 0 : index
    %c0_24 = arith.constant 0 : index
    %c0_25 = arith.constant 0 : index
    %51 = vector.load %arg12[%c0_23, %c0_24, %c0_25] : memref<10x18x8xf32, #tpu.memory_space<vmem>>, vector<10x1x8xf32>
    tpu.vector_store %arg12[%c0_23, %c0_24, %c0_25], %50 {strides = array<i32>} : memref<10x18x8xf32, #tpu.memory_space<vmem>>, vector<10x1x8xf32>,
    %c0_26 = arith.constant 0 : index
    %c17 = arith.constant 17 : index
    %c0_27 = arith.constant 0 : index
    %52 = vector.load %arg12[%c0_26, %c17, %c0_27] : memref<10x18x8xf32, #tpu.memory_space<vmem>>, vector<10x1x8xf32>
    tpu.vector_store %arg12[%c0_26, %c17, %c0_27], %50 {strides = array<i32>} : memref<10x18x8xf32, #tpu.memory_space<vmem>>, vector<10x1x8xf32>,
    %c0_28 = arith.constant 0 : index
    %c1 = arith.constant 1 : index
    %c0_29 = arith.constant 0 : index
    %53 = vector.load %arg12[%c0_28, %c1, %c0_29] : memref<10x18x8xf32, #tpu.memory_space<vmem>>, vector<1x16x8xf32>
    tpu.vector_store %arg12[%c0_28, %c1, %c0_29], %46 {strides = array<i32>} : memref<10x18x8xf32, #tpu.memory_space<vmem>>, vector<1x16x8xf32>,
    %c9 = arith.constant 9 : index
    %c1_30 = arith.constant 1 : index
    %c0_31 = arith.constant 0 : index
    %54 = vector.load %arg12[%c9, %c1_30, %c0_31] : memref<10x18x8xf32, #tpu.memory_space<vmem>>, vector<1x16x8xf32>
    tpu.vector_store %arg12[%c9, %c1_30, %c0_31], %49 {strides = array<i32>} : memref<10x18x8xf32, #tpu.memory_space<vmem>>, vector<1x16x8xf32>,
    %c1_32 = arith.constant 1 : index
    %c1_33 = arith.constant 1 : index
    %c0_34 = arith.constant 0 : index
    %55 = vector.load %arg12[%c1_32, %c1_33, %c0_34] : memref<10x18x8xf32, #tpu.memory_space<vmem>>, vector<8x16x8xf32>
    tpu.vector_store %arg12[%c1_32, %c1_33, %c0_34], %15 {strides = array<i32>} : memref<10x18x8xf32, #tpu.memory_space<vmem>>, vector<8x16x8xf32>,
    %cst_35 = arith.constant 0.000000e+00 : f32
    %56 = vector.broadcast %cst_35 : f32 to vector<128x8xf32>
    %c0_36 = arith.constant 0 : index
    %c0_37 = arith.constant 0 : index
    %c0_38 = arith.constant 0 : index
    %57 = vector.load %arg12[%c0_36, %c0_37, %c0_38] : memref<10x18x8xf32, #tpu.memory_space<vmem>>, vector<8x16x8xf32>
    %58 = vector.shape_cast %57 : vector<8x16x8xf32> to vector<128x8xf32>
    %59 = arith.truncf %58 : vector<128x8xf32> to vector<128x8xbf16>
    %c0_39 = arith.constant 0 : index
    %c0_40 = arith.constant 0 : index
    %c0_41 = arith.constant 0 : index
    %60 = vector.load %arg7[%c0_39, %c0_40, %c0_41] : memref<3x24x8xbf16, #tpu.memory_space<vmem>>, vector<1x8x8xbf16>
    %61 = vector.shape_cast %60 : vector<1x8x8xbf16> to vector<8x8xbf16>
    %cst_42 = arith.constant dense<0.000000e+00> : vector<128x8xf32>
    %62 = tpu.matmul %59, %61, %cst_42 {dimension_numbers = #tpu.dot_dimension_numbers<[1], [0], [0], [1], [0, 0, 1, 1], [], []>} : vector<128x8xbf16>, vector<8x8xbf16>, vector<128x8xf32> -> vector<128x8xf32>
    %63 = arith.addf %56, %62 : vector<128x8xf32>
    %c0_43 = arith.constant 0 : index
    %c1_44 = arith.constant 1 : index
    %c0_45 = arith.constant 0 : index
    %64 = vector.load %arg12[%c0_43, %c1_44, %c0_45] : memref<10x18x8xf32, #tpu.memory_space<vmem>>, vector<8x16x8xf32>
    %65 = vector.shape_cast %64 : vector<8x16x8xf32> to vector<128x8xf32>
    %66 = arith.truncf %65 : vector<128x8xf32> to vector<128x8xbf16>
    %c0_46 = arith.constant 0 : index
    %c8 = arith.constant 8 : index
    %c0_47 = arith.constant 0 : index
    %67 = vector.load %arg7[%c0_46, %c8, %c0_47] : memref<3x24x8xbf16, #tpu.memory_space<vmem>>, vector<1x8x8xbf16>
    %68 = vector.shape_cast %67 : vector<1x8x8xbf16> to vector<8x8xbf16>
    %cst_48 = arith.constant dense<0.000000e+00> : vector<128x8xf32>
    %69 = tpu.matmul %66, %68, %cst_48 {dimension_numbers = #tpu.dot_dimension_numbers<[1], [0], [0], [1], [0, 0, 1, 1], [], []>} : vector<128x8xbf16>, vector<8x8xbf16>, vector<128x8xf32> -> vector<128x8xf32>
    %70 = arith.addf %63, %69 : vector<128x8xf32>
    %c0_49 = arith.constant 0 : index
    %c2 = arith.constant 2 : index
    %c0_50 = arith.constant 0 : index
    %71 = vector.load %arg12[%c0_49, %c2, %c0_50] : memref<10x18x8xf32, #tpu.memory_space<vmem>>, vector<8x16x8xf32>
    %72 = vector.shape_cast %71 : vector<8x16x8xf32> to vector<128x8xf32>
    %73 = arith.truncf %72 : vector<128x8xf32> to vector<128x8xbf16>
    %c0_51 = arith.constant 0 : index
    %c16 = arith.constant 16 : index
    %c0_52 = arith.constant 0 : index
    %74 = vector.load %arg7[%c0_51, %c16, %c0_52] : memref<3x24x8xbf16, #tpu.memory_space<vmem>>, vector<1x8x8xbf16>
    %75 = vector.shape_cast %74 : vector<1x8x8xbf16> to vector<8x8xbf16>
    %cst_53 = arith.constant dense<0.000000e+00> : vector<128x8xf32>
    %76 = tpu.matmul %73, %75, %cst_53 {dimension_numbers = #tpu.dot_dimension_numbers<[1], [0], [0], [1], [0, 0, 1, 1], [], []>} : vector<128x8xbf16>, vector<8x8xbf16>, vector<128x8xf32> -> vector<128x8xf32>
    %77 = arith.addf %70, %76 : vector<128x8xf32>
    %c1_54 = arith.constant 1 : index
    %c0_55 = arith.constant 0 : index
    %c0_56 = arith.constant 0 : index
    %78 = vector.load %arg12[%c1_54, %c0_55, %c0_56] : memref<10x18x8xf32, #tpu.memory_space<vmem>>, vector<8x16x8xf32>
    %79 = vector.shape_cast %78 : vector<8x16x8xf32> to vector<128x8xf32>
    %80 = arith.truncf %79 : vector<128x8xf32> to vector<128x8xbf16>
    %c1_57 = arith.constant 1 : index
    %c0_58 = arith.constant 0 : index
    %c0_59 = arith.constant 0 : index
    %81 = vector.load %arg7[%c1_57, %c0_58, %c0_59] : memref<3x24x8xbf16, #tpu.memory_space<vmem>>, vector<1x8x8xbf16>
    %82 = vector.shape_cast %81 : vector<1x8x8xbf16> to vector<8x8xbf16>
    %cst_60 = arith.constant dense<0.000000e+00> : vector<128x8xf32>
    %83 = tpu.matmul %80, %82, %cst_60 {dimension_numbers = #tpu.dot_dimension_numbers<[1], [0], [0], [1], [0, 0, 1, 1], [], []>} : vector<128x8xbf16>, vector<8x8xbf16>, vector<128x8xf32> -> vector<128x8xf32>
    %84 = arith.addf %77, %83 : vector<128x8xf32>
    %c1_61 = arith.constant 1 : index
    %c1_62 = arith.constant 1 : index
    %c0_63 = arith.constant 0 : index
    %85 = vector.load %arg12[%c1_61, %c1_62, %c0_63] : memref<10x18x8xf32, #tpu.memory_space<vmem>>, vector<8x16x8xf32>
    %86 = vector.shape_cast %85 : vector<8x16x8xf32> to vector<128x8xf32>
    %87 = arith.truncf %86 : vector<128x8xf32> to vector<128x8xbf16>
    %c1_64 = arith.constant 1 : index
    %c8_65 = arith.constant 8 : index
    %c0_66 = arith.constant 0 : index
    %88 = vector.load %arg7[%c1_64, %c8_65, %c0_66] : memref<3x24x8xbf16, #tpu.memory_space<vmem>>, vector<1x8x8xbf16>
    %89 = vector.shape_cast %88 : vector<1x8x8xbf16> to vector<8x8xbf16>
    %cst_67 = arith.constant dense<0.000000e+00> : vector<128x8xf32>
    %90 = tpu.matmul %87, %89, %cst_67 {dimension_numbers = #tpu.dot_dimension_numbers<[1], [0], [0], [1], [0, 0, 1, 1], [], []>} : vector<128x8xbf16>, vector<8x8xbf16>, vector<128x8xf32> -> vector<128x8xf32>
    %91 = arith.addf %84, %90 : vector<128x8xf32>
    %c1_68 = arith.constant 1 : index
    %c2_69 = arith.constant 2 : index
    %c0_70 = arith.constant 0 : index
    %92 = vector.load %arg12[%c1_68, %c2_69, %c0_70] : memref<10x18x8xf32, #tpu.memory_space<vmem>>, vector<8x16x8xf32>
    %93 = vector.shape_cast %92 : vector<8x16x8xf32> to vector<128x8xf32>
    %94 = arith.truncf %93 : vector<128x8xf32> to vector<128x8xbf16>
    %c1_71 = arith.constant 1 : index
    %c16_72 = arith.constant 16 : index
    %c0_73 = arith.constant 0 : index
    %95 = vector.load %arg7[%c1_71, %c16_72, %c0_73] : memref<3x24x8xbf16, #tpu.memory_space<vmem>>, vector<1x8x8xbf16>
    %96 = vector.shape_cast %95 : vector<1x8x8xbf16> to vector<8x8xbf16>
    %cst_74 = arith.constant dense<0.000000e+00> : vector<128x8xf32>
    %97 = tpu.matmul %94, %96, %cst_74 {dimension_numbers = #tpu.dot_dimension_numbers<[1], [0], [0], [1], [0, 0, 1, 1], [], []>} : vector<128x8xbf16>, vector<8x8xbf16>, vector<128x8xf32> -> vector<128x8xf32>
    %98 = arith.addf %91, %97 : vector<128x8xf32>
    %c2_75 = arith.constant 2 : index
    %c0_76 = arith.constant 0 : index
    %c0_77 = arith.constant 0 : index
    %99 = vector.load %arg12[%c2_75, %c0_76, %c0_77] : memref<10x18x8xf32, #tpu.memory_space<vmem>>, vector<8x16x8xf32>
    %100 = vector.shape_cast %99 : vector<8x16x8xf32> to vector<128x8xf32>
    %101 = arith.truncf %100 : vector<128x8xf32> to vector<128x8xbf16>
    %c2_78 = arith.constant 2 : index
    %c0_79 = arith.constant 0 : index
    %c0_80 = arith.constant 0 : index
    %102 = vector.load %arg7[%c2_78, %c0_79, %c0_80] : memref<3x24x8xbf16, #tpu.memory_space<vmem>>, vector<1x8x8xbf16>
    %103 = vector.shape_cast %102 : vector<1x8x8xbf16> to vector<8x8xbf16>
    %cst_81 = arith.constant dense<0.000000e+00> : vector<128x8xf32>
    %104 = tpu.matmul %101, %103, %cst_81 {dimension_numbers = #tpu.dot_dimension_numbers<[1], [0], [0], [1], [0, 0, 1, 1], [], []>} : vector<128x8xbf16>, vector<8x8xbf16>, vector<128x8xf32> -> vector<128x8xf32>
    %105 = arith.addf %98, %104 : vector<128x8xf32>
    %c2_82 = arith.constant 2 : index
    %c1_83 = arith.constant 1 : index
    %c0_84 = arith.constant 0 : index
    %106 = vector.load %arg12[%c2_82, %c1_83, %c0_84] : memref<10x18x8xf32, #tpu.memory_space<vmem>>, vector<8x16x8xf32>
    %107 = vector.shape_cast %106 : vector<8x16x8xf32> to vector<128x8xf32>
    %108 = arith.truncf %107 : vector<128x8xf32> to vector<128x8xbf16>
    %c2_85 = arith.constant 2 : index
    %c8_86 = arith.constant 8 : index
    %c0_87 = arith.constant 0 : index
    %109 = vector.load %arg7[%c2_85, %c8_86, %c0_87] : memref<3x24x8xbf16, #tpu.memory_space<vmem>>, vector<1x8x8xbf16>
    %110 = vector.shape_cast %109 : vector<1x8x8xbf16> to vector<8x8xbf16>
    %cst_88 = arith.constant dense<0.000000e+00> : vector<128x8xf32>
    %111 = tpu.matmul %108, %110, %cst_88 {dimension_numbers = #tpu.dot_dimension_numbers<[1], [0], [0], [1], [0, 0, 1, 1], [], []>} : vector<128x8xbf16>, vector<8x8xbf16>, vector<128x8xf32> -> vector<128x8xf32>
    %112 = arith.addf %105, %111 : vector<128x8xf32>
    %c2_89 = arith.constant 2 : index
    %c2_90 = arith.constant 2 : index
    %c0_91 = arith.constant 0 : index
    %113 = vector.load %arg12[%c2_89, %c2_90, %c0_91] : memref<10x18x8xf32, #tpu.memory_space<vmem>>, vector<8x16x8xf32>
    %114 = vector.shape_cast %113 : vector<8x16x8xf32> to vector<128x8xf32>
    %115 = arith.truncf %114 : vector<128x8xf32> to vector<128x8xbf16>
    %c2_92 = arith.constant 2 : index
    %c16_93 = arith.constant 16 : index
    %c0_94 = arith.constant 0 : index
    %116 = vector.load %arg7[%c2_92, %c16_93, %c0_94] : memref<3x24x8xbf16, #tpu.memory_space<vmem>>, vector<1x8x8xbf16>
    %117 = vector.shape_cast %116 : vector<1x8x8xbf16> to vector<8x8xbf16>
    %cst_95 = arith.constant dense<0.000000e+00> : vector<128x8xf32>
    %118 = tpu.matmul %115, %117, %cst_95 {dimension_numbers = #tpu.dot_dimension_numbers<[1], [0], [0], [1], [0, 0, 1, 1], [], []>} : vector<128x8xbf16>, vector<8x8xbf16>, vector<128x8xf32> -> vector<128x8xf32>
    %119 = arith.addf %112, %118 : vector<128x8xf32>
    %c0_96 = arith.constant 0 : index
    %c0_97 = arith.constant 0 : index
    %c0_98 = arith.constant 0 : index
    %c0_99 = arith.constant 0 : index
    %120 = vector.load %arg8[%c0_96, %c0_97, %c0_98, %c0_99] : memref<1x8x16x4xf32, #tpu.memory_space<vmem>>, vector<1x8x16x4xf32>
    %121 = vector.shape_cast %120 : vector<1x8x16x4xf32> to vector<8x16x4xf32>
    %122 = vector.shape_cast %121 : vector<8x16x4xf32> to vector<128x4xf32>
    %123 = arith.truncf %122 : vector<128x4xf32> to vector<128x4xbf16>
    %c0_100 = arith.constant 0 : index
    %c0_101 = arith.constant 0 : index
    %124 = vector.load %arg9[%c0_100, %c0_101] : memref<4x8xbf16, #tpu.memory_space<vmem>>, vector<4x8xbf16>
    %cst_102 = arith.constant dense<0.000000e+00> : vector<128x8xf32>
    %125 = tpu.matmul %123, %124, %cst_102 {dimension_numbers = #tpu.dot_dimension_numbers<[1], [0], [0], [1], [0, 0, 1, 1], [], []>} : vector<128x4xbf16>, vector<4x8xbf16>, vector<128x8xf32> -> vector<128x8xf32>
    %c0_103 = arith.constant 0 : index
    %c0_104 = arith.constant 0 : index
    %126 = vector.load %arg10[%c0_103, %c0_104] : memref<1x8xf32, #tpu.memory_space<vmem>>, vector<1x8xf32>
    %127 = vector.broadcast %126 : vector<1x8xf32> to vector<128x8xf32>
    %128 = arith.addf %125, %127 : vector<128x8xf32>
    %129 = arith.addf %119, %128 : vector<128x8xf32>
    %130 = vector.shape_cast %129 : vector<128x8xf32> to vector<8x16x8xf32>
    %c0_105 = arith.constant 0 : index
    %c0_106 = arith.constant 0 : index
    %c0_107 = arith.constant 0 : index
    %c0_108 = arith.constant 0 : index
    %131 = vector.load %arg11[%c0_105, %c0_106, %c0_107, %c0_108] : memref<1x8x16x8xf32, #tpu.memory_space<vmem>>, vector<1x8x16x8xf32>
    %132 = vector.shape_cast %131 : vector<1x8x16x8xf32> to vector<8x16x8xf32>
    %133 = vector.shape_cast %130 : vector<8x16x8xf32> to vector<1x8x16x8xf32>
    tpu.vector_store %arg11[%c0_105, %c0_106, %c0_107, %c0_108], %133 {strides = array<i32>} : memref<1x8x16x8xf32, #tpu.memory_space<vmem>>, vector<1x8x16x8xf32>,
    return
  }
  func.func @transform_0(%arg0: i32, %arg1: i32) -> (i32, i32, i32, i32) {
    %c0_i32 = arith.constant 0 : i32
    %c0_i32_0 = arith.constant 0 : i32
    %c0_i32_1 = arith.constant 0 : i32
    return %arg0, %arg1, %c0_i32, %c0_i32_0 : i32, i32, i32, i32
  }
  func.func @transform_1(%arg0: i32, %arg1: i32) -> (i32, i32, i32, i32) {
    %c8_i32 = arith.constant 8 : i32
    %0 = arith.muli %arg1, %c8_i32 : i32
    %c1_i32 = arith.constant 1 : i32
    %1 = arith.subi %0, %c1_i32 : i32
    %c0_i32 = arith.constant 0 : i32
    %2 = arith.maxsi %1, %c0_i32 : i32
    %c0_i32_0 = arith.constant 0 : i32
    %c0_i32_1 = arith.constant 0 : i32
    %c0_i32_2 = arith.constant 0 : i32
    return %arg0, %2, %c0_i32_0, %c0_i32_1 : i32, i32, i32, i32
  }
  func.func @transform_2(%arg0: i32, %arg1: i32) -> (i32, i32, i32, i32) {
    %c1_i32 = arith.constant 1 : i32
    %0 = arith.addi %arg1, %c1_i32 : i32
    %c8_i32 = arith.constant 8 : i32
    %1 = arith.muli %0, %c8_i32 : i32
    %c15_i32 = arith.constant 15 : i32
    %2 = arith.minsi %1, %c15_i32 : i32
    %c0_i32 = arith.constant 0 : i32
    %c0_i32_0 = arith.constant 0 : i32
    %c0_i32_1 = arith.constant 0 : i32
    return %arg0, %2, %c0_i32, %c0_i32_0 : i32, i32, i32, i32
  }
  func.func @transform_3(%arg0: i32, %arg1: i32) -> (i32, i32) {
    %c0_i32 = arith.constant 0 : i32
    %c0_i32_0 = arith.constant 0 : i32
    %c0_i32_1 = arith.constant 0 : i32
    return %c0_i32, %c0_i32_0 : i32, i32
  }
  func.func @transform_4(%arg0: i32, %arg1: i32) -> (i32, i32) {
    %c0_i32 = arith.constant 0 : i32
    %c0_i32_0 = arith.constant 0 : i32
    %c0_i32_1 = arith.constant 0 : i32
    return %c0_i32, %c0_i32_0 : i32, i32
  }
  func.func @transform_5(%arg0: i32, %arg1: i32) -> (i32, i32, i32) {
    %c0_i32 = arith.constant 0 : i32
    %c0_i32_0 = arith.constant 0 : i32
    %c0_i32_1 = arith.constant 0 : i32
    %c0_i32_2 = arith.constant 0 : i32
    return %c0_i32, %c0_i32_0, %c0_i32_1 : i32, i32, i32
  }
  func.func @transform_6(%arg0: i32, %arg1: i32) -> (i32, i32, i32, i32) {
    %c0_i32 = arith.constant 0 : i32
    %c0_i32_0 = arith.constant 0 : i32
    %c0_i32_1 = arith.constant 0 : i32
    return %arg0, %arg1, %c0_i32, %c0_i32_0 : i32, i32, i32, i32
  }
  func.func @transform_7(%arg0: i32, %arg1: i32) -> (i32, i32) {
    %c0_i32 = arith.constant 0 : i32
    %c0_i32_0 = arith.constant 0 : i32
    %c0_i32_1 = arith.constant 0 : i32
    return %c0_i32, %c0_i32_0 : i32, i32
  }
  func.func @transform_8(%arg0: i32, %arg1: i32) -> (i32, i32) {
    %c0_i32 = arith.constant 0 : i32
    %c0_i32_0 = arith.constant 0 : i32
    %c0_i32_1 = arith.constant 0 : i32
    return %c0_i32, %c0_i32_0 : i32, i32
  }
  func.func @transform_9(%arg0: i32, %arg1: i32) -> (i32, i32, i32, i32) {
    %c0_i32 = arith.constant 0 : i32
    %c0_i32_0 = arith.constant 0 : i32
    %c0_i32_1 = arith.constant 0 : i32
    return %arg0, %arg1, %c0_i32, %c0_i32_0 : i32, i32, i32, i32
  }
}

</mosaic_0001>

<llo_original>
// kernel: resblock_forward.4
$region0: #{resblock_forward.4}
  #allocation0 [shape = 'u32[]', space=smem, size = 0x4, offset = 0x4, fixed_abs, tag = 'smem constant byte address 0x4 - core index']
  #allocation1 [shape = 'u32[144,128]{1,0:T(1,128)}', space=vmem, size = 0x12000, scoped, tag = 'internal scratch']
  #allocation2 [shape = 'f32[10,18,8]{2,1,0:T(8,128)}', space=vmem, size = 0x1e000, scoped, tag = 'scratch operand']
  %s0 = inlined_call_operand.vmem [shape: bf16[2,16,16,8], index: 0, kind: input, shape index: {}, may-alias: {0,1,2}]
  %s1 = inlined_call_operand.vmem [shape: bf16[2,16,16,8], index: 1, kind: input, shape index: {}, may-alias: {0,1,2}]
  %s2 = inlined_call_operand.vmem [shape: bf16[2,16,16,8], index: 2, kind: input, shape index: {}, may-alias: {0,1,2}]
  %s3 = inlined_call_operand.vmem [shape: f32[1,8], index: 3, kind: input, shape index: {}]
  %s4 = inlined_call_operand.vmem [shape: f32[1,8], index: 4, kind: input, shape index: {}]
  %s5 = inlined_call_operand.vmem [shape: bf16[3,24,8], index: 5, kind: input, shape index: {}]
  %s6 = inlined_call_operand.vmem [shape: bf16[2,16,16,8], index: 6, kind: output, shape index: {0}]
  %s7 = inlined_call_operand.vmem [shape: f32[2,2,2,8], index: 7, kind: output, shape index: {1}]
  %8 = xla_tuple %s6, %s7
  %s9 = sld [smem:[#allocation0]]
  $region65: #{resblock_forward.4} parent=0
    _
  %s11 = ssub.s32 1, %s9
  %s12 = scalar_select 0, %s11, %s9
  loop: start=0, step=1, limit=6
  $region2: #{resblock_forward.4} parent=0 // loop_pre_header
    _
  $region3: #{resblock_forward.4} parent=0 // loop_header
    %s14 = sphi 0, %s18
    %p15 = scmp.ge.s32.totalorder %s14, 6
    %s21 = sphi 0, %s33
    %s22 = sphi 0, %s29
    %s23 = sphi 0, %s21
    %s24 = sphi 0, %s22
    %s25 = sphi 0, %s23
    %s26 = sphi 0, %s24
    %s38 = sphi 0, %s40
    %s41 = sphi 0, %s38
    %s42 = sphi 0, %s41
    %s58 = sphi 0, %s42
    %s74 = sphi 0, %s76
    %s77 = sphi 0, %s74
    %s78 = sphi 0, %s77
    %s94 = sphi 0, %s78
    %s110 = sphi 0, %s112
    %s113 = sphi 0, %s110
    %s114 = sphi 0, %s113
    %s130 = sphi 0, %s114
    %s134 = sphi 0, %s134
    %s136 = sphi 0, %s134
    %s137 = sphi 0, %s136
    %s151 = sphi 0, %s137
    %s155 = sphi 0, %s155
    %s157 = sphi 0, %s155
    %s158 = sphi 0, %s157
    %s172 = sphi 0, %s158
    %s176 = sphi 0, %s176
    %s178 = sphi 0, %s176
    %s179 = sphi 0, %s178
    %s193 = sphi 0, %s179
    %s201 = sphi 0, %s203
    %s204 = sphi 0, %s201
    %s205 = sphi 0, %s204
    %s221 = sphi 0, %s205
    %s229 = sphi 0, %s231
    %s232 = sphi 0, %s229
    %s233 = sphi 0, %s232
    %s249 = sphi 0, %s233
  $region4: #{resblock_forward.4} parent=0 // loop_header_branch
    %17 = sbr.rel (%p15) target = $region8
  $region5: #{resblock_forward.4} parent=0 // loop_body
    %s19 = ssub.s32 %s14, 1
    %s20 = ssub.s32 %s14, 2
    %s27 = sadd.s32 1, %s22
    %p28 = scmp.ge.s32.totalorder %s27, 2
    %s29 = scalar_select %p28, 0, %s27
    %s30 = sadd.s32 1, %s21
    %s31 = scalar_select %p28, %s30, %s21
    %p32 = scmp.ge.s32.totalorder %s31, 2
    %s33 = scalar_select %p32, 0, %s31
    %s34 = ssub.s32 %s21, %s33
    %s35 = ssub.s32 %s22, %s29
    %s36 = sor.u32 %s34, %s35
    %p37 = scmp.eq.s32.totalorder %s36, 0
    %s39 = sadd.s32 %s38, 1
    %s40 = scalar_select %p37, %s38, %s39
    %p43 = pneg %p37
    %p44 = scmp.eq.s32.totalorder %s14, 3
    %p45 = por %p43, %p44
    %p46 = scmp.ne.s32.totalorder %s38, %s41
    %p47 = scmp.eq.s32.totalorder %s14, 0
    %p48 = por %p46, %p47
    %p49 = scmp.ne.s32.totalorder %s38, %s41
    %p50 = scmp.eq.s32.totalorder %s19, 3
    %p51 = por %p49, %p50
    %p52 = scmp.ne.s32.totalorder %s41, %s42
    %p53 = scmp.eq.s32.totalorder %s19, 0
    %p54 = por %p52, %p53
    %p55 = scmp.ne.s32.totalorder %s41, %s42
    %p56 = scmp.eq.s32.totalorder %s20, 3
    %p57 = por %p55, %p56
    %p59 = scmp.ne.s32.totalorder %s42, %s58
    %p60 = scmp.eq.s32.totalorder %s20, 0
    %p61 = por %p59, %p60
    %s62 = smul.u32 %s22, 8
    %s63 = ssub.s32 %s62, 1
    %p64 = scmp.gt.s32.totalorder %s63, 0
    %s65 = scalar_select %p64, %s63, 0
    %s66 = smul.u32 %s29, 8
    %s67 = ssub.s32 %s66, 1
    %p68 = scmp.gt.s32.totalorder %s67, 0
    %s69 = scalar_select %p68, %s67, 0
    %s70 = ssub.s32 %s21, %s33
    %s71 = ssub.s32 %s65, %s69
    %s72 = sor.u32 %s70, %s71
    %p73 = scmp.eq.s32.totalorder %s72, 0
    %s75 = sadd.s32 %s74, 1
    %s76 = scalar_select %p73, %s74, %s75
    %p79 = pneg %p73
    %p80 = scmp.eq.s32.totalorder %s14, 3
    %p81 = por %p79, %p80
    %p82 = scmp.ne.s32.totalorder %s74, %s77
    %p83 = scmp.eq.s32.totalorder %s14, 0
    %p84 = por %p82, %p83
    %p85 = scmp.ne.s32.totalorder %s74, %s77
    %p86 = scmp.eq.s32.totalorder %s19, 3
    %p87 = por %p85, %p86
    %p88 = scmp.ne.s32.totalorder %s77, %s78
    %p89 = scmp.eq.s32.totalorder %s19, 0
    %p90 = por %p88, %p89
    %p91 = scmp.ne.s32.totalorder %s77, %s78
    %p92 = scmp.eq.s32.totalorder %s20, 3
    %p93 = por %p91, %p92
    %p95 = scmp.ne.s32.totalorder %s78, %s94
    %p96 = scmp.eq.s32.totalorder %s20, 0
    %p97 = por %p95, %p96
    %s98 = sadd.s32 %s22, 1
    %s99 = smul.u32 %s98, 8
    %p100 = scmp.lt.s32.totalorder %s99, 15
    %s101 = scalar_select %p100, %s99, 15
    %s102 = sadd.s32 %s29, 1
    %s103 = smul.u32 %s102, 8
    %p104 = scmp.lt.s32.totalorder %s103, 15
    %s105 = scalar_select %p104, %s103, 15
    %s106 = ssub.s32 %s21, %s33
    %s107 = ssub.s32 %s101, %s105
    %s108 = sor.u32 %s106, %s107
    %p109 = scmp.eq.s32.totalorder %s108, 0
    %s111 = sadd.s32 %s110, 1
    %s112 = scalar_select %p109, %s110, %s111
    %p115 = pneg %p109
    %p116 = scmp.eq.s32.totalorder %s14, 3
    %p117 = por %p115, %p116
    %p118 = scmp.ne.s32.totalorder %s110, %s113
    %p119 = scmp.eq.s32.totalorder %s14, 0
    %p120 = por %p118, %p119
    %p121 = scmp.ne.s32.totalorder %s110, %s113
    %p122 = scmp.eq.s32.totalorder %s19, 3
    %p123 = por %p121, %p122
    %p124 = scmp.ne.s32.totalorder %s113, %s114
    %p125 = scmp.eq.s32.totalorder %s19, 0
    %p126 = por %p124, %p125
    %p127 = scmp.ne.s32.totalorder %s113, %s114
    %p128 = scmp.eq.s32.totalorder %s20, 3
    %p129 = por %p127, %p128
    %p131 = scmp.ne.s32.totalorder %s114, %s130
    %p132 = scmp.eq.s32.totalorder %s20, 0
    %p133 = por %p131, %p132
    %s135 = sadd.s32 %s134, 1
    %p138 = scmp.eq.s32.totalorder %s14, 3
    %p139 = scmp.ne.s32.totalorder %s134, %s136
    %p140 = scmp.eq.s32.totalorder %s14, 0
    %p141 = por %p139, %p140
    %p142 = scmp.ne.s32.totalorder %s134, %s136
    %p143 = scmp.eq.s32.totalorder %s19, 3
    %p144 = por %p142, %p143
    %p145 = scmp.ne.s32.totalorder %s136, %s137
    %p146 = scmp.eq.s32.totalorder %s19, 0
    %p147 = por %p145, %p146
    %p148 = scmp.ne.s32.totalorder %s136, %s137
    %p149 = scmp.eq.s32.totalorder %s20, 3
    %p150 = por %p148, %p149
    %p152 = scmp.ne.s32.totalorder %s137, %s151
    %p153 = scmp.eq.s32.totalorder %s20, 0
    %p154 = por %p152, %p153
    %s156 = sadd.s32 %s155, 1
    %p159 = scmp.eq.s32.totalorder %s14, 3
    %p160 = scmp.ne.s32.totalorder %s155, %s157
    %p161 = scmp.eq.s32.totalorder %s14, 0
    %p162 = por %p160, %p161
    %p163 = scmp.ne.s32.totalorder %s155, %s157
    %p164 = scmp.eq.s32.totalorder %s19, 3
    %p165 = por %p163, %p164
    %p166 = scmp.ne.s32.totalorder %s157, %s158
    %p167 = scmp.eq.s32.totalorder %s19, 0
    %p168 = por %p166, %p167
    %p169 = scmp.ne.s32.totalorder %s157, %s158
    %p170 = scmp.eq.s32.totalorder %s20, 3
    %p171 = por %p169, %p170
    %p173 = scmp.ne.s32.totalorder %s158, %s172
    %p174 = scmp.eq.s32.totalorder %s20, 0
    %p175 = por %p173, %p174
    %s177 = sadd.s32 %s176, 1
    %p180 = scmp.eq.s32.totalorder %s14, 3
    %p181 = scmp.ne.s32.totalorder %s176, %s178
    %p182 = scmp.eq.s32.totalorder %s14, 0
    %p183 = por %p181, %p182
    %p184 = scmp.ne.s32.totalorder %s176, %s178
    %p185 = scmp.eq.s32.totalorder %s19, 3
    %p186 = por %p184, %p185
    %p187 = scmp.ne.s32.totalorder %s178, %s179
    %p188 = scmp.eq.s32.totalorder %s19, 0
    %p189 = por %p187, %p188
    %p190 = scmp.ne.s32.totalorder %s178, %s179
    %p191 = scmp.eq.s32.totalorder %s20, 3
    %p192 = por %p190, %p191
    %p194 = scmp.ne.s32.totalorder %s179, %s193
    %p195 = scmp.eq.s32.totalorder %s20, 0
    %p196 = por %p194, %p195
    %s197 = ssub.s32 %s21, %s33
    %s198 = ssub.s32 %s22, %s29
    %s199 = sor.u32 %s197, %s198
    %p200 = scmp.eq.s32.totalorder %s199, 0
    %s202 = sadd.s32 %s201, 1
    %s203 = scalar_select %p200, %s201, %s202
    %p206 = pneg %p200
    %p207 = scmp.eq.s32.totalorder %s14, 3
    %p208 = por %p206, %p207
    %p209 = scmp.ne.s32.totalorder %s201, %s204
    %p210 = scmp.eq.s32.totalorder %s14, 0
    %p211 = por %p209, %p210
    %p212 = scmp.ne.s32.totalorder %s201, %s204
    %p213 = scmp.eq.s32.totalorder %s19, 3
    %p214 = por %p212, %p213
    %p215 = scmp.ne.s32.totalorder %s204, %s205
    %p216 = scmp.eq.s32.totalorder %s19, 0
    %p217 = por %p215, %p216
    %p218 = scmp.ne.s32.totalorder %s204, %s205
    %p219 = scmp.eq.s32.totalorder %s20, 3
    %p220 = por %p218, %p219
    %p222 = scmp.ne.s32.totalorder %s205, %s221
    %p223 = scmp.eq.s32.totalorder %s20, 0
    %p224 = por %p222, %p223
    %s225 = ssub.s32 %s21, %s33
    %s226 = ssub.s32 %s22, %s29
    %s227 = sor.u32 %s225, %s226
    %p228 = scmp.eq.s32.totalorder %s227, 0
    %s230 = sadd.s32 %s229, 1
    %s231 = scalar_select %p228, %s229, %s230
    %p234 = pneg %p228
    %p235 = scmp.eq.s32.totalorder %s14, 3
    %p236 = por %p234, %p235
    %p237 = scmp.ne.s32.totalorder %s229, %s232
    %p238 = scmp.eq.s32.totalorder %s14, 0
    %p239 = por %p237, %p238
    %p240 = scmp.ne.s32.totalorder %s229, %s232
    %p241 = scmp.eq.s32.totalorder %s19, 3
    %p242 = por %p240, %p241
    %p243 = scmp.ne.s32.totalorder %s232, %s233
    %p244 = scmp.eq.s32.totalorder %s19, 0
    %p245 = por %p243, %p244
    %p246 = scmp.ne.s32.totalorder %s232, %s233
    %p247 = scmp.eq.s32.totalorder %s20, 3
    %p248 = por %p246, %p247
    %p250 = scmp.ne.s32.totalorder %s233, %s249
    %p251 = scmp.eq.s32.totalorder %s20, 0
    %p252 = por %p250, %p251
    %p253 = scmp.le.s32.totalorder 1, %s14
    %p254 = scmp.lt.s32.totalorder %s14, 5
    %p255 = pnand %p253, %p254
    %p256 = pneg %p255
    // Predicated region
    $region9: #{resblock_forward.4} parent=5 // pred_check
      _
    $region10: #{resblock_forward.4} parent=5 // pred_check_branch
      %258 = sbr.rel (%p255) target = $region12
    $region11: #{resblock_forward.4} parent=5 // pred_region
      %s259 = ssub.s32 %s14, 1
      // Predicated region
      $region13: #{resblock_forward.4} parent=11 // pred_check
        %p260 = pneg %p147
      $region14: #{resblock_forward.4} parent=11 // pred_check_branch
        %262 = sbr.rel (%p260) target = $region16
      $region15: #{resblock_forward.4} parent=11 // pred_region
        _
      $region16: #{resblock_forward.4} parent=11 // pred_fallthru
        _
      // Predicated region
      $region17: #{resblock_forward.4} parent=11 // pred_check
        %p263 = pneg %p168
      $region18: #{resblock_forward.4} parent=11 // pred_check_branch
        %265 = sbr.rel (%p263) target = $region20
      $region19: #{resblock_forward.4} parent=11 // pred_region
        _
      $region20: #{resblock_forward.4} parent=11 // pred_fallthru
        _
      // Predicated region
      $region21: #{resblock_forward.4} parent=11 // pred_check
        %p266 = pneg %p189
      $region22: #{resblock_forward.4} parent=11 // pred_check_branch
        %268 = sbr.rel (%p266) target = $region24
      $region23: #{resblock_forward.4} parent=11 // pred_region
        _
      $region24: #{resblock_forward.4} parent=11 // pred_fallthru
        _
    $region12: #{resblock_forward.4} parent=5 // pred_fallthru
      _
    %p269 = scmp.lt.s32.totalorder %s14, 4
    // Predicated region
    $region25: #{resblock_forward.4} parent=5 // pred_check
      %p270 = pneg %p269
    $region26: #{resblock_forward.4} parent=5 // pred_check_branch
      %272 = sbr.rel (%p270) target = $region28
    $region27: #{resblock_forward.4} parent=5 // pred_region
      // Predicated region
      $region29: #{resblock_forward.4} parent=27 // pred_check
        %p273 = pneg %p48
      $region30: #{resblock_forward.4} parent=27 // pred_check_branch
        %275 = sbr.rel (%p273) target = $region32
      $region31: #{resblock_forward.4} parent=27 // pred_region
        %s276 = smul.u32 8, %s22
        %p277 = scmp.lt.s32.totalorder %s21, 1
        %s278 = scalar_select %p277, %s21, 1
        %p279 = scmp.lt.s32.totalorder %s276, 15
        %s280 = scalar_select %p279, %s276, 15
        %s281 = smul.addr %s280, 2
        %s282 = smul.addr %s278, 32
        %s283 = sadd.s32 %s281, %s282
        %s284 = smul.addr %s283, 4
        %s285 = scalar_lea.vmem %s0, %s284
        %s286 = smul.u32 8, %s22
      $region32: #{resblock_forward.4} parent=27 // pred_fallthru
        _
      // Predicated region
      $region33: #{resblock_forward.4} parent=27 // pred_check
        %p287 = pneg %p84
      $region34: #{resblock_forward.4} parent=27 // pred_check_branch
        %289 = sbr.rel (%p287) target = $region36
      $region35: #{resblock_forward.4} parent=27 // pred_region
        %s290 = smul.u32 %s22, 8
        %s291 = ssub.s32 %s290, 1
        %p292 = scmp.gt.s32.totalorder %s291, 0
        %s293 = scalar_select %p292, %s291, 0
        %p294 = scmp.lt.s32.totalorder %s21, 1
        %s295 = scalar_select %p294, %s21, 1
        %p296 = scmp.lt.s32.totalorder %s293, 15
        %s297 = scalar_select %p296, %s293, 15
        %s298 = smul.addr %s297, 2
        %s299 = smul.addr %s295, 32
        %s300 = sadd.s32 %s298, %s299
        %s301 = smul.addr %s300, 4
        %s302 = scalar_lea.vmem %s1, %s301
        %s303 = smul.u32 %s22, 8
        %s304 = ssub.s32 %s303, 1
        %p305 = scmp.gt.s32.totalorder %s304, 0
        %s306 = scalar_select %p305, %s304, 0
      $region36: #{resblock_forward.4} parent=27 // pred_fallthru
        _
      // Predicated region
      $region37: #{resblock_forward.4} parent=27 // pred_check
        %p307 = pneg %p120
      $region38: #{resblock_forward.4} parent=27 // pred_check_branch
        %309 = sbr.rel (%p307) target = $region40
      $region39: #{resblock_forward.4} parent=27 // pred_region
        %s310 = sadd.s32 %s22, 1
        %s311 = smul.u32 %s310, 8
        %p312 = scmp.lt.s32.totalorder %s311, 15
        %s313 = scalar_select %p312, %s311, 15
        %p314 = scmp.lt.s32.totalorder %s21, 1
        %s315 = scalar_select %p314, %s21, 1
        %p316 = scmp.lt.s32.totalorder %s313, 15
        %s317 = scalar_select %p316, %s313, 15
        %s318 = smul.addr %s317, 2
        %s319 = smul.addr %s315, 32
        %s320 = sadd.s32 %s318, %s319
        %s321 = smul.addr %s320, 4
        %s322 = scalar_lea.vmem %s2, %s321
        %s323 = sadd.s32 %s22, 1
        %s324 = smul.u32 %s323, 8
        %p325 = scmp.lt.s32.totalorder %s324, 15
        %s326 = scalar_select %p325, %s324, 15
      $region40: #{resblock_forward.4} parent=27 // pred_fallthru
        _
    $region28: #{resblock_forward.4} parent=5 // pred_fallthru
      _
    %p327 = scmp.le.s32.totalorder 1, %s14
    %p328 = scmp.lt.s32.totalorder %s14, 5
    %p329 = pnand %p327, %p328
    %p330 = pneg %p329
    // Predicated region
    $region41: #{resblock_forward.4} parent=5 // pred_check
      _
    $region42: #{resblock_forward.4} parent=5 // pred_check_branch
      %332 = sbr.rel (%p329) target = $region44
    $region43: #{resblock_forward.4} parent=5 // pred_region
      %s333 = ssub.s32 %s14, 1
      %s334 = smul.u32 8, %s24
      %p335 = scmp.lt.s32.totalorder %s23, 1
      %s336 = scalar_select %p335, %s23, 1
      %p337 = scmp.lt.s32.totalorder %s334, 15
      %s338 = scalar_select %p337, %s334, 15
      %s339 = smul.addr %s338, 2
      %s340 = smul.addr %s336, 32
      %s341 = sadd.s32 %s339, %s340
      %s342 = smul.addr %s341, 4
      %s343 = scalar_lea.vmem %s0, %s342
      %p344 = pneg %p54
      %p345 = pneg %p51
      %s346 = smul.u32 %s24, 8
      %s347 = ssub.s32 %s346, 1
      %p348 = scmp.gt.s32.totalorder %s347, 0
      %s349 = scalar_select %p348, %s347, 0
      %p350 = scmp.lt.s32.totalorder %s23, 1
      %s351 = scalar_select %p350, %s23, 1
      %p352 = scmp.lt.s32.totalorder %s349, 15
      %s353 = scalar_select %p352, %s349, 15
      %s354 = smul.addr %s353, 2
      %s355 = smul.addr %s351, 32
      %s356 = sadd.s32 %s354, %s355
      %s357 = smul.addr %s356, 4
      %s358 = scalar_lea.vmem %s1, %s357
      %p359 = pneg %p90
      %p360 = pneg %p87
      %s361 = sadd.s32 %s24, 1
      %s362 = smul.u32 %s361, 8
      %p363 = scmp.lt.s32.totalorder %s362, 15
      %s364 = scalar_select %p363, %s362, 15
      %p365 = scmp.lt.s32.totalorder %s23, 1
      %s366 = scalar_select %p365, %s23, 1
      %p367 = scmp.lt.s32.totalorder %s364, 15
      %s368 = scalar_select %p367, %s364, 15
      %s369 = smul.addr %s368, 2
      %s370 = smul.addr %s366, 32
      %s371 = sadd.s32 %s369, %s370
      %s372 = smul.addr %s371, 4
      %s373 = scalar_lea.vmem %s2, %s372
      %p374 = pneg %p126
      %p375 = pneg %p123
      %p376 = pneg %p147
      %p377 = pneg %p144
      %p378 = pneg %p168
      %p379 = pneg %p165
      %p380 = pneg %p189
      %p381 = pneg %p186
      %p382 = pneg %p217
      %p383 = pneg %p214
      %s384 = smul.u32 8, %s24
      %p385 = scmp.lt.s32.totalorder %s23, 1
      %s386 = scalar_select %p385, %s23, 1
      %p387 = scmp.lt.s32.totalorder %s384, 15
      %s388 = scalar_select %p387, %s384, 15
      %s389 = smul.addr %s388, 2
      %s390 = smul.addr %s386, 32
      %s391 = sadd.s32 %s389, %s390
      %s392 = smul.addr %s391, 4
      %s393 = scalar_lea.vmem %s6, %s392
      %p394 = pneg %p245
      %p395 = pneg %p242
      %p396 = scmp.lt.s32.totalorder %s23, 1
      %s397 = scalar_select %p396, %s23, 1
      %p398 = scmp.lt.s32.totalorder %s24, 1
      %s399 = scalar_select %p398, %s24, 1
      %s400 = smul.addr %s397, 2
      %s401 = sadd.s32 %s399, %s400
      %s402 = smul.addr %s401, 2
      %s403 = scalar_lea.vmem %s7, %s402
      %s404 = smul.u32 8, %s24
      %p405 = scmp.lt.s32.totalorder %s23, 1
      %s406 = scalar_select %p405, %s23, 1
      %p407 = scmp.lt.s32.totalorder %s404, 15
      %s408 = scalar_select %p407, %s404, 15
      %s409 = smul.addr %s408, 2
      %s410 = smul.addr %s406, 32
      %s411 = sadd.s32 %s409, %s410
      %s412 = smul.addr %s411, 4
      %s413 = scalar_lea.vmem %s0, %s412
      %s414 = smul.u32 8, %s24
      %s415 = smul.u32 %s24, 8
      %s416 = ssub.s32 %s415, 1
      %p417 = scmp.gt.s32.totalorder %s416, 0
      %s418 = scalar_select %p417, %s416, 0
      %p419 = scmp.lt.s32.totalorder %s23, 1
      %s420 = scalar_select %p419, %s23, 1
      %p421 = scmp.lt.s32.totalorder %s418, 15
      %s422 = scalar_select %p421, %s418, 15
      %s423 = smul.addr %s422, 2
      %s424 = smul.addr %s420, 32
      %s425 = sadd.s32 %s423, %s424
      %s426 = smul.addr %s425, 4
      %s427 = scalar_lea.vmem %s1, %s426
      %s428 = smul.u32 %s24, 8
      %s429 = ssub.s32 %s428, 1
      %p430 = scmp.gt.s32.totalorder %s429, 0
      %s431 = scalar_select %p430, %s429, 0
      %s432 = sadd.s32 %s24, 1
      %s433 = smul.u32 %s432, 8
      %p434 = scmp.lt.s32.totalorder %s433, 15
      %s435 = scalar_select %p434, %s433, 15
      %p436 = scmp.lt.s32.totalorder %s23, 1
      %s437 = scalar_select %p436, %s23, 1
      %p438 = scmp.lt.s32.totalorder %s435, 15
      %s439 = scalar_select %p438, %s435, 15
      %s440 = smul.addr %s439, 2
      %s441 = smul.addr %s437, 32
      %s442 = sadd.s32 %s440, %s441
      %s443 = smul.addr %s442, 4
      %s444 = scalar_lea.vmem %s2, %s443
      %s445 = sadd.s32 %s24, 1
      %s446 = smul.u32 %s445, 8
      %p447 = scmp.lt.s32.totalorder %s446, 15
      %s448 = scalar_select %p447, %s446, 15
      %s449 = smul.u32 8, %s24
      %p450 = scmp.lt.s32.totalorder %s23, 1
      %s451 = scalar_select %p450, %s23, 1
      %p452 = scmp.lt.s32.totalorder %s449, 15
      %s453 = scalar_select %p452, %s449, 15
      %s454 = smul.addr %s453, 2
      %s455 = smul.addr %s451, 32
      %s456 = sadd.s32 %s454, %s455
      %s457 = smul.addr %s456, 4
      %s458 = scalar_lea.vmem %s6, %s457
      %s459 = smul.u32 8, %s24
      %p460 = scmp.lt.s32.totalorder %s23, 1
      %s461 = scalar_select %p460, %s23, 1
      %p462 = scmp.lt.s32.totalorder %s24, 1
      %s463 = scalar_select %p462, %s24, 1
      %s464 = smul.addr %s461, 2
      %s465 = sadd.s32 %s463, %s464
      %s466 = smul.addr %s465, 2
      %s467 = scalar_lea.vmem %s7, %s466
      %v469 = vld [vmem:[%s3] sm:$0x1]
      %v470 = vld [vmem:[%s4] sm:$0x1]
      %v471 = vld [vmem:[%s413] sm:$0xf]
      %v472 = vld [vmem:[%s413 + $0x4] sm:$0xf]
      %v473 = vld [vmem:[%s413 + $0x8] sm:$0xf]
      %v474 = vld [vmem:[%s413 + $0xc] sm:$0xf]
      %v475 = vld [vmem:[%s413 + $0x10] sm:$0xf]
      %v476 = vld [vmem:[%s413 + $0x14] sm:$0xf]
      %v477 = vld [vmem:[%s413 + $0x18] sm:$0xf]
      %v478 = vld [vmem:[%s413 + $0x1c] sm:$0xf]
      %v479 = vld [vmem:[%s413 + $0x20] sm:$0xf]
      %v480 = vld [vmem:[%s413 + $0x24] sm:$0xf]
      %v481 = vld [vmem:[%s413 + $0x28] sm:$0xf]
      %v482 = vld [vmem:[%s413 + $0x2c] sm:$0xf]
      %v483 = vld [vmem:[%s413 + $0x30] sm:$0xf]
      %v484 = vld [vmem:[%s413 + $0x34] sm:$0xf]
      %v485 = vld [vmem:[%s413 + $0x38] sm:$0xf]
      %v486 = vld [vmem:[%s413 + $0x3c] sm:$0xf]
      %v487 = vunpack.c.l.bf16 %v471
      %v488 = vunpack.c.l.bf16 %v472
      %v489 = vunpack.c.l.bf16 %v473
      %v490 = vunpack.c.l.bf16 %v474
      %v491 = vunpack.c.l.bf16 %v475
      %v492 = vunpack.c.l.bf16 %v476
      %v493 = vunpack.c.l.bf16 %v477
      %v494 = vunpack.c.l.bf16 %v478
      %v495 = vunpack.c.l.bf16 %v479
      %v496 = vunpack.c.l.bf16 %v480
      %v497 = vunpack.c.l.bf16 %v481
      %v498 = vunpack.c.l.bf16 %v482
      %v499 = vunpack.c.l.bf16 %v483
      %v500 = vunpack.c.l.bf16 %v484
      %v501 = vunpack.c.l.bf16 %v485
      %v502 = vunpack.c.l.bf16 %v486
      %v504 = vlaneseq
      %v505 = vshrl.u32 %v504, 7
      %v506 = vsub.s32 0, %v505
      %v507 = vrot.slane %v469, %v506
      %v509 = vmul.f32 %v487, %v507
      %v510 = vmul.f32 %v488, %v507
      %v511 = vmul.f32 %v489, %v507
      %v512 = vmul.f32 %v490, %v507
      %v513 = vmul.f32 %v491, %v507
      %v514 = vmul.f32 %v492, %v507
      %v515 = vmul.f32 %v493, %v507
      %v516 = vmul.f32 %v494, %v507
      %v517 = vmul.f32 %v495, %v507
      %v518 = vmul.f32 %v496, %v507
      %v519 = vmul.f32 %v497, %v507
      %v520 = vmul.f32 %v498, %v507
      %v521 = vmul.f32 %v499, %v507
      %v522 = vmul.f32 %v500, %v507
      %v523 = vmul.f32 %v501, %v507
      %v524 = vmul.f32 %v502, %v507
      %v526 = vlaneseq
      %v527 = vshrl.u32 %v526, 7
      %v528 = vsub.s32 0, %v527
      %v529 = vrot.slane %v470, %v528
      %v531 = vadd.f32 %v509, %v529
      %v532 = vadd.f32 %v510, %v529
      %v533 = vadd.f32 %v511, %v529
      %v534 = vadd.f32 %v512, %v529
      %v535 = vadd.f32 %v513, %v529
      %v536 = vadd.f32 %v514, %v529
      %v537 = vadd.f32 %v515, %v529
      %v538 = vadd.f32 %v516, %v529
      %v539 = vadd.f32 %v517, %v529
      %v540 = vadd.f32 %v518, %v529
      %v541 = vadd.f32 %v519, %v529
      %v542 = vadd.f32 %v520, %v529
      %v543 = vadd.f32 %v521, %v529
      %v544 = vadd.f32 %v522, %v529
      %v545 = vadd.f32 %v523, %v529
      %v546 = vadd.f32 %v524, %v529
      %vm547 = vcmp.ge.f32.partialorder %v531, 0.0
      %vm548 = vcmp.ge.f32.partialorder %v532, 0.0
      %vm549 = vcmp.ge.f32.partialorder %v533, 0.0
      %vm550 = vcmp.ge.f32.partialorder %v534, 0.0
      %vm551 = vcmp.ge.f32.partialorder %v535, 0.0
      %vm552 = vcmp.ge.f32.partialorder %v536, 0.0
      %vm553 = vcmp.ge.f32.partialorder %v537, 0.0
      %vm554 = vcmp.ge.f32.partialorder %v538, 0.0
      %vm555 = vcmp.ge.f32.partialorder %v539, 0.0
      %vm556 = vcmp.ge.f32.partialorder %v540, 0.0
      %vm557 = vcmp.ge.f32.partialorder %v541, 0.0
      %vm558 = vcmp.ge.f32.partialorder %v542, 0.0
      %vm559 = vcmp.ge.f32.partialorder %v543, 0.0
      %vm560 = vcmp.ge.f32.partialorder %v544, 0.0
      %vm561 = vcmp.ge.f32.partialorder %v545, 0.0
      %vm562 = vcmp.ge.f32.partialorder %v546, 0.0
      %v563 = vmul.f32 %v531, 0.2
      %v564 = vmul.f32 %v532, 0.2
      %v565 = vmul.f32 %v533, 0.2
      %v566 = vmul.f32 %v534, 0.2
      %v567 = vmul.f32 %v535, 0.2
      %v568 = vmul.f32 %v536, 0.2
      %v569 = vmul.f32 %v537, 0.2
      %v570 = vmul.f32 %v538, 0.2
      %v571 = vmul.f32 %v539, 0.2
      %v572 = vmul.f32 %v540, 0.2
      %v573 = vmul.f32 %v541, 0.2
      %v574 = vmul.f32 %v542, 0.2
      %v575 = vmul.f32 %v543, 0.2
      %v576 = vmul.f32 %v544, 0.2
      %v577 = vmul.f32 %v545, 0.2
      %v578 = vmul.f32 %v546, 0.2
      %v579 = vsel %vm547, %v531, %v563
      %v580 = vsel %vm548, %v532, %v564
      %v581 = vsel %vm549, %v533, %v565
      %v582 = vsel %vm550, %v534, %v566
      %v583 = vsel %vm551, %v535, %v567
      %v584 = vsel %vm552, %v536, %v568
      %v585 = vsel %vm553, %v537, %v569
      %v586 = vsel %vm554, %v538, %v570
      %v587 = vsel %vm555, %v539, %v571
      %v588 = vsel %vm556, %v540, %v572
      %v589 = vsel %vm557, %v541, %v573
      %v590 = vsel %vm558, %v542, %v574
      %v591 = vsel %vm559, %v543, %v575
      %v592 = vsel %vm560, %v544, %v576
      %v593 = vsel %vm561, %v545, %v577
      %v594 = vsel %vm562, %v546, %v578
      %v595 = vld [vmem:[%s427] sm:$0xf]
      %v596 = vld [vmem:[%s427 + $0x4] sm:$0xf]
      %v597 = vunpack.c.l.bf16 %v595
      %v598 = vunpack.c.l.bf16 %v596
      %v599 = vmul.f32 %v597, %v507
      %v600 = vmul.f32 %v598, %v507
      %v601 = vadd.f32 %v599, %v529
      %v602 = vadd.f32 %v600, %v529
      %vm603 = vcmp.ge.f32.partialorder %v601, 0.0
      %vm604 = vcmp.ge.f32.partialorder %v602, 0.0
      %v605 = vmul.f32 %v601, 0.2
      %v606 = vmul.f32 %v602, 0.2
      %v607 = vsel %vm603, %v601, %v605
      %v608 = vsel %vm604, %v602, %v606
      %v609 = vld [vmem:[%s444] sm:$0xf]
      %v610 = vld [vmem:[%s444 + $0x4] sm:$0xf]
      %v611 = vunpack.c.l.bf16 %v609
      %v612 = vunpack.c.l.bf16 %v610
      %v613 = vmul.f32 %v611, %v507
      %v614 = vmul.f32 %v612, %v507
      %v615 = vadd.f32 %v613, %v529
      %v616 = vadd.f32 %v614, %v529
      %vm617 = vcmp.ge.f32.partialorder %v615, 0.0
      %vm618 = vcmp.ge.f32.partialorder %v616, 0.0
      %v619 = vmul.f32 %v615, 0.2
      %v620 = vmul.f32 %v616, 0.2
      %v621 = vsel %vm617, %v615, %v619
      %v622 = vsel %vm618, %v616, %v620
      %p623 = scmp.eq.s32.totalorder %s24, 0
      %s624 = scalar_select %p623, 1, 0
      %v625 = vstv %s624
      %vm626 = vcmp.eq.s32.totalorder %v625, 1
      %v627 = vsel %vm626, 0.0, %v607
      %v628 = vsel %vm626, 0.0, %v608
      %p629 = scmp.eq.s32.totalorder %s24, 1
      %s630 = scalar_select %p629, 1, 0
      %v631 = vstv %s630
      %vm632 = vcmp.eq.s32.totalorder %v631, 1
      %v633 = vsel %vm632, 0.0, %v621
      %v634 = vsel %vm632, 0.0, %v622
      %vm635 = vcmask 57344
      %636 = vst.msk [vmem:[#allocation2] sm:$0x1] %vm635, 0.0
      %637 = vst.msk [vmem:[#allocation2 + $0x18] sm:$0x1] %vm635, 0.0
      %638 = vst.msk [vmem:[#allocation2 + $0x30] sm:$0x1] %vm635, 0.0
      %639 = vst.msk [vmem:[#allocation2 + $0x48] sm:$0x1] %vm635, 0.0
      %640 = vst.msk [vmem:[#allocation2 + $0x60] sm:$0x1] %vm635, 0.0
      %641 = vst.msk [vmem:[#allocation2 + $0x78] sm:$0x1] %vm635, 0.0
      %642 = vst.msk [vmem:[#allocation2 + $0x90] sm:$0x1] %vm635, 0.0
      %643 = vst.msk [vmem:[#allocation2 + $0xa8] sm:$0x1] %vm635, 0.0
      %644 = vst.msk [vmem:[#allocation2 + $0xc0] sm:$0x1] %vm635, 0.0
      %645 = vst.msk [vmem:[#allocation2 + $0xd8] sm:$0x1] %vm635, 0.0
      %646 = vst.msk [vmem:[#allocation2 + $0x11] sm:$0x1] %vm635, 0.0
      %647 = vst.msk [vmem:[#allocation2 + $0x29] sm:$0x1] %vm635, 0.0
      %648 = vst.msk [vmem:[#allocation2 + $0x41] sm:$0x1] %vm635, 0.0
      %649 = vst.msk [vmem:[#allocation2 + $0x59] sm:$0x1] %vm635, 0.0
      %650 = vst.msk [vmem:[#allocation2 + $0x71] sm:$0x1] %vm635, 0.0
      %651 = vst.msk [vmem:[#allocation2 + $0x89] sm:$0x1] %vm635, 0.0
      %652 = vst.msk [vmem:[#allocation2 + $0xa1] sm:$0x1] %vm635, 0.0
      %653 = vst.msk [vmem:[#allocation2 + $0xb9] sm:$0x1] %vm635, 0.0
      %654 = vst.msk [vmem:[#allocation2 + $0xd1] sm:$0x1] %vm635, 0.0
      %655 = vst.msk [vmem:[#allocation2 + $0xe9] sm:$0x1] %vm635, 0.0
      %vm656 = vcmask 64512
      %657 = vst.msk [vmem:[#allocation2 + $0x1] sm:$0xff] %vm656, %v627
      %658 = vst.msk [vmem:[#allocation2 + $0x9] sm:$0xff] %vm656, %v628
      %s659 = scalar_lea.vmem [#allocation2], 216
      %660 = vst.msk [vmem:[%s659 + $0x1] sm:$0xff] %vm656, %v633
      %661 = vst.msk [vmem:[%s659 + $0x9] sm:$0xff] %vm656, %v634
      %s662 = scalar_lea.vmem [#allocation2], 24
      %663 = vst.msk [vmem:[%s662 + $0x1] sm:$0xff] %vm656, %v579
      %664 = vst.msk [vmem:[%s662 + $0x9] sm:$0xff] %vm656, %v580
      %665 = vst.msk [vmem:[%s662 + $0x19] sm:$0xff] %vm656, %v581
      %666 = vst.msk [vmem:[%s662 + $0x21] sm:$0xff] %vm656, %v582
      %667 = vst.msk [vmem:[%s662 + $0x31] sm:$0xff] %vm656, %v583
      %668 = vst.msk [vmem:[%s662 + $0x39] sm:$0xff] %vm656, %v584
      %669 = vst.msk [vmem:[%s662 + $0x49] sm:$0xff] %vm656, %v585
      %670 = vst.msk [vmem:[%s662 + $0x51] sm:$0xff] %vm656, %v586
      %671 = vst.msk [vmem:[%s662 + $0x61] sm:$0xff] %vm656, %v587
      %672 = vst.msk [vmem:[%s662 + $0x69] sm:$0xff] %vm656, %v588
      %673 = vst.msk [vmem:[%s662 + $0x79] sm:$0xff] %vm656, %v589
      %674 = vst.msk [vmem:[%s662 + $0x81] sm:$0xff] %vm656, %v590
      %675 = vst.msk [vmem:[%s662 + $0x91] sm:$0xff] %vm656, %v591
      %676 = vst.msk [vmem:[%s662 + $0x99] sm:$0xff] %vm656, %v592
      %677 = vst.msk [vmem:[%s662 + $0xa9] sm:$0xff] %vm656, %v593
      %678 = vst.msk [vmem:[%s662 + $0xb1] sm:$0xff] %vm656, %v594
      %v679 = vld [vmem:[#allocation2] sm:$0xff]
      %v680 = vld [vmem:[#allocation2 + $0x8] sm:$0xff]
      %v681 = vld [vmem:[#allocation2 + $0x18] sm:$0xff]
      %v682 = vld [vmem:[#allocation2 + $0x20] sm:$0xff]
      %v683 = vld [vmem:[#allocation2 + $0x30] sm:$0xff]
      %v684 = vld [vmem:[#allocation2 + $0x38] sm:$0xff]
      %v685 = vld [vmem:[#allocation2 + $0x48] sm:$0xff]
      %v686 = vld [vmem:[#allocation2 + $0x50] sm:$0xff]
      %v687 = vld [vmem:[#allocation2 + $0x60] sm:$0xff]
      %v688 = vld [vmem:[#allocation2 + $0x68] sm:$0xff]
      %v689 = vld [vmem:[#allocation2 + $0x78] sm:$0xff]
      %v690 = vld [vmem:[#allocation2 + $0x80] sm:$0xff]
      %v691 = vld [vmem:[#allocation2 + $0x90] sm:$0xff]
      %v692 = vld [vmem:[#allocation2 + $0x98] sm:$0xff]
      %v693 = vld [vmem:[#allocation2 + $0xa8] sm:$0xff]
      %v694 = vld [vmem:[#allocation2 + $0xb0] sm:$0xff]
      %v695 = vpack.c.bf16 %v680, %v679
      %v696 = vpack.c.bf16 %v682, %v681
      %v697 = vpack.c.bf16 %v684, %v683
      %v698 = vpack.c.bf16 %v686, %v685
      %v699 = vpack.c.bf16 %v688, %v687
      %v700 = vpack.c.bf16 %v690, %v689
      %v701 = vpack.c.bf16 %v692, %v691
      %v702 = vpack.c.bf16 %v694, %v693
      %v703 = vld [vmem:[%s5] sm:$0xf]
      %v704 = vld [vmem:[#allocation2 + $0x1] sm:$0xff]
      %v705 = vld [vmem:[#allocation2 + $0x9] sm:$0xff]
      %v706 = vld [vmem:[#allocation2 + $0x19] sm:$0xff]
      %v707 = vld [vmem:[#allocation2 + $0x21] sm:$0xff]
      %v708 = vld [vmem:[#allocation2 + $0x31] sm:$0xff]
      %v709 = vld [vmem:[#allocation2 + $0x39] sm:$0xff]
      %v710 = vld [vmem:[#allocation2 + $0x49] sm:$0xff]
      %v711 = vld [vmem:[#allocation2 + $0x51] sm:$0xff]
      %v712 = vld [vmem:[#allocation2 + $0x61] sm:$0xff]
      %v713 = vld [vmem:[#allocation2 + $0x69] sm:$0xff]
      %v714 = vld [vmem:[#allocation2 + $0x79] sm:$0xff]
      %v715 = vld [vmem:[#allocation2 + $0x81] sm:$0xff]
      %v716 = vld [vmem:[#allocation2 + $0x91] sm:$0xff]
      %v717 = vld [vmem:[#allocation2 + $0x99] sm:$0xff]
      %v718 = vld [vmem:[#allocation2 + $0xa9] sm:$0xff]
      %v719 = vld [vmem:[#allocation2 + $0xb1] sm:$0xff]
      %v720 = vpack.c.bf16 %v705, %v704
      %v721 = vpack.c.bf16 %v707, %v706
      %v722 = vpack.c.bf16 %v709, %v708
      %v723 = vpack.c.bf16 %v711, %v710
      %v724 = vpack.c.bf16 %v713, %v712
      %v725 = vpack.c.bf16 %v715, %v714
      %v726 = vpack.c.bf16 %v717, %v716
      %v727 = vpack.c.bf16 %v719, %v718
      %v728 = vld [vmem:[%s5 + $0x4] sm:$0xf]
      %v730 = vsel %vm656, %v720, 0
      %v733 = vsel %vm656, %v721, 0
      %v736 = vsel %vm656, %v722, 0
      %v739 = vsel %vm656, %v723, 0
      %v742 = vsel %vm656, %v724, 0
      %v745 = vsel %vm656, %v725, 0
      %v748 = vsel %vm656, %v726, 0
      %v751 = vsel %vm656, %v727, 0
      %vm753 = vcmask 1043456
      %v755 = vsel %vm753, %v728, 0
      %757 = vmatprep.subr.bf16.mxu0 0
      %758 = vmatpush1.bf16.msra.mxu0 0
      %759 = vmatprep.subr.bf16.mxu0 0
      %760 = vmatpush1.bf16.msra.mxu0 0
      %761 = vmatprep.subr.bf16.mxu0 0
      %762 = vmatpush1.bf16.msra.mxu0 0
      %763 = vmatprep.subr.bf16.mxu0 0
      %764 = vmatpush1.bf16.msra.mxu0 0
      %765 = vmatprep.subr.bf16.mxu0 0
      %766 = vmatpush1.bf16.msra.mxu0 0
      %767 = vmatprep.subr.bf16.mxu0 0
      %768 = vmatpush1.bf16.msra.mxu0 0
      %769 = vmatprep.subr.bf16.mxu0 0
      %770 = vmatpush1.bf16.msra.mxu0 0
      %771 = vmatprep.subr.bf16.mxu0 0
      %772 = vmatpush1.bf16.msra.mxu0 %v755
      %773 = vmatprep.subr.bf16.mxu0 0
      %774 = vmatpush2.bf16.msra.mxu0 0
      %775 = vmatprep.subr.bf16.mxu0 0
      %776 = vmatpush2.bf16.msra.mxu0 0
      %777 = vmatprep.subr.bf16.mxu0 0
      %778 = vmatpush2.bf16.msra.mxu0 0
      %779 = vmatprep.subr.bf16.mxu0 0
      %780 = vmatpush2.bf16.msra.mxu0 0
      %781 = vmatprep.subr.bf16.mxu0 0
      %782 = vmatpush2.bf16.msra.mxu0 0
      %783 = vmatprep.subr.bf16.mxu0 0
      %784 = vmatpush2.bf16.msra.mxu0 0
      %785 = vmatprep.subr.bf16.mxu0 0
      %786 = vmatpush2.bf16.msra.mxu0 0
      %787 = vmatprep.subr.bf16.mxu0 0
      %788 = vmatpush2.bf16.msra.mxu0 0
      %789 = vmatprep.mubr.bf16.mxu0 0
      %790 = vmatmul.mubr.bf16.gmra.mxu0 %v730
      %v791 = vpop.f32.mrf.mxu0
      %v792 = vadd.f32 0.0, %v791
      %v793 = vpop.f32.mrf.mxu0
      %v794 = vpop.f32.mrf.mxu0
      %v795 = vadd.f32 0.0, %v794
      %v796 = vpop.f32.mrf.mxu0
      %797 = vmatprep.mubr.bf16.mxu0 0
      %798 = vmatmul.mubr.bf16.gmra.mxu0 %v733
      %v799 = vpop.f32.mrf.mxu0
      %v800 = vadd.f32 0.0, %v799
      %v801 = vpop.f32.mrf.mxu0
      %v802 = vpop.f32.mrf.mxu0
      %v803 = vadd.f32 0.0, %v802
      %v804 = vpop.f32.mrf.mxu0
      %805 = vmatprep.mubr.bf16.mxu0 0
      %806 = vmatmul.mubr.bf16.gmra.mxu0 %v736
      %v807 = vpop.f32.mrf.mxu0
      %v808 = vadd.f32 0.0, %v807
      %v809 = vpop.f32.mrf.mxu0
      %v810 = vpop.f32.mrf.mxu0
      %v811 = vadd.f32 0.0, %v810
      %v812 = vpop.f32.mrf.mxu0
      %813 = vmatprep.mubr.bf16.mxu0 0
      %814 = vmatmul.mubr.bf16.gmra.mxu0 %v739
      %v815 = vpop.f32.mrf.mxu0
      %v816 = vadd.f32 0.0, %v815
      %v817 = vpop.f32.mrf.mxu0
      %v818 = vpop.f32.mrf.mxu0
      %v819 = vadd.f32 0.0, %v818
      %v820 = vpop.f32.mrf.mxu0
      %821 = vmatprep.mubr.bf16.mxu0 0
      %822 = vmatmul.mubr.bf16.gmra.mxu0 %v742
      %v823 = vpop.f32.mrf.mxu0
      %v824 = vadd.f32 0.0, %v823
      %v825 = vpop.f32.mrf.mxu0
      %v826 = vpop.f32.mrf.mxu0
      %v827 = vadd.f32 0.0, %v826
      %v828 = vpop.f32.mrf.mxu0
      %829 = vmatprep.mubr.bf16.mxu0 0
      %830 = vmatmul.mubr.bf16.gmra.mxu0 %v745
      %v831 = vpop.f32.mrf.mxu0
      %v832 = vadd.f32 0.0, %v831
      %v833 = vpop.f32.mrf.mxu0
      %v834 = vpop.f32.mrf.mxu0
      %v835 = vadd.f32 0.0, %v834
      %v836 = vpop.f32.mrf.mxu0
      %837 = vmatprep.mubr.bf16.mxu0 0
      %838 = vmatmul.mubr.bf16.gmra.mxu0 %v748
      %v839 = vpop.f32.mrf.mxu0
      %v840 = vadd.f32 0.0, %v839
      %v841 = vpop.f32.mrf.mxu0
      %v842 = vpop.f32.mrf.mxu0
      %v843 = vadd.f32 0.0, %v842
      %v844 = vpop.f32.mrf.mxu0
      %845 = vmatprep.mubr.bf16.mxu0 0
      %846 = vmatmul.mubr.bf16.gmra.mxu0 %v751
      %v847 = vpop.f32.mrf.mxu0
      %v848 = vadd.f32 0.0, %v847
      %v849 = vpop.f32.mrf.mxu0
      %v850 = vpop.f32.mrf.mxu0
      %v851 = vadd.f32 0.0, %v850
      %v852 = vpop.f32.mrf.mxu0
      %853 = vdwg.mxu0
      %v855 = vsel %vm656, %v695, 0
      %v858 = vsel %vm656, %v696, 0
      %v861 = vsel %vm656, %v697, 0
      %v864 = vsel %vm656, %v698, 0
      %v867 = vsel %vm656, %v699, 0
      %v870 = vsel %vm656, %v700, 0
      %v873 = vsel %vm656, %v701, 0
      %v876 = vsel %vm656, %v702, 0
      %v879 = vsel %vm753, %v703, 0
      %881 = vmatprep.subr.bf16.mxu0 0
      %882 = vmatpush1.bf16.msra.mxu0 0
      %883 = vmatprep.subr.bf16.mxu0 0
      %884 = vmatpush1.bf16.msra.mxu0 0
      %885 = vmatprep.subr.bf16.mxu0 0
      %886 = vmatpush1.bf16.msra.mxu0 0
      %887 = vmatprep.subr.bf16.mxu0 0
      %888 = vmatpush1.bf16.msra.mxu0 0
      %889 = vmatprep.subr.bf16.mxu0 0
      %890 = vmatpush1.bf16.msra.mxu0 0
      %891 = vmatprep.subr.bf16.mxu0 0
      %892 = vmatpush1.bf16.msra.mxu0 0
      %893 = vmatprep.subr.bf16.mxu0 0
      %894 = vmatpush1.bf16.msra.mxu0 0
      %895 = vmatprep.subr.bf16.mxu0 0
      %896 = vmatpush1.bf16.msra.mxu0 %v879
      %897 = vmatprep.subr.bf16.mxu0 0
      %898 = vmatpush2.bf16.msra.mxu0 0
      %899 = vmatprep.subr.bf16.mxu0 0
      %900 = vmatpush2.bf16.msra.mxu0 0
      %901 = vmatprep.subr.bf16.mxu0 0
      %902 = vmatpush2.bf16.msra.mxu0 0
      %903 = vmatprep.subr.bf16.mxu0 0
      %904 = vmatpush2.bf16.msra.mxu0 0
      %905 = vmatprep.subr.bf16.mxu0 0
      %906 = vmatpush2.bf16.msra.mxu0 0
      %907 = vmatprep.subr.bf16.mxu0 0
      %908 = vmatpush2.bf16.msra.mxu0 0
      %909 = vmatprep.subr.bf16.mxu0 0
      %910 = vmatpush2.bf16.msra.mxu0 0
      %911 = vmatprep.subr.bf16.mxu0 0
      %912 = vmatpush2.bf16.msra.mxu0 0
      %913 = vmatprep.mubr.bf16.mxu0 0
      %914 = vmatmul.mubr.bf16.gmra.mxu0 %v855
      %v915 = vpop.f32.mrf.mxu0
      %v916 = vadd.f32 %v792, %v915
      %v917 = vpop.f32.mrf.mxu0
      %v918 = vpop.f32.mrf.mxu0
      %v919 = vadd.f32 %v795, %v918
      %v920 = vpop.f32.mrf.mxu0
      %921 = vmatprep.mubr.bf16.mxu0 0
      %922 = vmatmul.mubr.bf16.gmra.mxu0 %v858
      %v923 = vpop.f32.mrf.mxu0
      %v924 = vadd.f32 %v800, %v923
      %v925 = vpop.f32.mrf.mxu0
      %v926 = vpop.f32.mrf.mxu0
      %v927 = vadd.f32 %v803, %v926
      %v928 = vpop.f32.mrf.mxu0
      %929 = vmatprep.mubr.bf16.mxu0 0
      %930 = vmatmul.mubr.bf16.gmra.mxu0 %v861
      %v931 = vpop.f32.mrf.mxu0
      %v932 = vadd.f32 %v808, %v931
      %v933 = vpop.f32.mrf.mxu0
      %v934 = vpop.f32.mrf.mxu0
      %v935 = vadd.f32 %v811, %v934
      %v936 = vpop.f32.mrf.mxu0
      %937 = vmatprep.mubr.bf16.mxu0 0
      %938 = vmatmul.mubr.bf16.gmra.mxu0 %v864
      %v939 = vpop.f32.mrf.mxu0
      %v940 = vadd.f32 %v816, %v939
      %v941 = vpop.f32.mrf.mxu0
      %v942 = vpop.f32.mrf.mxu0
      %v943 = vadd.f32 %v819, %v942
      %v944 = vpop.f32.mrf.mxu0
      %945 = vmatprep.mubr.bf16.mxu0 0
      %946 = vmatmul.mubr.bf16.gmra.mxu0 %v867
      %v947 = vpop.f32.mrf.mxu0
      %v948 = vadd.f32 %v824, %v947
      %v949 = vpop.f32.mrf.mxu0
      %v950 = vpop.f32.mrf.mxu0
      %v951 = vadd.f32 %v827, %v950
      %v952 = vpop.f32.mrf.mxu0
      %953 = vmatprep.mubr.bf16.mxu0 0
      %954 = vmatmul.mubr.bf16.gmra.mxu0 %v870
      %v955 = vpop.f32.mrf.mxu0
      %v956 = vadd.f32 %v832, %v955
      %v957 = vpop.f32.mrf.mxu0
      %v958 = vpop.f32.mrf.mxu0
      %v959 = vadd.f32 %v835, %v958
      %v960 = vpop.f32.mrf.mxu0
      %961 = vmatprep.mubr.bf16.mxu0 0
      %962 = vmatmul.mubr.bf16.gmra.mxu0 %v873
      %v963 = vpop.f32.mrf.mxu0
      %v964 = vadd.f32 %v840, %v963
      %v965 = vpop.f32.mrf.mxu0
      %v966 = vpop.f32.mrf.mxu0
      %v967 = vadd.f32 %v843, %v966
      %v968 = vpop.f32.mrf.mxu0
      %969 = vmatprep.mubr.bf16.mxu0 0
      %970 = vmatmul.mubr.bf16.gmra.mxu0 %v876
      %v971 = vpop.f32.mrf.mxu0
      %v972 = vadd.f32 %v848, %v971
      %v973 = vpop.f32.mrf.mxu0
      %v974 = vpop.f32.mrf.mxu0
      %v975 = vadd.f32 %v851, %v974
      %v976 = vpop.f32.mrf.mxu0
      %977 = vdwg.mxu0
      %v978 = vld [vmem:[#allocation2 + $0x2] sm:$0xff]
      %v979 = vld [vmem:[#allocation2 + $0xa] sm:$0xff]
      %v980 = vld [vmem:[#allocation2 + $0x1a] sm:$0xff]
      %v981 = vld [vmem:[#allocation2 + $0x22] sm:$0xff]
      %v982 = vld [vmem:[#allocation2 + $0x32] sm:$0xff]
      %v983 = vld [vmem:[#allocation2 + $0x3a] sm:$0xff]
      %v984 = vld [vmem:[#allocation2 + $0x4a] sm:$0xff]
      %v985 = vld [vmem:[#allocation2 + $0x52] sm:$0xff]
      %v986 = vld [vmem:[#allocation2 + $0x62] sm:$0xff]
      %v987 = vld [vmem:[#allocation2 + $0x6a] sm:$0xff]
      %v988 = vld [vmem:[#allocation2 + $0x7a] sm:$0xff]
      %v989 = vld [vmem:[#allocation2 + $0x82] sm:$0xff]
      %v990 = vld [vmem:[#allocation2 + $0x92] sm:$0xff]
      %v991 = vld [vmem:[#allocation2 + $0x9a] sm:$0xff]
      %v992 = vld [vmem:[#allocation2 + $0xaa] sm:$0xff]
      %v993 = vld [vmem:[#allocation2 + $0xb2] sm:$0xff]
      %v994 = vpack.c.bf16 %v979, %v978
      %v995 = vpack.c.bf16 %v981, %v980
      %v996 = vpack.c.bf16 %v983, %v982
      %v997 = vpack.c.bf16 %v985, %v984
      %v998 = vpack.c.bf16 %v987, %v986
      %v999 = vpack.c.bf16 %v989, %v988
      %v1000 = vpack.c.bf16 %v991, %v990
      %v1001 = vpack.c.bf16 %v993, %v992
      %v1002 = vld [vmem:[%s5 + $0x8] sm:$0xf]
      %v1004 = vsel %vm656, %v994, 0
      %v1007 = vsel %vm656, %v995, 0
      %v1010 = vsel %vm656, %v996, 0
      %v1013 = vsel %vm656, %v997, 0
      %v1016 = vsel %vm656, %v998, 0
      %v1019 = vsel %vm656, %v999, 0
      %v1022 = vsel %vm656, %v1000, 0
      %v1025 = vsel %vm656, %v1001, 0
      %v1028 = vsel %vm753, %v1002, 0
      %1030 = vmatprep.subr.bf16.mxu0 0
      %1031 = vmatpush1.bf16.msra.mxu0 0
      %1032 = vmatprep.subr.bf16.mxu0 0
      %1033 = vmatpush1.bf16.msra.mxu0 0
      %1034 = vmatprep.subr.bf16.mxu0 0
      %1035 = vmatpush1.bf16.msra.mxu0 0
      %1036 = vmatprep.subr.bf16.mxu0 0
      %1037 = vmatpush1.bf16.msra.mxu0 0
      %1038 = vmatprep.subr.bf16.mxu0 0
      %1039 = vmatpush1.bf16.msra.mxu0 0
      %1040 = vmatprep.subr.bf16.mxu0 0
      %1041 = vmatpush1.bf16.msra.mxu0 0
      %1042 = vmatprep.subr.bf16.mxu0 0
      %1043 = vmatpush1.bf16.msra.mxu0 0
      %1044 = vmatprep.subr.bf16.mxu0 0
      %1045 = vmatpush1.bf16.msra.mxu0 %v1028
      %1046 = vmatprep.subr.bf16.mxu0 0
      %1047 = vmatpush2.bf16.msra.mxu0 0
      %1048 = vmatprep.subr.bf16.mxu0 0
      %1049 = vmatpush2.bf16.msra.mxu0 0
      %1050 = vmatprep.subr.bf16.mxu0 0
      %1051 = vmatpush2.bf16.msra.mxu0 0
      %1052 = vmatprep.subr.bf16.mxu0 0
      %1053 = vmatpush2.bf16.msra.mxu0 0
      %1054 = vmatprep.subr.bf16.mxu0 0
      %1055 = vmatpush2.bf16.msra.mxu0 0
      %1056 = vmatprep.subr.bf16.mxu0 0
      %1057 = vmatpush2.bf16.msra.mxu0 0
      %1058 = vmatprep.subr.bf16.mxu0 0
      %1059 = vmatpush2.bf16.msra.mxu0 0
      %1060 = vmatprep.subr.bf16.mxu0 0
      %1061 = vmatpush2.bf16.msra.mxu0 0
      %1062 = vmatprep.mubr.bf16.mxu0 0
      %1063 = vmatmul.mubr.bf16.gmra.mxu0 %v1004
      %v1064 = vpop.f32.mrf.mxu0
      %v1065 = vadd.f32 0.0, %v1064
      %v1066 = vpop.f32.mrf.mxu0
      %v1067 = vpop.f32.mrf.mxu0
      %v1068 = vadd.f32 0.0, %v1067
      %v1069 = vpop.f32.mrf.mxu0
      %1070 = vmatprep.mubr.bf16.mxu0 0
      %1071 = vmatmul.mubr.bf16.gmra.mxu0 %v1007
      %v1072 = vpop.f32.mrf.mxu0
      %v1073 = vadd.f32 0.0, %v1072
      %v1074 = vpop.f32.mrf.mxu0
      %v1075 = vpop.f32.mrf.mxu0
      %v1076 = vadd.f32 0.0, %v1075
      %v1077 = vpop.f32.mrf.mxu0
      %1078 = vmatprep.mubr.bf16.mxu0 0
      %1079 = vmatmul.mubr.bf16.gmra.mxu0 %v1010
      %v1080 = vpop.f32.mrf.mxu0
      %v1081 = vadd.f32 0.0, %v1080
      %v1082 = vpop.f32.mrf.mxu0
      %v1083 = vpop.f32.mrf.mxu0
      %v1084 = vadd.f32 0.0, %v1083
      %v1085 = vpop.f32.mrf.mxu0
      %1086 = vmatprep.mubr.bf16.mxu0 0
      %1087 = vmatmul.mubr.bf16.gmra.mxu0 %v1013
      %v1088 = vpop.f32.mrf.mxu0
      %v1089 = vadd.f32 0.0, %v1088
      %v1090 = vpop.f32.mrf.mxu0
      %v1091 = vpop.f32.mrf.mxu0
      %v1092 = vadd.f32 0.0, %v1091
      %v1093 = vpop.f32.mrf.mxu0
      %1094 = vmatprep.mubr.bf16.mxu0 0
      %1095 = vmatmul.mubr.bf16.gmra.mxu0 %v1016
      %v1096 = vpop.f32.mrf.mxu0
      %v1097 = vadd.f32 0.0, %v1096
      %v1098 = vpop.f32.mrf.mxu0
      %v1099 = vpop.f32.mrf.mxu0
      %v1100 = vadd.f32 0.0, %v1099
      %v1101 = vpop.f32.mrf.mxu0
      %1102 = vmatprep.mubr.bf16.mxu0 0
      %1103 = vmatmul.mubr.bf16.gmra.mxu0 %v1019
      %v1104 = vpop.f32.mrf.mxu0
      %v1105 = vadd.f32 0.0, %v1104
      %v1106 = vpop.f32.mrf.mxu0
      %v1107 = vpop.f32.mrf.mxu0
      %v1108 = vadd.f32 0.0, %v1107
      %v1109 = vpop.f32.mrf.mxu0
      %1110 = vmatprep.mubr.bf16.mxu0 0
      %1111 = vmatmul.mubr.bf16.gmra.mxu0 %v1022
      %v1112 = vpop.f32.mrf.mxu0
      %v1113 = vadd.f32 0.0, %v1112
      %v1114 = vpop.f32.mrf.mxu0
      %v1115 = vpop.f32.mrf.mxu0
      %v1116 = vadd.f32 0.0, %v1115
      %v1117 = vpop.f32.mrf.mxu0
      %1118 = vmatprep.mubr.bf16.mxu0 0
      %1119 = vmatmul.mubr.bf16.gmra.mxu0 %v1025
      %v1120 = vpop.f32.mrf.mxu0
      %v1121 = vadd.f32 0.0, %v1120
      %v1122 = vpop.f32.mrf.mxu0
      %v1123 = vpop.f32.mrf.mxu0
      %v1124 = vadd.f32 0.0, %v1123
      %v1125 = vpop.f32.mrf.mxu0
      %1126 = vdwg.mxu0
      %v1127 = vadd.f32 %v916, %v1065
      %v1128 = vadd.f32 %v919, %v1068
      %v1129 = vadd.f32 %v924, %v1073
      %v1130 = vadd.f32 %v927, %v1076
      %v1131 = vadd.f32 %v932, %v1081
      %v1132 = vadd.f32 %v935, %v1084
      %v1133 = vadd.f32 %v940, %v1089
      %v1134 = vadd.f32 %v943, %v1092
      %v1135 = vadd.f32 %v948, %v1097
      %v1136 = vadd.f32 %v951, %v1100
      %v1137 = vadd.f32 %v956, %v1105
      %v1138 = vadd.f32 %v959, %v1108
      %v1139 = vadd.f32 %v964, %v1113
      %v1140 = vadd.f32 %v967, %v1116
      %v1141 = vadd.f32 %v972, %v1121
      %v1142 = vadd.f32 %v975, %v1124
      %v1143 = vld [vmem:[%s662] sm:$0xff]
      %v1144 = vld [vmem:[%s662 + $0x8] sm:$0xff]
      %v1145 = vld [vmem:[%s662 + $0x18] sm:$0xff]
      %v1146 = vld [vmem:[%s662 + $0x20] sm:$0xff]
      %v1147 = vld [vmem:[%s662 + $0x30] sm:$0xff]
      %v1148 = vld [vmem:[%s662 + $0x38] sm:$0xff]
      %v1149 = vld [vmem:[%s662 + $0x48] sm:$0xff]
      %v1150 = vld [vmem:[%s662 + $0x50] sm:$0xff]
      %v1151 = vld [vmem:[%s662 + $0x60] sm:$0xff]
      %v1152 = vld [vmem:[%s662 + $0x68] sm:$0xff]
      %v1153 = vld [vmem:[%s662 + $0x78] sm:$0xff]
      %v1154 = vld [vmem:[%s662 + $0x80] sm:$0xff]
      %v1155 = vld [vmem:[%s662 + $0x90] sm:$0xff]
      %v1156 = vld [vmem:[%s662 + $0x98] sm:$0xff]
      %v1157 = vld [vmem:[%s662 + $0xa8] sm:$0xff]
      %v1158 = vld [vmem:[%s662 + $0xb0] sm:$0xff]
      %v1159 = vpack.c.bf16 %v1144, %v1143
      %v1160 = vpack.c.bf16 %v1146, %v1145
      %v1161 = vpack.c.bf16 %v1148, %v1147
      %v1162 = vpack.c.bf16 %v1150, %v1149
      %v1163 = vpack.c.bf16 %v1152, %v1151
      %v1164 = vpack.c.bf16 %v1154, %v1153
      %v1165 = vpack.c.bf16 %v1156, %v1155
      %v1166 = vpack.c.bf16 %v1158, %v1157
      %s1167 = scalar_lea.vmem %s5, 12
      %v1168 = vld [vmem:[%s1167] sm:$0xf]
      %v1170 = vsel %vm656, %v1159, 0
      %v1173 = vsel %vm656, %v1160, 0
      %v1176 = vsel %vm656, %v1161, 0
      %v1179 = vsel %vm656, %v1162, 0
      %v1182 = vsel %vm656, %v1163, 0
      %v1185 = vsel %vm656, %v1164, 0
      %v1188 = vsel %vm656, %v1165, 0
      %v1191 = vsel %vm656, %v1166, 0
      %v1194 = vsel %vm753, %v1168, 0
      %1196 = vmatprep.subr.bf16.mxu0 0
      %1197 = vmatpush1.bf16.msra.mxu0 0
      %1198 = vmatprep.subr.bf16.mxu0 0
      %1199 = vmatpush1.bf16.msra.mxu0 0
      %1200 = vmatprep.subr.bf16.mxu0 0
      %1201 = vmatpush1.bf16.msra.mxu0 0
      %1202 = vmatprep.subr.bf16.mxu0 0
      %1203 = vmatpush1.bf16.msra.mxu0 0
      %1204 = vmatprep.subr.bf16.mxu0 0
      %1205 = vmatpush1.bf16.msra.mxu0 0
      %1206 = vmatprep.subr.bf16.mxu0 0
      %1207 = vmatpush1.bf16.msra.mxu0 0
      %1208 = vmatprep.subr.bf16.mxu0 0
      %1209 = vmatpush1.bf16.msra.mxu0 0
      %1210 = vmatprep.subr.bf16.mxu0 0
      %1211 = vmatpush1.bf16.msra.mxu0 %v1194
      %1212 = vmatprep.subr.bf16.mxu0 0
      %1213 = vmatpush2.bf16.msra.mxu0 0
      %1214 = vmatprep.subr.bf16.mxu0 0
      %1215 = vmatpush2.bf16.msra.mxu0 0
      %1216 = vmatprep.subr.bf16.mxu0 0
      %1217 = vmatpush2.bf16.msra.mxu0 0
      %1218 = vmatprep.subr.bf16.mxu0 0
      %1219 = vmatpush2.bf16.msra.mxu0 0
      %1220 = vmatprep.subr.bf16.mxu0 0
      %1221 = vmatpush2.bf16.msra.mxu0 0
      %1222 = vmatprep.subr.bf16.mxu0 0
      %1223 = vmatpush2.bf16.msra.mxu0 0
      %1224 = vmatprep.subr.bf16.mxu0 0
      %1225 = vmatpush2.bf16.msra.mxu0 0
      %1226 = vmatprep.subr.bf16.mxu0 0
      %1227 = vmatpush2.bf16.msra.mxu0 0
      %1228 = vmatprep.mubr.bf16.mxu0 0
      %1229 = vmatmul.mubr.bf16.gmra.mxu0 %v1170
      %v1230 = vpop.f32.mrf.mxu0
      %v1231 = vadd.f32 0.0, %v1230
      %v1232 = vpop.f32.mrf.mxu0
      %v1233 = vpop.f32.mrf.mxu0
      %v1234 = vadd.f32 0.0, %v1233
      %v1235 = vpop.f32.mrf.mxu0
      %1236 = vmatprep.mubr.bf16.mxu0 0
      %1237 = vmatmul.mubr.bf16.gmra.mxu0 %v1173
      %v1238 = vpop.f32.mrf.mxu0
      %v1239 = vadd.f32 0.0, %v1238
      %v1240 = vpop.f32.mrf.mxu0
      %v1241 = vpop.f32.mrf.mxu0
      %v1242 = vadd.f32 0.0, %v1241
      %v1243 = vpop.f32.mrf.mxu0
      %1244 = vmatprep.mubr.bf16.mxu0 0
      %1245 = vmatmul.mubr.bf16.gmra.mxu0 %v1176
      %v1246 = vpop.f32.mrf.mxu0
      %v1247 = vadd.f32 0.0, %v1246
      %v1248 = vpop.f32.mrf.mxu0
      %v1249 = vpop.f32.mrf.mxu0
      %v1250 = vadd.f32 0.0, %v1249
      %v1251 = vpop.f32.mrf.mxu0
      %1252 = vmatprep.mubr.bf16.mxu0 0
      %1253 = vmatmul.mubr.bf16.gmra.mxu0 %v1179
      %v1254 = vpop.f32.mrf.mxu0
      %v1255 = vadd.f32 0.0, %v1254
      %v1256 = vpop.f32.mrf.mxu0
      %v1257 = vpop.f32.mrf.mxu0
      %v1258 = vadd.f32 0.0, %v1257
      %v1259 = vpop.f32.mrf.mxu0
      %1260 = vmatprep.mubr.bf16.mxu0 0
      %1261 = vmatmul.mubr.bf16.gmra.mxu0 %v1182
      %v1262 = vpop.f32.mrf.mxu0
      %v1263 = vadd.f32 0.0, %v1262
      %v1264 = vpop.f32.mrf.mxu0
      %v1265 = vpop.f32.mrf.mxu0
      %v1266 = vadd.f32 0.0, %v1265
      %v1267 = vpop.f32.mrf.mxu0
      %1268 = vmatprep.mubr.bf16.mxu0 0
      %1269 = vmatmul.mubr.bf16.gmra.mxu0 %v1185
      %v1270 = vpop.f32.mrf.mxu0
      %v1271 = vadd.f32 0.0, %v1270
      %v1272 = vpop.f32.mrf.mxu0
      %v1273 = vpop.f32.mrf.mxu0
      %v1274 = vadd.f32 0.0, %v1273
      %v1275 = vpop.f32.mrf.mxu0
      %1276 = vmatprep.mubr.bf16.mxu0 0
      %1277 = vmatmul.mubr.bf16.gmra.mxu0 %v1188
      %v1278 = vpop.f32.mrf.mxu0
      %v1279 = vadd.f32 0.0, %v1278
      %v1280 = vpop.f32.mrf.mxu0
      %v1281 = vpop.f32.mrf.mxu0
      %v1282 = vadd.f32 0.0, %v1281
      %v1283 = vpop.f32.mrf.mxu0
      %1284 = vmatprep.mubr.bf16.mxu0 0
      %1285 = vmatmul.mubr.bf16.gmra.mxu0 %v1191
      %v1286 = vpop.f32.mrf.mxu0
      %v1287 = vadd.f32 0.0, %v1286
      %v1288 = vpop.f32.mrf.mxu0
      %v1289 = vpop.f32.mrf.mxu0
      %v1290 = vadd.f32 0.0, %v1289
      %v1291 = vpop.f32.mrf.mxu0
      %1292 = vdwg.mxu0
      %v1293 = vadd.f32 %v1127, %v1231
      %v1294 = vadd.f32 %v1128, %v1234
      %v1295 = vadd.f32 %v1129, %v1239
      %v1296 = vadd.f32 %v1130, %v1242
      %v1297 = vadd.f32 %v1131, %v1247
      %v1298 = vadd.f32 %v1132, %v1250
      %v1299 = vadd.f32 %v1133, %v1255
      %v1300 = vadd.f32 %v1134, %v1258
      %v1301 = vadd.f32 %v1135, %v1263
      %v1302 = vadd.f32 %v1136, %v1266
      %v1303 = vadd.f32 %v1137, %v1271
      %v1304 = vadd.f32 %v1138, %v1274
      %v1305 = vadd.f32 %v1139, %v1279
      %v1306 = vadd.f32 %v1140, %v1282
      %v1307 = vadd.f32 %v1141, %v1287
      %v1308 = vadd.f32 %v1142, %v1290
      %v1309 = vld [vmem:[%s662 + $0x1] sm:$0xff]
      %v1310 = vld [vmem:[%s662 + $0x9] sm:$0xff]
      %v1311 = vld [vmem:[%s662 + $0x19] sm:$0xff]
      %v1312 = vld [vmem:[%s662 + $0x21] sm:$0xff]
      %v1313 = vld [vmem:[%s662 + $0x31] sm:$0xff]
      %v1314 = vld [vmem:[%s662 + $0x39] sm:$0xff]
      %v1315 = vld [vmem:[%s662 + $0x49] sm:$0xff]
      %v1316 = vld [vmem:[%s662 + $0x51] sm:$0xff]
      %v1317 = vld [vmem:[%s662 + $0x61] sm:$0xff]
      %v1318 = vld [vmem:[%s662 + $0x69] sm:$0xff]
      %v1319 = vld [vmem:[%s662 + $0x79] sm:$0xff]
      %v1320 = vld [vmem:[%s662 + $0x81] sm:$0xff]
      %v1321 = vld [vmem:[%s662 + $0x91] sm:$0xff]
      %v1322 = vld [vmem:[%s662 + $0x99] sm:$0xff]
      %v1323 = vld [vmem:[%s662 + $0xa9] sm:$0xff]
      %v1324 = vld [vmem:[%s662 + $0xb1] sm:$0xff]
      %v1325 = vpack.c.bf16 %v1310, %v1309
      %v1326 = vpack.c.bf16 %v1312, %v1311
      %v1327 = vpack.c.bf16 %v1314, %v1313
      %v1328 = vpack.c.bf16 %v1316, %v1315
      %v1329 = vpack.c.bf16 %v1318, %v1317
      %v1330 = vpack.c.bf16 %v1320, %v1319
      %v1331 = vpack.c.bf16 %v1322, %v1321
      %v1332 = vpack.c.bf16 %v1324, %v1323
      %v1333 = vld [vmem:[%s1167 + $0x4] sm:$0xf]
      %v1335 = vsel %vm656, %v1325, 0
      %v1338 = vsel %vm656, %v1326, 0
      %v1341 = vsel %vm656, %v1327, 0
      %v1344 = vsel %vm656, %v1328, 0
      %v1347 = vsel %vm656, %v1329, 0
      %v1350 = vsel %vm656, %v1330, 0
      %v1353 = vsel %vm656, %v1331, 0
      %v1356 = vsel %vm656, %v1332, 0
      %v1359 = vsel %vm753, %v1333, 0
      %1361 = vmatprep.subr.bf16.mxu0 0
      %1362 = vmatpush1.bf16.msra.mxu0 0
      %1363 = vmatprep.subr.bf16.mxu0 0
      %1364 = vmatpush1.bf16.msra.mxu0 0
      %1365 = vmatprep.subr.bf16.mxu0 0
      %1366 = vmatpush1.bf16.msra.mxu0 0
      %1367 = vmatprep.subr.bf16.mxu0 0
      %1368 = vmatpush1.bf16.msra.mxu0 0
      %1369 = vmatprep.subr.bf16.mxu0 0
      %1370 = vmatpush1.bf16.msra.mxu0 0
      %1371 = vmatprep.subr.bf16.mxu0 0
      %1372 = vmatpush1.bf16.msra.mxu0 0
      %1373 = vmatprep.subr.bf16.mxu0 0
      %1374 = vmatpush1.bf16.msra.mxu0 0
      %1375 = vmatprep.subr.bf16.mxu0 0
      %1376 = vmatpush1.bf16.msra.mxu0 %v1359
      %1377 = vmatprep.subr.bf16.mxu0 0
      %1378 = vmatpush2.bf16.msra.mxu0 0
      %1379 = vmatprep.subr.bf16.mxu0 0
      %1380 = vmatpush2.bf16.msra.mxu0 0
      %1381 = vmatprep.subr.bf16.mxu0 0
      %1382 = vmatpush2.bf16.msra.mxu0 0
      %1383 = vmatprep.subr.bf16.mxu0 0
      %1384 = vmatpush2.bf16.msra.mxu0 0
      %1385 = vmatprep.subr.bf16.mxu0 0
      %1386 = vmatpush2.bf16.msra.mxu0 0
      %1387 = vmatprep.subr.bf16.mxu0 0
      %1388 = vmatpush2.bf16.msra.mxu0 0
      %1389 = vmatprep.subr.bf16.mxu0 0
      %1390 = vmatpush2.bf16.msra.mxu0 0
      %1391 = vmatprep.subr.bf16.mxu0 0
      %1392 = vmatpush2.bf16.msra.mxu0 0
      %1393 = vmatprep.mubr.bf16.mxu0 0
      %1394 = vmatmul.mubr.bf16.gmra.mxu0 %v1335
      %v1395 = vpop.f32.mrf.mxu0
      %v1396 = vadd.f32 0.0, %v1395
      %v1397 = vpop.f32.mrf.mxu0
      %v1398 = vpop.f32.mrf.mxu0
      %v1399 = vadd.f32 0.0, %v1398
      %v1400 = vpop.f32.mrf.mxu0
      %1401 = vmatprep.mubr.bf16.mxu0 0
      %1402 = vmatmul.mubr.bf16.gmra.mxu0 %v1338
      %v1403 = vpop.f32.mrf.mxu0
      %v1404 = vadd.f32 0.0, %v1403
      %v1405 = vpop.f32.mrf.mxu0
      %v1406 = vpop.f32.mrf.mxu0
      %v1407 = vadd.f32 0.0, %v1406
      %v1408 = vpop.f32.mrf.mxu0
      %1409 = vmatprep.mubr.bf16.mxu0 0
      %1410 = vmatmul.mubr.bf16.gmra.mxu0 %v1341
      %v1411 = vpop.f32.mrf.mxu0
      %v1412 = vadd.f32 0.0, %v1411
      %v1413 = vpop.f32.mrf.mxu0
      %v1414 = vpop.f32.mrf.mxu0
      %v1415 = vadd.f32 0.0, %v1414
      %v1416 = vpop.f32.mrf.mxu0
      %1417 = vmatprep.mubr.bf16.mxu0 0
      %1418 = vmatmul.mubr.bf16.gmra.mxu0 %v1344
      %v1419 = vpop.f32.mrf.mxu0
      %v1420 = vadd.f32 0.0, %v1419
      %v1421 = vpop.f32.mrf.mxu0
      %v1422 = vpop.f32.mrf.mxu0
      %v1423 = vadd.f32 0.0, %v1422
      %v1424 = vpop.f32.mrf.mxu0
      %1425 = vmatprep.mubr.bf16.mxu0 0
      %1426 = vmatmul.mubr.bf16.gmra.mxu0 %v1347
      %v1427 = vpop.f32.mrf.mxu0
      %v1428 = vadd.f32 0.0, %v1427
      %v1429 = vpop.f32.mrf.mxu0
      %v1430 = vpop.f32.mrf.mxu0
      %v1431 = vadd.f32 0.0, %v1430
      %v1432 = vpop.f32.mrf.mxu0
      %1433 = vmatprep.mubr.bf16.mxu0 0
      %1434 = vmatmul.mubr.bf16.gmra.mxu0 %v1350
      %v1435 = vpop.f32.mrf.mxu0
      %v1436 = vadd.f32 0.0, %v1435
      %v1437 = vpop.f32.mrf.mxu0
      %v1438 = vpop.f32.mrf.mxu0
      %v1439 = vadd.f32 0.0, %v1438
      %v1440 = vpop.f32.mrf.mxu0
      %1441 = vmatprep.mubr.bf16.mxu0 0
      %1442 = vmatmul.mubr.bf16.gmra.mxu0 %v1353
      %v1443 = vpop.f32.mrf.mxu0
      %v1444 = vadd.f32 0.0, %v1443
      %v1445 = vpop.f32.mrf.mxu0
      %v1446 = vpop.f32.mrf.mxu0
      %v1447 = vadd.f32 0.0, %v1446
      %v1448 = vpop.f32.mrf.mxu0
      %1449 = vmatprep.mubr.bf16.mxu0 0
      %1450 = vmatmul.mubr.bf16.gmra.mxu0 %v1356
      %v1451 = vpop.f32.mrf.mxu0
      %v1452 = vadd.f32 0.0, %v1451
      %v1453 = vpop.f32.mrf.mxu0
      %v1454 = vpop.f32.mrf.mxu0
      %v1455 = vadd.f32 0.0, %v1454
      %v1456 = vpop.f32.mrf.mxu0
      %1457 = vdwg.mxu0
      %v1458 = vadd.f32 %v1293, %v1396
      %v1459 = vadd.f32 %v1294, %v1399
      %v1460 = vadd.f32 %v1295, %v1404
      %v1461 = vadd.f32 %v1296, %v1407
      %v1462 = vadd.f32 %v1297, %v1412
      %v1463 = vadd.f32 %v1298, %v1415
      %v1464 = vadd.f32 %v1299, %v1420
      %v1465 = vadd.f32 %v1300, %v1423
      %v1466 = vadd.f32 %v1301, %v1428
      %v1467 = vadd.f32 %v1302, %v1431
      %v1468 = vadd.f32 %v1303, %v1436
      %v1469 = vadd.f32 %v1304, %v1439
      %v1470 = vadd.f32 %v1305, %v1444
      %v1471 = vadd.f32 %v1306, %v1447
      %v1472 = vadd.f32 %v1307, %v1452
      %v1473 = vadd.f32 %v1308, %v1455
      %v1474 = vld [vmem:[%s662 + $0x2] sm:$0xff]
      %v1475 = vld [vmem:[%s662 + $0xa] sm:$0xff]
      %v1476 = vld [vmem:[%s662 + $0x1a] sm:$0xff]
      %v1477 = vld [vmem:[%s662 + $0x22] sm:$0xff]
      %v1478 = vld [vmem:[%s662 + $0x32] sm:$0xff]
      %v1479 = vld [vmem:[%s662 + $0x3a] sm:$0xff]
      %v1480 = vld [vmem:[%s662 + $0x4a] sm:$0xff]
      %v1481 = vld [vmem:[%s662 + $0x52] sm:$0xff]
      %v1482 = vld [vmem:[%s662 + $0x62] sm:$0xff]
      %v1483 = vld [vmem:[%s662 + $0x6a] sm:$0xff]
      %v1484 = vld [vmem:[%s662 + $0x7a] sm:$0xff]
      %v1485 = vld [vmem:[%s662 + $0x82] sm:$0xff]
      %v1486 = vld [vmem:[%s662 + $0x92] sm:$0xff]
      %v1487 = vld [vmem:[%s662 + $0x9a] sm:$0xff]
      %v1488 = vld [vmem:[%s662 + $0xaa] sm:$0xff]
      %v1489 = vld [vmem:[%s662 + $0xb2] sm:$0xff]
      %v1490 = vpack.c.bf16 %v1475, %v1474
      %v1491 = vpack.c.bf16 %v1477, %v1476
      %v1492 = vpack.c.bf16 %v1479, %v1478
      %v1493 = vpack.c.bf16 %v1481, %v1480
      %v1494 = vpack.c.bf16 %v1483, %v1482
      %v1495 = vpack.c.bf16 %v1485, %v1484
      %v1496 = vpack.c.bf16 %v1487, %v1486
      %v1497 = vpack.c.bf16 %v1489, %v1488
      %v1498 = vld [vmem:[%s1167 + $0x8] sm:$0xf]
      %v1500 = vsel %vm656, %v1490, 0
      %v1503 = vsel %vm656, %v1491, 0
      %v1506 = vsel %vm656, %v1492, 0
      %v1509 = vsel %vm656, %v1493, 0
      %v1512 = vsel %vm656, %v1494, 0
      %v1515 = vsel %vm656, %v1495, 0
      %v1518 = vsel %vm656, %v1496, 0
      %v1521 = vsel %vm656, %v1497, 0
      %v1524 = vsel %vm753, %v1498, 0
      %1526 = vmatprep.subr.bf16.mxu0 0
      %1527 = vmatpush1.bf16.msra.mxu0 0
      %1528 = vmatprep.subr.bf16.mxu0 0
      %1529 = vmatpush1.bf16.msra.mxu0 0
      %1530 = vmatprep.subr.bf16.mxu0 0
      %1531 = vmatpush1.bf16.msra.mxu0 0
      %1532 = vmatprep.subr.bf16.mxu0 0
      %1533 = vmatpush1.bf16.msra.mxu0 0
      %1534 = vmatprep.subr.bf16.mxu0 0
      %1535 = vmatpush1.bf16.msra.mxu0 0
      %1536 = vmatprep.subr.bf16.mxu0 0
      %1537 = vmatpush1.bf16.msra.mxu0 0
      %1538 = vmatprep.subr.bf16.mxu0 0
      %1539 = vmatpush1.bf16.msra.mxu0 0
      %1540 = vmatprep.subr.bf16.mxu0 0
      %1541 = vmatpush1.bf16.msra.mxu0 %v1524
      %1542 = vmatprep.subr.bf16.mxu0 0
      %1543 = vmatpush2.bf16.msra.mxu0 0
      %1544 = vmatprep.subr.bf16.mxu0 0
      %1545 = vmatpush2.bf16.msra.mxu0 0
      %1546 = vmatprep.subr.bf16.mxu0 0
      %1547 = vmatpush2.bf16.msra.mxu0 0
      %1548 = vmatprep.subr.bf16.mxu0 0
      %1549 = vmatpush2.bf16.msra.mxu0 0
      %1550 = vmatprep.subr.bf16.mxu0 0
      %1551 = vmatpush2.bf16.msra.mxu0 0
      %1552 = vmatprep.subr.bf16.mxu0 0
      %1553 = vmatpush2.bf16.msra.mxu0 0
      %1554 = vmatprep.subr.bf16.mxu0 0
      %1555 = vmatpush2.bf16.msra.mxu0 0
      %1556 = vmatprep.subr.bf16.mxu0 0
      %1557 = vmatpush2.bf16.msra.mxu0 0
      %1558 = vmatprep.mubr.bf16.mxu0 0
      %1559 = vmatmul.mubr.bf16.gmra.mxu0 %v1500
      %v1560 = vpop.f32.mrf.mxu0
      %v1561 = vadd.f32 0.0, %v1560
      %v1562 = vpop.f32.mrf.mxu0
      %v1563 = vpop.f32.mrf.mxu0
      %v1564 = vadd.f32 0.0, %v1563
      %v1565 = vpop.f32.mrf.mxu0
      %1566 = vmatprep.mubr.bf16.mxu0 0
      %1567 = vmatmul.mubr.bf16.gmra.mxu0 %v1503
      %v1568 = vpop.f32.mrf.mxu0
      %v1569 = vadd.f32 0.0, %v1568
      %v1570 = vpop.f32.mrf.mxu0
      %v1571 = vpop.f32.mrf.mxu0
      %v1572 = vadd.f32 0.0, %v1571
      %v1573 = vpop.f32.mrf.mxu0
      %1574 = vmatprep.mubr.bf16.mxu0 0
      %1575 = vmatmul.mubr.bf16.gmra.mxu0 %v1506
      %v1576 = vpop.f32.mrf.mxu0
      %v1577 = vadd.f32 0.0, %v1576
      %v1578 = vpop.f32.mrf.mxu0
      %v1579 = vpop.f32.mrf.mxu0
      %v1580 = vadd.f32 0.0, %v1579
      %v1581 = vpop.f32.mrf.mxu0
      %1582 = vmatprep.mubr.bf16.mxu0 0
      %1583 = vmatmul.mubr.bf16.gmra.mxu0 %v1509
      %v1584 = vpop.f32.mrf.mxu0
      %v1585 = vadd.f32 0.0, %v1584
      %v1586 = vpop.f32.mrf.mxu0
      %v1587 = vpop.f32.mrf.mxu0
      %v1588 = vadd.f32 0.0, %v1587
      %v1589 = vpop.f32.mrf.mxu0
      %1590 = vmatprep.mubr.bf16.mxu0 0
      %1591 = vmatmul.mubr.bf16.gmra.mxu0 %v1512
      %v1592 = vpop.f32.mrf.mxu0
      %v1593 = vadd.f32 0.0, %v1592
      %v1594 = vpop.f32.mrf.mxu0
      %v1595 = vpop.f32.mrf.mxu0
      %v1596 = vadd.f32 0.0, %v1595
      %v1597 = vpop.f32.mrf.mxu0
      %1598 = vmatprep.mubr.bf16.mxu0 0
      %1599 = vmatmul.mubr.bf16.gmra.mxu0 %v1515
      %v1600 = vpop.f32.mrf.mxu0
      %v1601 = vadd.f32 0.0, %v1600
      %v1602 = vpop.f32.mrf.mxu0
      %v1603 = vpop.f32.mrf.mxu0
      %v1604 = vadd.f32 0.0, %v1603
      %v1605 = vpop.f32.mrf.mxu0
      %1606 = vmatprep.mubr.bf16.mxu0 0
      %1607 = vmatmul.mubr.bf16.gmra.mxu0 %v1518
      %v1608 = vpop.f32.mrf.mxu0
      %v1609 = vadd.f32 0.0, %v1608
      %v1610 = vpop.f32.mrf.mxu0
      %v1611 = vpop.f32.mrf.mxu0
      %v1612 = vadd.f32 0.0, %v1611
      %v1613 = vpop.f32.mrf.mxu0
      %1614 = vmatprep.mubr.bf16.mxu0 0
      %1615 = vmatmul.mubr.bf16.gmra.mxu0 %v1521
      %v1616 = vpop.f32.mrf.mxu0
      %v1617 = vadd.f32 0.0, %v1616
      %v1618 = vpop.f32.mrf.mxu0
      %v1619 = vpop.f32.mrf.mxu0
      %v1620 = vadd.f32 0.0, %v1619
      %v1621 = vpop.f32.mrf.mxu0
      %1622 = vdwg.mxu0
      %v1623 = vadd.f32 %v1458, %v1561
      %v1624 = vadd.f32 %v1459, %v1564
      %v1625 = vadd.f32 %v1460, %v1569
      %v1626 = vadd.f32 %v1461, %v1572
      %v1627 = vadd.f32 %v1462, %v1577
      %v1628 = vadd.f32 %v1463, %v1580
      %v1629 = vadd.f32 %v1464, %v1585
      %v1630 = vadd.f32 %v1465, %v1588
      %v1631 = vadd.f32 %v1466, %v1593
      %v1632 = vadd.f32 %v1467, %v1596
      %v1633 = vadd.f32 %v1468, %v1601
      %v1634 = vadd.f32 %v1469, %v1604
      %v1635 = vadd.f32 %v1470, %v1609
      %v1636 = vadd.f32 %v1471, %v1612
      %v1637 = vadd.f32 %v1472, %v1617
      %v1638 = vadd.f32 %v1473, %v1620
      %s1639 = scalar_lea.vmem [#allocation2], 48
      %v1640 = vld [vmem:[%s1639] sm:$0xff]
      %v1641 = vld [vmem:[%s1639 + $0x8] sm:$0xff]
      %v1642 = vld [vmem:[%s1639 + $0x18] sm:$0xff]
      %v1643 = vld [vmem:[%s1639 + $0x20] sm:$0xff]
      %v1644 = vld [vmem:[%s1639 + $0x30] sm:$0xff]
      %v1645 = vld [vmem:[%s1639 + $0x38] sm:$0xff]
      %v1646 = vld [vmem:[%s1639 + $0x48] sm:$0xff]
      %v1647 = vld [vmem:[%s1639 + $0x50] sm:$0xff]
      %v1648 = vld [vmem:[%s1639 + $0x60] sm:$0xff]
      %v1649 = vld [vmem:[%s1639 + $0x68] sm:$0xff]
      %v1650 = vld [vmem:[%s1639 + $0x78] sm:$0xff]
      %v1651 = vld [vmem:[%s1639 + $0x80] sm:$0xff]
      %v1652 = vld [vmem:[%s1639 + $0x90] sm:$0xff]
      %v1653 = vld [vmem:[%s1639 + $0x98] sm:$0xff]
      %v1654 = vld [vmem:[%s1639 + $0xa8] sm:$0xff]
      %v1655 = vld [vmem:[%s1639 + $0xb0] sm:$0xff]
      %v1656 = vpack.c.bf16 %v1641, %v1640
      %v1657 = vpack.c.bf16 %v1643, %v1642
      %v1658 = vpack.c.bf16 %v1645, %v1644
      %v1659 = vpack.c.bf16 %v1647, %v1646
      %v1660 = vpack.c.bf16 %v1649, %v1648
      %v1661 = vpack.c.bf16 %v1651, %v1650
      %v1662 = vpack.c.bf16 %v1653, %v1652
      %v1663 = vpack.c.bf16 %v1655, %v1654
      %s1664 = scalar_lea.vmem %s5, 24
      %v1665 = vld [vmem:[%s1664] sm:$0xf]
      %v1667 = vsel %vm656, %v1656, 0
      %v1670 = vsel %vm656, %v1657, 0
      %v1673 = vsel %vm656, %v1658, 0
      %v1676 = vsel %vm656, %v1659, 0
      %v1679 = vsel %vm656, %v1660, 0
      %v1682 = vsel %vm656, %v1661, 0
      %v1685 = vsel %vm656, %v1662, 0
      %v1688 = vsel %vm656, %v1663, 0
      %v1691 = vsel %vm753, %v1665, 0
      %1693 = vmatprep.subr.bf16.mxu0 0
      %1694 = vmatpush1.bf16.msra.mxu0 0
      %1695 = vmatprep.subr.bf16.mxu0 0
      %1696 = vmatpush1.bf16.msra.mxu0 0
      %1697 = vmatprep.subr.bf16.mxu0 0
      %1698 = vmatpush1.bf16.msra.mxu0 0
      %1699 = vmatprep.subr.bf16.mxu0 0
      %1700 = vmatpush1.bf16.msra.mxu0 0
      %1701 = vmatprep.subr.bf16.mxu0 0
      %1702 = vmatpush1.bf16.msra.mxu0 0
      %1703 = vmatprep.subr.bf16.mxu0 0
      %1704 = vmatpush1.bf16.msra.mxu0 0
      %1705 = vmatprep.subr.bf16.mxu0 0
      %1706 = vmatpush1.bf16.msra.mxu0 0
      %1707 = vmatprep.subr.bf16.mxu0 0
      %1708 = vmatpush1.bf16.msra.mxu0 %v1691
      %1709 = vmatprep.subr.bf16.mxu0 0
      %1710 = vmatpush2.bf16.msra.mxu0 0
      %1711 = vmatprep.subr.bf16.mxu0 0
      %1712 = vmatpush2.bf16.msra.mxu0 0
      %1713 = vmatprep.subr.bf16.mxu0 0
      %1714 = vmatpush2.bf16.msra.mxu0 0
      %1715 = vmatprep.subr.bf16.mxu0 0
      %1716 = vmatpush2.bf16.msra.mxu0 0
      %1717 = vmatprep.subr.bf16.mxu0 0
      %1718 = vmatpush2.bf16.msra.mxu0 0
      %1719 = vmatprep.subr.bf16.mxu0 0
      %1720 = vmatpush2.bf16.msra.mxu0 0
      %1721 = vmatprep.subr.bf16.mxu0 0
      %1722 = vmatpush2.bf16.msra.mxu0 0
      %1723 = vmatprep.subr.bf16.mxu0 0
      %1724 = vmatpush2.bf16.msra.mxu0 0
      %1725 = vmatprep.mubr.bf16.mxu0 0
      %1726 = vmatmul.mubr.bf16.gmra.mxu0 %v1667
      %v1727 = vpop.f32.mrf.mxu0
      %v1728 = vadd.f32 0.0, %v1727
      %v1729 = vpop.f32.mrf.mxu0
      %v1730 = vpop.f32.mrf.mxu0
      %v1731 = vadd.f32 0.0, %v1730
      %v1732 = vpop.f32.mrf.mxu0
      %1733 = vmatprep.mubr.bf16.mxu0 0
      %1734 = vmatmul.mubr.bf16.gmra.mxu0 %v1670
      %v1735 = vpop.f32.mrf.mxu0
      %v1736 = vadd.f32 0.0, %v1735
      %v1737 = vpop.f32.mrf.mxu0
      %v1738 = vpop.f32.mrf.mxu0
      %v1739 = vadd.f32 0.0, %v1738
      %v1740 = vpop.f32.mrf.mxu0
      %1741 = vmatprep.mubr.bf16.mxu0 0
      %1742 = vmatmul.mubr.bf16.gmra.mxu0 %v1673
      %v1743 = vpop.f32.mrf.mxu0
      %v1744 = vadd.f32 0.0, %v1743
      %v1745 = vpop.f32.mrf.mxu0
      %v1746 = vpop.f32.mrf.mxu0
      %v1747 = vadd.f32 0.0, %v1746
      %v1748 = vpop.f32.mrf.mxu0
      %1749 = vmatprep.mubr.bf16.mxu0 0
      %1750 = vmatmul.mubr.bf16.gmra.mxu0 %v1676
      %v1751 = vpop.f32.mrf.mxu0
      %v1752 = vadd.f32 0.0, %v1751
      %v1753 = vpop.f32.mrf.mxu0
      %v1754 = vpop.f32.mrf.mxu0
      %v1755 = vadd.f32 0.0, %v1754
      %v1756 = vpop.f32.mrf.mxu0
      %1757 = vmatprep.mubr.bf16.mxu0 0
      %1758 = vmatmul.mubr.bf16.gmra.mxu0 %v1679
      %v1759 = vpop.f32.mrf.mxu0
      %v1760 = vadd.f32 0.0, %v1759
      %v1761 = vpop.f32.mrf.mxu0
      %v1762 = vpop.f32.mrf.mxu0
      %v1763 = vadd.f32 0.0, %v1762
      %v1764 = vpop.f32.mrf.mxu0
      %1765 = vmatprep.mubr.bf16.mxu0 0
      %1766 = vmatmul.mubr.bf16.gmra.mxu0 %v1682
      %v1767 = vpop.f32.mrf.mxu0
      %v1768 = vadd.f32 0.0, %v1767
      %v1769 = vpop.f32.mrf.mxu0
      %v1770 = vpop.f32.mrf.mxu0
      %v1771 = vadd.f32 0.0, %v1770
      %v1772 = vpop.f32.mrf.mxu0
      %1773 = vmatprep.mubr.bf16.mxu0 0
      %1774 = vmatmul.mubr.bf16.gmra.mxu0 %v1685
      %v1775 = vpop.f32.mrf.mxu0
      %v1776 = vadd.f32 0.0, %v1775
      %v1777 = vpop.f32.mrf.mxu0
      %v1778 = vpop.f32.mrf.mxu0
      %v1779 = vadd.f32 0.0, %v1778
      %v1780 = vpop.f32.mrf.mxu0
      %1781 = vmatprep.mubr.bf16.mxu0 0
      %1782 = vmatmul.mubr.bf16.gmra.mxu0 %v1688
      %v1783 = vpop.f32.mrf.mxu0
      %v1784 = vadd.f32 0.0, %v1783
      %v1785 = vpop.f32.mrf.mxu0
      %v1786 = vpop.f32.mrf.mxu0
      %v1787 = vadd.f32 0.0, %v1786
      %v1788 = vpop.f32.mrf.mxu0
      %1789 = vdwg.mxu0
      %v1790 = vadd.f32 %v1623, %v1728
      %v1791 = vadd.f32 %v1624, %v1731
      %v1792 = vadd.f32 %v1625, %v1736
      %v1793 = vadd.f32 %v1626, %v1739
      %v1794 = vadd.f32 %v1627, %v1744
      %v1795 = vadd.f32 %v1628, %v1747
      %v1796 = vadd.f32 %v1629, %v1752
      %v1797 = vadd.f32 %v1630, %v1755
      %v1798 = vadd.f32 %v1631, %v1760
      %v1799 = vadd.f32 %v1632, %v1763
      %v1800 = vadd.f32 %v1633, %v1768
      %v1801 = vadd.f32 %v1634, %v1771
      %v1802 = vadd.f32 %v1635, %v1776
      %v1803 = vadd.f32 %v1636, %v1779
      %v1804 = vadd.f32 %v1637, %v1784
      %v1805 = vadd.f32 %v1638, %v1787
      %v1806 = vld [vmem:[%s1639 + $0x1] sm:$0xff]
      %v1807 = vld [vmem:[%s1639 + $0x9] sm:$0xff]
      %v1808 = vld [vmem:[%s1639 + $0x19] sm:$0xff]
      %v1809 = vld [vmem:[%s1639 + $0x21] sm:$0xff]
      %v1810 = vld [vmem:[%s1639 + $0x31] sm:$0xff]
      %v1811 = vld [vmem:[%s1639 + $0x39] sm:$0xff]
      %v1812 = vld [vmem:[%s1639 + $0x49] sm:$0xff]
      %v1813 = vld [vmem:[%s1639 + $0x51] sm:$0xff]
      %v1814 = vld [vmem:[%s1639 + $0x61] sm:$0xff]
      %v1815 = vld [vmem:[%s1639 + $0x69] sm:$0xff]
      %v1816 = vld [vmem:[%s1639 + $0x79] sm:$0xff]
      %v1817 = vld [vmem:[%s1639 + $0x81] sm:$0xff]
      %v1818 = vld [vmem:[%s1639 + $0x91] sm:$0xff]
      %v1819 = vld [vmem:[%s1639 + $0x99] sm:$0xff]
      %v1820 = vld [vmem:[%s1639 + $0xa9] sm:$0xff]
      %v1821 = vld [vmem:[%s1639 + $0xb1] sm:$0xff]
      %v1822 = vpack.c.bf16 %v1807, %v1806
      %v1823 = vpack.c.bf16 %v1809, %v1808
      %v1824 = vpack.c.bf16 %v1811, %v1810
      %v1825 = vpack.c.bf16 %v1813, %v1812
      %v1826 = vpack.c.bf16 %v1815, %v1814
      %v1827 = vpack.c.bf16 %v1817, %v1816
      %v1828 = vpack.c.bf16 %v1819, %v1818
      %v1829 = vpack.c.bf16 %v1821, %v1820
      %v1830 = vld [vmem:[%s1664 + $0x4] sm:$0xf]
      %v1832 = vsel %vm656, %v1822, 0
      %v1835 = vsel %vm656, %v1823, 0
      %v1838 = vsel %vm656, %v1824, 0
      %v1841 = vsel %vm656, %v1825, 0
      %v1844 = vsel %vm656, %v1826, 0
      %v1847 = vsel %vm656, %v1827, 0
      %v1850 = vsel %vm656, %v1828, 0
      %v1853 = vsel %vm656, %v1829, 0
      %v1856 = vsel %vm753, %v1830, 0
      %1858 = vmatprep.subr.bf16.mxu0 0
      %1859 = vmatpush1.bf16.msra.mxu0 0
      %1860 = vmatprep.subr.bf16.mxu0 0
      %1861 = vmatpush1.bf16.msra.mxu0 0
      %1862 = vmatprep.subr.bf16.mxu0 0
      %1863 = vmatpush1.bf16.msra.mxu0 0
      %1864 = vmatprep.subr.bf16.mxu0 0
      %1865 = vmatpush1.bf16.msra.mxu0 0
      %1866 = vmatprep.subr.bf16.mxu0 0
      %1867 = vmatpush1.bf16.msra.mxu0 0
      %1868 = vmatprep.subr.bf16.mxu0 0
      %1869 = vmatpush1.bf16.msra.mxu0 0
      %1870 = vmatprep.subr.bf16.mxu0 0
      %1871 = vmatpush1.bf16.msra.mxu0 0
      %1872 = vmatprep.subr.bf16.mxu0 0
      %1873 = vmatpush1.bf16.msra.mxu0 %v1856
      %1874 = vmatprep.subr.bf16.mxu0 0
      %1875 = vmatpush2.bf16.msra.mxu0 0
      %1876 = vmatprep.subr.bf16.mxu0 0
      %1877 = vmatpush2.bf16.msra.mxu0 0
      %1878 = vmatprep.subr.bf16.mxu0 0
      %1879 = vmatpush2.bf16.msra.mxu0 0
      %1880 = vmatprep.subr.bf16.mxu0 0
      %1881 = vmatpush2.bf16.msra.mxu0 0
      %1882 = vmatprep.subr.bf16.mxu0 0
      %1883 = vmatpush2.bf16.msra.mxu0 0
      %1884 = vmatprep.subr.bf16.mxu0 0
      %1885 = vmatpush2.bf16.msra.mxu0 0
      %1886 = vmatprep.subr.bf16.mxu0 0
      %1887 = vmatpush2.bf16.msra.mxu0 0
      %1888 = vmatprep.subr.bf16.mxu0 0
      %1889 = vmatpush2.bf16.msra.mxu0 0
      %1890 = vmatprep.mubr.bf16.mxu0 0
      %1891 = vmatmul.mubr.bf16.gmra.mxu0 %v1832
      %v1892 = vpop.f32.mrf.mxu0
      %v1893 = vadd.f32 0.0, %v1892
      %v1894 = vpop.f32.mrf.mxu0
      %v1895 = vpop.f32.mrf.mxu0
      %v1896 = vadd.f32 0.0, %v1895
      %v1897 = vpop.f32.mrf.mxu0
      %1898 = vmatprep.mubr.bf16.mxu0 0
      %1899 = vmatmul.mubr.bf16.gmra.mxu0 %v1835
      %v1900 = vpop.f32.mrf.mxu0
      %v1901 = vadd.f32 0.0, %v1900
      %v1902 = vpop.f32.mrf.mxu0
      %v1903 = vpop.f32.mrf.mxu0
      %v1904 = vadd.f32 0.0, %v1903
      %v1905 = vpop.f32.mrf.mxu0
      %1906 = vmatprep.mubr.bf16.mxu0 0
      %1907 = vmatmul.mubr.bf16.gmra.mxu0 %v1838
      %v1908 = vpop.f32.mrf.mxu0
      %v1909 = vadd.f32 0.0, %v1908
      %v1910 = vpop.f32.mrf.mxu0
      %v1911 = vpop.f32.mrf.mxu0
      %v1912 = vadd.f32 0.0, %v1911
      %v1913 = vpop.f32.mrf.mxu0
      %1914 = vmatprep.mubr.bf16.mxu0 0
      %1915 = vmatmul.mubr.bf16.gmra.mxu0 %v1841
      %v1916 = vpop.f32.mrf.mxu0
      %v1917 = vadd.f32 0.0, %v1916
      %v1918 = vpop.f32.mrf.mxu0
      %v1919 = vpop.f32.mrf.mxu0
      %v1920 = vadd.f32 0.0, %v1919
      %v1921 = vpop.f32.mrf.mxu0
      %1922 = vmatprep.mubr.bf16.mxu0 0
      %1923 = vmatmul.mubr.bf16.gmra.mxu0 %v1844
      %v1924 = vpop.f32.mrf.mxu0
      %v1925 = vadd.f32 0.0, %v1924
      %v1926 = vpop.f32.mrf.mxu0
      %v1927 = vpop.f32.mrf.mxu0
      %v1928 = vadd.f32 0.0, %v1927
      %v1929 = vpop.f32.mrf.mxu0
      %1930 = vmatprep.mubr.bf16.mxu0 0
      %1931 = vmatmul.mubr.bf16.gmra.mxu0 %v1847
      %v1932 = vpop.f32.mrf.mxu0
      %v1933 = vadd.f32 0.0, %v1932
      %v1934 = vpop.f32.mrf.mxu0
      %v1935 = vpop.f32.mrf.mxu0
      %v1936 = vadd.f32 0.0, %v1935
      %v1937 = vpop.f32.mrf.mxu0
      %1938 = vmatprep.mubr.bf16.mxu0 0
      %1939 = vmatmul.mubr.bf16.gmra.mxu0 %v1850
      %v1940 = vpop.f32.mrf.mxu0
      %v1941 = vadd.f32 0.0, %v1940
      %v1942 = vpop.f32.mrf.mxu0
      %v1943 = vpop.f32.mrf.mxu0
      %v1944 = vadd.f32 0.0, %v1943
      %v1945 = vpop.f32.mrf.mxu0
      %1946 = vmatprep.mubr.bf16.mxu0 0
      %1947 = vmatmul.mubr.bf16.gmra.mxu0 %v1853
      %v1948 = vpop.f32.mrf.mxu0
      %v1949 = vadd.f32 0.0, %v1948
      %v1950 = vpop.f32.mrf.mxu0
      %v1951 = vpop.f32.mrf.mxu0
      %v1952 = vadd.f32 0.0, %v1951
      %v1953 = vpop.f32.mrf.mxu0
      %1954 = vdwg.mxu0
      %v1955 = vadd.f32 %v1790, %v1893
      %v1956 = vadd.f32 %v1791, %v1896
      %v1957 = vadd.f32 %v1792, %v1901
      %v1958 = vadd.f32 %v1793, %v1904
      %v1959 = vadd.f32 %v1794, %v1909
      %v1960 = vadd.f32 %v1795, %v1912
      %v1961 = vadd.f32 %v1796, %v1917
      %v1962 = vadd.f32 %v1797, %v1920
      %v1963 = vadd.f32 %v1798, %v1925
      %v1964 = vadd.f32 %v1799, %v1928
      %v1965 = vadd.f32 %v1800, %v1933
      %v1966 = vadd.f32 %v1801, %v1936
      %v1967 = vadd.f32 %v1802, %v1941
      %v1968 = vadd.f32 %v1803, %v1944
      %v1969 = vadd.f32 %v1804, %v1949
      %v1970 = vadd.f32 %v1805, %v1952
      %v1971 = vld [vmem:[%s1639 + $0x2] sm:$0xff]
      %v1972 = vld [vmem:[%s1639 + $0xa] sm:$0xff]
      %v1973 = vld [vmem:[%s1639 + $0x1a] sm:$0xff]
      %v1974 = vld [vmem:[%s1639 + $0x22] sm:$0xff]
      %v1975 = vld [vmem:[%s1639 + $0x32] sm:$0xff]
      %v1976 = vld [vmem:[%s1639 + $0x3a] sm:$0xff]
      %v1977 = vld [vmem:[%s1639 + $0x4a] sm:$0xff]
      %v1978 = vld [vmem:[%s1639 + $0x52] sm:$0xff]
      %v1979 = vld [vmem:[%s1639 + $0x62] sm:$0xff]
      %v1980 = vld [vmem:[%s1639 + $0x6a] sm:$0xff]
      %v1981 = vld [vmem:[%s1639 + $0x7a] sm:$0xff]
      %v1982 = vld [vmem:[%s1639 + $0x82] sm:$0xff]
      %v1983 = vld [vmem:[%s1639 + $0x92] sm:$0xff]
      %v1984 = vld [vmem:[%s1639 + $0x9a] sm:$0xff]
      %v1985 = vld [vmem:[%s1639 + $0xaa] sm:$0xff]
      %v1986 = vld [vmem:[%s1639 + $0xb2] sm:$0xff]
      %v1987 = vpack.c.bf16 %v1972, %v1971
      %v1988 = vpack.c.bf16 %v1974, %v1973
      %v1989 = vpack.c.bf16 %v1976, %v1975
      %v1990 = vpack.c.bf16 %v1978, %v1977
      %v1991 = vpack.c.bf16 %v1980, %v1979
      %v1992 = vpack.c.bf16 %v1982, %v1981
      %v1993 = vpack.c.bf16 %v1984, %v1983
      %v1994 = vpack.c.bf16 %v1986, %v1985
      %v1995 = vld [vmem:[%s1664 + $0x8] sm:$0xf]
      %v1997 = vsel %vm656, %v1987, 0
      %v2000 = vsel %vm656, %v1988, 0
      %v2003 = vsel %vm656, %v1989, 0
      %v2006 = vsel %vm656, %v1990, 0
      %v2009 = vsel %vm656, %v1991, 0
      %v2012 = vsel %vm656, %v1992, 0
      %v2015 = vsel %vm656, %v1993, 0
      %v2018 = vsel %vm656, %v1994, 0
      %v2021 = vsel %vm753, %v1995, 0
      %2023 = vmatprep.subr.bf16.mxu0 0
      %2024 = vmatpush1.bf16.msra.mxu0 0
      %2025 = vmatprep.subr.bf16.mxu0 0
      %2026 = vmatpush1.bf16.msra.mxu0 0
      %2027 = vmatprep.subr.bf16.mxu0 0
      %2028 = vmatpush1.bf16.msra.mxu0 0
      %2029 = vmatprep.subr.bf16.mxu0 0
      %2030 = vmatpush1.bf16.msra.mxu0 0
      %2031 = vmatprep.subr.bf16.mxu0 0
      %2032 = vmatpush1.bf16.msra.mxu0 0
      %2033 = vmatprep.subr.bf16.mxu0 0
      %2034 = vmatpush1.bf16.msra.mxu0 0
      %2035 = vmatprep.subr.bf16.mxu0 0
      %2036 = vmatpush1.bf16.msra.mxu0 0
      %2037 = vmatprep.subr.bf16.mxu0 0
      %2038 = vmatpush1.bf16.msra.mxu0 %v2021
      %2039 = vmatprep.subr.bf16.mxu0 0
      %2040 = vmatpush2.bf16.msra.mxu0 0
      %2041 = vmatprep.subr.bf16.mxu0 0
      %2042 = vmatpush2.bf16.msra.mxu0 0
      %2043 = vmatprep.subr.bf16.mxu0 0
      %2044 = vmatpush2.bf16.msra.mxu0 0
      %2045 = vmatprep.subr.bf16.mxu0 0
      %2046 = vmatpush2.bf16.msra.mxu0 0
      %2047 = vmatprep.subr.bf16.mxu0 0
      %2048 = vmatpush2.bf16.msra.mxu0 0
      %2049 = vmatprep.subr.bf16.mxu0 0
      %2050 = vmatpush2.bf16.msra.mxu0 0
      %2051 = vmatprep.subr.bf16.mxu0 0
      %2052 = vmatpush2.bf16.msra.mxu0 0
      %2053 = vmatprep.subr.bf16.mxu0 0
      %2054 = vmatpush2.bf16.msra.mxu0 0
      %2055 = vmatprep.mubr.bf16.mxu0 0
      %2056 = vmatmul.mubr.bf16.gmra.mxu0 %v1997
      %v2057 = vpop.f32.mrf.mxu0
      %v2058 = vadd.f32 0.0, %v2057
      %v2059 = vpop.f32.mrf.mxu0
      %v2060 = vpop.f32.mrf.mxu0
      %v2061 = vadd.f32 0.0, %v2060
      %v2062 = vpop.f32.mrf.mxu0
      %2063 = vmatprep.mubr.bf16.mxu0 0
      %2064 = vmatmul.mubr.bf16.gmra.mxu0 %v2000
      %v2065 = vpop.f32.mrf.mxu0
      %v2066 = vadd.f32 0.0, %v2065
      %v2067 = vpop.f32.mrf.mxu0
      %v2068 = vpop.f32.mrf.mxu0
      %v2069 = vadd.f32 0.0, %v2068
      %v2070 = vpop.f32.mrf.mxu0
      %2071 = vmatprep.mubr.bf16.mxu0 0
      %2072 = vmatmul.mubr.bf16.gmra.mxu0 %v2003
      %v2073 = vpop.f32.mrf.mxu0
      %v2074 = vadd.f32 0.0, %v2073
      %v2075 = vpop.f32.mrf.mxu0
      %v2076 = vpop.f32.mrf.mxu0
      %v2077 = vadd.f32 0.0, %v2076
      %v2078 = vpop.f32.mrf.mxu0
      %2079 = vmatprep.mubr.bf16.mxu0 0
      %2080 = vmatmul.mubr.bf16.gmra.mxu0 %v2006
      %v2081 = vpop.f32.mrf.mxu0
      %v2082 = vadd.f32 0.0, %v2081
      %v2083 = vpop.f32.mrf.mxu0
      %v2084 = vpop.f32.mrf.mxu0
      %v2085 = vadd.f32 0.0, %v2084
      %v2086 = vpop.f32.mrf.mxu0
      %2087 = vmatprep.mubr.bf16.mxu0 0
      %2088 = vmatmul.mubr.bf16.gmra.mxu0 %v2009
      %v2089 = vpop.f32.mrf.mxu0
      %v2090 = vadd.f32 0.0, %v2089
      %v2091 = vpop.f32.mrf.mxu0
      %v2092 = vpop.f32.mrf.mxu0
      %v2093 = vadd.f32 0.0, %v2092
      %v2094 = vpop.f32.mrf.mxu0
      %2095 = vmatprep.mubr.bf16.mxu0 0
      %2096 = vmatmul.mubr.bf16.gmra.mxu0 %v2012
      %v2097 = vpop.f32.mrf.mxu0
      %v2098 = vadd.f32 0.0, %v2097
      %v2099 = vpop.f32.mrf.mxu0
      %v2100 = vpop.f32.mrf.mxu0
      %v2101 = vadd.f32 0.0, %v2100
      %v2102 = vpop.f32.mrf.mxu0
      %2103 = vmatprep.mubr.bf16.mxu0 0
      %2104 = vmatmul.mubr.bf16.gmra.mxu0 %v2015
      %v2105 = vpop.f32.mrf.mxu0
      %v2106 = vadd.f32 0.0, %v2105
      %v2107 = vpop.f32.mrf.mxu0
      %v2108 = vpop.f32.mrf.mxu0
      %v2109 = vadd.f32 0.0, %v2108
      %v2110 = vpop.f32.mrf.mxu0
      %2111 = vmatprep.mubr.bf16.mxu0 0
      %2112 = vmatmul.mubr.bf16.gmra.mxu0 %v2018
      %v2113 = vpop.f32.mrf.mxu0
      %v2114 = vadd.f32 0.0, %v2113
      %v2115 = vpop.f32.mrf.mxu0
      %v2116 = vpop.f32.mrf.mxu0
      %v2117 = vadd.f32 0.0, %v2116
      %v2118 = vpop.f32.mrf.mxu0
      %2119 = vdwg.mxu0
      %v2120 = vadd.f32 %v1955, %v2058
      %v2121 = vadd.f32 %v1956, %v2061
      %v2122 = vadd.f32 %v1957, %v2066
      %v2123 = vadd.f32 %v1958, %v2069
      %v2124 = vadd.f32 %v1959, %v2074
      %v2125 = vadd.f32 %v1960, %v2077
      %v2126 = vadd.f32 %v1961, %v2082
      %v2127 = vadd.f32 %v1962, %v2085
      %v2128 = vadd.f32 %v1963, %v2090
      %v2129 = vadd.f32 %v1964, %v2093
      %v2130 = vadd.f32 %v1965, %v2098
      %v2131 = vadd.f32 %v1966, %v2101
      %v2132 = vadd.f32 %v1967, %v2106
      %v2133 = vadd.f32 %v1968, %v2109
      %v2134 = vadd.f32 %v1969, %v2114
      %v2135 = vadd.f32 %v1970, %v2117
      %v2136 = vpack.c.bf16 %v2121, %v2120
      %v2137 = vpack.c.bf16 %v2123, %v2122
      %v2138 = vpack.c.bf16 %v2125, %v2124
      %v2139 = vpack.c.bf16 %v2127, %v2126
      %v2140 = vpack.c.bf16 %v2129, %v2128
      %v2141 = vpack.c.bf16 %v2131, %v2130
      %v2142 = vpack.c.bf16 %v2133, %v2132
      %v2143 = vpack.c.bf16 %v2135, %v2134
      %v2152 = vunpack.c.l.b16 %v2136
      %v2153 = vunpack.c.h.b16 %v2136
      %v2154 = vunpack.c.l.b16 %v2137
      %v2155 = vunpack.c.h.b16 %v2137
      %v2156 = vunpack.c.l.b16 %v2138
      %v2157 = vunpack.c.h.b16 %v2138
      %v2158 = vunpack.c.l.b16 %v2139
      %v2159 = vunpack.c.h.b16 %v2139
      %v2160 = vunpack.c.l.b16 %v2140
      %v2161 = vunpack.c.h.b16 %v2140
      %v2162 = vunpack.c.l.b16 %v2141
      %v2163 = vunpack.c.h.b16 %v2141
      %v2164 = vunpack.c.l.b16 %v2142
      %v2165 = vunpack.c.h.b16 %v2142
      %v2166 = vunpack.c.l.b16 %v2143
      %v2167 = vunpack.c.h.b16 %v2143
      %v2168 = vpack.c.b16 %v2152, %v2152
      %v2169 = vpack.c.b16 %v2153, %v2153
      %v2170 = vpack.c.b16 %v2154, %v2154
      %v2171 = vpack.c.b16 %v2155, %v2155
      %v2172 = vpack.c.b16 %v2156, %v2156
      %v2173 = vpack.c.b16 %v2157, %v2157
      %v2174 = vpack.c.b16 %v2158, %v2158
      %v2175 = vpack.c.b16 %v2159, %v2159
      %v2176 = vpack.c.b16 %v2160, %v2160
      %v2177 = vpack.c.b16 %v2161, %v2161
      %v2178 = vpack.c.b16 %v2162, %v2162
      %v2179 = vpack.c.b16 %v2163, %v2163
      %v2180 = vpack.c.b16 %v2164, %v2164
      %v2181 = vpack.c.b16 %v2165, %v2165
      %v2182 = vpack.c.b16 %v2166, %v2166
      %v2183 = vpack.c.b16 %v2167, %v2167
      %vm2200 = vcmask 60416
      %2201 = vst.msk [vmem:[%s458] sm:$0xf] %vm2200, %v2168
      %2202 = vst.msk [vmem:[%s458 + $0x4] sm:$0xf] %vm2200, %v2169
      %2203 = vst.msk [vmem:[%s458 + $0x8] sm:$0xf] %vm2200, %v2170
      %2204 = vst.msk [vmem:[%s458 + $0xc] sm:$0xf] %vm2200, %v2171
      %2205 = vst.msk [vmem:[%s458 + $0x10] sm:$0xf] %vm2200, %v2172
      %2206 = vst.msk [vmem:[%s458 + $0x14] sm:$0xf] %vm2200, %v2173
      %2207 = vst.msk [vmem:[%s458 + $0x18] sm:$0xf] %vm2200, %v2174
      %2208 = vst.msk [vmem:[%s458 + $0x1c] sm:$0xf] %vm2200, %v2175
      %2209 = vst.msk [vmem:[%s458 + $0x20] sm:$0xf] %vm2200, %v2176
      %2210 = vst.msk [vmem:[%s458 + $0x24] sm:$0xf] %vm2200, %v2177
      %2211 = vst.msk [vmem:[%s458 + $0x28] sm:$0xf] %vm2200, %v2178
      %2212 = vst.msk [vmem:[%s458 + $0x2c] sm:$0xf] %vm2200, %v2179
      %2213 = vst.msk [vmem:[%s458 + $0x30] sm:$0xf] %vm2200, %v2180
      %2214 = vst.msk [vmem:[%s458 + $0x34] sm:$0xf] %vm2200, %v2181
      %2215 = vst.msk [vmem:[%s458 + $0x38] sm:$0xf] %vm2200, %v2182
      %2216 = vst.msk [vmem:[%s458 + $0x3c] sm:$0xf] %vm2200, %v2183
      %v2217 = vsel %vm656, %v2120, 0.0
      %v2218 = vsel %vm656, %v2121, 0.0
      %v2219 = vadd.f32 %v2217, %v2218
      %v2220 = vsel %vm656, %v2122, 0.0
      %v2221 = vadd.f32 %v2219, %v2220
      %v2222 = vsel %vm656, %v2123, 0.0
      %v2223 = vadd.f32 %v2221, %v2222
      %v2224 = vsel %vm656, %v2124, 0.0
      %v2225 = vadd.f32 %v2223, %v2224
      %v2226 = vsel %vm656, %v2125, 0.0
      %v2227 = vadd.f32 %v2225, %v2226
      %v2228 = vsel %vm656, %v2126, 0.0
      %v2229 = vadd.f32 %v2227, %v2228
      %v2230 = vsel %vm656, %v2127, 0.0
      %v2231 = vadd.f32 %v2229, %v2230
      %v2232 = vsel %vm656, %v2128, 0.0
      %v2233 = vadd.f32 %v2231, %v2232
      %v2234 = vsel %vm656, %v2129, 0.0
      %v2235 = vadd.f32 %v2233, %v2234
      %v2236 = vsel %vm656, %v2130, 0.0
      %v2237 = vadd.f32 %v2235, %v2236
      %v2238 = vsel %vm656, %v2131, 0.0
      %v2239 = vadd.f32 %v2237, %v2238
      %v2240 = vsel %vm656, %v2132, 0.0
      %v2241 = vadd.f32 %v2239, %v2240
      %v2242 = vsel %vm656, %v2133, 0.0
      %v2243 = vadd.f32 %v2241, %v2242
      %v2244 = vsel %vm656, %v2134, 0.0
      %v2245 = vadd.f32 %v2243, %v2244
      %v2246 = vsel %vm656, %v2135, 0.0
      %v2247 = vadd.f32 %v2245, %v2246
      %v2248 = vrot.slane %v2247, 4
      %v2249 = vadd.f32 %v2247, %v2248
      %v2250 = vrot.slane %v2249, 2
      %v2251 = vadd.f32 %v2249, %v2250
      %v2252 = vrot.slane %v2251, 1
      %v2253 = vadd.f32 %v2251, %v2252
      %2254 = vst.msk [vmem:[%s467] sm:$0x1] %vm635, %v2253
      %v2255 = vmul.f32 %v2120, %v2120
      %v2256 = vmul.f32 %v2121, %v2121
      %v2257 = vmul.f32 %v2122, %v2122
      %v2258 = vmul.f32 %v2123, %v2123
      %v2259 = vmul.f32 %v2124, %v2124
      %v2260 = vmul.f32 %v2125, %v2125
      %v2261 = vmul.f32 %v2126, %v2126
      %v2262 = vmul.f32 %v2127, %v2127
      %v2263 = vmul.f32 %v2128, %v2128
      %v2264 = vmul.f32 %v2129, %v2129
      %v2265 = vmul.f32 %v2130, %v2130
      %v2266 = vmul.f32 %v2131, %v2131
      %v2267 = vmul.f32 %v2132, %v2132
      %v2268 = vmul.f32 %v2133, %v2133
      %v2269 = vmul.f32 %v2134, %v2134
      %v2270 = vmul.f32 %v2135, %v2135
      %v2271 = vsel %vm656, %v2255, 0.0
      %v2272 = vsel %vm656, %v2256, 0.0
      %v2273 = vadd.f32 %v2271, %v2272
      %v2274 = vsel %vm656, %v2257, 0.0
      %v2275 = vadd.f32 %v2273, %v2274
      %v2276 = vsel %vm656, %v2258, 0.0
      %v2277 = vadd.f32 %v2275, %v2276
      %v2278 = vsel %vm656, %v2259, 0.0
      %v2279 = vadd.f32 %v2277, %v2278
      %v2280 = vsel %vm656, %v2260, 0.0
      %v2281 = vadd.f32 %v2279, %v2280
      %v2282 = vsel %vm656, %v2261, 0.0
      %v2283 = vadd.f32 %v2281, %v2282
      %v2284 = vsel %vm656, %v2262, 0.0
      %v2285 = vadd.f32 %v2283, %v2284
      %v2286 = vsel %vm656, %v2263, 0.0
      %v2287 = vadd.f32 %v2285, %v2286
      %v2288 = vsel %vm656, %v2264, 0.0
      %v2289 = vadd.f32 %v2287, %v2288
      %v2290 = vsel %vm656, %v2265, 0.0
      %v2291 = vadd.f32 %v2289, %v2290
      %v2292 = vsel %vm656, %v2266, 0.0
      %v2293 = vadd.f32 %v2291, %v2292
      %v2294 = vsel %vm656, %v2267, 0.0
      %v2295 = vadd.f32 %v2293, %v2294
      %v2296 = vsel %vm656, %v2268, 0.0
      %v2297 = vadd.f32 %v2295, %v2296
      %v2298 = vsel %vm656, %v2269, 0.0
      %v2299 = vadd.f32 %v2297, %v2298
      %v2300 = vsel %vm656, %v2270, 0.0
      %v2301 = vadd.f32 %v2299, %v2300
      %v2302 = vrot.slane %v2301, 4
      %v2303 = vadd.f32 %v2301, %v2302
      %v2304 = vrot.slane %v2303, 2
      %v2305 = vadd.f32 %v2303, %v2304
      %v2306 = vrot.slane %v2305, 1
      %v2307 = vadd.f32 %v2305, %v2306
      %2308 = vst.msk [vmem:[%s467 + $0x1] sm:$0x1] %vm635, %v2307
      %s2309 = smul.u32 8, %s24
      %p2310 = scmp.lt.s32.totalorder %s23, 1
      %s2311 = scalar_select %p2310, %s23, 1
      %p2312 = scmp.lt.s32.totalorder %s2309, 15
      %s2313 = scalar_select %p2312, %s2309, 15
      %s2314 = smul.addr %s2313, 2
      %s2315 = smul.addr %s2311, 32
      %s2316 = sadd.s32 %s2314, %s2315
      %s2317 = smul.addr %s2316, 4
      %s2318 = scalar_lea.vmem %s6, %s2317
      %p2319 = scmp.lt.s32.totalorder %s23, 1
      %s2320 = scalar_select %p2319, %s23, 1
      %p2321 = scmp.lt.s32.totalorder %s24, 1
      %s2322 = scalar_select %p2321, %s24, 1
      %s2323 = smul.addr %s2320, 2
      %s2324 = sadd.s32 %s2322, %s2323
      %s2325 = smul.addr %s2324, 2
      %s2326 = scalar_lea.vmem %s7, %s2325
      // Predicated region
      $region45: #{resblock_forward.4} parent=43 // pred_check
        %p2327 = pneg %p214
      $region46: #{resblock_forward.4} parent=43 // pred_check_branch
        %2329 = sbr.rel (%p2327) target = $region48
      $region47: #{resblock_forward.4} parent=43 // pred_region
        %s2330 = smul.u32 8, %s24
      $region48: #{resblock_forward.4} parent=43 // pred_fallthru
        _
      // Predicated region
      $region49: #{resblock_forward.4} parent=43 // pred_check
        %p2331 = pneg %p242
      $region50: #{resblock_forward.4} parent=43 // pred_check_branch
        %2333 = sbr.rel (%p2331) target = $region52
      $region51: #{resblock_forward.4} parent=43 // pred_region
        _
      $region52: #{resblock_forward.4} parent=43 // pred_fallthru
        _
    $region44: #{resblock_forward.4} parent=5 // pred_fallthru
      _
    %p2334 = scmp.le.s32.totalorder 2, %s14
    // Predicated region
    $region53: #{resblock_forward.4} parent=5 // pred_check
      %p2335 = pneg %p2334
    $region54: #{resblock_forward.4} parent=5 // pred_check_branch
      %2337 = sbr.rel (%p2335) target = $region56
    $region55: #{resblock_forward.4} parent=5 // pred_region
      %s2338 = ssub.s32 %s14, 2
      // Predicated region
      $region57: #{resblock_forward.4} parent=55 // pred_check
        %p2339 = pneg %p220
      $region58: #{resblock_forward.4} parent=55 // pred_check_branch
        %2341 = sbr.rel (%p2339) target = $region60
      $region59: #{resblock_forward.4} parent=55 // pred_region
        %s2342 = smul.u32 8, %s26
        %p2343 = scmp.lt.s32.totalorder %s25, 1
        %s2344 = scalar_select %p2343, %s25, 1
        %p2345 = scmp.lt.s32.totalorder %s2342, 15
        %s2346 = scalar_select %p2345, %s2342, 15
        %s2347 = smul.addr %s2346, 2
        %s2348 = smul.addr %s2344, 32
        %s2349 = sadd.s32 %s2347, %s2348
        %s2350 = smul.addr %s2349, 4
        %s2351 = scalar_lea.vmem %s6, %s2350
      $region60: #{resblock_forward.4} parent=55 // pred_fallthru
        _
      // Predicated region
      $region61: #{resblock_forward.4} parent=55 // pred_check
        %p2352 = pneg %p248
      $region62: #{resblock_forward.4} parent=55 // pred_check_branch
        %2354 = sbr.rel (%p2352) target = $region64
      $region63: #{resblock_forward.4} parent=55 // pred_region
        %p2355 = scmp.lt.s32.totalorder %s25, 1
        %s2356 = scalar_select %p2355, %s25, 1
        %p2357 = scmp.lt.s32.totalorder %s26, 1
        %s2358 = scalar_select %p2357, %s26, 1
        %s2359 = smul.addr %s2356, 2
        %s2360 = sadd.s32 %s2358, %s2359
        %s2361 = smul.addr %s2360, 2
        %s2362 = scalar_lea.vmem %s7, %s2361
      $region64: #{resblock_forward.4} parent=55 // pred_fallthru
        _
    $region56: #{resblock_forward.4} parent=5 // pred_fallthru
      _
  $region6: #{resblock_forward.4} parent=0 // loop_footer
    %s18 = sadd.s32 1, %s14
  $region7: #{resblock_forward.4} parent=0 // loop_footer_branch
    %13 = sbr.rel target = $region3
  $region8: #{resblock_forward.4} parent=0 // loop_exit
    _

// kernel: resblock_forward.3
$region0: #{resblock_forward.3}
  #allocation0 [shape = 'u32[]', space=smem, size = 0x4, offset = 0x4, fixed_abs, tag = 'smem constant byte address 0x4 - core index']
  #allocation1 [shape = 'u32[144,128]{1,0:T(1,128)}', space=vmem, size = 0x12000, scoped, tag = 'internal scratch']
  #allocation2 [shape = 'f32[10,18,4]{2,1,0:T(8,128)}', space=vmem, size = 0x1e000, scoped, tag = 'scratch operand']
  %s0 = inlined_call_operand.vmem [shape: f32[2,16,16,4], index: 0, kind: input, shape index: {}, may-alias: {0,1,2}]
  %s1 = inlined_call_operand.vmem [shape: f32[2,16,16,4], index: 1, kind: input, shape index: {}, may-alias: {0,1,2}]
  %s2 = inlined_call_operand.vmem [shape: f32[2,16,16,4], index: 2, kind: input, shape index: {}, may-alias: {0,1,2}]
  %s3 = inlined_call_operand.vmem [shape: f32[1,4], index: 3, kind: input, shape index: {}]
  %s4 = inlined_call_operand.vmem [shape: f32[1,4], index: 4, kind: input, shape index: {}]
  %s5 = inlined_call_operand.vmem [shape: bf16[3,12,8], index: 5, kind: input, shape index: {}]
  %s6 = inlined_call_operand.vmem [shape: bf16[2,16,16,8], index: 6, kind: output, shape index: {0}]
  %s7 = inlined_call_operand.vmem [shape: f32[2,2,2,8], index: 7, kind: output, shape index: {1}]
  %8 = xla_tuple %s6, %s7
  %s9 = sld [smem:[#allocation0]]
  $region65: #{resblock_forward.3} parent=0
    _
  %s11 = ssub.s32 1, %s9
  %s12 = scalar_select 0, %s11, %s9
  loop: start=0, step=1, limit=6
  $region2: #{resblock_forward.3} parent=0 // loop_pre_header
    _
  $region3: #{resblock_forward.3} parent=0 // loop_header
    %s14 = sphi 0, %s18
    %p15 = scmp.ge.s32.totalorder %s14, 6
    %s21 = sphi 0, %s33
    %s22 = sphi 0, %s29
    %s23 = sphi 0, %s21
    %s24 = sphi 0, %s22
    %s25 = sphi 0, %s23
    %s26 = sphi 0, %s24
    %s38 = sphi 0, %s40
    %s41 = sphi 0, %s38
    %s42 = sphi 0, %s41
    %s58 = sphi 0, %s42
    %s74 = sphi 0, %s76
    %s77 = sphi 0, %s74
    %s78 = sphi 0, %s77
    %s94 = sphi 0, %s78
    %s110 = sphi 0, %s112
    %s113 = sphi 0, %s110
    %s114 = sphi 0, %s113
    %s130 = sphi 0, %s114
    %s134 = sphi 0, %s134
    %s136 = sphi 0, %s134
    %s137 = sphi 0, %s136
    %s151 = sphi 0, %s137
    %s155 = sphi 0, %s155
    %s157 = sphi 0, %s155
    %s158 = sphi 0, %s157
    %s172 = sphi 0, %s158
    %s176 = sphi 0, %s176
    %s178 = sphi 0, %s176
    %s179 = sphi 0, %s178
    %s193 = sphi 0, %s179
    %s201 = sphi 0, %s203
    %s204 = sphi 0, %s201
    %s205 = sphi 0, %s204
    %s221 = sphi 0, %s205
    %s229 = sphi 0, %s231
    %s232 = sphi 0, %s229
    %s233 = sphi 0, %s232
    %s249 = sphi 0, %s233
  $region4: #{resblock_forward.3} parent=0 // loop_header_branch
    %17 = sbr.rel (%p15) target = $region8
  $region5: #{resblock_forward.3} parent=0 // loop_body
    %s19 = ssub.s32 %s14, 1
    %s20 = ssub.s32 %s14, 2
    %s27 = sadd.s32 1, %s22
    %p28 = scmp.ge.s32.totalorder %s27, 2
    %s29 = scalar_select %p28, 0, %s27
    %s30 = sadd.s32 1, %s21
    %s31 = scalar_select %p28, %s30, %s21
    %p32 = scmp.ge.s32.totalorder %s31, 2
    %s33 = scalar_select %p32, 0, %s31
    %s34 = ssub.s32 %s21, %s33
    %s35 = ssub.s32 %s22, %s29
    %s36 = sor.u32 %s34, %s35
    %p37 = scmp.eq.s32.totalorder %s36, 0
    %s39 = sadd.s32 %s38, 1
    %s40 = scalar_select %p37, %s38, %s39
    %p43 = pneg %p37
    %p44 = scmp.eq.s32.totalorder %s14, 3
    %p45 = por %p43, %p44
    %p46 = scmp.ne.s32.totalorder %s38, %s41
    %p47 = scmp.eq.s32.totalorder %s14, 0
    %p48 = por %p46, %p47
    %p49 = scmp.ne.s32.totalorder %s38, %s41
    %p50 = scmp.eq.s32.totalorder %s19, 3
    %p51 = por %p49, %p50
    %p52 = scmp.ne.s32.totalorder %s41, %s42
    %p53 = scmp.eq.s32.totalorder %s19, 0
    %p54 = por %p52, %p53
    %p55 = scmp.ne.s32.totalorder %s41, %s42
    %p56 = scmp.eq.s32.totalorder %s20, 3
    %p57 = por %p55, %p56
    %p59 = scmp.ne.s32.totalorder %s42, %s58
    %p60 = scmp.eq.s32.totalorder %s20, 0
    %p61 = por %p59, %p60
    %s62 = smul.u32 %s22, 8
    %s63 = ssub.s32 %s62, 1
    %p64 = scmp.gt.s32.totalorder %s63, 0
    %s65 = scalar_select %p64, %s63, 0
    %s66 = smul.u32 %s29, 8
    %s67 = ssub.s32 %s66, 1
    %p68 = scmp.gt.s32.totalorder %s67, 0
    %s69 = scalar_select %p68, %s67, 0
    %s70 = ssub.s32 %s21, %s33
    %s71 = ssub.s32 %s65, %s69
    %s72 = sor.u32 %s70, %s71
    %p73 = scmp.eq.s32.totalorder %s72, 0
    %s75 = sadd.s32 %s74, 1
    %s76 = scalar_select %p73, %s74, %s75
    %p79 = pneg %p73
    %p80 = scmp.eq.s32.totalorder %s14, 3
    %p81 = por %p79, %p80
    %p82 = scmp.ne.s32.totalorder %s74, %s77
    %p83 = scmp.eq.s32.totalorder %s14, 0
    %p84 = por %p82, %p83
    %p85 = scmp.ne.s32.totalorder %s74, %s77
    %p86 = scmp.eq.s32.totalorder %s19, 3
    %p87 = por %p85, %p86
    %p88 = scmp.ne.s32.totalorder %s77, %s78
    %p89 = scmp.eq.s32.totalorder %s19, 0
    %p90 = por %p88, %p89
    %p91 = scmp.ne.s32.totalorder %s77, %s78
    %p92 = scmp.eq.s32.totalorder %s20, 3
    %p93 = por %p91, %p92
    %p95 = scmp.ne.s32.totalorder %s78, %s94
    %p96 = scmp.eq.s32.totalorder %s20, 0
    %p97 = por %p95, %p96
    %s98 = sadd.s32 %s22, 1
    %s99 = smul.u32 %s98, 8
    %p100 = scmp.lt.s32.totalorder %s99, 15
    %s101 = scalar_select %p100, %s99, 15
    %s102 = sadd.s32 %s29, 1
    %s103 = smul.u32 %s102, 8
    %p104 = scmp.lt.s32.totalorder %s103, 15
    %s105 = scalar_select %p104, %s103, 15
    %s106 = ssub.s32 %s21, %s33
    %s107 = ssub.s32 %s101, %s105
    %s108 = sor.u32 %s106, %s107
    %p109 = scmp.eq.s32.totalorder %s108, 0
    %s111 = sadd.s32 %s110, 1
    %s112 = scalar_select %p109, %s110, %s111
    %p115 = pneg %p109
    %p116 = scmp.eq.s32.totalorder %s14, 3
    %p117 = por %p115, %p116
    %p118 = scmp.ne.s32.totalorder %s110, %s113
    %p119 = scmp.eq.s32.totalorder %s14, 0
    %p120 = por %p118, %p119
    %p121 = scmp.ne.s32.totalorder %s110, %s113
    %p122 = scmp.eq.s32.totalorder %s19, 3
    %p123 = por %p121, %p122
    %p124 = scmp.ne.s32.totalorder %s113, %s114
    %p125 = scmp.eq.s32.totalorder %s19, 0
    %p126 = por %p124, %p125
    %p127 = scmp.ne.s32.totalorder %s113, %s114
    %p128 = scmp.eq.s32.totalorder %s20, 3
    %p129 = por %p127, %p128
    %p131 = scmp.ne.s32.totalorder %s114, %s130
    %p132 = scmp.eq.s32.totalorder %s20, 0
    %p133 = por %p131, %p132
    %s135 = sadd.s32 %s134, 1
    %p138 = scmp.eq.s32.totalorder %s14, 3
    %p139 = scmp.ne.s32.totalorder %s134, %s136
    %p140 = scmp.eq.s32.totalorder %s14, 0
    %p141 = por %p139, %p140
    %p142 = scmp.ne.s32.totalorder %s134, %s136
    %p143 = scmp.eq.s32.totalorder %s19, 3
    %p144 = por %p142, %p143
    %p145 = scmp.ne.s32.totalorder %s136, %s137
    %p146 = scmp.eq.s32.totalorder %s19, 0
    %p147 = por %p145, %p146
    %p148 = scmp.ne.s32.totalorder %s136, %s137
    %p149 = scmp.eq.s32.totalorder %s20, 3
    %p150 = por %p148, %p149
    %p152 = scmp.ne.s32.totalorder %s137, %s151
    %p153 = scmp.eq.s32.totalorder %s20, 0
    %p154 = por %p152, %p153
    %s156 = sadd.s32 %s155, 1
    %p159 = scmp.eq.s32.totalorder %s14, 3
    %p160 = scmp.ne.s32.totalorder %s155, %s157
    %p161 = scmp.eq.s32.totalorder %s14, 0
    %p162 = por %p160, %p161
    %p163 = scmp.ne.s32.totalorder %s155, %s157
    %p164 = scmp.eq.s32.totalorder %s19, 3
    %p165 = por %p163, %p164
    %p166 = scmp.ne.s32.totalorder %s157, %s158
    %p167 = scmp.eq.s32.totalorder %s19, 0
    %p168 = por %p166, %p167
    %p169 = scmp.ne.s32.totalorder %s157, %s158
    %p170 = scmp.eq.s32.totalorder %s20, 3
    %p171 = por %p169, %p170
    %p173 = scmp.ne.s32.totalorder %s158, %s172
    %p174 = scmp.eq.s32.totalorder %s20, 0
    %p175 = por %p173, %p174
    %s177 = sadd.s32 %s176, 1
    %p180 = scmp.eq.s32.totalorder %s14, 3
    %p181 = scmp.ne.s32.totalorder %s176, %s178
    %p182 = scmp.eq.s32.totalorder %s14, 0
    %p183 = por %p181, %p182
    %p184 = scmp.ne.s32.totalorder %s176, %s178
    %p185 = scmp.eq.s32.totalorder %s19, 3
    %p186 = por %p184, %p185
    %p187 = scmp.ne.s32.totalorder %s178, %s179
    %p188 = scmp.eq.s32.totalorder %s19, 0
    %p189 = por %p187, %p188
    %p190 = scmp.ne.s32.totalorder %s178, %s179
    %p191 = scmp.eq.s32.totalorder %s20, 3
    %p192 = por %p190, %p191
    %p194 = scmp.ne.s32.totalorder %s179, %s193
    %p195 = scmp.eq.s32.totalorder %s20, 0
    %p196 = por %p194, %p195
    %s197 = ssub.s32 %s21, %s33
    %s198 = ssub.s32 %s22, %s29
    %s199 = sor.u32 %s197, %s198
    %p200 = scmp.eq.s32.totalorder %s199, 0
    %s202 = sadd.s32 %s201, 1
    %s203 = scalar_select %p200, %s201, %s202
    %p206 = pneg %p200
    %p207 = scmp.eq.s32.totalorder %s14, 3
    %p208 = por %p206, %p207
    %p209 = scmp.ne.s32.totalorder %s201, %s204
    %p210 = scmp.eq.s32.totalorder %s14, 0
    %p211 = por %p209, %p210
    %p212 = scmp.ne.s32.totalorder %s201, %s204
    %p213 = scmp.eq.s32.totalorder %s19, 3
    %p214 = por %p212, %p213
    %p215 = scmp.ne.s32.totalorder %s204, %s205
    %p216 = scmp.eq.s32.totalorder %s19, 0
    %p217 = por %p215, %p216
    %p218 = scmp.ne.s32.totalorder %s204, %s205
    %p219 = scmp.eq.s32.totalorder %s20, 3
    %p220 = por %p218, %p219
    %p222 = scmp.ne.s32.totalorder %s205, %s221
    %p223 = scmp.eq.s32.totalorder %s20, 0
    %p224 = por %p222, %p223
    %s225 = ssub.s32 %s21, %s33
    %s226 = ssub.s32 %s22, %s29
    %s227 = sor.u32 %s225, %s226
    %p228 = scmp.eq.s32.totalorder %s227, 0
    %s230 = sadd.s32 %s229, 1
    %s231 = scalar_select %p228, %s229, %s230
    %p234 = pneg %p228
    %p235 = scmp.eq.s32.totalorder %s14, 3
    %p236 = por %p234, %p235
    %p237 = scmp.ne.s32.totalorder %s229, %s232
    %p238 = scmp.eq.s32.totalorder %s14, 0
    %p239 = por %p237, %p238
    %p240 = scmp.ne.s32.totalorder %s229, %s232
    %p241 = scmp.eq.s32.totalorder %s19, 3
    %p242 = por %p240, %p241
    %p243 = scmp.ne.s32.totalorder %s232, %s233
    %p244 = scmp.eq.s32.totalorder %s19, 0
    %p245 = por %p243, %p244
    %p246 = scmp.ne.s32.totalorder %s232, %s233
    %p247 = scmp.eq.s32.totalorder %s20, 3
    %p248 = por %p246, %p247
    %p250 = scmp.ne.s32.totalorder %s233, %s249
    %p251 = scmp.eq.s32.totalorder %s20, 0
    %p252 = por %p250, %p251
    %p253 = scmp.le.s32.totalorder 1, %s14
    %p254 = scmp.lt.s32.totalorder %s14, 5
    %p255 = pnand %p253, %p254
    %p256 = pneg %p255
    // Predicated region
    $region9: #{resblock_forward.3} parent=5 // pred_check
      _
    $region10: #{resblock_forward.3} parent=5 // pred_check_branch
      %258 = sbr.rel (%p255) target = $region12
    $region11: #{resblock_forward.3} parent=5 // pred_region
      %s259 = ssub.s32 %s14, 1
      // Predicated region
      $region13: #{resblock_forward.3} parent=11 // pred_check
        %p260 = pneg %p147
      $region14: #{resblock_forward.3} parent=11 // pred_check_branch
        %262 = sbr.rel (%p260) target = $region16
      $region15: #{resblock_forward.3} parent=11 // pred_region
        _
      $region16: #{resblock_forward.3} parent=11 // pred_fallthru
        _
      // Predicated region
      $region17: #{resblock_forward.3} parent=11 // pred_check
        %p263 = pneg %p168
      $region18: #{resblock_forward.3} parent=11 // pred_check_branch
        %265 = sbr.rel (%p263) target = $region20
      $region19: #{resblock_forward.3} parent=11 // pred_region
        _
      $region20: #{resblock_forward.3} parent=11 // pred_fallthru
        _
      // Predicated region
      $region21: #{resblock_forward.3} parent=11 // pred_check
        %p266 = pneg %p189
      $region22: #{resblock_forward.3} parent=11 // pred_check_branch
        %268 = sbr.rel (%p266) target = $region24
      $region23: #{resblock_forward.3} parent=11 // pred_region
        _
      $region24: #{resblock_forward.3} parent=11 // pred_fallthru
        _
    $region12: #{resblock_forward.3} parent=5 // pred_fallthru
      _
    %p269 = scmp.lt.s32.totalorder %s14, 4
    // Predicated region
    $region25: #{resblock_forward.3} parent=5 // pred_check
      %p270 = pneg %p269
    $region26: #{resblock_forward.3} parent=5 // pred_check_branch
      %272 = sbr.rel (%p270) target = $region28
    $region27: #{resblock_forward.3} parent=5 // pred_region
      // Predicated region
      $region29: #{resblock_forward.3} parent=27 // pred_check
        %p273 = pneg %p48
      $region30: #{resblock_forward.3} parent=27 // pred_check_branch
        %275 = sbr.rel (%p273) target = $region32
      $region31: #{resblock_forward.3} parent=27 // pred_region
        %s276 = smul.u32 8, %s22
        %p277 = scmp.lt.s32.totalorder %s21, 1
        %s278 = scalar_select %p277, %s21, 1
        %p279 = scmp.lt.s32.totalorder %s276, 15
        %s280 = scalar_select %p279, %s276, 15
        %s281 = smul.addr %s280, 2
        %s282 = smul.addr %s278, 32
        %s283 = sadd.s32 %s281, %s282
        %s284 = smul.addr %s283, 8
        %s285 = scalar_lea.vmem %s0, %s284
        %s286 = smul.u32 8, %s22
      $region32: #{resblock_forward.3} parent=27 // pred_fallthru
        _
      // Predicated region
      $region33: #{resblock_forward.3} parent=27 // pred_check
        %p287 = pneg %p84
      $region34: #{resblock_forward.3} parent=27 // pred_check_branch
        %289 = sbr.rel (%p287) target = $region36
      $region35: #{resblock_forward.3} parent=27 // pred_region
        %s290 = smul.u32 %s22, 8
        %s291 = ssub.s32 %s290, 1
        %p292 = scmp.gt.s32.totalorder %s291, 0
        %s293 = scalar_select %p292, %s291, 0
        %p294 = scmp.lt.s32.totalorder %s21, 1
        %s295 = scalar_select %p294, %s21, 1
        %p296 = scmp.lt.s32.totalorder %s293, 15
        %s297 = scalar_select %p296, %s293, 15
        %s298 = smul.addr %s297, 2
        %s299 = smul.addr %s295, 32
        %s300 = sadd.s32 %s298, %s299
        %s301 = smul.addr %s300, 8
        %s302 = scalar_lea.vmem %s1, %s301
        %s303 = smul.u32 %s22, 8
        %s304 = ssub.s32 %s303, 1
        %p305 = scmp.gt.s32.totalorder %s304, 0
        %s306 = scalar_select %p305, %s304, 0
      $region36: #{resblock_forward.3} parent=27 // pred_fallthru
        _
      // Predicated region
      $region37: #{resblock_forward.3} parent=27 // pred_check
        %p307 = pneg %p120
      $region38: #{resblock_forward.3} parent=27 // pred_check_branch
        %309 = sbr.rel (%p307) target = $region40
      $region39: #{resblock_forward.3} parent=27 // pred_region
        %s310 = sadd.s32 %s22, 1
        %s311 = smul.u32 %s310, 8
        %p312 = scmp.lt.s32.totalorder %s311, 15
        %s313 = scalar_select %p312, %s311, 15
        %p314 = scmp.lt.s32.totalorder %s21, 1
        %s315 = scalar_select %p314, %s21, 1
        %p316 = scmp.lt.s32.totalorder %s313, 15
        %s317 = scalar_select %p316, %s313, 15
        %s318 = smul.addr %s317, 2
        %s319 = smul.addr %s315, 32
        %s320 = sadd.s32 %s318, %s319
        %s321 = smul.addr %s320, 8
        %s322 = scalar_lea.vmem %s2, %s321
        %s323 = sadd.s32 %s22, 1
        %s324 = smul.u32 %s323, 8
        %p325 = scmp.lt.s32.totalorder %s324, 15
        %s326 = scalar_select %p325, %s324, 15
      $region40: #{resblock_forward.3} parent=27 // pred_fallthru
        _
    $region28: #{resblock_forward.3} parent=5 // pred_fallthru
      _
    %p327 = scmp.le.s32.totalorder 1, %s14
    %p328 = scmp.lt.s32.totalorder %s14, 5
    %p329 = pnand %p327, %p328
    %p330 = pneg %p329
    // Predicated region
    $region41: #{resblock_forward.3} parent=5 // pred_check
      _
    $region42: #{resblock_forward.3} parent=5 // pred_check_branch
      %332 = sbr.rel (%p329) target = $region44
    $region43: #{resblock_forward.3} parent=5 // pred_region
      %s333 = ssub.s32 %s14, 1
      %s334 = smul.u32 8, %s24
      %p335 = scmp.lt.s32.totalorder %s23, 1
      %s336 = scalar_select %p335, %s23, 1
      %p337 = scmp.lt.s32.totalorder %s334, 15
      %s338 = scalar_select %p337, %s334, 15
      %s339 = smul.addr %s338, 2
      %s340 = smul.addr %s336, 32
      %s341 = sadd.s32 %s339, %s340
      %s342 = smul.addr %s341, 8
      %s343 = scalar_lea.vmem %s0, %s342
      %p344 = pneg %p54
      %p345 = pneg %p51
      %s346 = smul.u32 %s24, 8
      %s347 = ssub.s32 %s346, 1
      %p348 = scmp.gt.s32.totalorder %s347, 0
      %s349 = scalar_select %p348, %s347, 0
      %p350 = scmp.lt.s32.totalorder %s23, 1
      %s351 = scalar_select %p350, %s23, 1
      %p352 = scmp.lt.s32.totalorder %s349, 15
      %s353 = scalar_select %p352, %s349, 15
      %s354 = smul.addr %s353, 2
      %s355 = smul.addr %s351, 32
      %s356 = sadd.s32 %s354, %s355
      %s357 = smul.addr %s356, 8
      %s358 = scalar_lea.vmem %s1, %s357
      %p359 = pneg %p90
      %p360 = pneg %p87
      %s361 = sadd.s32 %s24, 1
      %s362 = smul.u32 %s361, 8
      %p363 = scmp.lt.s32.totalorder %s362, 15
      %s364 = scalar_select %p363, %s362, 15
      %p365 = scmp.lt.s32.totalorder %s23, 1
      %s366 = scalar_select %p365, %s23, 1
      %p367 = scmp.lt.s32.totalorder %s364, 15
      %s368 = scalar_select %p367, %s364, 15
      %s369 = smul.addr %s368, 2
      %s370 = smul.addr %s366, 32
      %s371 = sadd.s32 %s369, %s370
      %s372 = smul.addr %s371, 8
      %s373 = scalar_lea.vmem %s2, %s372
      %p374 = pneg %p126
      %p375 = pneg %p123
      %p376 = pneg %p147
      %p377 = pneg %p144
      %p378 = pneg %p168
      %p379 = pneg %p165
      %p380 = pneg %p189
      %p381 = pneg %p186
      %p382 = pneg %p217
      %p383 = pneg %p214
      %s384 = smul.u32 8, %s24
      %p385 = scmp.lt.s32.totalorder %s23, 1
      %s386 = scalar_select %p385, %s23, 1
      %p387 = scmp.lt.s32.totalorder %s384, 15
      %s388 = scalar_select %p387, %s384, 15
      %s389 = smul.addr %s388, 2
      %s390 = smul.addr %s386, 32
      %s391 = sadd.s32 %s389, %s390
      %s392 = smul.addr %s391, 4
      %s393 = scalar_lea.vmem %s6, %s392
      %p394 = pneg %p245
      %p395 = pneg %p242
      %p396 = scmp.lt.s32.totalorder %s23, 1
      %s397 = scalar_select %p396, %s23, 1
      %p398 = scmp.lt.s32.totalorder %s24, 1
      %s399 = scalar_select %p398, %s24, 1
      %s400 = smul.addr %s397, 2
      %s401 = sadd.s32 %s399, %s400
      %s402 = smul.addr %s401, 2
      %s403 = scalar_lea.vmem %s7, %s402
      %s404 = smul.u32 8, %s24
      %p405 = scmp.lt.s32.totalorder %s23, 1
      %s406 = scalar_select %p405, %s23, 1
      %p407 = scmp.lt.s32.totalorder %s404, 15
      %s408 = scalar_select %p407, %s404, 15
      %s409 = smul.addr %s408, 2
      %s410 = smul.addr %s406, 32
      %s411 = sadd.s32 %s409, %s410
      %s412 = smul.addr %s411, 8
      %s413 = scalar_lea.vmem %s0, %s412
      %s414 = smul.u32 8, %s24
      %s415 = smul.u32 %s24, 8
      %s416 = ssub.s32 %s415, 1
      %p417 = scmp.gt.s32.totalorder %s416, 0
      %s418 = scalar_select %p417, %s416, 0
      %p419 = scmp.lt.s32.totalorder %s23, 1
      %s420 = scalar_select %p419, %s23, 1
      %p421 = scmp.lt.s32.totalorder %s418, 15
      %s422 = scalar_select %p421, %s418, 15
      %s423 = smul.addr %s422, 2
      %s424 = smul.addr %s420, 32
      %s425 = sadd.s32 %s423, %s424
      %s426 = smul.addr %s425, 8
      %s427 = scalar_lea.vmem %s1, %s426
      %s428 = smul.u32 %s24, 8
      %s429 = ssub.s32 %s428, 1
      %p430 = scmp.gt.s32.totalorder %s429, 0
      %s431 = scalar_select %p430, %s429, 0
      %s432 = sadd.s32 %s24, 1
      %s433 = smul.u32 %s432, 8
      %p434 = scmp.lt.s32.totalorder %s433, 15
      %s435 = scalar_select %p434, %s433, 15
      %p436 = scmp.lt.s32.totalorder %s23, 1
      %s437 = scalar_select %p436, %s23, 1
      %p438 = scmp.lt.s32.totalorder %s435, 15
      %s439 = scalar_select %p438, %s435, 15
      %s440 = smul.addr %s439, 2
      %s441 = smul.addr %s437, 32
      %s442 = sadd.s32 %s440, %s441
      %s443 = smul.addr %s442, 8
      %s444 = scalar_lea.vmem %s2, %s443
      %s445 = sadd.s32 %s24, 1
      %s446 = smul.u32 %s445, 8
      %p447 = scmp.lt.s32.totalorder %s446, 15
      %s448 = scalar_select %p447, %s446, 15
      %s449 = smul.u32 8, %s24
      %p450 = scmp.lt.s32.totalorder %s23, 1
      %s451 = scalar_select %p450, %s23, 1
      %p452 = scmp.lt.s32.totalorder %s449, 15
      %s453 = scalar_select %p452, %s449, 15
      %s454 = smul.addr %s453, 2
      %s455 = smul.addr %s451, 32
      %s456 = sadd.s32 %s454, %s455
      %s457 = smul.addr %s456, 4
      %s458 = scalar_lea.vmem %s6, %s457
      %s459 = smul.u32 8, %s24
      %p460 = scmp.lt.s32.totalorder %s23, 1
      %s461 = scalar_select %p460, %s23, 1
      %p462 = scmp.lt.s32.totalorder %s24, 1
      %s463 = scalar_select %p462, %s24, 1
      %s464 = smul.addr %s461, 2
      %s465 = sadd.s32 %s463, %s464
      %s466 = smul.addr %s465, 2
      %s467 = scalar_lea.vmem %s7, %s466
      %v469 = vld [vmem:[%s3] sm:$0x1]
      %v470 = vld [vmem:[%s4] sm:$0x1]
      %v471 = vld [vmem:[%s413] sm:$0xff]
      %v472 = vld [vmem:[%s413 + $0x8] sm:$0xff]
      %v473 = vld [vmem:[%s413 + $0x10] sm:$0xff]
      %v474 = vld [vmem:[%s413 + $0x18] sm:$0xff]
      %v475 = vld [vmem:[%s413 + $0x20] sm:$0xff]
      %v476 = vld [vmem:[%s413 + $0x28] sm:$0xff]
      %v477 = vld [vmem:[%s413 + $0x30] sm:$0xff]
      %v478 = vld [vmem:[%s413 + $0x38] sm:$0xff]
      %v479 = vld [vmem:[%s413 + $0x40] sm:$0xff]
      %v480 = vld [vmem:[%s413 + $0x48] sm:$0xff]
      %v481 = vld [vmem:[%s413 + $0x50] sm:$0xff]
      %v482 = vld [vmem:[%s413 + $0x58] sm:$0xff]
      %v483 = vld [vmem:[%s413 + $0x60] sm:$0xff]
      %v484 = vld [vmem:[%s413 + $0x68] sm:$0xff]
      %v485 = vld [vmem:[%s413 + $0x70] sm:$0xff]
      %v486 = vld [vmem:[%s413 + $0x78] sm:$0xff]
      %v488 = vlaneseq
      %v489 = vshrl.u32 %v488, 7
      %v490 = vsub.s32 0, %v489
      %v491 = vrot.slane %v469, %v490
      %v493 = vmul.f32 %v471, %v491
      %v494 = vmul.f32 %v472, %v491
      %v495 = vmul.f32 %v473, %v491
      %v496 = vmul.f32 %v474, %v491
      %v497 = vmul.f32 %v475, %v491
      %v498 = vmul.f32 %v476, %v491
      %v499 = vmul.f32 %v477, %v491
      %v500 = vmul.f32 %v478, %v491
      %v501 = vmul.f32 %v479, %v491
      %v502 = vmul.f32 %v480, %v491
      %v503 = vmul.f32 %v481, %v491
      %v504 = vmul.f32 %v482, %v491
      %v505 = vmul.f32 %v483, %v491
      %v506 = vmul.f32 %v484, %v491
      %v507 = vmul.f32 %v485, %v491
      %v508 = vmul.f32 %v486, %v491
      %v510 = vlaneseq
      %v511 = vshrl.u32 %v510, 7
      %v512 = vsub.s32 0, %v511
      %v513 = vrot.slane %v470, %v512
      %v515 = vadd.f32 %v493, %v513
      %v516 = vadd.f32 %v494, %v513
      %v517 = vadd.f32 %v495, %v513
      %v518 = vadd.f32 %v496, %v513
      %v519 = vadd.f32 %v497, %v513
      %v520 = vadd.f32 %v498, %v513
      %v521 = vadd.f32 %v499, %v513
      %v522 = vadd.f32 %v500, %v513
      %v523 = vadd.f32 %v501, %v513
      %v524 = vadd.f32 %v502, %v513
      %v525 = vadd.f32 %v503, %v513
      %v526 = vadd.f32 %v504, %v513
      %v527 = vadd.f32 %v505, %v513
      %v528 = vadd.f32 %v506, %v513
      %v529 = vadd.f32 %v507, %v513
      %v530 = vadd.f32 %v508, %v513
      %vm531 = vcmp.ge.f32.partialorder %v515, 0.0
      %vm532 = vcmp.ge.f32.partialorder %v516, 0.0
      %vm533 = vcmp.ge.f32.partialorder %v517, 0.0
      %vm534 = vcmp.ge.f32.partialorder %v518, 0.0
      %vm535 = vcmp.ge.f32.partialorder %v519, 0.0
      %vm536 = vcmp.ge.f32.partialorder %v520, 0.0
      %vm537 = vcmp.ge.f32.partialorder %v521, 0.0
      %vm538 = vcmp.ge.f32.partialorder %v522, 0.0
      %vm539 = vcmp.ge.f32.partialorder %v523, 0.0
      %vm540 = vcmp.ge.f32.partialorder %v524, 0.0
      %vm541 = vcmp.ge.f32.partialorder %v525, 0.0
      %vm542 = vcmp.ge.f32.partialorder %v526, 0.0
      %vm543 = vcmp.ge.f32.partialorder %v527, 0.0
      %vm544 = vcmp.ge.f32.partialorder %v528, 0.0
      %vm545 = vcmp.ge.f32.partialorder %v529, 0.0
      %vm546 = vcmp.ge.f32.partialorder %v530, 0.0
      %v547 = vmul.f32 %v515, 0.2
      %v548 = vmul.f32 %v516, 0.2
      %v549 = vmul.f32 %v517, 0.2
      %v550 = vmul.f32 %v518, 0.2
      %v551 = vmul.f32 %v519, 0.2
      %v552 = vmul.f32 %v520, 0.2
      %v553 = vmul.f32 %v521, 0.2
      %v554 = vmul.f32 %v522, 0.2
      %v555 = vmul.f32 %v523, 0.2
      %v556 = vmul.f32 %v524, 0.2
      %v557 = vmul.f32 %v525, 0.2
      %v558 = vmul.f32 %v526, 0.2
      %v559 = vmul.f32 %v527, 0.2
      %v560 = vmul.f32 %v528, 0.2
      %v561 = vmul.f32 %v529, 0.2
      %v562 = vmul.f32 %v530, 0.2
      %v563 = vsel %vm531, %v515, %v547
      %v564 = vsel %vm532, %v516, %v548
      %v565 = vsel %vm533, %v517, %v549
      %v566 = vsel %vm534, %v518, %v550
      %v567 = vsel %vm535, %v519, %v551
      %v568 = vsel %vm536, %v520, %v552
      %v569 = vsel %vm537, %v521, %v553
      %v570 = vsel %vm538, %v522, %v554
      %v571 = vsel %vm539, %v523, %v555
      %v572 = vsel %vm540, %v524, %v556
      %v573 = vsel %vm541, %v525, %v557
      %v574 = vsel %vm542, %v526, %v558
      %v575 = vsel %vm543, %v527, %v559
      %v576 = vsel %vm544, %v528, %v560
      %v577 = vsel %vm545, %v529, %v561
      %v578 = vsel %vm546, %v530, %v562
      %v579 = vld [vmem:[%s427] sm:$0xff]
      %v580 = vld [vmem:[%s427 + $0x8] sm:$0xff]
      %v581 = vmul.f32 %v579, %v491
      %v582 = vmul.f32 %v580, %v491
      %v583 = vadd.f32 %v581, %v513
      %v584 = vadd.f32 %v582, %v513
      %vm585 = vcmp.ge.f32.partialorder %v583, 0.0
      %vm586 = vcmp.ge.f32.partialorder %v584, 0.0
      %v587 = vmul.f32 %v583, 0.2
      %v588 = vmul.f32 %v584, 0.2
      %v589 = vsel %vm585, %v583, %v587
      %v590 = vsel %vm586, %v584, %v588
      %v591 = vld [vmem:[%s444] sm:$0xff]
      %v592 = vld [vmem:[%s444 + $0x8] sm:$0xff]
      %v593 = vmul.f32 %v591, %v491
      %v594 = vmul.f32 %v592, %v491
      %v595 = vadd.f32 %v593, %v513
      %v596 = vadd.f32 %v594, %v513
      %vm597 = vcmp.ge.f32.partialorder %v595, 0.0
      %vm598 = vcmp.ge.f32.partialorder %v596, 0.0
      %v599 = vmul.f32 %v595, 0.2
      %v600 = vmul.f32 %v596, 0.2
      %v601 = vsel %vm597, %v595, %v599
      %v602 = vsel %vm598, %v596, %v600
      %p603 = scmp.eq.s32.totalorder %s24, 0
      %s604 = scalar_select %p603, 1, 0
      %v605 = vstv %s604
      %vm606 = vcmp.eq.s32.totalorder %v605, 1
      %v607 = vsel %vm606, 0.0, %v589
      %v608 = vsel %vm606, 0.0, %v590
      %p609 = scmp.eq.s32.totalorder %s24, 1
      %s610 = scalar_select %p609, 1, 0
      %v611 = vstv %s610
      %vm612 = vcmp.eq.s32.totalorder %v611, 1
      %v613 = vsel %vm612, 0.0, %v601
      %v614 = vsel %vm612, 0.0, %v602
      %vm615 = vcmask 24576
      %616 = vst.msk [vmem:[#allocation2] sm:$0x1] %vm615, 0.0
      %617 = vst.msk [vmem:[#allocation2 + $0x18] sm:$0x1] %vm615, 0.0
      %618 = vst.msk [vmem:[#allocation2 + $0x30] sm:$0x1] %vm615, 0.0
      %619 = vst.msk [vmem:[#allocation2 + $0x48] sm:$0x1] %vm615, 0.0
      %620 = vst.msk [vmem:[#allocation2 + $0x60] sm:$0x1] %vm615, 0.0
      %621 = vst.msk [vmem:[#allocation2 + $0x78] sm:$0x1] %vm615, 0.0
      %622 = vst.msk [vmem:[#allocation2 + $0x90] sm:$0x1] %vm615, 0.0
      %623 = vst.msk [vmem:[#allocation2 + $0xa8] sm:$0x1] %vm615, 0.0
      %624 = vst.msk [vmem:[#allocation2 + $0xc0] sm:$0x1] %vm615, 0.0
      %625 = vst.msk [vmem:[#allocation2 + $0xd8] sm:$0x1] %vm615, 0.0
      %626 = vst.msk [vmem:[#allocation2 + $0x11] sm:$0x1] %vm615, 0.0
      %627 = vst.msk [vmem:[#allocation2 + $0x29] sm:$0x1] %vm615, 0.0
      %628 = vst.msk [vmem:[#allocation2 + $0x41] sm:$0x1] %vm615, 0.0
      %629 = vst.msk [vmem:[#allocation2 + $0x59] sm:$0x1] %vm615, 0.0
      %630 = vst.msk [vmem:[#allocation2 + $0x71] sm:$0x1] %vm615, 0.0
      %631 = vst.msk [vmem:[#allocation2 + $0x89] sm:$0x1] %vm615, 0.0
      %632 = vst.msk [vmem:[#allocation2 + $0xa1] sm:$0x1] %vm615, 0.0
      %633 = vst.msk [vmem:[#allocation2 + $0xb9] sm:$0x1] %vm615, 0.0
      %634 = vst.msk [vmem:[#allocation2 + $0xd1] sm:$0x1] %vm615, 0.0
      %635 = vst.msk [vmem:[#allocation2 + $0xe9] sm:$0x1] %vm615, 0.0
      %vm636 = vcmask 31744
      %637 = vst.msk [vmem:[#allocation2 + $0x1] sm:$0xff] %vm636, %v607
      %638 = vst.msk [vmem:[#allocation2 + $0x9] sm:$0xff] %vm636, %v608
      %s639 = scalar_lea.vmem [#allocation2], 216
      %640 = vst.msk [vmem:[%s639 + $0x1] sm:$0xff] %vm636, %v613
      %641 = vst.msk [vmem:[%s639 + $0x9] sm:$0xff] %vm636, %v614
      %s642 = scalar_lea.vmem [#allocation2], 24
      %643 = vst.msk [vmem:[%s642 + $0x1] sm:$0xff] %vm636, %v563
      %644 = vst.msk [vmem:[%s642 + $0x9] sm:$0xff] %vm636, %v564
      %645 = vst.msk [vmem:[%s642 + $0x19] sm:$0xff] %vm636, %v565
      %646 = vst.msk [vmem:[%s642 + $0x21] sm:$0xff] %vm636, %v566
      %647 = vst.msk [vmem:[%s642 + $0x31] sm:$0xff] %vm636, %v567
      %648 = vst.msk [vmem:[%s642 + $0x39] sm:$0xff] %vm636, %v568
      %649 = vst.msk [vmem:[%s642 + $0x49] sm:$0xff] %vm636, %v569
      %650 = vst.msk [vmem:[%s642 + $0x51] sm:$0xff] %vm636, %v570
      %651 = vst.msk [vmem:[%s642 + $0x61] sm:$0xff] %vm636, %v571
      %652 = vst.msk [vmem:[%s642 + $0x69] sm:$0xff] %vm636, %v572
      %653 = vst.msk [vmem:[%s642 + $0x79] sm:$0xff] %vm636, %v573
      %654 = vst.msk [vmem:[%s642 + $0x81] sm:$0xff] %vm636, %v574
      %655 = vst.msk [vmem:[%s642 + $0x91] sm:$0xff] %vm636, %v575
      %656 = vst.msk [vmem:[%s642 + $0x99] sm:$0xff] %vm636, %v576
      %657 = vst.msk [vmem:[%s642 + $0xa9] sm:$0xff] %vm636, %v577
      %658 = vst.msk [vmem:[%s642 + $0xb1] sm:$0xff] %vm636, %v578
      %v659 = vld [vmem:[#allocation2] sm:$0xff]
      %v660 = vld [vmem:[#allocation2 + $0x8] sm:$0xff]
      %v661 = vld [vmem:[#allocation2 + $0x18] sm:$0xff]
      %v662 = vld [vmem:[#allocation2 + $0x20] sm:$0xff]
      %v663 = vld [vmem:[#allocation2 + $0x30] sm:$0xff]
      %v664 = vld [vmem:[#allocation2 + $0x38] sm:$0xff]
      %v665 = vld [vmem:[#allocation2 + $0x48] sm:$0xff]
      %v666 = vld [vmem:[#allocation2 + $0x50] sm:$0xff]
      %v667 = vld [vmem:[#allocation2 + $0x60] sm:$0xff]
      %v668 = vld [vmem:[#allocation2 + $0x68] sm:$0xff]
      %v669 = vld [vmem:[#allocation2 + $0x78] sm:$0xff]
      %v670 = vld [vmem:[#allocation2 + $0x80] sm:$0xff]
      %v671 = vld [vmem:[#allocation2 + $0x90] sm:$0xff]
      %v672 = vld [vmem:[#allocation2 + $0x98] sm:$0xff]
      %v673 = vld [vmem:[#allocation2 + $0xa8] sm:$0xff]
      %v674 = vld [vmem:[#allocation2 + $0xb0] sm:$0xff]
      %v675 = vpack.c.bf16 %v660, %v659
      %v676 = vpack.c.bf16 %v662, %v661
      %v677 = vpack.c.bf16 %v664, %v663
      %v678 = vpack.c.bf16 %v666, %v665
      %v679 = vpack.c.bf16 %v668, %v667
      %v680 = vpack.c.bf16 %v670, %v669
      %v681 = vpack.c.bf16 %v672, %v671
      %v682 = vpack.c.bf16 %v674, %v673
      %v683 = vld [vmem:[%s5] sm:$0x3]
      %v684 = vld [vmem:[#allocation2 + $0x1] sm:$0xff]
      %v685 = vld [vmem:[#allocation2 + $0x9] sm:$0xff]
      %v686 = vld [vmem:[#allocation2 + $0x19] sm:$0xff]
      %v687 = vld [vmem:[#allocation2 + $0x21] sm:$0xff]
      %v688 = vld [vmem:[#allocation2 + $0x31] sm:$0xff]
      %v689 = vld [vmem:[#allocation2 + $0x39] sm:$0xff]
      %v690 = vld [vmem:[#allocation2 + $0x49] sm:$0xff]
      %v691 = vld [vmem:[#allocation2 + $0x51] sm:$0xff]
      %v692 = vld [vmem:[#allocation2 + $0x61] sm:$0xff]
      %v693 = vld [vmem:[#allocation2 + $0x69] sm:$0xff]
      %v694 = vld [vmem:[#allocation2 + $0x79] sm:$0xff]
      %v695 = vld [vmem:[#allocation2 + $0x81] sm:$0xff]
      %v696 = vld [vmem:[#allocation2 + $0x91] sm:$0xff]
      %v697 = vld [vmem:[#allocation2 + $0x99] sm:$0xff]
      %v698 = vld [vmem:[#allocation2 + $0xa9] sm:$0xff]
      %v699 = vld [vmem:[#allocation2 + $0xb1] sm:$0xff]
      %v700 = vpack.c.bf16 %v685, %v684
      %v701 = vpack.c.bf16 %v687, %v686
      %v702 = vpack.c.bf16 %v689, %v688
      %v703 = vpack.c.bf16 %v691, %v690
      %v704 = vpack.c.bf16 %v693, %v692
      %v705 = vpack.c.bf16 %v695, %v694
      %v706 = vpack.c.bf16 %v697, %v696
      %v707 = vpack.c.bf16 %v699, %v698
      %v708 = vld [vmem:[%s5] sm:$0xc]
      %v710 = vunpack.c.l.b16 %v708
      %v711 = vpack.c.b16 %v710, %v710
      %v712 = vrot.slane %v711, 2
      %v714 = vsel %vm636, %v700, 0
      %v717 = vsel %vm636, %v701, 0
      %v720 = vsel %vm636, %v702, 0
      %v723 = vsel %vm636, %v703, 0
      %v726 = vsel %vm636, %v704, 0
      %v729 = vsel %vm636, %v705, 0
      %v732 = vsel %vm636, %v706, 0
      %v735 = vsel %vm636, %v707, 0
      %vm737 = vcmask 1041408
      %v739 = vsel %vm737, %v712, 0
      %741 = vmatprep.subr.bf16.mxu0 0
      %742 = vmatpush1.bf16.msra.mxu0 0
      %743 = vmatprep.subr.bf16.mxu0 0
      %744 = vmatpush1.bf16.msra.mxu0 0
      %745 = vmatprep.subr.bf16.mxu0 0
      %746 = vmatpush1.bf16.msra.mxu0 0
      %747 = vmatprep.subr.bf16.mxu0 0
      %748 = vmatpush1.bf16.msra.mxu0 0
      %749 = vmatprep.subr.bf16.mxu0 0
      %750 = vmatpush1.bf16.msra.mxu0 0
      %751 = vmatprep.subr.bf16.mxu0 0
      %752 = vmatpush1.bf16.msra.mxu0 0
      %753 = vmatprep.subr.bf16.mxu0 0
      %754 = vmatpush1.bf16.msra.mxu0 0
      %755 = vmatprep.subr.bf16.mxu0 0
      %756 = vmatpush1.bf16.msra.mxu0 %v739
      %757 = vmatprep.subr.bf16.mxu0 0
      %758 = vmatpush2.bf16.msra.mxu0 0
      %759 = vmatprep.subr.bf16.mxu0 0
      %760 = vmatpush2.bf16.msra.mxu0 0
      %761 = vmatprep.subr.bf16.mxu0 0
      %762 = vmatpush2.bf16.msra.mxu0 0
      %763 = vmatprep.subr.bf16.mxu0 0
      %764 = vmatpush2.bf16.msra.mxu0 0
      %765 = vmatprep.subr.bf16.mxu0 0
      %766 = vmatpush2.bf16.msra.mxu0 0
      %767 = vmatprep.subr.bf16.mxu0 0
      %768 = vmatpush2.bf16.msra.mxu0 0
      %769 = vmatprep.subr.bf16.mxu0 0
      %770 = vmatpush2.bf16.msra.mxu0 0
      %771 = vmatprep.subr.bf16.mxu0 0
      %772 = vmatpush2.bf16.msra.mxu0 0
      %773 = vmatprep.mubr.bf16.mxu0 0
      %774 = vmatmul.mubr.bf16.gmra.mxu0 %v714
      %v775 = vpop.f32.mrf.mxu0
      %v776 = vadd.f32 0.0, %v775
      %v777 = vpop.f32.mrf.mxu0
      %v778 = vpop.f32.mrf.mxu0
      %v779 = vadd.f32 0.0, %v778
      %v780 = vpop.f32.mrf.mxu0
      %781 = vmatprep.mubr.bf16.mxu0 0
      %782 = vmatmul.mubr.bf16.gmra.mxu0 %v717
      %v783 = vpop.f32.mrf.mxu0
      %v784 = vadd.f32 0.0, %v783
      %v785 = vpop.f32.mrf.mxu0
      %v786 = vpop.f32.mrf.mxu0
      %v787 = vadd.f32 0.0, %v786
      %v788 = vpop.f32.mrf.mxu0
      %789 = vmatprep.mubr.bf16.mxu0 0
      %790 = vmatmul.mubr.bf16.gmra.mxu0 %v720
      %v791 = vpop.f32.mrf.mxu0
      %v792 = vadd.f32 0.0, %v791
      %v793 = vpop.f32.mrf.mxu0
      %v794 = vpop.f32.mrf.mxu0
      %v795 = vadd.f32 0.0, %v794
      %v796 = vpop.f32.mrf.mxu0
      %797 = vmatprep.mubr.bf16.mxu0 0
      %798 = vmatmul.mubr.bf16.gmra.mxu0 %v723
      %v799 = vpop.f32.mrf.mxu0
      %v800 = vadd.f32 0.0, %v799
      %v801 = vpop.f32.mrf.mxu0
      %v802 = vpop.f32.mrf.mxu0
      %v803 = vadd.f32 0.0, %v802
      %v804 = vpop.f32.mrf.mxu0
      %805 = vmatprep.mubr.bf16.mxu0 0
      %806 = vmatmul.mubr.bf16.gmra.mxu0 %v726
      %v807 = vpop.f32.mrf.mxu0
      %v808 = vadd.f32 0.0, %v807
      %v809 = vpop.f32.mrf.mxu0
      %v810 = vpop.f32.mrf.mxu0
      %v811 = vadd.f32 0.0, %v810
      %v812 = vpop.f32.mrf.mxu0
      %813 = vmatprep.mubr.bf16.mxu0 0
      %814 = vmatmul.mubr.bf16.gmra.mxu0 %v729
      %v815 = vpop.f32.mrf.mxu0
      %v816 = vadd.f32 0.0, %v815
      %v817 = vpop.f32.mrf.mxu0
      %v818 = vpop.f32.mrf.mxu0
      %v819 = vadd.f32 0.0, %v818
      %v820 = vpop.f32.mrf.mxu0
      %821 = vmatprep.mubr.bf16.mxu0 0
      %822 = vmatmul.mubr.bf16.gmra.mxu0 %v732
      %v823 = vpop.f32.mrf.mxu0
      %v824 = vadd.f32 0.0, %v823
      %v825 = vpop.f32.mrf.mxu0
      %v826 = vpop.f32.mrf.mxu0
      %v827 = vadd.f32 0.0, %v826
      %v828 = vpop.f32.mrf.mxu0
      %829 = vmatprep.mubr.bf16.mxu0 0
      %830 = vmatmul.mubr.bf16.gmra.mxu0 %v735
      %v831 = vpop.f32.mrf.mxu0
      %v832 = vadd.f32 0.0, %v831
      %v833 = vpop.f32.mrf.mxu0
      %v834 = vpop.f32.mrf.mxu0
      %v835 = vadd.f32 0.0, %v834
      %v836 = vpop.f32.mrf.mxu0
      %837 = vdwg.mxu0
      %v839 = vsel %vm636, %v675, 0
      %v842 = vsel %vm636, %v676, 0
      %v845 = vsel %vm636, %v677, 0
      %v848 = vsel %vm636, %v678, 0
      %v851 = vsel %vm636, %v679, 0
      %v854 = vsel %vm636, %v680, 0
      %v857 = vsel %vm636, %v681, 0
      %v860 = vsel %vm636, %v682, 0
      %v863 = vsel %vm737, %v683, 0
      %865 = vmatprep.subr.bf16.mxu0 0
      %866 = vmatpush1.bf16.msra.mxu0 0
      %867 = vmatprep.subr.bf16.mxu0 0
      %868 = vmatpush1.bf16.msra.mxu0 0
      %869 = vmatprep.subr.bf16.mxu0 0
      %870 = vmatpush1.bf16.msra.mxu0 0
      %871 = vmatprep.subr.bf16.mxu0 0
      %872 = vmatpush1.bf16.msra.mxu0 0
      %873 = vmatprep.subr.bf16.mxu0 0
      %874 = vmatpush1.bf16.msra.mxu0 0
      %875 = vmatprep.subr.bf16.mxu0 0
      %876 = vmatpush1.bf16.msra.mxu0 0
      %877 = vmatprep.subr.bf16.mxu0 0
      %878 = vmatpush1.bf16.msra.mxu0 0
      %879 = vmatprep.subr.bf16.mxu0 0
      %880 = vmatpush1.bf16.msra.mxu0 %v863
      %881 = vmatprep.subr.bf16.mxu0 0
      %882 = vmatpush2.bf16.msra.mxu0 0
      %883 = vmatprep.subr.bf16.mxu0 0
      %884 = vmatpush2.bf16.msra.mxu0 0
      %885 = vmatprep.subr.bf16.mxu0 0
      %886 = vmatpush2.bf16.msra.mxu0 0
      %887 = vmatprep.subr.bf16.mxu0 0
      %888 = vmatpush2.bf16.msra.mxu0 0
      %889 = vmatprep.subr.bf16.mxu0 0
      %890 = vmatpush2.bf16.msra.mxu0 0
      %891 = vmatprep.subr.bf16.mxu0 0
      %892 = vmatpush2.bf16.msra.mxu0 0
      %893 = vmatprep.subr.bf16.mxu0 0
      %894 = vmatpush2.bf16.msra.mxu0 0
      %895 = vmatprep.subr.bf16.mxu0 0
      %896 = vmatpush2.bf16.msra.mxu0 0
      %897 = vmatprep.mubr.bf16.mxu0 0
      %898 = vmatmul.mubr.bf16.gmra.mxu0 %v839
      %v899 = vpop.f32.mrf.mxu0
      %v900 = vadd.f32 %v776, %v899
      %v901 = vpop.f32.mrf.mxu0
      %v902 = vpop.f32.mrf.mxu0
      %v903 = vadd.f32 %v779, %v902
      %v904 = vpop.f32.mrf.mxu0
      %905 = vmatprep.mubr.bf16.mxu0 0
      %906 = vmatmul.mubr.bf16.gmra.mxu0 %v842
      %v907 = vpop.f32.mrf.mxu0
      %v908 = vadd.f32 %v784, %v907
      %v909 = vpop.f32.mrf.mxu0
      %v910 = vpop.f32.mrf.mxu0
      %v911 = vadd.f32 %v787, %v910
      %v912 = vpop.f32.mrf.mxu0
      %913 = vmatprep.mubr.bf16.mxu0 0
      %914 = vmatmul.mubr.bf16.gmra.mxu0 %v845
      %v915 = vpop.f32.mrf.mxu0
      %v916 = vadd.f32 %v792, %v915
      %v917 = vpop.f32.mrf.mxu0
      %v918 = vpop.f32.mrf.mxu0
      %v919 = vadd.f32 %v795, %v918
      %v920 = vpop.f32.mrf.mxu0
      %921 = vmatprep.mubr.bf16.mxu0 0
      %922 = vmatmul.mubr.bf16.gmra.mxu0 %v848
      %v923 = vpop.f32.mrf.mxu0
      %v924 = vadd.f32 %v800, %v923
      %v925 = vpop.f32.mrf.mxu0
      %v926 = vpop.f32.mrf.mxu0
      %v927 = vadd.f32 %v803, %v926
      %v928 = vpop.f32.mrf.mxu0
      %929 = vmatprep.mubr.bf16.mxu0 0
      %930 = vmatmul.mubr.bf16.gmra.mxu0 %v851
      %v931 = vpop.f32.mrf.mxu0
      %v932 = vadd.f32 %v808, %v931
      %v933 = vpop.f32.mrf.mxu0
      %v934 = vpop.f32.mrf.mxu0
      %v935 = vadd.f32 %v811, %v934
      %v936 = vpop.f32.mrf.mxu0
      %937 = vmatprep.mubr.bf16.mxu0 0
      %938 = vmatmul.mubr.bf16.gmra.mxu0 %v854
      %v939 = vpop.f32.mrf.mxu0
      %v940 = vadd.f32 %v816, %v939
      %v941 = vpop.f32.mrf.mxu0
      %v942 = vpop.f32.mrf.mxu0
      %v943 = vadd.f32 %v819, %v942
      %v944 = vpop.f32.mrf.mxu0
      %945 = vmatprep.mubr.bf16.mxu0 0
      %946 = vmatmul.mubr.bf16.gmra.mxu0 %v857
      %v947 = vpop.f32.mrf.mxu0
      %v948 = vadd.f32 %v824, %v947
      %v949 = vpop.f32.mrf.mxu0
      %v950 = vpop.f32.mrf.mxu0
      %v951 = vadd.f32 %v827, %v950
      %v952 = vpop.f32.mrf.mxu0
      %953 = vmatprep.mubr.bf16.mxu0 0
      %954 = vmatmul.mubr.bf16.gmra.mxu0 %v860
      %v955 = vpop.f32.mrf.mxu0
      %v956 = vadd.f32 %v832, %v955
      %v957 = vpop.f32.mrf.mxu0
      %v958 = vpop.f32.mrf.mxu0
      %v959 = vadd.f32 %v835, %v958
      %v960 = vpop.f32.mrf.mxu0
      %961 = vdwg.mxu0
      %v962 = vld [vmem:[#allocation2 + $0x2] sm:$0xff]
      %v963 = vld [vmem:[#allocation2 + $0xa] sm:$0xff]
      %v964 = vld [vmem:[#allocation2 + $0x1a] sm:$0xff]
      %v965 = vld [vmem:[#allocation2 + $0x22] sm:$0xff]
      %v966 = vld [vmem:[#allocation2 + $0x32] sm:$0xff]
      %v967 = vld [vmem:[#allocation2 + $0x3a] sm:$0xff]
      %v968 = vld [vmem:[#allocation2 + $0x4a] sm:$0xff]
      %v969 = vld [vmem:[#allocation2 + $0x52] sm:$0xff]
      %v970 = vld [vmem:[#allocation2 + $0x62] sm:$0xff]
      %v971 = vld [vmem:[#allocation2 + $0x6a] sm:$0xff]
      %v972 = vld [vmem:[#allocation2 + $0x7a] sm:$0xff]
      %v973 = vld [vmem:[#allocation2 + $0x82] sm:$0xff]
      %v974 = vld [vmem:[#allocation2 + $0x92] sm:$0xff]
      %v975 = vld [vmem:[#allocation2 + $0x9a] sm:$0xff]
      %v976 = vld [vmem:[#allocation2 + $0xaa] sm:$0xff]
      %v977 = vld [vmem:[#allocation2 + $0xb2] sm:$0xff]
      %v978 = vpack.c.bf16 %v963, %v962
      %v979 = vpack.c.bf16 %v965, %v964
      %v980 = vpack.c.bf16 %v967, %v966
      %v981 = vpack.c.bf16 %v969, %v968
      %v982 = vpack.c.bf16 %v971, %v970
      %v983 = vpack.c.bf16 %v973, %v972
      %v984 = vpack.c.bf16 %v975, %v974
      %v985 = vpack.c.bf16 %v977, %v976
      %v986 = vld [vmem:[%s5 + $0x4] sm:$0x3]
      %v988 = vsel %vm636, %v978, 0
      %v991 = vsel %vm636, %v979, 0
      %v994 = vsel %vm636, %v980, 0
      %v997 = vsel %vm636, %v981, 0
      %v1000 = vsel %vm636, %v982, 0
      %v1003 = vsel %vm636, %v983, 0
      %v1006 = vsel %vm636, %v984, 0
      %v1009 = vsel %vm636, %v985, 0
      %v1012 = vsel %vm737, %v986, 0
      %1014 = vmatprep.subr.bf16.mxu0 0
      %1015 = vmatpush1.bf16.msra.mxu0 0
      %1016 = vmatprep.subr.bf16.mxu0 0
      %1017 = vmatpush1.bf16.msra.mxu0 0
      %1018 = vmatprep.subr.bf16.mxu0 0
      %1019 = vmatpush1.bf16.msra.mxu0 0
      %1020 = vmatprep.subr.bf16.mxu0 0
      %1021 = vmatpush1.bf16.msra.mxu0 0
      %1022 = vmatprep.subr.bf16.mxu0 0
      %1023 = vmatpush1.bf16.msra.mxu0 0
      %1024 = vmatprep.subr.bf16.mxu0 0
      %1025 = vmatpush1.bf16.msra.mxu0 0
      %1026 = vmatprep.subr.bf16.mxu0 0
      %1027 = vmatpush1.bf16.msra.mxu0 0
      %1028 = vmatprep.subr.bf16.mxu0 0
      %1029 = vmatpush1.bf16.msra.mxu0 %v1012
      %1030 = vmatprep.subr.bf16.mxu0 0
      %1031 = vmatpush2.bf16.msra.mxu0 0
      %1032 = vmatprep.subr.bf16.mxu0 0
      %1033 = vmatpush2.bf16.msra.mxu0 0
      %1034 = vmatprep.subr.bf16.mxu0 0
      %1035 = vmatpush2.bf16.msra.mxu0 0
      %1036 = vmatprep.subr.bf16.mxu0 0
      %1037 = vmatpush2.bf16.msra.mxu0 0
      %1038 = vmatprep.subr.bf16.mxu0 0
      %1039 = vmatpush2.bf16.msra.mxu0 0
      %1040 = vmatprep.subr.bf16.mxu0 0
      %1041 = vmatpush2.bf16.msra.mxu0 0
      %1042 = vmatprep.subr.bf16.mxu0 0
      %1043 = vmatpush2.bf16.msra.mxu0 0
      %1044 = vmatprep.subr.bf16.mxu0 0
      %1045 = vmatpush2.bf16.msra.mxu0 0
      %1046 = vmatprep.mubr.bf16.mxu0 0
      %1047 = vmatmul.mubr.bf16.gmra.mxu0 %v988
      %v1048 = vpop.f32.mrf.mxu0
      %v1049 = vadd.f32 0.0, %v1048
      %v1050 = vpop.f32.mrf.mxu0
      %v1051 = vpop.f32.mrf.mxu0
      %v1052 = vadd.f32 0.0, %v1051
      %v1053 = vpop.f32.mrf.mxu0
      %1054 = vmatprep.mubr.bf16.mxu0 0
      %1055 = vmatmul.mubr.bf16.gmra.mxu0 %v991
      %v1056 = vpop.f32.mrf.mxu0
      %v1057 = vadd.f32 0.0, %v1056
      %v1058 = vpop.f32.mrf.mxu0
      %v1059 = vpop.f32.mrf.mxu0
      %v1060 = vadd.f32 0.0, %v1059
      %v1061 = vpop.f32.mrf.mxu0
      %1062 = vmatprep.mubr.bf16.mxu0 0
      %1063 = vmatmul.mubr.bf16.gmra.mxu0 %v994
      %v1064 = vpop.f32.mrf.mxu0
      %v1065 = vadd.f32 0.0, %v1064
      %v1066 = vpop.f32.mrf.mxu0
      %v1067 = vpop.f32.mrf.mxu0
      %v1068 = vadd.f32 0.0, %v1067
      %v1069 = vpop.f32.mrf.mxu0
      %1070 = vmatprep.mubr.bf16.mxu0 0
      %1071 = vmatmul.mubr.bf16.gmra.mxu0 %v997
      %v1072 = vpop.f32.mrf.mxu0
      %v1073 = vadd.f32 0.0, %v1072
      %v1074 = vpop.f32.mrf.mxu0
      %v1075 = vpop.f32.mrf.mxu0
      %v1076 = vadd.f32 0.0, %v1075
      %v1077 = vpop.f32.mrf.mxu0
      %1078 = vmatprep.mubr.bf16.mxu0 0
      %1079 = vmatmul.mubr.bf16.gmra.mxu0 %v1000
      %v1080 = vpop.f32.mrf.mxu0
      %v1081 = vadd.f32 0.0, %v1080
      %v1082 = vpop.f32.mrf.mxu0
      %v1083 = vpop.f32.mrf.mxu0
      %v1084 = vadd.f32 0.0, %v1083
      %v1085 = vpop.f32.mrf.mxu0
      %1086 = vmatprep.mubr.bf16.mxu0 0
      %1087 = vmatmul.mubr.bf16.gmra.mxu0 %v1003
      %v1088 = vpop.f32.mrf.mxu0
      %v1089 = vadd.f32 0.0, %v1088
      %v1090 = vpop.f32.mrf.mxu0
      %v1091 = vpop.f32.mrf.mxu0
      %v1092 = vadd.f32 0.0, %v1091
      %v1093 = vpop.f32.mrf.mxu0
      %1094 = vmatprep.mubr.bf16.mxu0 0
      %1095 = vmatmul.mubr.bf16.gmra.mxu0 %v1006
      %v1096 = vpop.f32.mrf.mxu0
      %v1097 = vadd.f32 0.0, %v1096
      %v1098 = vpop.f32.mrf.mxu0
      %v1099 = vpop.f32.mrf.mxu0
      %v1100 = vadd.f32 0.0, %v1099
      %v1101 = vpop.f32.mrf.mxu0
      %1102 = vmatprep.mubr.bf16.mxu0 0
      %1103 = vmatmul.mubr.bf16.gmra.mxu0 %v1009
      %v1104 = vpop.f32.mrf.mxu0
      %v1105 = vadd.f32 0.0, %v1104
      %v1106 = vpop.f32.mrf.mxu0
      %v1107 = vpop.f32.mrf.mxu0
      %v1108 = vadd.f32 0.0, %v1107
      %v1109 = vpop.f32.mrf.mxu0
      %1110 = vdwg.mxu0
      %v1111 = vadd.f32 %v900, %v1049
      %v1112 = vadd.f32 %v903, %v1052
      %v1113 = vadd.f32 %v908, %v1057
      %v1114 = vadd.f32 %v911, %v1060
      %v1115 = vadd.f32 %v916, %v1065
      %v1116 = vadd.f32 %v919, %v1068
      %v1117 = vadd.f32 %v924, %v1073
      %v1118 = vadd.f32 %v927, %v1076
      %v1119 = vadd.f32 %v932, %v1081
      %v1120 = vadd.f32 %v935, %v1084
      %v1121 = vadd.f32 %v940, %v1089
      %v1122 = vadd.f32 %v943, %v1092
      %v1123 = vadd.f32 %v948, %v1097
      %v1124 = vadd.f32 %v951, %v1100
      %v1125 = vadd.f32 %v956, %v1105
      %v1126 = vadd.f32 %v959, %v1108
      %v1127 = vld [vmem:[%s642] sm:$0xff]
      %v1128 = vld [vmem:[%s642 + $0x8] sm:$0xff]
      %v1129 = vld [vmem:[%s642 + $0x18] sm:$0xff]
      %v1130 = vld [vmem:[%s642 + $0x20] sm:$0xff]
      %v1131 = vld [vmem:[%s642 + $0x30] sm:$0xff]
      %v1132 = vld [vmem:[%s642 + $0x38] sm:$0xff]
      %v1133 = vld [vmem:[%s642 + $0x48] sm:$0xff]
      %v1134 = vld [vmem:[%s642 + $0x50] sm:$0xff]
      %v1135 = vld [vmem:[%s642 + $0x60] sm:$0xff]
      %v1136 = vld [vmem:[%s642 + $0x68] sm:$0xff]
      %v1137 = vld [vmem:[%s642 + $0x78] sm:$0xff]
      %v1138 = vld [vmem:[%s642 + $0x80] sm:$0xff]
      %v1139 = vld [vmem:[%s642 + $0x90] sm:$0xff]
      %v1140 = vld [vmem:[%s642 + $0x98] sm:$0xff]
      %v1141 = vld [vmem:[%s642 + $0xa8] sm:$0xff]
      %v1142 = vld [vmem:[%s642 + $0xb0] sm:$0xff]
      %v1143 = vpack.c.bf16 %v1128, %v1127
      %v1144 = vpack.c.bf16 %v1130, %v1129
      %v1145 = vpack.c.bf16 %v1132, %v1131
      %v1146 = vpack.c.bf16 %v1134, %v1133
      %v1147 = vpack.c.bf16 %v1136, %v1135
      %v1148 = vpack.c.bf16 %v1138, %v1137
      %v1149 = vpack.c.bf16 %v1140, %v1139
      %v1150 = vpack.c.bf16 %v1142, %v1141
      %s1151 = scalar_lea.vmem %s5, 8
      %v1152 = vld [vmem:[%s1151] sm:$0x3]
      %v1154 = vsel %vm636, %v1143, 0
      %v1157 = vsel %vm636, %v1144, 0
      %v1160 = vsel %vm636, %v1145, 0
      %v1163 = vsel %vm636, %v1146, 0
      %v1166 = vsel %vm636, %v1147, 0
      %v1169 = vsel %vm636, %v1148, 0
      %v1172 = vsel %vm636, %v1149, 0
      %v1175 = vsel %vm636, %v1150, 0
      %v1178 = vsel %vm737, %v1152, 0
      %1180 = vmatprep.subr.bf16.mxu0 0
      %1181 = vmatpush1.bf16.msra.mxu0 0
      %1182 = vmatprep.subr.bf16.mxu0 0
      %1183 = vmatpush1.bf16.msra.mxu0 0
      %1184 = vmatprep.subr.bf16.mxu0 0
      %1185 = vmatpush1.bf16.msra.mxu0 0
      %1186 = vmatprep.subr.bf16.mxu0 0
      %1187 = vmatpush1.bf16.msra.mxu0 0
      %1188 = vmatprep.subr.bf16.mxu0 0
      %1189 = vmatpush1.bf16.msra.mxu0 0
      %1190 = vmatprep.subr.bf16.mxu0 0
      %1191 = vmatpush1.bf16.msra.mxu0 0
      %1192 = vmatprep.subr.bf16.mxu0 0
      %1193 = vmatpush1.bf16.msra.mxu0 0
      %1194 = vmatprep.subr.bf16.mxu0 0
      %1195 = vmatpush1.bf16.msra.mxu0 %v1178
      %1196 = vmatprep.subr.bf16.mxu0 0
      %1197 = vmatpush2.bf16.msra.mxu0 0
      %1198 = vmatprep.subr.bf16.mxu0 0
      %1199 = vmatpush2.bf16.msra.mxu0 0
      %1200 = vmatprep.subr.bf16.mxu0 0
      %1201 = vmatpush2.bf16.msra.mxu0 0
      %1202 = vmatprep.subr.bf16.mxu0 0
      %1203 = vmatpush2.bf16.msra.mxu0 0
      %1204 = vmatprep.subr.bf16.mxu0 0
      %1205 = vmatpush2.bf16.msra.mxu0 0
      %1206 = vmatprep.subr.bf16.mxu0 0
      %1207 = vmatpush2.bf16.msra.mxu0 0
      %1208 = vmatprep.subr.bf16.mxu0 0
      %1209 = vmatpush2.bf16.msra.mxu0 0
      %1210 = vmatprep.subr.bf16.mxu0 0
      %1211 = vmatpush2.bf16.msra.mxu0 0
      %1212 = vmatprep.mubr.bf16.mxu0 0
      %1213 = vmatmul.mubr.bf16.gmra.mxu0 %v1154
      %v1214 = vpop.f32.mrf.mxu0
      %v1215 = vadd.f32 0.0, %v1214
      %v1216 = vpop.f32.mrf.mxu0
      %v1217 = vpop.f32.mrf.mxu0
      %v1218 = vadd.f32 0.0, %v1217
      %v1219 = vpop.f32.mrf.mxu0
      %1220 = vmatprep.mubr.bf16.mxu0 0
      %1221 = vmatmul.mubr.bf16.gmra.mxu0 %v1157
      %v1222 = vpop.f32.mrf.mxu0
      %v1223 = vadd.f32 0.0, %v1222
      %v1224 = vpop.f32.mrf.mxu0
      %v1225 = vpop.f32.mrf.mxu0
      %v1226 = vadd.f32 0.0, %v1225
      %v1227 = vpop.f32.mrf.mxu0
      %1228 = vmatprep.mubr.bf16.mxu0 0
      %1229 = vmatmul.mubr.bf16.gmra.mxu0 %v1160
      %v1230 = vpop.f32.mrf.mxu0
      %v1231 = vadd.f32 0.0, %v1230
      %v1232 = vpop.f32.mrf.mxu0
      %v1233 = vpop.f32.mrf.mxu0
      %v1234 = vadd.f32 0.0, %v1233
      %v1235 = vpop.f32.mrf.mxu0
      %1236 = vmatprep.mubr.bf16.mxu0 0
      %1237 = vmatmul.mubr.bf16.gmra.mxu0 %v1163
      %v1238 = vpop.f32.mrf.mxu0
      %v1239 = vadd.f32 0.0, %v1238
      %v1240 = vpop.f32.mrf.mxu0
      %v1241 = vpop.f32.mrf.mxu0
      %v1242 = vadd.f32 0.0, %v1241
      %v1243 = vpop.f32.mrf.mxu0
      %1244 = vmatprep.mubr.bf16.mxu0 0
      %1245 = vmatmul.mubr.bf16.gmra.mxu0 %v1166
      %v1246 = vpop.f32.mrf.mxu0
      %v1247 = vadd.f32 0.0, %v1246
      %v1248 = vpop.f32.mrf.mxu0
      %v1249 = vpop.f32.mrf.mxu0
      %v1250 = vadd.f32 0.0, %v1249
      %v1251 = vpop.f32.mrf.mxu0
      %1252 = vmatprep.mubr.bf16.mxu0 0
      %1253 = vmatmul.mubr.bf16.gmra.mxu0 %v1169
      %v1254 = vpop.f32.mrf.mxu0
      %v1255 = vadd.f32 0.0, %v1254
      %v1256 = vpop.f32.mrf.mxu0
      %v1257 = vpop.f32.mrf.mxu0
      %v1258 = vadd.f32 0.0, %v1257
      %v1259 = vpop.f32.mrf.mxu0
      %1260 = vmatprep.mubr.bf16.mxu0 0
      %1261 = vmatmul.mubr.bf16.gmra.mxu0 %v1172
      %v1262 = vpop.f32.mrf.mxu0
      %v1263 = vadd.f32 0.0, %v1262
      %v1264 = vpop.f32.mrf.mxu0
      %v1265 = vpop.f32.mrf.mxu0
      %v1266 = vadd.f32 0.0, %v1265
      %v1267 = vpop.f32.mrf.mxu0
      %1268 = vmatprep.mubr.bf16.mxu0 0
      %1269 = vmatmul.mubr.bf16.gmra.mxu0 %v1175
      %v1270 = vpop.f32.mrf.mxu0
      %v1271 = vadd.f32 0.0, %v1270
      %v1272 = vpop.f32.mrf.mxu0
      %v1273 = vpop.f32.mrf.mxu0
      %v1274 = vadd.f32 0.0, %v1273
      %v1275 = vpop.f32.mrf.mxu0
      %1276 = vdwg.mxu0
      %v1277 = vadd.f32 %v1111, %v1215
      %v1278 = vadd.f32 %v1112, %v1218
      %v1279 = vadd.f32 %v1113, %v1223
      %v1280 = vadd.f32 %v1114, %v1226
      %v1281 = vadd.f32 %v1115, %v1231
      %v1282 = vadd.f32 %v1116, %v1234
      %v1283 = vadd.f32 %v1117, %v1239
      %v1284 = vadd.f32 %v1118, %v1242
      %v1285 = vadd.f32 %v1119, %v1247
      %v1286 = vadd.f32 %v1120, %v1250
      %v1287 = vadd.f32 %v1121, %v1255
      %v1288 = vadd.f32 %v1122, %v1258
      %v1289 = vadd.f32 %v1123, %v1263
      %v1290 = vadd.f32 %v1124, %v1266
      %v1291 = vadd.f32 %v1125, %v1271
      %v1292 = vadd.f32 %v1126, %v1274
      %v1293 = vld [vmem:[%s642 + $0x1] sm:$0xff]
      %v1294 = vld [vmem:[%s642 + $0x9] sm:$0xff]
      %v1295 = vld [vmem:[%s642 + $0x19] sm:$0xff]
      %v1296 = vld [vmem:[%s642 + $0x21] sm:$0xff]
      %v1297 = vld [vmem:[%s642 + $0x31] sm:$0xff]
      %v1298 = vld [vmem:[%s642 + $0x39] sm:$0xff]
      %v1299 = vld [vmem:[%s642 + $0x49] sm:$0xff]
      %v1300 = vld [vmem:[%s642 + $0x51] sm:$0xff]
      %v1301 = vld [vmem:[%s642 + $0x61] sm:$0xff]
      %v1302 = vld [vmem:[%s642 + $0x69] sm:$0xff]
      %v1303 = vld [vmem:[%s642 + $0x79] sm:$0xff]
      %v1304 = vld [vmem:[%s642 + $0x81] sm:$0xff]
      %v1305 = vld [vmem:[%s642 + $0x91] sm:$0xff]
      %v1306 = vld [vmem:[%s642 + $0x99] sm:$0xff]
      %v1307 = vld [vmem:[%s642 + $0xa9] sm:$0xff]
      %v1308 = vld [vmem:[%s642 + $0xb1] sm:$0xff]
      %v1309 = vpack.c.bf16 %v1294, %v1293
      %v1310 = vpack.c.bf16 %v1296, %v1295
      %v1311 = vpack.c.bf16 %v1298, %v1297
      %v1312 = vpack.c.bf16 %v1300, %v1299
      %v1313 = vpack.c.bf16 %v1302, %v1301
      %v1314 = vpack.c.bf16 %v1304, %v1303
      %v1315 = vpack.c.bf16 %v1306, %v1305
      %v1316 = vpack.c.bf16 %v1308, %v1307
      %v1317 = vld [vmem:[%s1151] sm:$0xc]
      %v1319 = vunpack.c.l.b16 %v1317
      %v1320 = vpack.c.b16 %v1319, %v1319
      %v1321 = vrot.slane %v1320, 2
      %v1323 = vsel %vm636, %v1309, 0
      %v1326 = vsel %vm636, %v1310, 0
      %v1329 = vsel %vm636, %v1311, 0
      %v1332 = vsel %vm636, %v1312, 0
      %v1335 = vsel %vm636, %v1313, 0
      %v1338 = vsel %vm636, %v1314, 0
      %v1341 = vsel %vm636, %v1315, 0
      %v1344 = vsel %vm636, %v1316, 0
      %v1347 = vsel %vm737, %v1321, 0
      %1349 = vmatprep.subr.bf16.mxu0 0
      %1350 = vmatpush1.bf16.msra.mxu0 0
      %1351 = vmatprep.subr.bf16.mxu0 0
      %1352 = vmatpush1.bf16.msra.mxu0 0
      %1353 = vmatprep.subr.bf16.mxu0 0
      %1354 = vmatpush1.bf16.msra.mxu0 0
      %1355 = vmatprep.subr.bf16.mxu0 0
      %1356 = vmatpush1.bf16.msra.mxu0 0
      %1357 = vmatprep.subr.bf16.mxu0 0
      %1358 = vmatpush1.bf16.msra.mxu0 0
      %1359 = vmatprep.subr.bf16.mxu0 0
      %1360 = vmatpush1.bf16.msra.mxu0 0
      %1361 = vmatprep.subr.bf16.mxu0 0
      %1362 = vmatpush1.bf16.msra.mxu0 0
      %1363 = vmatprep.subr.bf16.mxu0 0
      %1364 = vmatpush1.bf16.msra.mxu0 %v1347
      %1365 = vmatprep.subr.bf16.mxu0 0
      %1366 = vmatpush2.bf16.msra.mxu0 0
      %1367 = vmatprep.subr.bf16.mxu0 0
      %1368 = vmatpush2.bf16.msra.mxu0 0
      %1369 = vmatprep.subr.bf16.mxu0 0
      %1370 = vmatpush2.bf16.msra.mxu0 0
      %1371 = vmatprep.subr.bf16.mxu0 0
      %1372 = vmatpush2.bf16.msra.mxu0 0
      %1373 = vmatprep.subr.bf16.mxu0 0
      %1374 = vmatpush2.bf16.msra.mxu0 0
      %1375 = vmatprep.subr.bf16.mxu0 0
      %1376 = vmatpush2.bf16.msra.mxu0 0
      %1377 = vmatprep.subr.bf16.mxu0 0
      %1378 = vmatpush2.bf16.msra.mxu0 0
      %1379 = vmatprep.subr.bf16.mxu0 0
      %1380 = vmatpush2.bf16.msra.mxu0 0
      %1381 = vmatprep.mubr.bf16.mxu0 0
      %1382 = vmatmul.mubr.bf16.gmra.mxu0 %v1323
      %v1383 = vpop.f32.mrf.mxu0
      %v1384 = vadd.f32 0.0, %v1383
      %v1385 = vpop.f32.mrf.mxu0
      %v1386 = vpop.f32.mrf.mxu0
      %v1387 = vadd.f32 0.0, %v1386
      %v1388 = vpop.f32.mrf.mxu0
      %1389 = vmatprep.mubr.bf16.mxu0 0
      %1390 = vmatmul.mubr.bf16.gmra.mxu0 %v1326
      %v1391 = vpop.f32.mrf.mxu0
      %v1392 = vadd.f32 0.0, %v1391
      %v1393 = vpop.f32.mrf.mxu0
      %v1394 = vpop.f32.mrf.mxu0
      %v1395 = vadd.f32 0.0, %v1394
      %v1396 = vpop.f32.mrf.mxu0
      %1397 = vmatprep.mubr.bf16.mxu0 0
      %1398 = vmatmul.mubr.bf16.gmra.mxu0 %v1329
      %v1399 = vpop.f32.mrf.mxu0
      %v1400 = vadd.f32 0.0, %v1399
      %v1401 = vpop.f32.mrf.mxu0
      %v1402 = vpop.f32.mrf.mxu0
      %v1403 = vadd.f32 0.0, %v1402
      %v1404 = vpop.f32.mrf.mxu0
      %1405 = vmatprep.mubr.bf16.mxu0 0
      %1406 = vmatmul.mubr.bf16.gmra.mxu0 %v1332
      %v1407 = vpop.f32.mrf.mxu0
      %v1408 = vadd.f32 0.0, %v1407
      %v1409 = vpop.f32.mrf.mxu0
      %v1410 = vpop.f32.mrf.mxu0
      %v1411 = vadd.f32 0.0, %v1410
      %v1412 = vpop.f32.mrf.mxu0
      %1413 = vmatprep.mubr.bf16.mxu0 0
      %1414 = vmatmul.mubr.bf16.gmra.mxu0 %v1335
      %v1415 = vpop.f32.mrf.mxu0
      %v1416 = vadd.f32 0.0, %v1415
      %v1417 = vpop.f32.mrf.mxu0
      %v1418 = vpop.f32.mrf.mxu0
      %v1419 = vadd.f32 0.0, %v1418
      %v1420 = vpop.f32.mrf.mxu0
      %1421 = vmatprep.mubr.bf16.mxu0 0
      %1422 = vmatmul.mubr.bf16.gmra.mxu0 %v1338
      %v1423 = vpop.f32.mrf.mxu0
      %v1424 = vadd.f32 0.0, %v1423
      %v1425 = vpop.f32.mrf.mxu0
      %v1426 = vpop.f32.mrf.mxu0
      %v1427 = vadd.f32 0.0, %v1426
      %v1428 = vpop.f32.mrf.mxu0
      %1429 = vmatprep.mubr.bf16.mxu0 0
      %1430 = vmatmul.mubr.bf16.gmra.mxu0 %v1341
      %v1431 = vpop.f32.mrf.mxu0
      %v1432 = vadd.f32 0.0, %v1431
      %v1433 = vpop.f32.mrf.mxu0
      %v1434 = vpop.f32.mrf.mxu0
      %v1435 = vadd.f32 0.0, %v1434
      %v1436 = vpop.f32.mrf.mxu0
      %1437 = vmatprep.mubr.bf16.mxu0 0
      %1438 = vmatmul.mubr.bf16.gmra.mxu0 %v1344
      %v1439 = vpop.f32.mrf.mxu0
      %v1440 = vadd.f32 0.0, %v1439
      %v1441 = vpop.f32.mrf.mxu0
      %v1442 = vpop.f32.mrf.mxu0
      %v1443 = vadd.f32 0.0, %v1442
      %v1444 = vpop.f32.mrf.mxu0
      %1445 = vdwg.mxu0
      %v1446 = vadd.f32 %v1277, %v1384
      %v1447 = vadd.f32 %v1278, %v1387
      %v1448 = vadd.f32 %v1279, %v1392
      %v1449 = vadd.f32 %v1280, %v1395
      %v1450 = vadd.f32 %v1281, %v1400
      %v1451 = vadd.f32 %v1282, %v1403
      %v1452 = vadd.f32 %v1283, %v1408
      %v1453 = vadd.f32 %v1284, %v1411
      %v1454 = vadd.f32 %v1285, %v1416
      %v1455 = vadd.f32 %v1286, %v1419
      %v1456 = vadd.f32 %v1287, %v1424
      %v1457 = vadd.f32 %v1288, %v1427
      %v1458 = vadd.f32 %v1289, %v1432
      %v1459 = vadd.f32 %v1290, %v1435
      %v1460 = vadd.f32 %v1291, %v1440
      %v1461 = vadd.f32 %v1292, %v1443
      %v1462 = vld [vmem:[%s642 + $0x2] sm:$0xff]
      %v1463 = vld [vmem:[%s642 + $0xa] sm:$0xff]
      %v1464 = vld [vmem:[%s642 + $0x1a] sm:$0xff]
      %v1465 = vld [vmem:[%s642 + $0x22] sm:$0xff]
      %v1466 = vld [vmem:[%s642 + $0x32] sm:$0xff]
      %v1467 = vld [vmem:[%s642 + $0x3a] sm:$0xff]
      %v1468 = vld [vmem:[%s642 + $0x4a] sm:$0xff]
      %v1469 = vld [vmem:[%s642 + $0x52] sm:$0xff]
      %v1470 = vld [vmem:[%s642 + $0x62] sm:$0xff]
      %v1471 = vld [vmem:[%s642 + $0x6a] sm:$0xff]
      %v1472 = vld [vmem:[%s642 + $0x7a] sm:$0xff]
      %v1473 = vld [vmem:[%s642 + $0x82] sm:$0xff]
      %v1474 = vld [vmem:[%s642 + $0x92] sm:$0xff]
      %v1475 = vld [vmem:[%s642 + $0x9a] sm:$0xff]
      %v1476 = vld [vmem:[%s642 + $0xaa] sm:$0xff]
      %v1477 = vld [vmem:[%s642 + $0xb2] sm:$0xff]
      %v1478 = vpack.c.bf16 %v1463, %v1462
      %v1479 = vpack.c.bf16 %v1465, %v1464
      %v1480 = vpack.c.bf16 %v1467, %v1466
      %v1481 = vpack.c.bf16 %v1469, %v1468
      %v1482 = vpack.c.bf16 %v1471, %v1470
      %v1483 = vpack.c.bf16 %v1473, %v1472
      %v1484 = vpack.c.bf16 %v1475, %v1474
      %v1485 = vpack.c.bf16 %v1477, %v1476
      %v1486 = vld [vmem:[%s1151 + $0x4] sm:$0x3]
      %v1488 = vsel %vm636, %v1478, 0
      %v1491 = vsel %vm636, %v1479, 0
      %v1494 = vsel %vm636, %v1480, 0
      %v1497 = vsel %vm636, %v1481, 0
      %v1500 = vsel %vm636, %v1482, 0
      %v1503 = vsel %vm636, %v1483, 0
      %v1506 = vsel %vm636, %v1484, 0
      %v1509 = vsel %vm636, %v1485, 0
      %v1512 = vsel %vm737, %v1486, 0
      %1514 = vmatprep.subr.bf16.mxu0 0
      %1515 = vmatpush1.bf16.msra.mxu0 0
      %1516 = vmatprep.subr.bf16.mxu0 0
      %1517 = vmatpush1.bf16.msra.mxu0 0
      %1518 = vmatprep.subr.bf16.mxu0 0
      %1519 = vmatpush1.bf16.msra.mxu0 0
      %1520 = vmatprep.subr.bf16.mxu0 0
      %1521 = vmatpush1.bf16.msra.mxu0 0
      %1522 = vmatprep.subr.bf16.mxu0 0
      %1523 = vmatpush1.bf16.msra.mxu0 0
      %1524 = vmatprep.subr.bf16.mxu0 0
      %1525 = vmatpush1.bf16.msra.mxu0 0
      %1526 = vmatprep.subr.bf16.mxu0 0
      %1527 = vmatpush1.bf16.msra.mxu0 0
      %1528 = vmatprep.subr.bf16.mxu0 0
      %1529 = vmatpush1.bf16.msra.mxu0 %v1512
      %1530 = vmatprep.subr.bf16.mxu0 0
      %1531 = vmatpush2.bf16.msra.mxu0 0
      %1532 = vmatprep.subr.bf16.mxu0 0
      %1533 = vmatpush2.bf16.msra.mxu0 0
      %1534 = vmatprep.subr.bf16.mxu0 0
      %1535 = vmatpush2.bf16.msra.mxu0 0
      %1536 = vmatprep.subr.bf16.mxu0 0
      %1537 = vmatpush2.bf16.msra.mxu0 0
      %1538 = vmatprep.subr.bf16.mxu0 0
      %1539 = vmatpush2.bf16.msra.mxu0 0
      %1540 = vmatprep.subr.bf16.mxu0 0
      %1541 = vmatpush2.bf16.msra.mxu0 0
      %1542 = vmatprep.subr.bf16.mxu0 0
      %1543 = vmatpush2.bf16.msra.mxu0 0
      %1544 = vmatprep.subr.bf16.mxu0 0
      %1545 = vmatpush2.bf16.msra.mxu0 0
      %1546 = vmatprep.mubr.bf16.mxu0 0
      %1547 = vmatmul.mubr.bf16.gmra.mxu0 %v1488
      %v1548 = vpop.f32.mrf.mxu0
      %v1549 = vadd.f32 0.0, %v1548
      %v1550 = vpop.f32.mrf.mxu0
      %v1551 = vpop.f32.mrf.mxu0
      %v1552 = vadd.f32 0.0, %v1551
      %v1553 = vpop.f32.mrf.mxu0
      %1554 = vmatprep.mubr.bf16.mxu0 0
      %1555 = vmatmul.mubr.bf16.gmra.mxu0 %v1491
      %v1556 = vpop.f32.mrf.mxu0
      %v1557 = vadd.f32 0.0, %v1556
      %v1558 = vpop.f32.mrf.mxu0
      %v1559 = vpop.f32.mrf.mxu0
      %v1560 = vadd.f32 0.0, %v1559
      %v1561 = vpop.f32.mrf.mxu0
      %1562 = vmatprep.mubr.bf16.mxu0 0
      %1563 = vmatmul.mubr.bf16.gmra.mxu0 %v1494
      %v1564 = vpop.f32.mrf.mxu0
      %v1565 = vadd.f32 0.0, %v1564
      %v1566 = vpop.f32.mrf.mxu0
      %v1567 = vpop.f32.mrf.mxu0
      %v1568 = vadd.f32 0.0, %v1567
      %v1569 = vpop.f32.mrf.mxu0
      %1570 = vmatprep.mubr.bf16.mxu0 0
      %1571 = vmatmul.mubr.bf16.gmra.mxu0 %v1497
      %v1572 = vpop.f32.mrf.mxu0
      %v1573 = vadd.f32 0.0, %v1572
      %v1574 = vpop.f32.mrf.mxu0
      %v1575 = vpop.f32.mrf.mxu0
      %v1576 = vadd.f32 0.0, %v1575
      %v1577 = vpop.f32.mrf.mxu0
      %1578 = vmatprep.mubr.bf16.mxu0 0
      %1579 = vmatmul.mubr.bf16.gmra.mxu0 %v1500
      %v1580 = vpop.f32.mrf.mxu0
      %v1581 = vadd.f32 0.0, %v1580
      %v1582 = vpop.f32.mrf.mxu0
      %v1583 = vpop.f32.mrf.mxu0
      %v1584 = vadd.f32 0.0, %v1583
      %v1585 = vpop.f32.mrf.mxu0
      %1586 = vmatprep.mubr.bf16.mxu0 0
      %1587 = vmatmul.mubr.bf16.gmra.mxu0 %v1503
      %v1588 = vpop.f32.mrf.mxu0
      %v1589 = vadd.f32 0.0, %v1588
      %v1590 = vpop.f32.mrf.mxu0
      %v1591 = vpop.f32.mrf.mxu0
      %v1592 = vadd.f32 0.0, %v1591
      %v1593 = vpop.f32.mrf.mxu0
      %1594 = vmatprep.mubr.bf16.mxu0 0
      %1595 = vmatmul.mubr.bf16.gmra.mxu0 %v1506
      %v1596 = vpop.f32.mrf.mxu0
      %v1597 = vadd.f32 0.0, %v1596
      %v1598 = vpop.f32.mrf.mxu0
      %v1599 = vpop.f32.mrf.mxu0
      %v1600 = vadd.f32 0.0, %v1599
      %v1601 = vpop.f32.mrf.mxu0
      %1602 = vmatprep.mubr.bf16.mxu0 0
      %1603 = vmatmul.mubr.bf16.gmra.mxu0 %v1509
      %v1604 = vpop.f32.mrf.mxu0
      %v1605 = vadd.f32 0.0, %v1604
      %v1606 = vpop.f32.mrf.mxu0
      %v1607 = vpop.f32.mrf.mxu0
      %v1608 = vadd.f32 0.0, %v1607
      %v1609 = vpop.f32.mrf.mxu0
      %1610 = vdwg.mxu0
      %v1611 = vadd.f32 %v1446, %v1549
      %v1612 = vadd.f32 %v1447, %v1552
      %v1613 = vadd.f32 %v1448, %v1557
      %v1614 = vadd.f32 %v1449, %v1560
      %v1615 = vadd.f32 %v1450, %v1565
      %v1616 = vadd.f32 %v1451, %v1568
      %v1617 = vadd.f32 %v1452, %v1573
      %v1618 = vadd.f32 %v1453, %v1576
      %v1619 = vadd.f32 %v1454, %v1581
      %v1620 = vadd.f32 %v1455, %v1584
      %v1621 = vadd.f32 %v1456, %v1589
      %v1622 = vadd.f32 %v1457, %v1592
      %v1623 = vadd.f32 %v1458, %v1597
      %v1624 = vadd.f32 %v1459, %v1600
      %v1625 = vadd.f32 %v1460, %v1605
      %v1626 = vadd.f32 %v1461, %v1608
      %s1627 = scalar_lea.vmem [#allocation2], 48
      %v1628 = vld [vmem:[%s1627] sm:$0xff]
      %v1629 = vld [vmem:[%s1627 + $0x8] sm:$0xff]
      %v1630 = vld [vmem:[%s1627 + $0x18] sm:$0xff]
      %v1631 = vld [vmem:[%s1627 + $0x20] sm:$0xff]
      %v1632 = vld [vmem:[%s1627 + $0x30] sm:$0xff]
      %v1633 = vld [vmem:[%s1627 + $0x38] sm:$0xff]
      %v1634 = vld [vmem:[%s1627 + $0x48] sm:$0xff]
      %v1635 = vld [vmem:[%s1627 + $0x50] sm:$0xff]
      %v1636 = vld [vmem:[%s1627 + $0x60] sm:$0xff]
      %v1637 = vld [vmem:[%s1627 + $0x68] sm:$0xff]
      %v1638 = vld [vmem:[%s1627 + $0x78] sm:$0xff]
      %v1639 = vld [vmem:[%s1627 + $0x80] sm:$0xff]
      %v1640 = vld [vmem:[%s1627 + $0x90] sm:$0xff]
      %v1641 = vld [vmem:[%s1627 + $0x98] sm:$0xff]
      %v1642 = vld [vmem:[%s1627 + $0xa8] sm:$0xff]
      %v1643 = vld [vmem:[%s1627 + $0xb0] sm:$0xff]
      %v1644 = vpack.c.bf16 %v1629, %v1628
      %v1645 = vpack.c.bf16 %v1631, %v1630
      %v1646 = vpack.c.bf16 %v1633, %v1632
      %v1647 = vpack.c.bf16 %v1635, %v1634
      %v1648 = vpack.c.bf16 %v1637, %v1636
      %v1649 = vpack.c.bf16 %v1639, %v1638
      %v1650 = vpack.c.bf16 %v1641, %v1640
      %v1651 = vpack.c.bf16 %v1643, %v1642
      %s1652 = scalar_lea.vmem %s5, 16
      %v1653 = vld [vmem:[%s1652] sm:$0x3]
      %v1655 = vsel %vm636, %v1644, 0
      %v1658 = vsel %vm636, %v1645, 0
      %v1661 = vsel %vm636, %v1646, 0
      %v1664 = vsel %vm636, %v1647, 0
      %v1667 = vsel %vm636, %v1648, 0
      %v1670 = vsel %vm636, %v1649, 0
      %v1673 = vsel %vm636, %v1650, 0
      %v1676 = vsel %vm636, %v1651, 0
      %v1679 = vsel %vm737, %v1653, 0
      %1681 = vmatprep.subr.bf16.mxu0 0
      %1682 = vmatpush1.bf16.msra.mxu0 0
      %1683 = vmatprep.subr.bf16.mxu0 0
      %1684 = vmatpush1.bf16.msra.mxu0 0
      %1685 = vmatprep.subr.bf16.mxu0 0
      %1686 = vmatpush1.bf16.msra.mxu0 0
      %1687 = vmatprep.subr.bf16.mxu0 0
      %1688 = vmatpush1.bf16.msra.mxu0 0
      %1689 = vmatprep.subr.bf16.mxu0 0
      %1690 = vmatpush1.bf16.msra.mxu0 0
      %1691 = vmatprep.subr.bf16.mxu0 0
      %1692 = vmatpush1.bf16.msra.mxu0 0
      %1693 = vmatprep.subr.bf16.mxu0 0
      %1694 = vmatpush1.bf16.msra.mxu0 0
      %1695 = vmatprep.subr.bf16.mxu0 0
      %1696 = vmatpush1.bf16.msra.mxu0 %v1679
      %1697 = vmatprep.subr.bf16.mxu0 0
      %1698 = vmatpush2.bf16.msra.mxu0 0
      %1699 = vmatprep.subr.bf16.mxu0 0
      %1700 = vmatpush2.bf16.msra.mxu0 0
      %1701 = vmatprep.subr.bf16.mxu0 0
      %1702 = vmatpush2.bf16.msra.mxu0 0
      %1703 = vmatprep.subr.bf16.mxu0 0
      %1704 = vmatpush2.bf16.msra.mxu0 0
      %1705 = vmatprep.subr.bf16.mxu0 0
      %1706 = vmatpush2.bf16.msra.mxu0 0
      %1707 = vmatprep.subr.bf16.mxu0 0
      %1708 = vmatpush2.bf16.msra.mxu0 0
      %1709 = vmatprep.subr.bf16.mxu0 0
      %1710 = vmatpush2.bf16.msra.mxu0 0
      %1711 = vmatprep.subr.bf16.mxu0 0
      %1712 = vmatpush2.bf16.msra.mxu0 0
      %1713 = vmatprep.mubr.bf16.mxu0 0
      %1714 = vmatmul.mubr.bf16.gmra.mxu0 %v1655
      %v1715 = vpop.f32.mrf.mxu0
      %v1716 = vadd.f32 0.0, %v1715
      %v1717 = vpop.f32.mrf.mxu0
      %v1718 = vpop.f32.mrf.mxu0
      %v1719 = vadd.f32 0.0, %v1718
      %v1720 = vpop.f32.mrf.mxu0
      %1721 = vmatprep.mubr.bf16.mxu0 0
      %1722 = vmatmul.mubr.bf16.gmra.mxu0 %v1658
      %v1723 = vpop.f32.mrf.mxu0
      %v1724 = vadd.f32 0.0, %v1723
      %v1725 = vpop.f32.mrf.mxu0
      %v1726 = vpop.f32.mrf.mxu0
      %v1727 = vadd.f32 0.0, %v1726
      %v1728 = vpop.f32.mrf.mxu0
      %1729 = vmatprep.mubr.bf16.mxu0 0
      %1730 = vmatmul.mubr.bf16.gmra.mxu0 %v1661
      %v1731 = vpop.f32.mrf.mxu0
      %v1732 = vadd.f32 0.0, %v1731
      %v1733 = vpop.f32.mrf.mxu0
      %v1734 = vpop.f32.mrf.mxu0
      %v1735 = vadd.f32 0.0, %v1734
      %v1736 = vpop.f32.mrf.mxu0
      %1737 = vmatprep.mubr.bf16.mxu0 0
      %1738 = vmatmul.mubr.bf16.gmra.mxu0 %v1664
      %v1739 = vpop.f32.mrf.mxu0
      %v1740 = vadd.f32 0.0, %v1739
      %v1741 = vpop.f32.mrf.mxu0
      %v1742 = vpop.f32.mrf.mxu0
      %v1743 = vadd.f32 0.0, %v1742
      %v1744 = vpop.f32.mrf.mxu0
      %1745 = vmatprep.mubr.bf16.mxu0 0
      %1746 = vmatmul.mubr.bf16.gmra.mxu0 %v1667
      %v1747 = vpop.f32.mrf.mxu0
      %v1748 = vadd.f32 0.0, %v1747
      %v1749 = vpop.f32.mrf.mxu0
      %v1750 = vpop.f32.mrf.mxu0
      %v1751 = vadd.f32 0.0, %v1750
      %v1752 = vpop.f32.mrf.mxu0
      %1753 = vmatprep.mubr.bf16.mxu0 0
      %1754 = vmatmul.mubr.bf16.gmra.mxu0 %v1670
      %v1755 = vpop.f32.mrf.mxu0
      %v1756 = vadd.f32 0.0, %v1755
      %v1757 = vpop.f32.mrf.mxu0
      %v1758 = vpop.f32.mrf.mxu0
      %v1759 = vadd.f32 0.0, %v1758
      %v1760 = vpop.f32.mrf.mxu0
      %1761 = vmatprep.mubr.bf16.mxu0 0
      %1762 = vmatmul.mubr.bf16.gmra.mxu0 %v1673
      %v1763 = vpop.f32.mrf.mxu0
      %v1764 = vadd.f32 0.0, %v1763
      %v1765 = vpop.f32.mrf.mxu0
      %v1766 = vpop.f32.mrf.mxu0
      %v1767 = vadd.f32 0.0, %v1766
      %v1768 = vpop.f32.mrf.mxu0
      %1769 = vmatprep.mubr.bf16.mxu0 0
      %1770 = vmatmul.mubr.bf16.gmra.mxu0 %v1676
      %v1771 = vpop.f32.mrf.mxu0
      %v1772 = vadd.f32 0.0, %v1771
      %v1773 = vpop.f32.mrf.mxu0
      %v1774 = vpop.f32.mrf.mxu0
      %v1775 = vadd.f32 0.0, %v1774
      %v1776 = vpop.f32.mrf.mxu0
      %1777 = vdwg.mxu0
      %v1778 = vadd.f32 %v1611, %v1716
      %v1779 = vadd.f32 %v1612, %v1719
      %v1780 = vadd.f32 %v1613, %v1724
      %v1781 = vadd.f32 %v1614, %v1727
      %v1782 = vadd.f32 %v1615, %v1732
      %v1783 = vadd.f32 %v1616, %v1735
      %v1784 = vadd.f32 %v1617, %v1740
      %v1785 = vadd.f32 %v1618, %v1743
      %v1786 = vadd.f32 %v1619, %v1748
      %v1787 = vadd.f32 %v1620, %v1751
      %v1788 = vadd.f32 %v1621, %v1756
      %v1789 = vadd.f32 %v1622, %v1759
      %v1790 = vadd.f32 %v1623, %v1764
      %v1791 = vadd.f32 %v1624, %v1767
      %v1792 = vadd.f32 %v1625, %v1772
      %v1793 = vadd.f32 %v1626, %v1775
      %v1794 = vld [vmem:[%s1627 + $0x1] sm:$0xff]
      %v1795 = vld [vmem:[%s1627 + $0x9] sm:$0xff]
      %v1796 = vld [vmem:[%s1627 + $0x19] sm:$0xff]
      %v1797 = vld [vmem:[%s1627 + $0x21] sm:$0xff]
      %v1798 = vld [vmem:[%s1627 + $0x31] sm:$0xff]
      %v1799 = vld [vmem:[%s1627 + $0x39] sm:$0xff]
      %v1800 = vld [vmem:[%s1627 + $0x49] sm:$0xff]
      %v1801 = vld [vmem:[%s1627 + $0x51] sm:$0xff]
      %v1802 = vld [vmem:[%s1627 + $0x61] sm:$0xff]
      %v1803 = vld [vmem:[%s1627 + $0x69] sm:$0xff]
      %v1804 = vld [vmem:[%s1627 + $0x79] sm:$0xff]
      %v1805 = vld [vmem:[%s1627 + $0x81] sm:$0xff]
      %v1806 = vld [vmem:[%s1627 + $0x91] sm:$0xff]
      %v1807 = vld [vmem:[%s1627 + $0x99] sm:$0xff]
      %v1808 = vld [vmem:[%s1627 + $0xa9] sm:$0xff]
      %v1809 = vld [vmem:[%s1627 + $0xb1] sm:$0xff]
      %v1810 = vpack.c.bf16 %v1795, %v1794
      %v1811 = vpack.c.bf16 %v1797, %v1796
      %v1812 = vpack.c.bf16 %v1799, %v1798
      %v1813 = vpack.c.bf16 %v1801, %v1800
      %v1814 = vpack.c.bf16 %v1803, %v1802
      %v1815 = vpack.c.bf16 %v1805, %v1804
      %v1816 = vpack.c.bf16 %v1807, %v1806
      %v1817 = vpack.c.bf16 %v1809, %v1808
      %v1818 = vld [vmem:[%s1652] sm:$0xc]
      %v1820 = vunpack.c.l.b16 %v1818
      %v1821 = vpack.c.b16 %v1820, %v1820
      %v1822 = vrot.slane %v1821, 2
      %v1824 = vsel %vm636, %v1810, 0
      %v1827 = vsel %vm636, %v1811, 0
      %v1830 = vsel %vm636, %v1812, 0
      %v1833 = vsel %vm636, %v1813, 0
      %v1836 = vsel %vm636, %v1814, 0
      %v1839 = vsel %vm636, %v1815, 0
      %v1842 = vsel %vm636, %v1816, 0
      %v1845 = vsel %vm636, %v1817, 0
      %v1848 = vsel %vm737, %v1822, 0
      %1850 = vmatprep.subr.bf16.mxu0 0
      %1851 = vmatpush1.bf16.msra.mxu0 0
      %1852 = vmatprep.subr.bf16.mxu0 0
      %1853 = vmatpush1.bf16.msra.mxu0 0
      %1854 = vmatprep.subr.bf16.mxu0 0
      %1855 = vmatpush1.bf16.msra.mxu0 0
      %1856 = vmatprep.subr.bf16.mxu0 0
      %1857 = vmatpush1.bf16.msra.mxu0 0
      %1858 = vmatprep.subr.bf16.mxu0 0
      %1859 = vmatpush1.bf16.msra.mxu0 0
      %1860 = vmatprep.subr.bf16.mxu0 0
      %1861 = vmatpush1.bf16.msra.mxu0 0
      %1862 = vmatprep.subr.bf16.mxu0 0
      %1863 = vmatpush1.bf16.msra.mxu0 0
      %1864 = vmatprep.subr.bf16.mxu0 0
      %1865 = vmatpush1.bf16.msra.mxu0 %v1848
      %1866 = vmatprep.subr.bf16.mxu0 0
      %1867 = vmatpush2.bf16.msra.mxu0 0
      %1868 = vmatprep.subr.bf16.mxu0 0
      %1869 = vmatpush2.bf16.msra.mxu0 0
      %1870 = vmatprep.subr.bf16.mxu0 0
      %1871 = vmatpush2.bf16.msra.mxu0 0
      %1872 = vmatprep.subr.bf16.mxu0 0
      %1873 = vmatpush2.bf16.msra.mxu0 0
      %1874 = vmatprep.subr.bf16.mxu0 0
      %1875 = vmatpush2.bf16.msra.mxu0 0
      %1876 = vmatprep.subr.bf16.mxu0 0
      %1877 = vmatpush2.bf16.msra.mxu0 0
      %1878 = vmatprep.subr.bf16.mxu0 0
      %1879 = vmatpush2.bf16.msra.mxu0 0
      %1880 = vmatprep.subr.bf16.mxu0 0
      %1881 = vmatpush2.bf16.msra.mxu0 0
      %1882 = vmatprep.mubr.bf16.mxu0 0
      %1883 = vmatmul.mubr.bf16.gmra.mxu0 %v1824
      %v1884 = vpop.f32.mrf.mxu0
      %v1885 = vadd.f32 0.0, %v1884
      %v1886 = vpop.f32.mrf.mxu0
      %v1887 = vpop.f32.mrf.mxu0
      %v1888 = vadd.f32 0.0, %v1887
      %v1889 = vpop.f32.mrf.mxu0
      %1890 = vmatprep.mubr.bf16.mxu0 0
      %1891 = vmatmul.mubr.bf16.gmra.mxu0 %v1827
      %v1892 = vpop.f32.mrf.mxu0
      %v1893 = vadd.f32 0.0, %v1892
      %v1894 = vpop.f32.mrf.mxu0
      %v1895 = vpop.f32.mrf.mxu0
      %v1896 = vadd.f32 0.0, %v1895
      %v1897 = vpop.f32.mrf.mxu0
      %1898 = vmatprep.mubr.bf16.mxu0 0
      %1899 = vmatmul.mubr.bf16.gmra.mxu0 %v1830
      %v1900 = vpop.f32.mrf.mxu0
      %v1901 = vadd.f32 0.0, %v1900
      %v1902 = vpop.f32.mrf.mxu0
      %v1903 = vpop.f32.mrf.mxu0
      %v1904 = vadd.f32 0.0, %v1903
      %v1905 = vpop.f32.mrf.mxu0
      %1906 = vmatprep.mubr.bf16.mxu0 0
      %1907 = vmatmul.mubr.bf16.gmra.mxu0 %v1833
      %v1908 = vpop.f32.mrf.mxu0
      %v1909 = vadd.f32 0.0, %v1908
      %v1910 = vpop.f32.mrf.mxu0
      %v1911 = vpop.f32.mrf.mxu0
      %v1912 = vadd.f32 0.0, %v1911
      %v1913 = vpop.f32.mrf.mxu0
      %1914 = vmatprep.mubr.bf16.mxu0 0
      %1915 = vmatmul.mubr.bf16.gmra.mxu0 %v1836
      %v1916 = vpop.f32.mrf.mxu0
      %v1917 = vadd.f32 0.0, %v1916
      %v1918 = vpop.f32.mrf.mxu0
      %v1919 = vpop.f32.mrf.mxu0
      %v1920 = vadd.f32 0.0, %v1919
      %v1921 = vpop.f32.mrf.mxu0
      %1922 = vmatprep.mubr.bf16.mxu0 0
      %1923 = vmatmul.mubr.bf16.gmra.mxu0 %v1839
      %v1924 = vpop.f32.mrf.mxu0
      %v1925 = vadd.f32 0.0, %v1924
      %v1926 = vpop.f32.mrf.mxu0
      %v1927 = vpop.f32.mrf.mxu0
      %v1928 = vadd.f32 0.0, %v1927
      %v1929 = vpop.f32.mrf.mxu0
      %1930 = vmatprep.mubr.bf16.mxu0 0
      %1931 = vmatmul.mubr.bf16.gmra.mxu0 %v1842
      %v1932 = vpop.f32.mrf.mxu0
      %v1933 = vadd.f32 0.0, %v1932
      %v1934 = vpop.f32.mrf.mxu0
      %v1935 = vpop.f32.mrf.mxu0
      %v1936 = vadd.f32 0.0, %v1935
      %v1937 = vpop.f32.mrf.mxu0
      %1938 = vmatprep.mubr.bf16.mxu0 0
      %1939 = vmatmul.mubr.bf16.gmra.mxu0 %v1845
      %v1940 = vpop.f32.mrf.mxu0
      %v1941 = vadd.f32 0.0, %v1940
      %v1942 = vpop.f32.mrf.mxu0
      %v1943 = vpop.f32.mrf.mxu0
      %v1944 = vadd.f32 0.0, %v1943
      %v1945 = vpop.f32.mrf.mxu0
      %1946 = vdwg.mxu0
      %v1947 = vadd.f32 %v1778, %v1885
      %v1948 = vadd.f32 %v1779, %v1888
      %v1949 = vadd.f32 %v1780, %v1893
      %v1950 = vadd.f32 %v1781, %v1896
      %v1951 = vadd.f32 %v1782, %v1901
      %v1952 = vadd.f32 %v1783, %v1904
      %v1953 = vadd.f32 %v1784, %v1909
      %v1954 = vadd.f32 %v1785, %v1912
      %v1955 = vadd.f32 %v1786, %v1917
      %v1956 = vadd.f32 %v1787, %v1920
      %v1957 = vadd.f32 %v1788, %v1925
      %v1958 = vadd.f32 %v1789, %v1928
      %v1959 = vadd.f32 %v1790, %v1933
      %v1960 = vadd.f32 %v1791, %v1936
      %v1961 = vadd.f32 %v1792, %v1941
      %v1962 = vadd.f32 %v1793, %v1944
      %v1963 = vld [vmem:[%s1627 + $0x2] sm:$0xff]
      %v1964 = vld [vmem:[%s1627 + $0xa] sm:$0xff]
      %v1965 = vld [vmem:[%s1627 + $0x1a] sm:$0xff]
      %v1966 = vld [vmem:[%s1627 + $0x22] sm:$0xff]
      %v1967 = vld [vmem:[%s1627 + $0x32] sm:$0xff]
      %v1968 = vld [vmem:[%s1627 + $0x3a] sm:$0xff]
      %v1969 = vld [vmem:[%s1627 + $0x4a] sm:$0xff]
      %v1970 = vld [vmem:[%s1627 + $0x52] sm:$0xff]
      %v1971 = vld [vmem:[%s1627 + $0x62] sm:$0xff]
      %v1972 = vld [vmem:[%s1627 + $0x6a] sm:$0xff]
      %v1973 = vld [vmem:[%s1627 + $0x7a] sm:$0xff]
      %v1974 = vld [vmem:[%s1627 + $0x82] sm:$0xff]
      %v1975 = vld [vmem:[%s1627 + $0x92] sm:$0xff]
      %v1976 = vld [vmem:[%s1627 + $0x9a] sm:$0xff]
      %v1977 = vld [vmem:[%s1627 + $0xaa] sm:$0xff]
      %v1978 = vld [vmem:[%s1627 + $0xb2] sm:$0xff]
      %v1979 = vpack.c.bf16 %v1964, %v1963
      %v1980 = vpack.c.bf16 %v1966, %v1965
      %v1981 = vpack.c.bf16 %v1968, %v1967
      %v1982 = vpack.c.bf16 %v1970, %v1969
      %v1983 = vpack.c.bf16 %v1972, %v1971
      %v1984 = vpack.c.bf16 %v1974, %v1973
      %v1985 = vpack.c.bf16 %v1976, %v1975
      %v1986 = vpack.c.bf16 %v1978, %v1977
      %v1987 = vld [vmem:[%s1652 + $0x4] sm:$0x3]
      %v1989 = vsel %vm636, %v1979, 0
      %v1992 = vsel %vm636, %v1980, 0
      %v1995 = vsel %vm636, %v1981, 0
      %v1998 = vsel %vm636, %v1982, 0
      %v2001 = vsel %vm636, %v1983, 0
      %v2004 = vsel %vm636, %v1984, 0
      %v2007 = vsel %vm636, %v1985, 0
      %v2010 = vsel %vm636, %v1986, 0
      %v2013 = vsel %vm737, %v1987, 0
      %2015 = vmatprep.subr.bf16.mxu0 0
      %2016 = vmatpush1.bf16.msra.mxu0 0
      %2017 = vmatprep.subr.bf16.mxu0 0
      %2018 = vmatpush1.bf16.msra.mxu0 0
      %2019 = vmatprep.subr.bf16.mxu0 0
      %2020 = vmatpush1.bf16.msra.mxu0 0
      %2021 = vmatprep.subr.bf16.mxu0 0
      %2022 = vmatpush1.bf16.msra.mxu0 0
      %2023 = vmatprep.subr.bf16.mxu0 0
      %2024 = vmatpush1.bf16.msra.mxu0 0
      %2025 = vmatprep.subr.bf16.mxu0 0
      %2026 = vmatpush1.bf16.msra.mxu0 0
      %2027 = vmatprep.subr.bf16.mxu0 0
      %2028 = vmatpush1.bf16.msra.mxu0 0
      %2029 = vmatprep.subr.bf16.mxu0 0
      %2030 = vmatpush1.bf16.msra.mxu0 %v2013
      %2031 = vmatprep.subr.bf16.mxu0 0
      %2032 = vmatpush2.bf16.msra.mxu0 0
      %2033 = vmatprep.subr.bf16.mxu0 0
      %2034 = vmatpush2.bf16.msra.mxu0 0
      %2035 = vmatprep.subr.bf16.mxu0 0
      %2036 = vmatpush2.bf16.msra.mxu0 0
      %2037 = vmatprep.subr.bf16.mxu0 0
      %2038 = vmatpush2.bf16.msra.mxu0 0
      %2039 = vmatprep.subr.bf16.mxu0 0
      %2040 = vmatpush2.bf16.msra.mxu0 0
      %2041 = vmatprep.subr.bf16.mxu0 0
      %2042 = vmatpush2.bf16.msra.mxu0 0
      %2043 = vmatprep.subr.bf16.mxu0 0
      %2044 = vmatpush2.bf16.msra.mxu0 0
      %2045 = vmatprep.subr.bf16.mxu0 0
      %2046 = vmatpush2.bf16.msra.mxu0 0
      %2047 = vmatprep.mubr.bf16.mxu0 0
      %2048 = vmatmul.mubr.bf16.gmra.mxu0 %v1989
      %v2049 = vpop.f32.mrf.mxu0
      %v2050 = vadd.f32 0.0, %v2049
      %v2051 = vpop.f32.mrf.mxu0
      %v2052 = vpop.f32.mrf.mxu0
      %v2053 = vadd.f32 0.0, %v2052
      %v2054 = vpop.f32.mrf.mxu0
      %2055 = vmatprep.mubr.bf16.mxu0 0
      %2056 = vmatmul.mubr.bf16.gmra.mxu0 %v1992
      %v2057 = vpop.f32.mrf.mxu0
      %v2058 = vadd.f32 0.0, %v2057
      %v2059 = vpop.f32.mrf.mxu0
      %v2060 = vpop.f32.mrf.mxu0
      %v2061 = vadd.f32 0.0, %v2060
      %v2062 = vpop.f32.mrf.mxu0
      %2063 = vmatprep.mubr.bf16.mxu0 0
      %2064 = vmatmul.mubr.bf16.gmra.mxu0 %v1995
      %v2065 = vpop.f32.mrf.mxu0
      %v2066 = vadd.f32 0.0, %v2065
      %v2067 = vpop.f32.mrf.mxu0
      %v2068 = vpop.f32.mrf.mxu0
      %v2069 = vadd.f32 0.0, %v2068
      %v2070 = vpop.f32.mrf.mxu0
      %2071 = vmatprep.mubr.bf16.mxu0 0
      %2072 = vmatmul.mubr.bf16.gmra.mxu0 %v1998
      %v2073 = vpop.f32.mrf.mxu0
      %v2074 = vadd.f32 0.0, %v2073
      %v2075 = vpop.f32.mrf.mxu0
      %v2076 = vpop.f32.mrf.mxu0
      %v2077 = vadd.f32 0.0, %v2076
      %v2078 = vpop.f32.mrf.mxu0
      %2079 = vmatprep.mubr.bf16.mxu0 0
      %2080 = vmatmul.mubr.bf16.gmra.mxu0 %v2001
      %v2081 = vpop.f32.mrf.mxu0
      %v2082 = vadd.f32 0.0, %v2081
      %v2083 = vpop.f32.mrf.mxu0
      %v2084 = vpop.f32.mrf.mxu0
      %v2085 = vadd.f32 0.0, %v2084
      %v2086 = vpop.f32.mrf.mxu0
      %2087 = vmatprep.mubr.bf16.mxu0 0
      %2088 = vmatmul.mubr.bf16.gmra.mxu0 %v2004
      %v2089 = vpop.f32.mrf.mxu0
      %v2090 = vadd.f32 0.0, %v2089
      %v2091 = vpop.f32.mrf.mxu0
      %v2092 = vpop.f32.mrf.mxu0
      %v2093 = vadd.f32 0.0, %v2092
      %v2094 = vpop.f32.mrf.mxu0
      %2095 = vmatprep.mubr.bf16.mxu0 0
      %2096 = vmatmul.mubr.bf16.gmra.mxu0 %v2007
      %v2097 = vpop.f32.mrf.mxu0
      %v2098 = vadd.f32 0.0, %v2097
      %v2099 = vpop.f32.mrf.mxu0
      %v2100 = vpop.f32.mrf.mxu0
      %v2101 = vadd.f32 0.0, %v2100
      %v2102 = vpop.f32.mrf.mxu0
      %2103 = vmatprep.mubr.bf16.mxu0 0
      %2104 = vmatmul.mubr.bf16.gmra.mxu0 %v2010
      %v2105 = vpop.f32.mrf.mxu0
      %v2106 = vadd.f32 0.0, %v2105
      %v2107 = vpop.f32.mrf.mxu0
      %v2108 = vpop.f32.mrf.mxu0
      %v2109 = vadd.f32 0.0, %v2108
      %v2110 = vpop.f32.mrf.mxu0
      %2111 = vdwg.mxu0
      %v2112 = vadd.f32 %v1947, %v2050
      %v2113 = vadd.f32 %v1948, %v2053
      %v2114 = vadd.f32 %v1949, %v2058
      %v2115 = vadd.f32 %v1950, %v2061
      %v2116 = vadd.f32 %v1951, %v2066
      %v2117 = vadd.f32 %v1952, %v2069
      %v2118 = vadd.f32 %v1953, %v2074
      %v2119 = vadd.f32 %v1954, %v2077
      %v2120 = vadd.f32 %v1955, %v2082
      %v2121 = vadd.f32 %v1956, %v2085
      %v2122 = vadd.f32 %v1957, %v2090
      %v2123 = vadd.f32 %v1958, %v2093
      %v2124 = vadd.f32 %v1959, %v2098
      %v2125 = vadd.f32 %v1960, %v2101
      %v2126 = vadd.f32 %v1961, %v2106
      %v2127 = vadd.f32 %v1962, %v2109
      %v2128 = vpack.c.bf16 %v2113, %v2112
      %v2129 = vpack.c.bf16 %v2115, %v2114
      %v2130 = vpack.c.bf16 %v2117, %v2116
      %v2131 = vpack.c.bf16 %v2119, %v2118
      %v2132 = vpack.c.bf16 %v2121, %v2120
      %v2133 = vpack.c.bf16 %v2123, %v2122
      %v2134 = vpack.c.bf16 %v2125, %v2124
      %v2135 = vpack.c.bf16 %v2127, %v2126
      %v2144 = vunpack.c.l.b16 %v2128
      %v2145 = vunpack.c.h.b16 %v2128
      %v2146 = vunpack.c.l.b16 %v2129
      %v2147 = vunpack.c.h.b16 %v2129
      %v2148 = vunpack.c.l.b16 %v2130
      %v2149 = vunpack.c.h.b16 %v2130
      %v2150 = vunpack.c.l.b16 %v2131
      %v2151 = vunpack.c.h.b16 %v2131
      %v2152 = vunpack.c.l.b16 %v2132
      %v2153 = vunpack.c.h.b16 %v2132
      %v2154 = vunpack.c.l.b16 %v2133
      %v2155 = vunpack.c.h.b16 %v2133
      %v2156 = vunpack.c.l.b16 %v2134
      %v2157 = vunpack.c.h.b16 %v2134
      %v2158 = vunpack.c.l.b16 %v2135
      %v2159 = vunpack.c.h.b16 %v2135
      %v2160 = vpack.c.b16 %v2144, %v2144
      %v2161 = vpack.c.b16 %v2145, %v2145
      %v2162 = vpack.c.b16 %v2146, %v2146
      %v2163 = vpack.c.b16 %v2147, %v2147
      %v2164 = vpack.c.b16 %v2148, %v2148
      %v2165 = vpack.c.b16 %v2149, %v2149
      %v2166 = vpack.c.b16 %v2150, %v2150
      %v2167 = vpack.c.b16 %v2151, %v2151
      %v2168 = vpack.c.b16 %v2152, %v2152
      %v2169 = vpack.c.b16 %v2153, %v2153
      %v2170 = vpack.c.b16 %v2154, %v2154
      %v2171 = vpack.c.b16 %v2155, %v2155
      %v2172 = vpack.c.b16 %v2156, %v2156
      %v2173 = vpack.c.b16 %v2157, %v2157
      %v2174 = vpack.c.b16 %v2158, %v2158
      %v2175 = vpack.c.b16 %v2159, %v2159
      %vm2192 = vcmask 60416
      %2193 = vst.msk [vmem:[%s458] sm:$0xf] %vm2192, %v2160
      %2194 = vst.msk [vmem:[%s458 + $0x4] sm:$0xf] %vm2192, %v2161
      %2195 = vst.msk [vmem:[%s458 + $0x8] sm:$0xf] %vm2192, %v2162
      %2196 = vst.msk [vmem:[%s458 + $0xc] sm:$0xf] %vm2192, %v2163
      %2197 = vst.msk [vmem:[%s458 + $0x10] sm:$0xf] %vm2192, %v2164
      %2198 = vst.msk [vmem:[%s458 + $0x14] sm:$0xf] %vm2192, %v2165
      %2199 = vst.msk [vmem:[%s458 + $0x18] sm:$0xf] %vm2192, %v2166
      %2200 = vst.msk [vmem:[%s458 + $0x1c] sm:$0xf] %vm2192, %v2167
      %2201 = vst.msk [vmem:[%s458 + $0x20] sm:$0xf] %vm2192, %v2168
      %2202 = vst.msk [vmem:[%s458 + $0x24] sm:$0xf] %vm2192, %v2169
      %2203 = vst.msk [vmem:[%s458 + $0x28] sm:$0xf] %vm2192, %v2170
      %2204 = vst.msk [vmem:[%s458 + $0x2c] sm:$0xf] %vm2192, %v2171
      %2205 = vst.msk [vmem:[%s458 + $0x30] sm:$0xf] %vm2192, %v2172
      %2206 = vst.msk [vmem:[%s458 + $0x34] sm:$0xf] %vm2192, %v2173
      %2207 = vst.msk [vmem:[%s458 + $0x38] sm:$0xf] %vm2192, %v2174
      %2208 = vst.msk [vmem:[%s458 + $0x3c] sm:$0xf] %vm2192, %v2175
      %vm2209 = vcmask 64512
      %v2210 = vsel %vm2209, %v2112, 0.0
      %v2211 = vsel %vm2209, %v2113, 0.0
      %v2212 = vadd.f32 %v2210, %v2211
      %v2213 = vsel %vm2209, %v2114, 0.0
      %v2214 = vadd.f32 %v2212, %v2213
      %v2215 = vsel %vm2209, %v2115, 0.0
      %v2216 = vadd.f32 %v2214, %v2215
      %v2217 = vsel %vm2209, %v2116, 0.0
      %v2218 = vadd.f32 %v2216, %v2217
      %v2219 = vsel %vm2209, %v2117, 0.0
      %v2220 = vadd.f32 %v2218, %v2219
      %v2221 = vsel %vm2209, %v2118, 0.0
      %v2222 = vadd.f32 %v2220, %v2221
      %v2223 = vsel %vm2209, %v2119, 0.0
      %v2224 = vadd.f32 %v2222, %v2223
      %v2225 = vsel %vm2209, %v2120, 0.0
      %v2226 = vadd.f32 %v2224, %v2225
      %v2227 = vsel %vm2209, %v2121, 0.0
      %v2228 = vadd.f32 %v2226, %v2227
      %v2229 = vsel %vm2209, %v2122, 0.0
      %v2230 = vadd.f32 %v2228, %v2229
      %v2231 = vsel %vm2209, %v2123, 0.0
      %v2232 = vadd.f32 %v2230, %v2231
      %v2233 = vsel %vm2209, %v2124, 0.0
      %v2234 = vadd.f32 %v2232, %v2233
      %v2235 = vsel %vm2209, %v2125, 0.0
      %v2236 = vadd.f32 %v2234, %v2235
      %v2237 = vsel %vm2209, %v2126, 0.0
      %v2238 = vadd.f32 %v2236, %v2237
      %v2239 = vsel %vm2209, %v2127, 0.0
      %v2240 = vadd.f32 %v2238, %v2239
      %v2241 = vrot.slane %v2240, 4
      %v2242 = vadd.f32 %v2240, %v2241
      %v2243 = vrot.slane %v2242, 2
      %v2244 = vadd.f32 %v2242, %v2243
      %v2245 = vrot.slane %v2244, 1
      %v2246 = vadd.f32 %v2244, %v2245
      %vm2247 = vcmask 57344
      %2248 = vst.msk [vmem:[%s467] sm:$0x1] %vm2247, %v2246
      %v2249 = vmul.f32 %v2112, %v2112
      %v2250 = vmul.f32 %v2113, %v2113
      %v2251 = vmul.f32 %v2114, %v2114
      %v2252 = vmul.f32 %v2115, %v2115
      %v2253 = vmul.f32 %v2116, %v2116
      %v2254 = vmul.f32 %v2117, %v2117
      %v2255 = vmul.f32 %v2118, %v2118
      %v2256 = vmul.f32 %v2119, %v2119
      %v2257 = vmul.f32 %v2120, %v2120
      %v2258 = vmul.f32 %v2121, %v2121
      %v2259 = vmul.f32 %v2122, %v2122
      %v2260 = vmul.f32 %v2123, %v2123
      %v2261 = vmul.f32 %v2124, %v2124
      %v2262 = vmul.f32 %v2125, %v2125
      %v2263 = vmul.f32 %v2126, %v2126
      %v2264 = vmul.f32 %v2127, %v2127
      %v2265 = vsel %vm2209, %v2249, 0.0
      %v2266 = vsel %vm2209, %v2250, 0.0
      %v2267 = vadd.f32 %v2265, %v2266
      %v2268 = vsel %vm2209, %v2251, 0.0
      %v2269 = vadd.f32 %v2267, %v2268
      %v2270 = vsel %vm2209, %v2252, 0.0
      %v2271 = vadd.f32 %v2269, %v2270
      %v2272 = vsel %vm2209, %v2253, 0.0
      %v2273 = vadd.f32 %v2271, %v2272
      %v2274 = vsel %vm2209, %v2254, 0.0
      %v2275 = vadd.f32 %v2273, %v2274
      %v2276 = vsel %vm2209, %v2255, 0.0
      %v2277 = vadd.f32 %v2275, %v2276
      %v2278 = vsel %vm2209, %v2256, 0.0
      %v2279 = vadd.f32 %v2277, %v2278
      %v2280 = vsel %vm2209, %v2257, 0.0
      %v2281 = vadd.f32 %v2279, %v2280
      %v2282 = vsel %vm2209, %v2258, 0.0
      %v2283 = vadd.f32 %v2281, %v2282
      %v2284 = vsel %vm2209, %v2259, 0.0
      %v2285 = vadd.f32 %v2283, %v2284
      %v2286 = vsel %vm2209, %v2260, 0.0
      %v2287 = vadd.f32 %v2285, %v2286
      %v2288 = vsel %vm2209, %v2261, 0.0
      %v2289 = vadd.f32 %v2287, %v2288
      %v2290 = vsel %vm2209, %v2262, 0.0
      %v2291 = vadd.f32 %v2289, %v2290
      %v2292 = vsel %vm2209, %v2263, 0.0
      %v2293 = vadd.f32 %v2291, %v2292
      %v2294 = vsel %vm2209, %v2264, 0.0
      %v2295 = vadd.f32 %v2293, %v2294
      %v2296 = vrot.slane %v2295, 4
      %v2297 = vadd.f32 %v2295, %v2296
      %v2298 = vrot.slane %v2297, 2
      %v2299 = vadd.f32 %v2297, %v2298
      %v2300 = vrot.slane %v2299, 1
      %v2301 = vadd.f32 %v2299, %v2300
      %2302 = vst.msk [vmem:[%s467 + $0x1] sm:$0x1] %vm2247, %v2301
      %s2303 = smul.u32 8, %s24
      %p2304 = scmp.lt.s32.totalorder %s23, 1
      %s2305 = scalar_select %p2304, %s23, 1
      %p2306 = scmp.lt.s32.totalorder %s2303, 15
      %s2307 = scalar_select %p2306, %s2303, 15
      %s2308 = smul.addr %s2307, 2
      %s2309 = smul.addr %s2305, 32
      %s2310 = sadd.s32 %s2308, %s2309
      %s2311 = smul.addr %s2310, 4
      %s2312 = scalar_lea.vmem %s6, %s2311
      %p2313 = scmp.lt.s32.totalorder %s23, 1
      %s2314 = scalar_select %p2313, %s23, 1
      %p2315 = scmp.lt.s32.totalorder %s24, 1
      %s2316 = scalar_select %p2315, %s24, 1
      %s2317 = smul.addr %s2314, 2
      %s2318 = sadd.s32 %s2316, %s2317
      %s2319 = smul.addr %s2318, 2
      %s2320 = scalar_lea.vmem %s7, %s2319
      // Predicated region
      $region45: #{resblock_forward.3} parent=43 // pred_check
        %p2321 = pneg %p214
      $region46: #{resblock_forward.3} parent=43 // pred_check_branch
        %2323 = sbr.rel (%p2321) target = $region48
      $region47: #{resblock_forward.3} parent=43 // pred_region
        %s2324 = smul.u32 8, %s24
      $region48: #{resblock_forward.3} parent=43 // pred_fallthru
        _
      // Predicated region
      $region49: #{resblock_forward.3} parent=43 // pred_check
        %p2325 = pneg %p242
      $region50: #{resblock_forward.3} parent=43 // pred_check_branch
        %2327 = sbr.rel (%p2325) target = $region52
      $region51: #{resblock_forward.3} parent=43 // pred_region
        _
      $region52: #{resblock_forward.3} parent=43 // pred_fallthru
        _
    $region44: #{resblock_forward.3} parent=5 // pred_fallthru
      _
    %p2328 = scmp.le.s32.totalorder 2, %s14
    // Predicated region
    $region53: #{resblock_forward.3} parent=5 // pred_check
      %p2329 = pneg %p2328
    $region54: #{resblock_forward.3} parent=5 // pred_check_branch
      %2331 = sbr.rel (%p2329) target = $region56
    $region55: #{resblock_forward.3} parent=5 // pred_region
      %s2332 = ssub.s32 %s14, 2
      // Predicated region
      $region57: #{resblock_forward.3} parent=55 // pred_check
        %p2333 = pneg %p220
      $region58: #{resblock_forward.3} parent=55 // pred_check_branch
        %2335 = sbr.rel (%p2333) target = $region60
      $region59: #{resblock_forward.3} parent=55 // pred_region
        %s2336 = smul.u32 8, %s26
        %p2337 = scmp.lt.s32.totalorder %s25, 1
        %s2338 = scalar_select %p2337, %s25, 1
        %p2339 = scmp.lt.s32.totalorder %s2336, 15
        %s2340 = scalar_select %p2339, %s2336, 15
        %s2341 = smul.addr %s2340, 2
        %s2342 = smul.addr %s2338, 32
        %s2343 = sadd.s32 %s2341, %s2342
        %s2344 = smul.addr %s2343, 4
        %s2345 = scalar_lea.vmem %s6, %s2344
      $region60: #{resblock_forward.3} parent=55 // pred_fallthru
        _
      // Predicated region
      $region61: #{resblock_forward.3} parent=55 // pred_check
        %p2346 = pneg %p248
      $region62: #{resblock_forward.3} parent=55 // pred_check_branch
        %2348 = sbr.rel (%p2346) target = $region64
      $region63: #{resblock_forward.3} parent=55 // pred_region
        %p2349 = scmp.lt.s32.totalorder %s25, 1
        %s2350 = scalar_select %p2349, %s25, 1
        %p2351 = scmp.lt.s32.totalorder %s26, 1
        %s2352 = scalar_select %p2351, %s26, 1
        %s2353 = smul.addr %s2350, 2
        %s2354 = sadd.s32 %s2352, %s2353
        %s2355 = smul.addr %s2354, 2
        %s2356 = scalar_lea.vmem %s7, %s2355
      $region64: #{resblock_forward.3} parent=55 // pred_fallthru
        _
    $region56: #{resblock_forward.3} parent=5 // pred_fallthru
      _
  $region6: #{resblock_forward.3} parent=0 // loop_footer
    %s18 = sadd.s32 1, %s14
  $region7: #{resblock_forward.3} parent=0 // loop_footer_branch
    %13 = sbr.rel target = $region3
  $region8: #{resblock_forward.3} parent=0 // loop_exit
    _

// kernel: resblock_forward.5
$region0: #{resblock_forward.5}
  #allocation0 [shape = 'u32[]', space=smem, size = 0x4, offset = 0x4, fixed_abs, tag = 'smem constant byte address 0x4 - core index']
  #allocation1 [shape = 'u32[144,128]{1,0:T(1,128)}', space=vmem, size = 0x12000, scoped, tag = 'internal scratch']
  #allocation2 [shape = 'f32[10,18,8]{2,1,0:T(8,128)}', space=vmem, size = 0x1e000, scoped, tag = 'scratch operand']
  %s0 = inlined_call_operand.vmem [shape: bf16[2,16,16,8], index: 0, kind: input, shape index: {}, may-alias: {0,1,2}]
  %s1 = inlined_call_operand.vmem [shape: bf16[2,16,16,8], index: 1, kind: input, shape index: {}, may-alias: {0,1,2}]
  %s2 = inlined_call_operand.vmem [shape: bf16[2,16,16,8], index: 2, kind: input, shape index: {}, may-alias: {0,1,2}]
  %s3 = inlined_call_operand.vmem [shape: f32[1,8], index: 3, kind: input, shape index: {}]
  %s4 = inlined_call_operand.vmem [shape: f32[1,8], index: 4, kind: input, shape index: {}]
  %s5 = inlined_call_operand.vmem [shape: bf16[3,24,8], index: 5, kind: input, shape index: {}]
  %s6 = inlined_call_operand.vmem [shape: f32[2,16,16,4], index: 6, kind: input, shape index: {}]
  %s7 = inlined_call_operand.vmem [shape: bf16[4,8], index: 7, kind: input, shape index: {}]
  %s8 = inlined_call_operand.vmem [shape: f32[1,8], index: 8, kind: input, shape index: {}]
  %s9 = inlined_call_operand.vmem [shape: f32[2,16,16,8], index: 9, kind: output, shape index: {}]
  %s10 = sld [smem:[#allocation0]]
  $region69: #{resblock_forward.5} parent=0
    _
  %s12 = ssub.s32 1, %s10
  %s13 = scalar_select 0, %s12, %s10
  loop: start=0, step=1, limit=6
  $region2: #{resblock_forward.5} parent=0 // loop_pre_header
    _
  $region3: #{resblock_forward.5} parent=0 // loop_header
    %s15 = sphi 0, %s19
    %p16 = scmp.ge.s32.totalorder %s15, 6
    %s22 = sphi 0, %s34
    %s23 = sphi 0, %s30
    %s24 = sphi 0, %s22
    %s25 = sphi 0, %s23
    %s26 = sphi 0, %s24
    %s27 = sphi 0, %s25
    %s39 = sphi 0, %s41
    %s42 = sphi 0, %s39
    %s43 = sphi 0, %s42
    %s59 = sphi 0, %s43
    %s75 = sphi 0, %s77
    %s78 = sphi 0, %s75
    %s79 = sphi 0, %s78
    %s95 = sphi 0, %s79
    %s111 = sphi 0, %s113
    %s114 = sphi 0, %s111
    %s115 = sphi 0, %s114
    %s131 = sphi 0, %s115
    %s135 = sphi 0, %s135
    %s137 = sphi 0, %s135
    %s138 = sphi 0, %s137
    %s152 = sphi 0, %s138
    %s156 = sphi 0, %s156
    %s158 = sphi 0, %s156
    %s159 = sphi 0, %s158
    %s173 = sphi 0, %s159
    %s177 = sphi 0, %s177
    %s179 = sphi 0, %s177
    %s180 = sphi 0, %s179
    %s194 = sphi 0, %s180
    %s202 = sphi 0, %s204
    %s205 = sphi 0, %s202
    %s206 = sphi 0, %s205
    %s222 = sphi 0, %s206
    %s226 = sphi 0, %s226
    %s228 = sphi 0, %s226
    %s229 = sphi 0, %s228
    %s243 = sphi 0, %s229
    %s247 = sphi 0, %s247
    %s249 = sphi 0, %s247
    %s250 = sphi 0, %s249
    %s264 = sphi 0, %s250
    %s272 = sphi 0, %s274
    %s275 = sphi 0, %s272
    %s276 = sphi 0, %s275
    %s292 = sphi 0, %s276
  $region4: #{resblock_forward.5} parent=0 // loop_header_branch
    %18 = sbr.rel (%p16) target = $region8
  $region5: #{resblock_forward.5} parent=0 // loop_body
    %s20 = ssub.s32 %s15, 1
    %s21 = ssub.s32 %s15, 2
    %s28 = sadd.s32 1, %s23
    %p29 = scmp.ge.s32.totalorder %s28, 2
    %s30 = scalar_select %p29, 0, %s28
    %s31 = sadd.s32 1, %s22
    %s32 = scalar_select %p29, %s31, %s22
    %p33 = scmp.ge.s32.totalorder %s32, 2
    %s34 = scalar_select %p33, 0, %s32
    %s35 = ssub.s32 %s22, %s34
    %s36 = ssub.s32 %s23, %s30
    %s37 = sor.u32 %s35, %s36
    %p38 = scmp.eq.s32.totalorder %s37, 0
    %s40 = sadd.s32 %s39, 1
    %s41 = scalar_select %p38, %s39, %s40
    %p44 = pneg %p38
    %p45 = scmp.eq.s32.totalorder %s15, 3
    %p46 = por %p44, %p45
    %p47 = scmp.ne.s32.totalorder %s39, %s42
    %p48 = scmp.eq.s32.totalorder %s15, 0
    %p49 = por %p47, %p48
    %p50 = scmp.ne.s32.totalorder %s39, %s42
    %p51 = scmp.eq.s32.totalorder %s20, 3
    %p52 = por %p50, %p51
    %p53 = scmp.ne.s32.totalorder %s42, %s43
    %p54 = scmp.eq.s32.totalorder %s20, 0
    %p55 = por %p53, %p54
    %p56 = scmp.ne.s32.totalorder %s42, %s43
    %p57 = scmp.eq.s32.totalorder %s21, 3
    %p58 = por %p56, %p57
    %p60 = scmp.ne.s32.totalorder %s43, %s59
    %p61 = scmp.eq.s32.totalorder %s21, 0
    %p62 = por %p60, %p61
    %s63 = smul.u32 %s23, 8
    %s64 = ssub.s32 %s63, 1
    %p65 = scmp.gt.s32.totalorder %s64, 0
    %s66 = scalar_select %p65, %s64, 0
    %s67 = smul.u32 %s30, 8
    %s68 = ssub.s32 %s67, 1
    %p69 = scmp.gt.s32.totalorder %s68, 0
    %s70 = scalar_select %p69, %s68, 0
    %s71 = ssub.s32 %s22, %s34
    %s72 = ssub.s32 %s66, %s70
    %s73 = sor.u32 %s71, %s72
    %p74 = scmp.eq.s32.totalorder %s73, 0
    %s76 = sadd.s32 %s75, 1
    %s77 = scalar_select %p74, %s75, %s76
    %p80 = pneg %p74
    %p81 = scmp.eq.s32.totalorder %s15, 3
    %p82 = por %p80, %p81
    %p83 = scmp.ne.s32.totalorder %s75, %s78
    %p84 = scmp.eq.s32.totalorder %s15, 0
    %p85 = por %p83, %p84
    %p86 = scmp.ne.s32.totalorder %s75, %s78
    %p87 = scmp.eq.s32.totalorder %s20, 3
    %p88 = por %p86, %p87
    %p89 = scmp.ne.s32.totalorder %s78, %s79
    %p90 = scmp.eq.s32.totalorder %s20, 0
    %p91 = por %p89, %p90
    %p92 = scmp.ne.s32.totalorder %s78, %s79
    %p93 = scmp.eq.s32.totalorder %s21, 3
    %p94 = por %p92, %p93
    %p96 = scmp.ne.s32.totalorder %s79, %s95
    %p97 = scmp.eq.s32.totalorder %s21, 0
    %p98 = por %p96, %p97
    %s99 = sadd.s32 %s23, 1
    %s100 = smul.u32 %s99, 8
    %p101 = scmp.lt.s32.totalorder %s100, 15
    %s102 = scalar_select %p101, %s100, 15
    %s103 = sadd.s32 %s30, 1
    %s104 = smul.u32 %s103, 8
    %p105 = scmp.lt.s32.totalorder %s104, 15
    %s106 = scalar_select %p105, %s104, 15
    %s107 = ssub.s32 %s22, %s34
    %s108 = ssub.s32 %s102, %s106
    %s109 = sor.u32 %s107, %s108
    %p110 = scmp.eq.s32.totalorder %s109, 0
    %s112 = sadd.s32 %s111, 1
    %s113 = scalar_select %p110, %s111, %s112
    %p116 = pneg %p110
    %p117 = scmp.eq.s32.totalorder %s15, 3
    %p118 = por %p116, %p117
    %p119 = scmp.ne.s32.totalorder %s111, %s114
    %p120 = scmp.eq.s32.totalorder %s15, 0
    %p121 = por %p119, %p120
    %p122 = scmp.ne.s32.totalorder %s111, %s114
    %p123 = scmp.eq.s32.totalorder %s20, 3
    %p124 = por %p122, %p123
    %p125 = scmp.ne.s32.totalorder %s114, %s115
    %p126 = scmp.eq.s32.totalorder %s20, 0
    %p127 = por %p125, %p126
    %p128 = scmp.ne.s32.totalorder %s114, %s115
    %p129 = scmp.eq.s32.totalorder %s21, 3
    %p130 = por %p128, %p129
    %p132 = scmp.ne.s32.totalorder %s115, %s131
    %p133 = scmp.eq.s32.totalorder %s21, 0
    %p134 = por %p132, %p133
    %s136 = sadd.s32 %s135, 1
    %p139 = scmp.eq.s32.totalorder %s15, 3
    %p140 = scmp.ne.s32.totalorder %s135, %s137
    %p141 = scmp.eq.s32.totalorder %s15, 0
    %p142 = por %p140, %p141
    %p143 = scmp.ne.s32.totalorder %s135, %s137
    %p144 = scmp.eq.s32.totalorder %s20, 3
    %p145 = por %p143, %p144
    %p146 = scmp.ne.s32.totalorder %s137, %s138
    %p147 = scmp.eq.s32.totalorder %s20, 0
    %p148 = por %p146, %p147
    %p149 = scmp.ne.s32.totalorder %s137, %s138
    %p150 = scmp.eq.s32.totalorder %s21, 3
    %p151 = por %p149, %p150
    %p153 = scmp.ne.s32.totalorder %s138, %s152
    %p154 = scmp.eq.s32.totalorder %s21, 0
    %p155 = por %p153, %p154
    %s157 = sadd.s32 %s156, 1
    %p160 = scmp.eq.s32.totalorder %s15, 3
    %p161 = scmp.ne.s32.totalorder %s156, %s158
    %p162 = scmp.eq.s32.totalorder %s15, 0
    %p163 = por %p161, %p162
    %p164 = scmp.ne.s32.totalorder %s156, %s158
    %p165 = scmp.eq.s32.totalorder %s20, 3
    %p166 = por %p164, %p165
    %p167 = scmp.ne.s32.totalorder %s158, %s159
    %p168 = scmp.eq.s32.totalorder %s20, 0
    %p169 = por %p167, %p168
    %p170 = scmp.ne.s32.totalorder %s158, %s159
    %p171 = scmp.eq.s32.totalorder %s21, 3
    %p172 = por %p170, %p171
    %p174 = scmp.ne.s32.totalorder %s159, %s173
    %p175 = scmp.eq.s32.totalorder %s21, 0
    %p176 = por %p174, %p175
    %s178 = sadd.s32 %s177, 1
    %p181 = scmp.eq.s32.totalorder %s15, 3
    %p182 = scmp.ne.s32.totalorder %s177, %s179
    %p183 = scmp.eq.s32.totalorder %s15, 0
    %p184 = por %p182, %p183
    %p185 = scmp.ne.s32.totalorder %s177, %s179
    %p186 = scmp.eq.s32.totalorder %s20, 3
    %p187 = por %p185, %p186
    %p188 = scmp.ne.s32.totalorder %s179, %s180
    %p189 = scmp.eq.s32.totalorder %s20, 0
    %p190 = por %p188, %p189
    %p191 = scmp.ne.s32.totalorder %s179, %s180
    %p192 = scmp.eq.s32.totalorder %s21, 3
    %p193 = por %p191, %p192
    %p195 = scmp.ne.s32.totalorder %s180, %s194
    %p196 = scmp.eq.s32.totalorder %s21, 0
    %p197 = por %p195, %p196
    %s198 = ssub.s32 %s22, %s34
    %s199 = ssub.s32 %s23, %s30
    %s200 = sor.u32 %s198, %s199
    %p201 = scmp.eq.s32.totalorder %s200, 0
    %s203 = sadd.s32 %s202, 1
    %s204 = scalar_select %p201, %s202, %s203
    %p207 = pneg %p201
    %p208 = scmp.eq.s32.totalorder %s15, 3
    %p209 = por %p207, %p208
    %p210 = scmp.ne.s32.totalorder %s202, %s205
    %p211 = scmp.eq.s32.totalorder %s15, 0
    %p212 = por %p210, %p211
    %p213 = scmp.ne.s32.totalorder %s202, %s205
    %p214 = scmp.eq.s32.totalorder %s20, 3
    %p215 = por %p213, %p214
    %p216 = scmp.ne.s32.totalorder %s205, %s206
    %p217 = scmp.eq.s32.totalorder %s20, 0
    %p218 = por %p216, %p217
    %p219 = scmp.ne.s32.totalorder %s205, %s206
    %p220 = scmp.eq.s32.totalorder %s21, 3
    %p221 = por %p219, %p220
    %p223 = scmp.ne.s32.totalorder %s206, %s222
    %p224 = scmp.eq.s32.totalorder %s21, 0
    %p225 = por %p223, %p224
    %s227 = sadd.s32 %s226, 1
    %p230 = scmp.eq.s32.totalorder %s15, 3
    %p231 = scmp.ne.s32.totalorder %s226, %s228
    %p232 = scmp.eq.s32.totalorder %s15, 0
    %p233 = por %p231, %p232
    %p234 = scmp.ne.s32.totalorder %s226, %s228
    %p235 = scmp.eq.s32.totalorder %s20, 3
    %p236 = por %p234, %p235
    %p237 = scmp.ne.s32.totalorder %s228, %s229
    %p238 = scmp.eq.s32.totalorder %s20, 0
    %p239 = por %p237, %p238
    %p240 = scmp.ne.s32.totalorder %s228, %s229
    %p241 = scmp.eq.s32.totalorder %s21, 3
    %p242 = por %p240, %p241
    %p244 = scmp.ne.s32.totalorder %s229, %s243
    %p245 = scmp.eq.s32.totalorder %s21, 0
    %p246 = por %p244, %p245
    %s248 = sadd.s32 %s247, 1
    %p251 = scmp.eq.s32.totalorder %s15, 3
    %p252 = scmp.ne.s32.totalorder %s247, %s249
    %p253 = scmp.eq.s32.totalorder %s15, 0
    %p254 = por %p252, %p253
    %p255 = scmp.ne.s32.totalorder %s247, %s249
    %p256 = scmp.eq.s32.totalorder %s20, 3
    %p257 = por %p255, %p256
    %p258 = scmp.ne.s32.totalorder %s249, %s250
    %p259 = scmp.eq.s32.totalorder %s20, 0
    %p260 = por %p258, %p259
    %p261 = scmp.ne.s32.totalorder %s249, %s250
    %p262 = scmp.eq.s32.totalorder %s21, 3
    %p263 = por %p261, %p262
    %p265 = scmp.ne.s32.totalorder %s250, %s264
    %p266 = scmp.eq.s32.totalorder %s21, 0
    %p267 = por %p265, %p266
    %s268 = ssub.s32 %s22, %s34
    %s269 = ssub.s32 %s23, %s30
    %s270 = sor.u32 %s268, %s269
    %p271 = scmp.eq.s32.totalorder %s270, 0
    %s273 = sadd.s32 %s272, 1
    %s274 = scalar_select %p271, %s272, %s273
    %p277 = pneg %p271
    %p278 = scmp.eq.s32.totalorder %s15, 3
    %p279 = por %p277, %p278
    %p280 = scmp.ne.s32.totalorder %s272, %s275
    %p281 = scmp.eq.s32.totalorder %s15, 0
    %p282 = por %p280, %p281
    %p283 = scmp.ne.s32.totalorder %s272, %s275
    %p284 = scmp.eq.s32.totalorder %s20, 3
    %p285 = por %p283, %p284
    %p286 = scmp.ne.s32.totalorder %s275, %s276
    %p287 = scmp.eq.s32.totalorder %s20, 0
    %p288 = por %p286, %p287
    %p289 = scmp.ne.s32.totalorder %s275, %s276
    %p290 = scmp.eq.s32.totalorder %s21, 3
    %p291 = por %p289, %p290
    %p293 = scmp.ne.s32.totalorder %s276, %s292
    %p294 = scmp.eq.s32.totalorder %s21, 0
    %p295 = por %p293, %p294
    %p296 = scmp.le.s32.totalorder 1, %s15
    %p297 = scmp.lt.s32.totalorder %s15, 5
    %p298 = pnand %p296, %p297
    %p299 = pneg %p298
    // Predicated region
    $region9: #{resblock_forward.5} parent=5 // pred_check
      _
    $region10: #{resblock_forward.5} parent=5 // pred_check_branch
      %301 = sbr.rel (%p298) target = $region12
    $region11: #{resblock_forward.5} parent=5 // pred_region
      %s302 = ssub.s32 %s15, 1
      // Predicated region
      $region13: #{resblock_forward.5} parent=11 // pred_check
        %p303 = pneg %p148
      $region14: #{resblock_forward.5} parent=11 // pred_check_branch
        %305 = sbr.rel (%p303) target = $region16
      $region15: #{resblock_forward.5} parent=11 // pred_region
        _
      $region16: #{resblock_forward.5} parent=11 // pred_fallthru
        _
      // Predicated region
      $region17: #{resblock_forward.5} parent=11 // pred_check
        %p306 = pneg %p169
      $region18: #{resblock_forward.5} parent=11 // pred_check_branch
        %308 = sbr.rel (%p306) target = $region20
      $region19: #{resblock_forward.5} parent=11 // pred_region
        _
      $region20: #{resblock_forward.5} parent=11 // pred_fallthru
        _
      // Predicated region
      $region21: #{resblock_forward.5} parent=11 // pred_check
        %p309 = pneg %p190
      $region22: #{resblock_forward.5} parent=11 // pred_check_branch
        %311 = sbr.rel (%p309) target = $region24
      $region23: #{resblock_forward.5} parent=11 // pred_region
        _
      $region24: #{resblock_forward.5} parent=11 // pred_fallthru
        _
      // Predicated region
      $region25: #{resblock_forward.5} parent=11 // pred_check
        %p312 = pneg %p239
      $region26: #{resblock_forward.5} parent=11 // pred_check_branch
        %314 = sbr.rel (%p312) target = $region28
      $region27: #{resblock_forward.5} parent=11 // pred_region
        _
      $region28: #{resblock_forward.5} parent=11 // pred_fallthru
        _
      // Predicated region
      $region29: #{resblock_forward.5} parent=11 // pred_check
        %p315 = pneg %p260
      $region30: #{resblock_forward.5} parent=11 // pred_check_branch
        %317 = sbr.rel (%p315) target = $region32
      $region31: #{resblock_forward.5} parent=11 // pred_region
        _
      $region32: #{resblock_forward.5} parent=11 // pred_fallthru
        _
    $region12: #{resblock_forward.5} parent=5 // pred_fallthru
      _
    %p318 = scmp.lt.s32.totalorder %s15, 4
    // Predicated region
    $region33: #{resblock_forward.5} parent=5 // pred_check
      %p319 = pneg %p318
    $region34: #{resblock_forward.5} parent=5 // pred_check_branch
      %321 = sbr.rel (%p319) target = $region36
    $region35: #{resblock_forward.5} parent=5 // pred_region
      // Predicated region
      $region37: #{resblock_forward.5} parent=35 // pred_check
        %p322 = pneg %p49
      $region38: #{resblock_forward.5} parent=35 // pred_check_branch
        %324 = sbr.rel (%p322) target = $region40
      $region39: #{resblock_forward.5} parent=35 // pred_region
        %s325 = smul.u32 8, %s23
        %p326 = scmp.lt.s32.totalorder %s22, 1
        %s327 = scalar_select %p326, %s22, 1
        %p328 = scmp.lt.s32.totalorder %s325, 15
        %s329 = scalar_select %p328, %s325, 15
        %s330 = smul.addr %s329, 2
        %s331 = smul.addr %s327, 32
        %s332 = sadd.s32 %s330, %s331
        %s333 = smul.addr %s332, 4
        %s334 = scalar_lea.vmem %s0, %s333
        %s335 = smul.u32 8, %s23
      $region40: #{resblock_forward.5} parent=35 // pred_fallthru
        _
      // Predicated region
      $region41: #{resblock_forward.5} parent=35 // pred_check
        %p336 = pneg %p85
      $region42: #{resblock_forward.5} parent=35 // pred_check_branch
        %338 = sbr.rel (%p336) target = $region44
      $region43: #{resblock_forward.5} parent=35 // pred_region
        %s339 = smul.u32 %s23, 8
        %s340 = ssub.s32 %s339, 1
        %p341 = scmp.gt.s32.totalorder %s340, 0
        %s342 = scalar_select %p341, %s340, 0
        %p343 = scmp.lt.s32.totalorder %s22, 1
        %s344 = scalar_select %p343, %s22, 1
        %p345 = scmp.lt.s32.totalorder %s342, 15
        %s346 = scalar_select %p345, %s342, 15
        %s347 = smul.addr %s346, 2
        %s348 = smul.addr %s344, 32
        %s349 = sadd.s32 %s347, %s348
        %s350 = smul.addr %s349, 4
        %s351 = scalar_lea.vmem %s1, %s350
        %s352 = smul.u32 %s23, 8
        %s353 = ssub.s32 %s352, 1
        %p354 = scmp.gt.s32.totalorder %s353, 0
        %s355 = scalar_select %p354, %s353, 0
      $region44: #{resblock_forward.5} parent=35 // pred_fallthru
        _
      // Predicated region
      $region45: #{resblock_forward.5} parent=35 // pred_check
        %p356 = pneg %p121
      $region46: #{resblock_forward.5} parent=35 // pred_check_branch
        %358 = sbr.rel (%p356) target = $region48
      $region47: #{resblock_forward.5} parent=35 // pred_region
        %s359 = sadd.s32 %s23, 1
        %s360 = smul.u32 %s359, 8
        %p361 = scmp.lt.s32.totalorder %s360, 15
        %s362 = scalar_select %p361, %s360, 15
        %p363 = scmp.lt.s32.totalorder %s22, 1
        %s364 = scalar_select %p363, %s22, 1
        %p365 = scmp.lt.s32.totalorder %s362, 15
        %s366 = scalar_select %p365, %s362, 15
        %s367 = smul.addr %s366, 2
        %s368 = smul.addr %s364, 32
        %s369 = sadd.s32 %s367, %s368
        %s370 = smul.addr %s369, 4
        %s371 = scalar_lea.vmem %s2, %s370
        %s372 = sadd.s32 %s23, 1
        %s373 = smul.u32 %s372, 8
        %p374 = scmp.lt.s32.totalorder %s373, 15
        %s375 = scalar_select %p374, %s373, 15
      $region48: #{resblock_forward.5} parent=35 // pred_fallthru
        _
      // Predicated region
      $region49: #{resblock_forward.5} parent=35 // pred_check
        %p376 = pneg %p212
      $region50: #{resblock_forward.5} parent=35 // pred_check_branch
        %378 = sbr.rel (%p376) target = $region52
      $region51: #{resblock_forward.5} parent=35 // pred_region
        %s379 = smul.u32 8, %s23
        %p380 = scmp.lt.s32.totalorder %s22, 1
        %s381 = scalar_select %p380, %s22, 1
        %p382 = scmp.lt.s32.totalorder %s379, 15
        %s383 = scalar_select %p382, %s379, 15
        %s384 = smul.addr %s383, 2
        %s385 = smul.addr %s381, 32
        %s386 = sadd.s32 %s384, %s385
        %s387 = smul.addr %s386, 8
        %s388 = scalar_lea.vmem %s6, %s387
        %s389 = smul.u32 8, %s23
      $region52: #{resblock_forward.5} parent=35 // pred_fallthru
        _
    $region36: #{resblock_forward.5} parent=5 // pred_fallthru
      _
    %p390 = scmp.le.s32.totalorder 1, %s15
    %p391 = scmp.lt.s32.totalorder %s15, 5
    %p392 = pnand %p390, %p391
    %p393 = pneg %p392
    // Predicated region
    $region53: #{resblock_forward.5} parent=5 // pred_check
      _
    $region54: #{resblock_forward.5} parent=5 // pred_check_branch
      %395 = sbr.rel (%p392) target = $region56
    $region55: #{resblock_forward.5} parent=5 // pred_region
      %s396 = ssub.s32 %s15, 1
      %s397 = smul.u32 8, %s25
      %p398 = scmp.lt.s32.totalorder %s24, 1
      %s399 = scalar_select %p398, %s24, 1
      %p400 = scmp.lt.s32.totalorder %s397, 15
      %s401 = scalar_select %p400, %s397, 15
      %s402 = smul.addr %s401, 2
      %s403 = smul.addr %s399, 32
      %s404 = sadd.s32 %s402, %s403
      %s405 = smul.addr %s404, 4
      %s406 = scalar_lea.vmem %s0, %s405
      %p407 = pneg %p55
      %p408 = pneg %p52
      %s409 = smul.u32 %s25, 8
      %s410 = ssub.s32 %s409, 1
      %p411 = scmp.gt.s32.totalorder %s410, 0
      %s412 = scalar_select %p411, %s410, 0
      %p413 = scmp.lt.s32.totalorder %s24, 1
      %s414 = scalar_select %p413, %s24, 1
      %p415 = scmp.lt.s32.totalorder %s412, 15
      %s416 = scalar_select %p415, %s412, 15
      %s417 = smul.addr %s416, 2
      %s418 = smul.addr %s414, 32
      %s419 = sadd.s32 %s417, %s418
      %s420 = smul.addr %s419, 4
      %s421 = scalar_lea.vmem %s1, %s420
      %p422 = pneg %p91
      %p423 = pneg %p88
      %s424 = sadd.s32 %s25, 1
      %s425 = smul.u32 %s424, 8
      %p426 = scmp.lt.s32.totalorder %s425, 15
      %s427 = scalar_select %p426, %s425, 15
      %p428 = scmp.lt.s32.totalorder %s24, 1
      %s429 = scalar_select %p428, %s24, 1
      %p430 = scmp.lt.s32.totalorder %s427, 15
      %s431 = scalar_select %p430, %s427, 15
      %s432 = smul.addr %s431, 2
      %s433 = smul.addr %s429, 32
      %s434 = sadd.s32 %s432, %s433
      %s435 = smul.addr %s434, 4
      %s436 = scalar_lea.vmem %s2, %s435
      %p437 = pneg %p127
      %p438 = pneg %p124
      %p439 = pneg %p148
      %p440 = pneg %p145
      %p441 = pneg %p169
      %p442 = pneg %p166
      %p443 = pneg %p190
      %p444 = pneg %p187
      %s445 = smul.u32 8, %s25
      %p446 = scmp.lt.s32.totalorder %s24, 1
      %s447 = scalar_select %p446, %s24, 1
      %p448 = scmp.lt.s32.totalorder %s445, 15
      %s449 = scalar_select %p448, %s445, 15
      %s450 = smul.addr %s449, 2
      %s451 = smul.addr %s447, 32
      %s452 = sadd.s32 %s450, %s451
      %s453 = smul.addr %s452, 8
      %s454 = scalar_lea.vmem %s6, %s453
      %p455 = pneg %p218
      %p456 = pneg %p215
      %p457 = pneg %p239
      %p458 = pneg %p236
      %p459 = pneg %p260
      %p460 = pneg %p257
      %p461 = pneg %p288
      %p462 = pneg %p285
      %s463 = smul.u32 8, %s25
      %p464 = scmp.lt.s32.totalorder %s24, 1
      %s465 = scalar_select %p464, %s24, 1
      %p466 = scmp.lt.s32.totalorder %s463, 15
      %s467 = scalar_select %p466, %s463, 15
      %s468 = smul.addr %s467, 2
      %s469 = smul.addr %s465, 32
      %s470 = sadd.s32 %s468, %s469
      %s471 = smul.addr %s470, 8
      %s472 = scalar_lea.vmem %s9, %s471
      %s473 = smul.u32 8, %s25
      %p474 = scmp.lt.s32.totalorder %s24, 1
      %s475 = scalar_select %p474, %s24, 1
      %p476 = scmp.lt.s32.totalorder %s473, 15
      %s477 = scalar_select %p476, %s473, 15
      %s478 = smul.addr %s477, 2
      %s479 = smul.addr %s475, 32
      %s480 = sadd.s32 %s478, %s479
      %s481 = smul.addr %s480, 4
      %s482 = scalar_lea.vmem %s0, %s481
      %s483 = smul.u32 8, %s25
      %s484 = smul.u32 %s25, 8
      %s485 = ssub.s32 %s484, 1
      %p486 = scmp.gt.s32.totalorder %s485, 0
      %s487 = scalar_select %p486, %s485, 0
      %p488 = scmp.lt.s32.totalorder %s24, 1
      %s489 = scalar_select %p488, %s24, 1
      %p490 = scmp.lt.s32.totalorder %s487, 15
      %s491 = scalar_select %p490, %s487, 15
      %s492 = smul.addr %s491, 2
      %s493 = smul.addr %s489, 32
      %s494 = sadd.s32 %s492, %s493
      %s495 = smul.addr %s494, 4
      %s496 = scalar_lea.vmem %s1, %s495
      %s497 = smul.u32 %s25, 8
      %s498 = ssub.s32 %s497, 1
      %p499 = scmp.gt.s32.totalorder %s498, 0
      %s500 = scalar_select %p499, %s498, 0
      %s501 = sadd.s32 %s25, 1
      %s502 = smul.u32 %s501, 8
      %p503 = scmp.lt.s32.totalorder %s502, 15
      %s504 = scalar_select %p503, %s502, 15
      %p505 = scmp.lt.s32.totalorder %s24, 1
      %s506 = scalar_select %p505, %s24, 1
      %p507 = scmp.lt.s32.totalorder %s504, 15
      %s508 = scalar_select %p507, %s504, 15
      %s509 = smul.addr %s508, 2
      %s510 = smul.addr %s506, 32
      %s511 = sadd.s32 %s509, %s510
      %s512 = smul.addr %s511, 4
      %s513 = scalar_lea.vmem %s2, %s512
      %s514 = sadd.s32 %s25, 1
      %s515 = smul.u32 %s514, 8
      %p516 = scmp.lt.s32.totalorder %s515, 15
      %s517 = scalar_select %p516, %s515, 15
      %s518 = smul.u32 8, %s25
      %p519 = scmp.lt.s32.totalorder %s24, 1
      %s520 = scalar_select %p519, %s24, 1
      %p521 = scmp.lt.s32.totalorder %s518, 15
      %s522 = scalar_select %p521, %s518, 15
      %s523 = smul.addr %s522, 2
      %s524 = smul.addr %s520, 32
      %s525 = sadd.s32 %s523, %s524
      %s526 = smul.addr %s525, 8
      %s527 = scalar_lea.vmem %s6, %s526
      %s528 = smul.u32 8, %s25
      %s529 = smul.u32 8, %s25
      %p530 = scmp.lt.s32.totalorder %s24, 1
      %s531 = scalar_select %p530, %s24, 1
      %p532 = scmp.lt.s32.totalorder %s529, 15
      %s533 = scalar_select %p532, %s529, 15
      %s534 = smul.addr %s533, 2
      %s535 = smul.addr %s531, 32
      %s536 = sadd.s32 %s534, %s535
      %s537 = smul.addr %s536, 8
      %s538 = scalar_lea.vmem %s9, %s537
      %s539 = smul.u32 8, %s25
      %v541 = vld [vmem:[%s3] sm:$0x1]
      %v542 = vld [vmem:[%s4] sm:$0x1]
      %v543 = vld [vmem:[%s482] sm:$0xf]
      %v544 = vld [vmem:[%s482 + $0x4] sm:$0xf]
      %v545 = vld [vmem:[%s482 + $0x8] sm:$0xf]
      %v546 = vld [vmem:[%s482 + $0xc] sm:$0xf]
      %v547 = vld [vmem:[%s482 + $0x10] sm:$0xf]
      %v548 = vld [vmem:[%s482 + $0x14] sm:$0xf]
      %v549 = vld [vmem:[%s482 + $0x18] sm:$0xf]
      %v550 = vld [vmem:[%s482 + $0x1c] sm:$0xf]
      %v551 = vld [vmem:[%s482 + $0x20] sm:$0xf]
      %v552 = vld [vmem:[%s482 + $0x24] sm:$0xf]
      %v553 = vld [vmem:[%s482 + $0x28] sm:$0xf]
      %v554 = vld [vmem:[%s482 + $0x2c] sm:$0xf]
      %v555 = vld [vmem:[%s482 + $0x30] sm:$0xf]
      %v556 = vld [vmem:[%s482 + $0x34] sm:$0xf]
      %v557 = vld [vmem:[%s482 + $0x38] sm:$0xf]
      %v558 = vld [vmem:[%s482 + $0x3c] sm:$0xf]
      %v559 = vunpack.c.l.bf16 %v543
      %v560 = vunpack.c.l.bf16 %v544
      %v561 = vunpack.c.l.bf16 %v545
      %v562 = vunpack.c.l.bf16 %v546
      %v563 = vunpack.c.l.bf16 %v547
      %v564 = vunpack.c.l.bf16 %v548
      %v565 = vunpack.c.l.bf16 %v549
      %v566 = vunpack.c.l.bf16 %v550
      %v567 = vunpack.c.l.bf16 %v551
      %v568 = vunpack.c.l.bf16 %v552
      %v569 = vunpack.c.l.bf16 %v553
      %v570 = vunpack.c.l.bf16 %v554
      %v571 = vunpack.c.l.bf16 %v555
      %v572 = vunpack.c.l.bf16 %v556
      %v573 = vunpack.c.l.bf16 %v557
      %v574 = vunpack.c.l.bf16 %v558
      %v576 = vlaneseq
      %v577 = vshrl.u32 %v576, 7
      %v578 = vsub.s32 0, %v577
      %v579 = vrot.slane %v541, %v578
      %v581 = vmul.f32 %v559, %v579
      %v582 = vmul.f32 %v560, %v579
      %v583 = vmul.f32 %v561, %v579
      %v584 = vmul.f32 %v562, %v579
      %v585 = vmul.f32 %v563, %v579
      %v586 = vmul.f32 %v564, %v579
      %v587 = vmul.f32 %v565, %v579
      %v588 = vmul.f32 %v566, %v579
      %v589 = vmul.f32 %v567, %v579
      %v590 = vmul.f32 %v568, %v579
      %v591 = vmul.f32 %v569, %v579
      %v592 = vmul.f32 %v570, %v579
      %v593 = vmul.f32 %v571, %v579
      %v594 = vmul.f32 %v572, %v579
      %v595 = vmul.f32 %v573, %v579
      %v596 = vmul.f32 %v574, %v579
      %v598 = vlaneseq
      %v599 = vshrl.u32 %v598, 7
      %v600 = vsub.s32 0, %v599
      %v601 = vrot.slane %v542, %v600
      %v603 = vadd.f32 %v581, %v601
      %v604 = vadd.f32 %v582, %v601
      %v605 = vadd.f32 %v583, %v601
      %v606 = vadd.f32 %v584, %v601
      %v607 = vadd.f32 %v585, %v601
      %v608 = vadd.f32 %v586, %v601
      %v609 = vadd.f32 %v587, %v601
      %v610 = vadd.f32 %v588, %v601
      %v611 = vadd.f32 %v589, %v601
      %v612 = vadd.f32 %v590, %v601
      %v613 = vadd.f32 %v591, %v601
      %v614 = vadd.f32 %v592, %v601
      %v615 = vadd.f32 %v593, %v601
      %v616 = vadd.f32 %v594, %v601
      %v617 = vadd.f32 %v595, %v601
      %v618 = vadd.f32 %v596, %v601
      %vm619 = vcmp.ge.f32.partialorder %v603, 0.0
      %vm620 = vcmp.ge.f32.partialorder %v604, 0.0
      %vm621 = vcmp.ge.f32.partialorder %v605, 0.0
      %vm622 = vcmp.ge.f32.partialorder %v606, 0.0
      %vm623 = vcmp.ge.f32.partialorder %v607, 0.0
      %vm624 = vcmp.ge.f32.partialorder %v608, 0.0
      %vm625 = vcmp.ge.f32.partialorder %v609, 0.0
      %vm626 = vcmp.ge.f32.partialorder %v610, 0.0
      %vm627 = vcmp.ge.f32.partialorder %v611, 0.0
      %vm628 = vcmp.ge.f32.partialorder %v612, 0.0
      %vm629 = vcmp.ge.f32.partialorder %v613, 0.0
      %vm630 = vcmp.ge.f32.partialorder %v614, 0.0
      %vm631 = vcmp.ge.f32.partialorder %v615, 0.0
      %vm632 = vcmp.ge.f32.partialorder %v616, 0.0
      %vm633 = vcmp.ge.f32.partialorder %v617, 0.0
      %vm634 = vcmp.ge.f32.partialorder %v618, 0.0
      %v635 = vmul.f32 %v603, 0.2
      %v636 = vmul.f32 %v604, 0.2
      %v637 = vmul.f32 %v605, 0.2
      %v638 = vmul.f32 %v606, 0.2
      %v639 = vmul.f32 %v607, 0.2
      %v640 = vmul.f32 %v608, 0.2
      %v641 = vmul.f32 %v609, 0.2
      %v642 = vmul.f32 %v610, 0.2
      %v643 = vmul.f32 %v611, 0.2
      %v644 = vmul.f32 %v612, 0.2
      %v645 = vmul.f32 %v613, 0.2
      %v646 = vmul.f32 %v614, 0.2
      %v647 = vmul.f32 %v615, 0.2
      %v648 = vmul.f32 %v616, 0.2
      %v649 = vmul.f32 %v617, 0.2
      %v650 = vmul.f32 %v618, 0.2
      %v651 = vsel %vm619, %v603, %v635
      %v652 = vsel %vm620, %v604, %v636
      %v653 = vsel %vm621, %v605, %v637
      %v654 = vsel %vm622, %v606, %v638
      %v655 = vsel %vm623, %v607, %v639
      %v656 = vsel %vm624, %v608, %v640
      %v657 = vsel %vm625, %v609, %v641
      %v658 = vsel %vm626, %v610, %v642
      %v659 = vsel %vm627, %v611, %v643
      %v660 = vsel %vm628, %v612, %v644
      %v661 = vsel %vm629, %v613, %v645
      %v662 = vsel %vm630, %v614, %v646
      %v663 = vsel %vm631, %v615, %v647
      %v664 = vsel %vm632, %v616, %v648
      %v665 = vsel %vm633, %v617, %v649
      %v666 = vsel %vm634, %v618, %v650
      %v667 = vld [vmem:[%s496] sm:$0xf]
      %v668 = vld [vmem:[%s496 + $0x4] sm:$0xf]
      %v669 = vunpack.c.l.bf16 %v667
      %v670 = vunpack.c.l.bf16 %v668
      %v671 = vmul.f32 %v669, %v579
      %v672 = vmul.f32 %v670, %v579
      %v673 = vadd.f32 %v671, %v601
      %v674 = vadd.f32 %v672, %v601
      %vm675 = vcmp.ge.f32.partialorder %v673, 0.0
      %vm676 = vcmp.ge.f32.partialorder %v674, 0.0
      %v677 = vmul.f32 %v673, 0.2
      %v678 = vmul.f32 %v674, 0.2
      %v679 = vsel %vm675, %v673, %v677
      %v680 = vsel %vm676, %v674, %v678
      %v681 = vld [vmem:[%s513] sm:$0xf]
      %v682 = vld [vmem:[%s513 + $0x4] sm:$0xf]
      %v683 = vunpack.c.l.bf16 %v681
      %v684 = vunpack.c.l.bf16 %v682
      %v685 = vmul.f32 %v683, %v579
      %v686 = vmul.f32 %v684, %v579
      %v687 = vadd.f32 %v685, %v601
      %v688 = vadd.f32 %v686, %v601
      %vm689 = vcmp.ge.f32.partialorder %v687, 0.0
      %vm690 = vcmp.ge.f32.partialorder %v688, 0.0
      %v691 = vmul.f32 %v687, 0.2
      %v692 = vmul.f32 %v688, 0.2
      %v693 = vsel %vm689, %v687, %v691
      %v694 = vsel %vm690, %v688, %v692
      %p695 = scmp.eq.s32.totalorder %s25, 0
      %s696 = scalar_select %p695, 1, 0
      %v697 = vstv %s696
      %vm698 = vcmp.eq.s32.totalorder %v697, 1
      %v699 = vsel %vm698, 0.0, %v679
      %v700 = vsel %vm698, 0.0, %v680
      %p701 = scmp.eq.s32.totalorder %s25, 1
      %s702 = scalar_select %p701, 1, 0
      %v703 = vstv %s702
      %vm704 = vcmp.eq.s32.totalorder %v703, 1
      %v705 = vsel %vm704, 0.0, %v693
      %v706 = vsel %vm704, 0.0, %v694
      %vm707 = vcmask 57344
      %708 = vst.msk [vmem:[#allocation2] sm:$0x1] %vm707, 0.0
      %709 = vst.msk [vmem:[#allocation2 + $0x18] sm:$0x1] %vm707, 0.0
      %710 = vst.msk [vmem:[#allocation2 + $0x30] sm:$0x1] %vm707, 0.0
      %711 = vst.msk [vmem:[#allocation2 + $0x48] sm:$0x1] %vm707, 0.0
      %712 = vst.msk [vmem:[#allocation2 + $0x60] sm:$0x1] %vm707, 0.0
      %713 = vst.msk [vmem:[#allocation2 + $0x78] sm:$0x1] %vm707, 0.0
      %714 = vst.msk [vmem:[#allocation2 + $0x90] sm:$0x1] %vm707, 0.0
      %715 = vst.msk [vmem:[#allocation2 + $0xa8] sm:$0x1] %vm707, 0.0
      %716 = vst.msk [vmem:[#allocation2 + $0xc0] sm:$0x1] %vm707, 0.0
      %717 = vst.msk [vmem:[#allocation2 + $0xd8] sm:$0x1] %vm707, 0.0
      %718 = vst.msk [vmem:[#allocation2 + $0x11] sm:$0x1] %vm707, 0.0
      %719 = vst.msk [vmem:[#allocation2 + $0x29] sm:$0x1] %vm707, 0.0
      %720 = vst.msk [vmem:[#allocation2 + $0x41] sm:$0x1] %vm707, 0.0
      %721 = vst.msk [vmem:[#allocation2 + $0x59] sm:$0x1] %vm707, 0.0
      %722 = vst.msk [vmem:[#allocation2 + $0x71] sm:$0x1] %vm707, 0.0
      %723 = vst.msk [vmem:[#allocation2 + $0x89] sm:$0x1] %vm707, 0.0
      %724 = vst.msk [vmem:[#allocation2 + $0xa1] sm:$0x1] %vm707, 0.0
      %725 = vst.msk [vmem:[#allocation2 + $0xb9] sm:$0x1] %vm707, 0.0
      %726 = vst.msk [vmem:[#allocation2 + $0xd1] sm:$0x1] %vm707, 0.0
      %727 = vst.msk [vmem:[#allocation2 + $0xe9] sm:$0x1] %vm707, 0.0
      %vm728 = vcmask 64512
      %729 = vst.msk [vmem:[#allocation2 + $0x1] sm:$0xff] %vm728, %v699
      %730 = vst.msk [vmem:[#allocation2 + $0x9] sm:$0xff] %vm728, %v700
      %s731 = scalar_lea.vmem [#allocation2], 216
      %732 = vst.msk [vmem:[%s731 + $0x1] sm:$0xff] %vm728, %v705
      %733 = vst.msk [vmem:[%s731 + $0x9] sm:$0xff] %vm728, %v706
      %s734 = scalar_lea.vmem [#allocation2], 24
      %735 = vst.msk [vmem:[%s734 + $0x1] sm:$0xff] %vm728, %v651
      %736 = vst.msk [vmem:[%s734 + $0x9] sm:$0xff] %vm728, %v652
      %737 = vst.msk [vmem:[%s734 + $0x19] sm:$0xff] %vm728, %v653
      %738 = vst.msk [vmem:[%s734 + $0x21] sm:$0xff] %vm728, %v654
      %739 = vst.msk [vmem:[%s734 + $0x31] sm:$0xff] %vm728, %v655
      %740 = vst.msk [vmem:[%s734 + $0x39] sm:$0xff] %vm728, %v656
      %741 = vst.msk [vmem:[%s734 + $0x49] sm:$0xff] %vm728, %v657
      %742 = vst.msk [vmem:[%s734 + $0x51] sm:$0xff] %vm728, %v658
      %743 = vst.msk [vmem:[%s734 + $0x61] sm:$0xff] %vm728, %v659
      %744 = vst.msk [vmem:[%s734 + $0x69] sm:$0xff] %vm728, %v660
      %745 = vst.msk [vmem:[%s734 + $0x79] sm:$0xff] %vm728, %v661
      %746 = vst.msk [vmem:[%s734 + $0x81] sm:$0xff] %vm728, %v662
      %747 = vst.msk [vmem:[%s734 + $0x91] sm:$0xff] %vm728, %v663
      %748 = vst.msk [vmem:[%s734 + $0x99] sm:$0xff] %vm728, %v664
      %749 = vst.msk [vmem:[%s734 + $0xa9] sm:$0xff] %vm728, %v665
      %750 = vst.msk [vmem:[%s734 + $0xb1] sm:$0xff] %vm728, %v666
      %v751 = vld [vmem:[#allocation2] sm:$0xff]
      %v752 = vld [vmem:[#allocation2 + $0x8] sm:$0xff]
      %v753 = vld [vmem:[#allocation2 + $0x18] sm:$0xff]
      %v754 = vld [vmem:[#allocation2 + $0x20] sm:$0xff]
      %v755 = vld [vmem:[#allocation2 + $0x30] sm:$0xff]
      %v756 = vld [vmem:[#allocation2 + $0x38] sm:$0xff]
      %v757 = vld [vmem:[#allocation2 + $0x48] sm:$0xff]
      %v758 = vld [vmem:[#allocation2 + $0x50] sm:$0xff]
      %v759 = vld [vmem:[#allocation2 + $0x60] sm:$0xff]
      %v760 = vld [vmem:[#allocation2 + $0x68] sm:$0xff]
      %v761 = vld [vmem:[#allocation2 + $0x78] sm:$0xff]
      %v762 = vld [vmem:[#allocation2 + $0x80] sm:$0xff]
      %v763 = vld [vmem:[#allocation2 + $0x90] sm:$0xff]
      %v764 = vld [vmem:[#allocation2 + $0x98] sm:$0xff]
      %v765 = vld [vmem:[#allocation2 + $0xa8] sm:$0xff]
      %v766 = vld [vmem:[#allocation2 + $0xb0] sm:$0xff]
      %v767 = vpack.c.bf16 %v752, %v751
      %v768 = vpack.c.bf16 %v754, %v753
      %v769 = vpack.c.bf16 %v756, %v755
      %v770 = vpack.c.bf16 %v758, %v757
      %v771 = vpack.c.bf16 %v760, %v759
      %v772 = vpack.c.bf16 %v762, %v761
      %v773 = vpack.c.bf16 %v764, %v763
      %v774 = vpack.c.bf16 %v766, %v765
      %v775 = vld [vmem:[%s5] sm:$0xf]
      %v776 = vld [vmem:[#allocation2 + $0x1] sm:$0xff]
      %v777 = vld [vmem:[#allocation2 + $0x9] sm:$0xff]
      %v778 = vld [vmem:[#allocation2 + $0x19] sm:$0xff]
      %v779 = vld [vmem:[#allocation2 + $0x21] sm:$0xff]
      %v780 = vld [vmem:[#allocation2 + $0x31] sm:$0xff]
      %v781 = vld [vmem:[#allocation2 + $0x39] sm:$0xff]
      %v782 = vld [vmem:[#allocation2 + $0x49] sm:$0xff]
      %v783 = vld [vmem:[#allocation2 + $0x51] sm:$0xff]
      %v784 = vld [vmem:[#allocation2 + $0x61] sm:$0xff]
      %v785 = vld [vmem:[#allocation2 + $0x69] sm:$0xff]
      %v786 = vld [vmem:[#allocation2 + $0x79] sm:$0xff]
      %v787 = vld [vmem:[#allocation2 + $0x81] sm:$0xff]
      %v788 = vld [vmem:[#allocation2 + $0x91] sm:$0xff]
      %v789 = vld [vmem:[#allocation2 + $0x99] sm:$0xff]
      %v790 = vld [vmem:[#allocation2 + $0xa9] sm:$0xff]
      %v791 = vld [vmem:[#allocation2 + $0xb1] sm:$0xff]
      %v792 = vpack.c.bf16 %v777, %v776
      %v793 = vpack.c.bf16 %v779, %v778
      %v794 = vpack.c.bf16 %v781, %v780
      %v795 = vpack.c.bf16 %v783, %v782
      %v796 = vpack.c.bf16 %v785, %v784
      %v797 = vpack.c.bf16 %v787, %v786
      %v798 = vpack.c.bf16 %v789, %v788
      %v799 = vpack.c.bf16 %v791, %v790
      %v800 = vld [vmem:[%s5 + $0x4] sm:$0xf]
      %v802 = vsel %vm728, %v792, 0
      %v805 = vsel %vm728, %v793, 0
      %v808 = vsel %vm728, %v794, 0
      %v811 = vsel %vm728, %v795, 0
      %v814 = vsel %vm728, %v796, 0
      %v817 = vsel %vm728, %v797, 0
      %v820 = vsel %vm728, %v798, 0
      %v823 = vsel %vm728, %v799, 0
      %vm825 = vcmask 1043456
      %v827 = vsel %vm825, %v800, 0
      %829 = vmatprep.subr.bf16.mxu0 0
      %830 = vmatpush1.bf16.msra.mxu0 0
      %831 = vmatprep.subr.bf16.mxu0 0
      %832 = vmatpush1.bf16.msra.mxu0 0
      %833 = vmatprep.subr.bf16.mxu0 0
      %834 = vmatpush1.bf16.msra.mxu0 0
      %835 = vmatprep.subr.bf16.mxu0 0
      %836 = vmatpush1.bf16.msra.mxu0 0
      %837 = vmatprep.subr.bf16.mxu0 0
      %838 = vmatpush1.bf16.msra.mxu0 0
      %839 = vmatprep.subr.bf16.mxu0 0
      %840 = vmatpush1.bf16.msra.mxu0 0
      %841 = vmatprep.subr.bf16.mxu0 0
      %842 = vmatpush1.bf16.msra.mxu0 0
      %843 = vmatprep.subr.bf16.mxu0 0
      %844 = vmatpush1.bf16.msra.mxu0 %v827
      %845 = vmatprep.subr.bf16.mxu0 0
      %846 = vmatpush2.bf16.msra.mxu0 0
      %847 = vmatprep.subr.bf16.mxu0 0
      %848 = vmatpush2.bf16.msra.mxu0 0
      %849 = vmatprep.subr.bf16.mxu0 0
      %850 = vmatpush2.bf16.msra.mxu0 0
      %851 = vmatprep.subr.bf16.mxu0 0
      %852 = vmatpush2.bf16.msra.mxu0 0
      %853 = vmatprep.subr.bf16.mxu0 0
      %854 = vmatpush2.bf16.msra.mxu0 0
      %855 = vmatprep.subr.bf16.mxu0 0
      %856 = vmatpush2.bf16.msra.mxu0 0
      %857 = vmatprep.subr.bf16.mxu0 0
      %858 = vmatpush2.bf16.msra.mxu0 0
      %859 = vmatprep.subr.bf16.mxu0 0
      %860 = vmatpush2.bf16.msra.mxu0 0
      %861 = vmatprep.mubr.bf16.mxu0 0
      %862 = vmatmul.mubr.bf16.gmra.mxu0 %v802
      %v863 = vpop.f32.mrf.mxu0
      %v864 = vadd.f32 0.0, %v863
      %v865 = vpop.f32.mrf.mxu0
      %v866 = vpop.f32.mrf.mxu0
      %v867 = vadd.f32 0.0, %v866
      %v868 = vpop.f32.mrf.mxu0
      %869 = vmatprep.mubr.bf16.mxu0 0
      %870 = vmatmul.mubr.bf16.gmra.mxu0 %v805
      %v871 = vpop.f32.mrf.mxu0
      %v872 = vadd.f32 0.0, %v871
      %v873 = vpop.f32.mrf.mxu0
      %v874 = vpop.f32.mrf.mxu0
      %v875 = vadd.f32 0.0, %v874
      %v876 = vpop.f32.mrf.mxu0
      %877 = vmatprep.mubr.bf16.mxu0 0
      %878 = vmatmul.mubr.bf16.gmra.mxu0 %v808
      %v879 = vpop.f32.mrf.mxu0
      %v880 = vadd.f32 0.0, %v879
      %v881 = vpop.f32.mrf.mxu0
      %v882 = vpop.f32.mrf.mxu0
      %v883 = vadd.f32 0.0, %v882
      %v884 = vpop.f32.mrf.mxu0
      %885 = vmatprep.mubr.bf16.mxu0 0
      %886 = vmatmul.mubr.bf16.gmra.mxu0 %v811
      %v887 = vpop.f32.mrf.mxu0
      %v888 = vadd.f32 0.0, %v887
      %v889 = vpop.f32.mrf.mxu0
      %v890 = vpop.f32.mrf.mxu0
      %v891 = vadd.f32 0.0, %v890
      %v892 = vpop.f32.mrf.mxu0
      %893 = vmatprep.mubr.bf16.mxu0 0
      %894 = vmatmul.mubr.bf16.gmra.mxu0 %v814
      %v895 = vpop.f32.mrf.mxu0
      %v896 = vadd.f32 0.0, %v895
      %v897 = vpop.f32.mrf.mxu0
      %v898 = vpop.f32.mrf.mxu0
      %v899 = vadd.f32 0.0, %v898
      %v900 = vpop.f32.mrf.mxu0
      %901 = vmatprep.mubr.bf16.mxu0 0
      %902 = vmatmul.mubr.bf16.gmra.mxu0 %v817
      %v903 = vpop.f32.mrf.mxu0
      %v904 = vadd.f32 0.0, %v903
      %v905 = vpop.f32.mrf.mxu0
      %v906 = vpop.f32.mrf.mxu0
      %v907 = vadd.f32 0.0, %v906
      %v908 = vpop.f32.mrf.mxu0
      %909 = vmatprep.mubr.bf16.mxu0 0
      %910 = vmatmul.mubr.bf16.gmra.mxu0 %v820
      %v911 = vpop.f32.mrf.mxu0
      %v912 = vadd.f32 0.0, %v911
      %v913 = vpop.f32.mrf.mxu0
      %v914 = vpop.f32.mrf.mxu0
      %v915 = vadd.f32 0.0, %v914
      %v916 = vpop.f32.mrf.mxu0
      %917 = vmatprep.mubr.bf16.mxu0 0
      %918 = vmatmul.mubr.bf16.gmra.mxu0 %v823
      %v919 = vpop.f32.mrf.mxu0
      %v920 = vadd.f32 0.0, %v919
      %v921 = vpop.f32.mrf.mxu0
      %v922 = vpop.f32.mrf.mxu0
      %v923 = vadd.f32 0.0, %v922
      %v924 = vpop.f32.mrf.mxu0
      %925 = vdwg.mxu0
      %v927 = vsel %vm728, %v767, 0
      %v930 = vsel %vm728, %v768, 0
      %v933 = vsel %vm728, %v769, 0
      %v936 = vsel %vm728, %v770, 0
      %v939 = vsel %vm728, %v771, 0
      %v942 = vsel %vm728, %v772, 0
      %v945 = vsel %vm728, %v773, 0
      %v948 = vsel %vm728, %v774, 0
      %v951 = vsel %vm825, %v775, 0
      %953 = vmatprep.subr.bf16.mxu0 0
      %954 = vmatpush1.bf16.msra.mxu0 0
      %955 = vmatprep.subr.bf16.mxu0 0
      %956 = vmatpush1.bf16.msra.mxu0 0
      %957 = vmatprep.subr.bf16.mxu0 0
      %958 = vmatpush1.bf16.msra.mxu0 0
      %959 = vmatprep.subr.bf16.mxu0 0
      %960 = vmatpush1.bf16.msra.mxu0 0
      %961 = vmatprep.subr.bf16.mxu0 0
      %962 = vmatpush1.bf16.msra.mxu0 0
      %963 = vmatprep.subr.bf16.mxu0 0
      %964 = vmatpush1.bf16.msra.mxu0 0
      %965 = vmatprep.subr.bf16.mxu0 0
      %966 = vmatpush1.bf16.msra.mxu0 0
      %967 = vmatprep.subr.bf16.mxu0 0
      %968 = vmatpush1.bf16.msra.mxu0 %v951
      %969 = vmatprep.subr.bf16.mxu0 0
      %970 = vmatpush2.bf16.msra.mxu0 0
      %971 = vmatprep.subr.bf16.mxu0 0
      %972 = vmatpush2.bf16.msra.mxu0 0
      %973 = vmatprep.subr.bf16.mxu0 0
      %974 = vmatpush2.bf16.msra.mxu0 0
      %975 = vmatprep.subr.bf16.mxu0 0
      %976 = vmatpush2.bf16.msra.mxu0 0
      %977 = vmatprep.subr.bf16.mxu0 0
      %978 = vmatpush2.bf16.msra.mxu0 0
      %979 = vmatprep.subr.bf16.mxu0 0
      %980 = vmatpush2.bf16.msra.mxu0 0
      %981 = vmatprep.subr.bf16.mxu0 0
      %982 = vmatpush2.bf16.msra.mxu0 0
      %983 = vmatprep.subr.bf16.mxu0 0
      %984 = vmatpush2.bf16.msra.mxu0 0
      %985 = vmatprep.mubr.bf16.mxu0 0
      %986 = vmatmul.mubr.bf16.gmra.mxu0 %v927
      %v987 = vpop.f32.mrf.mxu0
      %v988 = vadd.f32 %v864, %v987
      %v989 = vpop.f32.mrf.mxu0
      %v990 = vpop.f32.mrf.mxu0
      %v991 = vadd.f32 %v867, %v990
      %v992 = vpop.f32.mrf.mxu0
      %993 = vmatprep.mubr.bf16.mxu0 0
      %994 = vmatmul.mubr.bf16.gmra.mxu0 %v930
      %v995 = vpop.f32.mrf.mxu0
      %v996 = vadd.f32 %v872, %v995
      %v997 = vpop.f32.mrf.mxu0
      %v998 = vpop.f32.mrf.mxu0
      %v999 = vadd.f32 %v875, %v998
      %v1000 = vpop.f32.mrf.mxu0
      %1001 = vmatprep.mubr.bf16.mxu0 0
      %1002 = vmatmul.mubr.bf16.gmra.mxu0 %v933
      %v1003 = vpop.f32.mrf.mxu0
      %v1004 = vadd.f32 %v880, %v1003
      %v1005 = vpop.f32.mrf.mxu0
      %v1006 = vpop.f32.mrf.mxu0
      %v1007 = vadd.f32 %v883, %v1006
      %v1008 = vpop.f32.mrf.mxu0
      %1009 = vmatprep.mubr.bf16.mxu0 0
      %1010 = vmatmul.mubr.bf16.gmra.mxu0 %v936
      %v1011 = vpop.f32.mrf.mxu0
      %v1012 = vadd.f32 %v888, %v1011
      %v1013 = vpop.f32.mrf.mxu0
      %v1014 = vpop.f32.mrf.mxu0
      %v1015 = vadd.f32 %v891, %v1014
      %v1016 = vpop.f32.mrf.mxu0
      %1017 = vmatprep.mubr.bf16.mxu0 0
      %1018 = vmatmul.mubr.bf16.gmra.mxu0 %v939
      %v1019 = vpop.f32.mrf.mxu0
      %v1020 = vadd.f32 %v896, %v1019
      %v1021 = vpop.f32.mrf.mxu0
      %v1022 = vpop.f32.mrf.mxu0
      %v1023 = vadd.f32 %v899, %v1022
      %v1024 = vpop.f32.mrf.mxu0
      %1025 = vmatprep.mubr.bf16.mxu0 0
      %1026 = vmatmul.mubr.bf16.gmra.mxu0 %v942
      %v1027 = vpop.f32.mrf.mxu0
      %v1028 = vadd.f32 %v904, %v1027
      %v1029 = vpop.f32.mrf.mxu0
      %v1030 = vpop.f32.mrf.mxu0
      %v1031 = vadd.f32 %v907, %v1030
      %v1032 = vpop.f32.mrf.mxu0
      %1033 = vmatprep.mubr.bf16.mxu0 0
      %1034 = vmatmul.mubr.bf16.gmra.mxu0 %v945
      %v1035 = vpop.f32.mrf.mxu0
      %v1036 = vadd.f32 %v912, %v1035
      %v1037 = vpop.f32.mrf.mxu0
      %v1038 = vpop.f32.mrf.mxu0
      %v1039 = vadd.f32 %v915, %v1038
      %v1040 = vpop.f32.mrf.mxu0
      %1041 = vmatprep.mubr.bf16.mxu0 0
      %1042 = vmatmul.mubr.bf16.gmra.mxu0 %v948
      %v1043 = vpop.f32.mrf.mxu0
      %v1044 = vadd.f32 %v920, %v1043
      %v1045 = vpop.f32.mrf.mxu0
      %v1046 = vpop.f32.mrf.mxu0
      %v1047 = vadd.f32 %v923, %v1046
      %v1048 = vpop.f32.mrf.mxu0
      %1049 = vdwg.mxu0
      %v1050 = vld [vmem:[#allocation2 + $0x2] sm:$0xff]
      %v1051 = vld [vmem:[#allocation2 + $0xa] sm:$0xff]
      %v1052 = vld [vmem:[#allocation2 + $0x1a] sm:$0xff]
      %v1053 = vld [vmem:[#allocation2 + $0x22] sm:$0xff]
      %v1054 = vld [vmem:[#allocation2 + $0x32] sm:$0xff]
      %v1055 = vld [vmem:[#allocation2 + $0x3a] sm:$0xff]
      %v1056 = vld [vmem:[#allocation2 + $0x4a] sm:$0xff]
      %v1057 = vld [vmem:[#allocation2 + $0x52] sm:$0xff]
      %v1058 = vld [vmem:[#allocation2 + $0x62] sm:$0xff]
      %v1059 = vld [vmem:[#allocation2 + $0x6a] sm:$0xff]
      %v1060 = vld [vmem:[#allocation2 + $0x7a] sm:$0xff]
      %v1061 = vld [vmem:[#allocation2 + $0x82] sm:$0xff]
      %v1062 = vld [vmem:[#allocation2 + $0x92] sm:$0xff]
      %v1063 = vld [vmem:[#allocation2 + $0x9a] sm:$0xff]
      %v1064 = vld [vmem:[#allocation2 + $0xaa] sm:$0xff]
      %v1065 = vld [vmem:[#allocation2 + $0xb2] sm:$0xff]
      %v1066 = vpack.c.bf16 %v1051, %v1050
      %v1067 = vpack.c.bf16 %v1053, %v1052
      %v1068 = vpack.c.bf16 %v1055, %v1054
      %v1069 = vpack.c.bf16 %v1057, %v1056
      %v1070 = vpack.c.bf16 %v1059, %v1058
      %v1071 = vpack.c.bf16 %v1061, %v1060
      %v1072 = vpack.c.bf16 %v1063, %v1062
      %v1073 = vpack.c.bf16 %v1065, %v1064
      %v1074 = vld [vmem:[%s5 + $0x8] sm:$0xf]
      %v1076 = vsel %vm728, %v1066, 0
      %v1079 = vsel %vm728, %v1067, 0
      %v1082 = vsel %vm728, %v1068, 0
      %v1085 = vsel %vm728, %v1069, 0
      %v1088 = vsel %vm728, %v1070, 0
      %v1091 = vsel %vm728, %v1071, 0
      %v1094 = vsel %vm728, %v1072, 0
      %v1097 = vsel %vm728, %v1073, 0
      %v1100 = vsel %vm825, %v1074, 0
      %1102 = vmatprep.subr.bf16.mxu0 0
      %1103 = vmatpush1.bf16.msra.mxu0 0
      %1104 = vmatprep.subr.bf16.mxu0 0
      %1105 = vmatpush1.bf16.msra.mxu0 0
      %1106 = vmatprep.subr.bf16.mxu0 0
      %1107 = vmatpush1.bf16.msra.mxu0 0
      %1108 = vmatprep.subr.bf16.mxu0 0
      %1109 = vmatpush1.bf16.msra.mxu0 0
      %1110 = vmatprep.subr.bf16.mxu0 0
      %1111 = vmatpush1.bf16.msra.mxu0 0
      %1112 = vmatprep.subr.bf16.mxu0 0
      %1113 = vmatpush1.bf16.msra.mxu0 0
      %1114 = vmatprep.subr.bf16.mxu0 0
      %1115 = vmatpush1.bf16.msra.mxu0 0
      %1116 = vmatprep.subr.bf16.mxu0 0
      %1117 = vmatpush1.bf16.msra.mxu0 %v1100
      %1118 = vmatprep.subr.bf16.mxu0 0
      %1119 = vmatpush2.bf16.msra.mxu0 0
      %1120 = vmatprep.subr.bf16.mxu0 0
      %1121 = vmatpush2.bf16.msra.mxu0 0
      %1122 = vmatprep.subr.bf16.mxu0 0
      %1123 = vmatpush2.bf16.msra.mxu0 0
      %1124 = vmatprep.subr.bf16.mxu0 0
      %1125 = vmatpush2.bf16.msra.mxu0 0
      %1126 = vmatprep.subr.bf16.mxu0 0
      %1127 = vmatpush2.bf16.msra.mxu0 0
      %1128 = vmatprep.subr.bf16.mxu0 0
      %1129 = vmatpush2.bf16.msra.mxu0 0
      %1130 = vmatprep.subr.bf16.mxu0 0
      %1131 = vmatpush2.bf16.msra.mxu0 0
      %1132 = vmatprep.subr.bf16.mxu0 0
      %1133 = vmatpush2.bf16.msra.mxu0 0
      %1134 = vmatprep.mubr.bf16.mxu0 0
      %1135 = vmatmul.mubr.bf16.gmra.mxu0 %v1076
      %v1136 = vpop.f32.mrf.mxu0
      %v1137 = vadd.f32 0.0, %v1136
      %v1138 = vpop.f32.mrf.mxu0
      %v1139 = vpop.f32.mrf.mxu0
      %v1140 = vadd.f32 0.0, %v1139
      %v1141 = vpop.f32.mrf.mxu0
      %1142 = vmatprep.mubr.bf16.mxu0 0
      %1143 = vmatmul.mubr.bf16.gmra.mxu0 %v1079
      %v1144 = vpop.f32.mrf.mxu0
      %v1145 = vadd.f32 0.0, %v1144
      %v1146 = vpop.f32.mrf.mxu0
      %v1147 = vpop.f32.mrf.mxu0
      %v1148 = vadd.f32 0.0, %v1147
      %v1149 = vpop.f32.mrf.mxu0
      %1150 = vmatprep.mubr.bf16.mxu0 0
      %1151 = vmatmul.mubr.bf16.gmra.mxu0 %v1082
      %v1152 = vpop.f32.mrf.mxu0
      %v1153 = vadd.f32 0.0, %v1152
      %v1154 = vpop.f32.mrf.mxu0
      %v1155 = vpop.f32.mrf.mxu0
      %v1156 = vadd.f32 0.0, %v1155
      %v1157 = vpop.f32.mrf.mxu0
      %1158 = vmatprep.mubr.bf16.mxu0 0
      %1159 = vmatmul.mubr.bf16.gmra.mxu0 %v1085
      %v1160 = vpop.f32.mrf.mxu0
      %v1161 = vadd.f32 0.0, %v1160
      %v1162 = vpop.f32.mrf.mxu0
      %v1163 = vpop.f32.mrf.mxu0
      %v1164 = vadd.f32 0.0, %v1163
      %v1165 = vpop.f32.mrf.mxu0
      %1166 = vmatprep.mubr.bf16.mxu0 0
      %1167 = vmatmul.mubr.bf16.gmra.mxu0 %v1088
      %v1168 = vpop.f32.mrf.mxu0
      %v1169 = vadd.f32 0.0, %v1168
      %v1170 = vpop.f32.mrf.mxu0
      %v1171 = vpop.f32.mrf.mxu0
      %v1172 = vadd.f32 0.0, %v1171
      %v1173 = vpop.f32.mrf.mxu0
      %1174 = vmatprep.mubr.bf16.mxu0 0
      %1175 = vmatmul.mubr.bf16.gmra.mxu0 %v1091
      %v1176 = vpop.f32.mrf.mxu0
      %v1177 = vadd.f32 0.0, %v1176
      %v1178 = vpop.f32.mrf.mxu0
      %v1179 = vpop.f32.mrf.mxu0
      %v1180 = vadd.f32 0.0, %v1179
      %v1181 = vpop.f32.mrf.mxu0
      %1182 = vmatprep.mubr.bf16.mxu0 0
      %1183 = vmatmul.mubr.bf16.gmra.mxu0 %v1094
      %v1184 = vpop.f32.mrf.mxu0
      %v1185 = vadd.f32 0.0, %v1184
      %v1186 = vpop.f32.mrf.mxu0
      %v1187 = vpop.f32.mrf.mxu0
      %v1188 = vadd.f32 0.0, %v1187
      %v1189 = vpop.f32.mrf.mxu0
      %1190 = vmatprep.mubr.bf16.mxu0 0
      %1191 = vmatmul.mubr.bf16.gmra.mxu0 %v1097
      %v1192 = vpop.f32.mrf.mxu0
      %v1193 = vadd.f32 0.0, %v1192
      %v1194 = vpop.f32.mrf.mxu0
      %v1195 = vpop.f32.mrf.mxu0
      %v1196 = vadd.f32 0.0, %v1195
      %v1197 = vpop.f32.mrf.mxu0
      %1198 = vdwg.mxu0
      %v1199 = vadd.f32 %v988, %v1137
      %v1200 = vadd.f32 %v991, %v1140
      %v1201 = vadd.f32 %v996, %v1145
      %v1202 = vadd.f32 %v999, %v1148
      %v1203 = vadd.f32 %v1004, %v1153
      %v1204 = vadd.f32 %v1007, %v1156
      %v1205 = vadd.f32 %v1012, %v1161
      %v1206 = vadd.f32 %v1015, %v1164
      %v1207 = vadd.f32 %v1020, %v1169
      %v1208 = vadd.f32 %v1023, %v1172
      %v1209 = vadd.f32 %v1028, %v1177
      %v1210 = vadd.f32 %v1031, %v1180
      %v1211 = vadd.f32 %v1036, %v1185
      %v1212 = vadd.f32 %v1039, %v1188
      %v1213 = vadd.f32 %v1044, %v1193
      %v1214 = vadd.f32 %v1047, %v1196
      %v1215 = vld [vmem:[%s734] sm:$0xff]
      %v1216 = vld [vmem:[%s734 + $0x8] sm:$0xff]
      %v1217 = vld [vmem:[%s734 + $0x18] sm:$0xff]
      %v1218 = vld [vmem:[%s734 + $0x20] sm:$0xff]
      %v1219 = vld [vmem:[%s734 + $0x30] sm:$0xff]
      %v1220 = vld [vmem:[%s734 + $0x38] sm:$0xff]
      %v1221 = vld [vmem:[%s734 + $0x48] sm:$0xff]
      %v1222 = vld [vmem:[%s734 + $0x50] sm:$0xff]
      %v1223 = vld [vmem:[%s734 + $0x60] sm:$0xff]
      %v1224 = vld [vmem:[%s734 + $0x68] sm:$0xff]
      %v1225 = vld [vmem:[%s734 + $0x78] sm:$0xff]
      %v1226 = vld [vmem:[%s734 + $0x80] sm:$0xff]
      %v1227 = vld [vmem:[%s734 + $0x90] sm:$0xff]
      %v1228 = vld [vmem:[%s734 + $0x98] sm:$0xff]
      %v1229 = vld [vmem:[%s734 + $0xa8] sm:$0xff]
      %v1230 = vld [vmem:[%s734 + $0xb0] sm:$0xff]
      %v1231 = vpack.c.bf16 %v1216, %v1215
      %v1232 = vpack.c.bf16 %v1218, %v1217
      %v1233 = vpack.c.bf16 %v1220, %v1219
      %v1234 = vpack.c.bf16 %v1222, %v1221
      %v1235 = vpack.c.bf16 %v1224, %v1223
      %v1236 = vpack.c.bf16 %v1226, %v1225
      %v1237 = vpack.c.bf16 %v1228, %v1227
      %v1238 = vpack.c.bf16 %v1230, %v1229
      %s1239 = scalar_lea.vmem %s5, 12
      %v1240 = vld [vmem:[%s1239] sm:$0xf]
      %v1242 = vsel %vm728, %v1231, 0
      %v1245 = vsel %vm728, %v1232, 0
      %v1248 = vsel %vm728, %v1233, 0
      %v1251 = vsel %vm728, %v1234, 0
      %v1254 = vsel %vm728, %v1235, 0
      %v1257 = vsel %vm728, %v1236, 0
      %v1260 = vsel %vm728, %v1237, 0
      %v1263 = vsel %vm728, %v1238, 0
      %v1266 = vsel %vm825, %v1240, 0
      %1268 = vmatprep.subr.bf16.mxu0 0
      %1269 = vmatpush1.bf16.msra.mxu0 0
      %1270 = vmatprep.subr.bf16.mxu0 0
      %1271 = vmatpush1.bf16.msra.mxu0 0
      %1272 = vmatprep.subr.bf16.mxu0 0
      %1273 = vmatpush1.bf16.msra.mxu0 0
      %1274 = vmatprep.subr.bf16.mxu0 0
      %1275 = vmatpush1.bf16.msra.mxu0 0
      %1276 = vmatprep.subr.bf16.mxu0 0
      %1277 = vmatpush1.bf16.msra.mxu0 0
      %1278 = vmatprep.subr.bf16.mxu0 0
      %1279 = vmatpush1.bf16.msra.mxu0 0
      %1280 = vmatprep.subr.bf16.mxu0 0
      %1281 = vmatpush1.bf16.msra.mxu0 0
      %1282 = vmatprep.subr.bf16.mxu0 0
      %1283 = vmatpush1.bf16.msra.mxu0 %v1266
      %1284 = vmatprep.subr.bf16.mxu0 0
      %1285 = vmatpush2.bf16.msra.mxu0 0
      %1286 = vmatprep.subr.bf16.mxu0 0
      %1287 = vmatpush2.bf16.msra.mxu0 0
      %1288 = vmatprep.subr.bf16.mxu0 0
      %1289 = vmatpush2.bf16.msra.mxu0 0
      %1290 = vmatprep.subr.bf16.mxu0 0
      %1291 = vmatpush2.bf16.msra.mxu0 0
      %1292 = vmatprep.subr.bf16.mxu0 0
      %1293 = vmatpush2.bf16.msra.mxu0 0
      %1294 = vmatprep.subr.bf16.mxu0 0
      %1295 = vmatpush2.bf16.msra.mxu0 0
      %1296 = vmatprep.subr.bf16.mxu0 0
      %1297 = vmatpush2.bf16.msra.mxu0 0
      %1298 = vmatprep.subr.bf16.mxu0 0
      %1299 = vmatpush2.bf16.msra.mxu0 0
      %1300 = vmatprep.mubr.bf16.mxu0 0
      %1301 = vmatmul.mubr.bf16.gmra.mxu0 %v1242
      %v1302 = vpop.f32.mrf.mxu0
      %v1303 = vadd.f32 0.0, %v1302
      %v1304 = vpop.f32.mrf.mxu0
      %v1305 = vpop.f32.mrf.mxu0
      %v1306 = vadd.f32 0.0, %v1305
      %v1307 = vpop.f32.mrf.mxu0
      %1308 = vmatprep.mubr.bf16.mxu0 0
      %1309 = vmatmul.mubr.bf16.gmra.mxu0 %v1245
      %v1310 = vpop.f32.mrf.mxu0
      %v1311 = vadd.f32 0.0, %v1310
      %v1312 = vpop.f32.mrf.mxu0
      %v1313 = vpop.f32.mrf.mxu0
      %v1314 = vadd.f32 0.0, %v1313
      %v1315 = vpop.f32.mrf.mxu0
      %1316 = vmatprep.mubr.bf16.mxu0 0
      %1317 = vmatmul.mubr.bf16.gmra.mxu0 %v1248
      %v1318 = vpop.f32.mrf.mxu0
      %v1319 = vadd.f32 0.0, %v1318
      %v1320 = vpop.f32.mrf.mxu0
      %v1321 = vpop.f32.mrf.mxu0
      %v1322 = vadd.f32 0.0, %v1321
      %v1323 = vpop.f32.mrf.mxu0
      %1324 = vmatprep.mubr.bf16.mxu0 0
      %1325 = vmatmul.mubr.bf16.gmra.mxu0 %v1251
      %v1326 = vpop.f32.mrf.mxu0
      %v1327 = vadd.f32 0.0, %v1326
      %v1328 = vpop.f32.mrf.mxu0
      %v1329 = vpop.f32.mrf.mxu0
      %v1330 = vadd.f32 0.0, %v1329
      %v1331 = vpop.f32.mrf.mxu0
      %1332 = vmatprep.mubr.bf16.mxu0 0
      %1333 = vmatmul.mubr.bf16.gmra.mxu0 %v1254
      %v1334 = vpop.f32.mrf.mxu0
      %v1335 = vadd.f32 0.0, %v1334
      %v1336 = vpop.f32.mrf.mxu0
      %v1337 = vpop.f32.mrf.mxu0
      %v1338 = vadd.f32 0.0, %v1337
      %v1339 = vpop.f32.mrf.mxu0
      %1340 = vmatprep.mubr.bf16.mxu0 0
      %1341 = vmatmul.mubr.bf16.gmra.mxu0 %v1257
      %v1342 = vpop.f32.mrf.mxu0
      %v1343 = vadd.f32 0.0, %v1342
      %v1344 = vpop.f32.mrf.mxu0
      %v1345 = vpop.f32.mrf.mxu0
      %v1346 = vadd.f32 0.0, %v1345
      %v1347 = vpop.f32.mrf.mxu0
      %1348 = vmatprep.mubr.bf16.mxu0 0
      %1349 = vmatmul.mubr.bf16.gmra.mxu0 %v1260
      %v1350 = vpop.f32.mrf.mxu0
      %v1351 = vadd.f32 0.0, %v1350
      %v1352 = vpop.f32.mrf.mxu0
      %v1353 = vpop.f32.mrf.mxu0
      %v1354 = vadd.f32 0.0, %v1353
      %v1355 = vpop.f32.mrf.mxu0
      %1356 = vmatprep.mubr.bf16.mxu0 0
      %1357 = vmatmul.mubr.bf16.gmra.mxu0 %v1263
      %v1358 = vpop.f32.mrf.mxu0
      %v1359 = vadd.f32 0.0, %v1358
      %v1360 = vpop.f32.mrf.mxu0
      %v1361 = vpop.f32.mrf.mxu0
      %v1362 = vadd.f32 0.0, %v1361
      %v1363 = vpop.f32.mrf.mxu0
      %1364 = vdwg.mxu0
      %v1365 = vadd.f32 %v1199, %v1303
      %v1366 = vadd.f32 %v1200, %v1306
      %v1367 = vadd.f32 %v1201, %v1311
      %v1368 = vadd.f32 %v1202, %v1314
      %v1369 = vadd.f32 %v1203, %v1319
      %v1370 = vadd.f32 %v1204, %v1322
      %v1371 = vadd.f32 %v1205, %v1327
      %v1372 = vadd.f32 %v1206, %v1330
      %v1373 = vadd.f32 %v1207, %v1335
      %v1374 = vadd.f32 %v1208, %v1338
      %v1375 = vadd.f32 %v1209, %v1343
      %v1376 = vadd.f32 %v1210, %v1346
      %v1377 = vadd.f32 %v1211, %v1351
      %v1378 = vadd.f32 %v1212, %v1354
      %v1379 = vadd.f32 %v1213, %v1359
      %v1380 = vadd.f32 %v1214, %v1362
      %v1381 = vld [vmem:[%s734 + $0x1] sm:$0xff]
      %v1382 = vld [vmem:[%s734 + $0x9] sm:$0xff]
      %v1383 = vld [vmem:[%s734 + $0x19] sm:$0xff]
      %v1384 = vld [vmem:[%s734 + $0x21] sm:$0xff]
      %v1385 = vld [vmem:[%s734 + $0x31] sm:$0xff]
      %v1386 = vld [vmem:[%s734 + $0x39] sm:$0xff]
      %v1387 = vld [vmem:[%s734 + $0x49] sm:$0xff]
      %v1388 = vld [vmem:[%s734 + $0x51] sm:$0xff]
      %v1389 = vld [vmem:[%s734 + $0x61] sm:$0xff]
      %v1390 = vld [vmem:[%s734 + $0x69] sm:$0xff]
      %v1391 = vld [vmem:[%s734 + $0x79] sm:$0xff]
      %v1392 = vld [vmem:[%s734 + $0x81] sm:$0xff]
      %v1393 = vld [vmem:[%s734 + $0x91] sm:$0xff]
      %v1394 = vld [vmem:[%s734 + $0x99] sm:$0xff]
      %v1395 = vld [vmem:[%s734 + $0xa9] sm:$0xff]
      %v1396 = vld [vmem:[%s734 + $0xb1] sm:$0xff]
      %v1397 = vpack.c.bf16 %v1382, %v1381
      %v1398 = vpack.c.bf16 %v1384, %v1383
      %v1399 = vpack.c.bf16 %v1386, %v1385
      %v1400 = vpack.c.bf16 %v1388, %v1387
      %v1401 = vpack.c.bf16 %v1390, %v1389
      %v1402 = vpack.c.bf16 %v1392, %v1391
      %v1403 = vpack.c.bf16 %v1394, %v1393
      %v1404 = vpack.c.bf16 %v1396, %v1395
      %v1405 = vld [vmem:[%s1239 + $0x4] sm:$0xf]
      %v1407 = vsel %vm728, %v1397, 0
      %v1410 = vsel %vm728, %v1398, 0
      %v1413 = vsel %vm728, %v1399, 0
      %v1416 = vsel %vm728, %v1400, 0
      %v1419 = vsel %vm728, %v1401, 0
      %v1422 = vsel %vm728, %v1402, 0
      %v1425 = vsel %vm728, %v1403, 0
      %v1428 = vsel %vm728, %v1404, 0
      %v1431 = vsel %vm825, %v1405, 0
      %1433 = vmatprep.subr.bf16.mxu0 0
      %1434 = vmatpush1.bf16.msra.mxu0 0
      %1435 = vmatprep.subr.bf16.mxu0 0
      %1436 = vmatpush1.bf16.msra.mxu0 0
      %1437 = vmatprep.subr.bf16.mxu0 0
      %1438 = vmatpush1.bf16.msra.mxu0 0
      %1439 = vmatprep.subr.bf16.mxu0 0
      %1440 = vmatpush1.bf16.msra.mxu0 0
      %1441 = vmatprep.subr.bf16.mxu0 0
      %1442 = vmatpush1.bf16.msra.mxu0 0
      %1443 = vmatprep.subr.bf16.mxu0 0
      %1444 = vmatpush1.bf16.msra.mxu0 0
      %1445 = vmatprep.subr.bf16.mxu0 0
      %1446 = vmatpush1.bf16.msra.mxu0 0
      %1447 = vmatprep.subr.bf16.mxu0 0
      %1448 = vmatpush1.bf16.msra.mxu0 %v1431
      %1449 = vmatprep.subr.bf16.mxu0 0
      %1450 = vmatpush2.bf16.msra.mxu0 0
      %1451 = vmatprep.subr.bf16.mxu0 0
      %1452 = vmatpush2.bf16.msra.mxu0 0
      %1453 = vmatprep.subr.bf16.mxu0 0
      %1454 = vmatpush2.bf16.msra.mxu0 0
      %1455 = vmatprep.subr.bf16.mxu0 0
      %1456 = vmatpush2.bf16.msra.mxu0 0
      %1457 = vmatprep.subr.bf16.mxu0 0
      %1458 = vmatpush2.bf16.msra.mxu0 0
      %1459 = vmatprep.subr.bf16.mxu0 0
      %1460 = vmatpush2.bf16.msra.mxu0 0
      %1461 = vmatprep.subr.bf16.mxu0 0
      %1462 = vmatpush2.bf16.msra.mxu0 0
      %1463 = vmatprep.subr.bf16.mxu0 0
      %1464 = vmatpush2.bf16.msra.mxu0 0
      %1465 = vmatprep.mubr.bf16.mxu0 0
      %1466 = vmatmul.mubr.bf16.gmra.mxu0 %v1407
      %v1467 = vpop.f32.mrf.mxu0
      %v1468 = vadd.f32 0.0, %v1467
      %v1469 = vpop.f32.mrf.mxu0
      %v1470 = vpop.f32.mrf.mxu0
      %v1471 = vadd.f32 0.0, %v1470
      %v1472 = vpop.f32.mrf.mxu0
      %1473 = vmatprep.mubr.bf16.mxu0 0
      %1474 = vmatmul.mubr.bf16.gmra.mxu0 %v1410
      %v1475 = vpop.f32.mrf.mxu0
      %v1476 = vadd.f32 0.0, %v1475
      %v1477 = vpop.f32.mrf.mxu0
      %v1478 = vpop.f32.mrf.mxu0
      %v1479 = vadd.f32 0.0, %v1478
      %v1480 = vpop.f32.mrf.mxu0
      %1481 = vmatprep.mubr.bf16.mxu0 0
      %1482 = vmatmul.mubr.bf16.gmra.mxu0 %v1413
      %v1483 = vpop.f32.mrf.mxu0
      %v1484 = vadd.f32 0.0, %v1483
      %v1485 = vpop.f32.mrf.mxu0
      %v1486 = vpop.f32.mrf.mxu0
      %v1487 = vadd.f32 0.0, %v1486
      %v1488 = vpop.f32.mrf.mxu0
      %1489 = vmatprep.mubr.bf16.mxu0 0
      %1490 = vmatmul.mubr.bf16.gmra.mxu0 %v1416
      %v1491 = vpop.f32.mrf.mxu0
      %v1492 = vadd.f32 0.0, %v1491
      %v1493 = vpop.f32.mrf.mxu0
      %v1494 = vpop.f32.mrf.mxu0
      %v1495 = vadd.f32 0.0, %v1494
      %v1496 = vpop.f32.mrf.mxu0
      %1497 = vmatprep.mubr.bf16.mxu0 0
      %1498 = vmatmul.mubr.bf16.gmra.mxu0 %v1419
      %v1499 = vpop.f32.mrf.mxu0
      %v1500 = vadd.f32 0.0, %v1499
      %v1501 = vpop.f32.mrf.mxu0
      %v1502 = vpop.f32.mrf.mxu0
      %v1503 = vadd.f32 0.0, %v1502
      %v1504 = vpop.f32.mrf.mxu0
      %1505 = vmatprep.mubr.bf16.mxu0 0
      %1506 = vmatmul.mubr.bf16.gmra.mxu0 %v1422
      %v1507 = vpop.f32.mrf.mxu0
      %v1508 = vadd.f32 0.0, %v1507
      %v1509 = vpop.f32.mrf.mxu0
      %v1510 = vpop.f32.mrf.mxu0
      %v1511 = vadd.f32 0.0, %v1510
      %v1512 = vpop.f32.mrf.mxu0
      %1513 = vmatprep.mubr.bf16.mxu0 0
      %1514 = vmatmul.mubr.bf16.gmra.mxu0 %v1425
      %v1515 = vpop.f32.mrf.mxu0
      %v1516 = vadd.f32 0.0, %v1515
      %v1517 = vpop.f32.mrf.mxu0
      %v1518 = vpop.f32.mrf.mxu0
      %v1519 = vadd.f32 0.0, %v1518
      %v1520 = vpop.f32.mrf.mxu0
      %1521 = vmatprep.mubr.bf16.mxu0 0
      %1522 = vmatmul.mubr.bf16.gmra.mxu0 %v1428
      %v1523 = vpop.f32.mrf.mxu0
      %v1524 = vadd.f32 0.0, %v1523
      %v1525 = vpop.f32.mrf.mxu0
      %v1526 = vpop.f32.mrf.mxu0
      %v1527 = vadd.f32 0.0, %v1526
      %v1528 = vpop.f32.mrf.mxu0
      %1529 = vdwg.mxu0
      %v1530 = vadd.f32 %v1365, %v1468
      %v1531 = vadd.f32 %v1366, %v1471
      %v1532 = vadd.f32 %v1367, %v1476
      %v1533 = vadd.f32 %v1368, %v1479
      %v1534 = vadd.f32 %v1369, %v1484
      %v1535 = vadd.f32 %v1370, %v1487
      %v1536 = vadd.f32 %v1371, %v1492
      %v1537 = vadd.f32 %v1372, %v1495
      %v1538 = vadd.f32 %v1373, %v1500
      %v1539 = vadd.f32 %v1374, %v1503
      %v1540 = vadd.f32 %v1375, %v1508
      %v1541 = vadd.f32 %v1376, %v1511
      %v1542 = vadd.f32 %v1377, %v1516
      %v1543 = vadd.f32 %v1378, %v1519
      %v1544 = vadd.f32 %v1379, %v1524
      %v1545 = vadd.f32 %v1380, %v1527
      %v1546 = vld [vmem:[%s734 + $0x2] sm:$0xff]
      %v1547 = vld [vmem:[%s734 + $0xa] sm:$0xff]
      %v1548 = vld [vmem:[%s734 + $0x1a] sm:$0xff]
      %v1549 = vld [vmem:[%s734 + $0x22] sm:$0xff]
      %v1550 = vld [vmem:[%s734 + $0x32] sm:$0xff]
      %v1551 = vld [vmem:[%s734 + $0x3a] sm:$0xff]
      %v1552 = vld [vmem:[%s734 + $0x4a] sm:$0xff]
      %v1553 = vld [vmem:[%s734 + $0x52] sm:$0xff]
      %v1554 = vld [vmem:[%s734 + $0x62] sm:$0xff]
      %v1555 = vld [vmem:[%s734 + $0x6a] sm:$0xff]
      %v1556 = vld [vmem:[%s734 + $0x7a] sm:$0xff]
      %v1557 = vld [vmem:[%s734 + $0x82] sm:$0xff]
      %v1558 = vld [vmem:[%s734 + $0x92] sm:$0xff]
      %v1559 = vld [vmem:[%s734 + $0x9a] sm:$0xff]
      %v1560 = vld [vmem:[%s734 + $0xaa] sm:$0xff]
      %v1561 = vld [vmem:[%s734 + $0xb2] sm:$0xff]
      %v1562 = vpack.c.bf16 %v1547, %v1546
      %v1563 = vpack.c.bf16 %v1549, %v1548
      %v1564 = vpack.c.bf16 %v1551, %v1550
      %v1565 = vpack.c.bf16 %v1553, %v1552
      %v1566 = vpack.c.bf16 %v1555, %v1554
      %v1567 = vpack.c.bf16 %v1557, %v1556
      %v1568 = vpack.c.bf16 %v1559, %v1558
      %v1569 = vpack.c.bf16 %v1561, %v1560
      %v1570 = vld [vmem:[%s1239 + $0x8] sm:$0xf]
      %v1572 = vsel %vm728, %v1562, 0
      %v1575 = vsel %vm728, %v1563, 0
      %v1578 = vsel %vm728, %v1564, 0
      %v1581 = vsel %vm728, %v1565, 0
      %v1584 = vsel %vm728, %v1566, 0
      %v1587 = vsel %vm728, %v1567, 0
      %v1590 = vsel %vm728, %v1568, 0
      %v1593 = vsel %vm728, %v1569, 0
      %v1596 = vsel %vm825, %v1570, 0
      %1598 = vmatprep.subr.bf16.mxu0 0
      %1599 = vmatpush1.bf16.msra.mxu0 0
      %1600 = vmatprep.subr.bf16.mxu0 0
      %1601 = vmatpush1.bf16.msra.mxu0 0
      %1602 = vmatprep.subr.bf16.mxu0 0
      %1603 = vmatpush1.bf16.msra.mxu0 0
      %1604 = vmatprep.subr.bf16.mxu0 0
      %1605 = vmatpush1.bf16.msra.mxu0 0
      %1606 = vmatprep.subr.bf16.mxu0 0
      %1607 = vmatpush1.bf16.msra.mxu0 0
      %1608 = vmatprep.subr.bf16.mxu0 0
      %1609 = vmatpush1.bf16.msra.mxu0 0
      %1610 = vmatprep.subr.bf16.mxu0 0
      %1611 = vmatpush1.bf16.msra.mxu0 0
      %1612 = vmatprep.subr.bf16.mxu0 0
      %1613 = vmatpush1.bf16.msra.mxu0 %v1596
      %1614 = vmatprep.subr.bf16.mxu0 0
      %1615 = vmatpush2.bf16.msra.mxu0 0
      %1616 = vmatprep.subr.bf16.mxu0 0
      %1617 = vmatpush2.bf16.msra.mxu0 0
      %1618 = vmatprep.subr.bf16.mxu0 0
      %1619 = vmatpush2.bf16.msra.mxu0 0
      %1620 = vmatprep.subr.bf16.mxu0 0
      %1621 = vmatpush2.bf16.msra.mxu0 0
      %1622 = vmatprep.subr.bf16.mxu0 0
      %1623 = vmatpush2.bf16.msra.mxu0 0
      %1624 = vmatprep.subr.bf16.mxu0 0
      %1625 = vmatpush2.bf16.msra.mxu0 0
      %1626 = vmatprep.subr.bf16.mxu0 0
      %1627 = vmatpush2.bf16.msra.mxu0 0
      %1628 = vmatprep.subr.bf16.mxu0 0
      %1629 = vmatpush2.bf16.msra.mxu0 0
      %1630 = vmatprep.mubr.bf16.mxu0 0
      %1631 = vmatmul.mubr.bf16.gmra.mxu0 %v1572
      %v1632 = vpop.f32.mrf.mxu0
      %v1633 = vadd.f32 0.0, %v1632
      %v1634 = vpop.f32.mrf.mxu0
      %v1635 = vpop.f32.mrf.mxu0
      %v1636 = vadd.f32 0.0, %v1635
      %v1637 = vpop.f32.mrf.mxu0
      %1638 = vmatprep.mubr.bf16.mxu0 0
      %1639 = vmatmul.mubr.bf16.gmra.mxu0 %v1575
      %v1640 = vpop.f32.mrf.mxu0
      %v1641 = vadd.f32 0.0, %v1640
      %v1642 = vpop.f32.mrf.mxu0
      %v1643 = vpop.f32.mrf.mxu0
      %v1644 = vadd.f32 0.0, %v1643
      %v1645 = vpop.f32.mrf.mxu0
      %1646 = vmatprep.mubr.bf16.mxu0 0
      %1647 = vmatmul.mubr.bf16.gmra.mxu0 %v1578
      %v1648 = vpop.f32.mrf.mxu0
      %v1649 = vadd.f32 0.0, %v1648
      %v1650 = vpop.f32.mrf.mxu0
      %v1651 = vpop.f32.mrf.mxu0
      %v1652 = vadd.f32 0.0, %v1651
      %v1653 = vpop.f32.mrf.mxu0
      %1654 = vmatprep.mubr.bf16.mxu0 0
      %1655 = vmatmul.mubr.bf16.gmra.mxu0 %v1581
      %v1656 = vpop.f32.mrf.mxu0
      %v1657 = vadd.f32 0.0, %v1656
      %v1658 = vpop.f32.mrf.mxu0
      %v1659 = vpop.f32.mrf.mxu0
      %v1660 = vadd.f32 0.0, %v1659
      %v1661 = vpop.f32.mrf.mxu0
      %1662 = vmatprep.mubr.bf16.mxu0 0
      %1663 = vmatmul.mubr.bf16.gmra.mxu0 %v1584
      %v1664 = vpop.f32.mrf.mxu0
      %v1665 = vadd.f32 0.0, %v1664
      %v1666 = vpop.f32.mrf.mxu0
      %v1667 = vpop.f32.mrf.mxu0
      %v1668 = vadd.f32 0.0, %v1667
      %v1669 = vpop.f32.mrf.mxu0
      %1670 = vmatprep.mubr.bf16.mxu0 0
      %1671 = vmatmul.mubr.bf16.gmra.mxu0 %v1587
      %v1672 = vpop.f32.mrf.mxu0
      %v1673 = vadd.f32 0.0, %v1672
      %v1674 = vpop.f32.mrf.mxu0
      %v1675 = vpop.f32.mrf.mxu0
      %v1676 = vadd.f32 0.0, %v1675
      %v1677 = vpop.f32.mrf.mxu0
      %1678 = vmatprep.mubr.bf16.mxu0 0
      %1679 = vmatmul.mubr.bf16.gmra.mxu0 %v1590
      %v1680 = vpop.f32.mrf.mxu0
      %v1681 = vadd.f32 0.0, %v1680
      %v1682 = vpop.f32.mrf.mxu0
      %v1683 = vpop.f32.mrf.mxu0
      %v1684 = vadd.f32 0.0, %v1683
      %v1685 = vpop.f32.mrf.mxu0
      %1686 = vmatprep.mubr.bf16.mxu0 0
      %1687 = vmatmul.mubr.bf16.gmra.mxu0 %v1593
      %v1688 = vpop.f32.mrf.mxu0
      %v1689 = vadd.f32 0.0, %v1688
      %v1690 = vpop.f32.mrf.mxu0
      %v1691 = vpop.f32.mrf.mxu0
      %v1692 = vadd.f32 0.0, %v1691
      %v1693 = vpop.f32.mrf.mxu0
      %1694 = vdwg.mxu0
      %v1695 = vadd.f32 %v1530, %v1633
      %v1696 = vadd.f32 %v1531, %v1636
      %v1697 = vadd.f32 %v1532, %v1641
      %v1698 = vadd.f32 %v1533, %v1644
      %v1699 = vadd.f32 %v1534, %v1649
      %v1700 = vadd.f32 %v1535, %v1652
      %v1701 = vadd.f32 %v1536, %v1657
      %v1702 = vadd.f32 %v1537, %v1660
      %v1703 = vadd.f32 %v1538, %v1665
      %v1704 = vadd.f32 %v1539, %v1668
      %v1705 = vadd.f32 %v1540, %v1673
      %v1706 = vadd.f32 %v1541, %v1676
      %v1707 = vadd.f32 %v1542, %v1681
      %v1708 = vadd.f32 %v1543, %v1684
      %v1709 = vadd.f32 %v1544, %v1689
      %v1710 = vadd.f32 %v1545, %v1692
      %s1711 = scalar_lea.vmem [#allocation2], 48
      %v1712 = vld [vmem:[%s1711] sm:$0xff]
      %v1713 = vld [vmem:[%s1711 + $0x8] sm:$0xff]
      %v1714 = vld [vmem:[%s1711 + $0x18] sm:$0xff]
      %v1715 = vld [vmem:[%s1711 + $0x20] sm:$0xff]
      %v1716 = vld [vmem:[%s1711 + $0x30] sm:$0xff]
      %v1717 = vld [vmem:[%s1711 + $0x38] sm:$0xff]
      %v1718 = vld [vmem:[%s1711 + $0x48] sm:$0xff]
      %v1719 = vld [vmem:[%s1711 + $0x50] sm:$0xff]
      %v1720 = vld [vmem:[%s1711 + $0x60] sm:$0xff]
      %v1721 = vld [vmem:[%s1711 + $0x68] sm:$0xff]
      %v1722 = vld [vmem:[%s1711 + $0x78] sm:$0xff]
      %v1723 = vld [vmem:[%s1711 + $0x80] sm:$0xff]
      %v1724 = vld [vmem:[%s1711 + $0x90] sm:$0xff]
      %v1725 = vld [vmem:[%s1711 + $0x98] sm:$0xff]
      %v1726 = vld [vmem:[%s1711 + $0xa8] sm:$0xff]
      %v1727 = vld [vmem:[%s1711 + $0xb0] sm:$0xff]
      %v1728 = vpack.c.bf16 %v1713, %v1712
      %v1729 = vpack.c.bf16 %v1715, %v1714
      %v1730 = vpack.c.bf16 %v1717, %v1716
      %v1731 = vpack.c.bf16 %v1719, %v1718
      %v1732 = vpack.c.bf16 %v1721, %v1720
      %v1733 = vpack.c.bf16 %v1723, %v1722
      %v1734 = vpack.c.bf16 %v1725, %v1724
      %v1735 = vpack.c.bf16 %v1727, %v1726
      %s1736 = scalar_lea.vmem %s5, 24
      %v1737 = vld [vmem:[%s1736] sm:$0xf]
      %v1739 = vsel %vm728, %v1728, 0
      %v1742 = vsel %vm728, %v1729, 0
      %v1745 = vsel %vm728, %v1730, 0
      %v1748 = vsel %vm728, %v1731, 0
      %v1751 = vsel %vm728, %v1732, 0
      %v1754 = vsel %vm728, %v1733, 0
      %v1757 = vsel %vm728, %v1734, 0
      %v1760 = vsel %vm728, %v1735, 0
      %v1763 = vsel %vm825, %v1737, 0
      %1765 = vmatprep.subr.bf16.mxu0 0
      %1766 = vmatpush1.bf16.msra.mxu0 0
      %1767 = vmatprep.subr.bf16.mxu0 0
      %1768 = vmatpush1.bf16.msra.mxu0 0
      %1769 = vmatprep.subr.bf16.mxu0 0
      %1770 = vmatpush1.bf16.msra.mxu0 0
      %1771 = vmatprep.subr.bf16.mxu0 0
      %1772 = vmatpush1.bf16.msra.mxu0 0
      %1773 = vmatprep.subr.bf16.mxu0 0
      %1774 = vmatpush1.bf16.msra.mxu0 0
      %1775 = vmatprep.subr.bf16.mxu0 0
      %1776 = vmatpush1.bf16.msra.mxu0 0
      %1777 = vmatprep.subr.bf16.mxu0 0
      %1778 = vmatpush1.bf16.msra.mxu0 0
      %1779 = vmatprep.subr.bf16.mxu0 0
      %1780 = vmatpush1.bf16.msra.mxu0 %v1763
      %1781 = vmatprep.subr.bf16.mxu0 0
      %1782 = vmatpush2.bf16.msra.mxu0 0
      %1783 = vmatprep.subr.bf16.mxu0 0
      %1784 = vmatpush2.bf16.msra.mxu0 0
      %1785 = vmatprep.subr.bf16.mxu0 0
      %1786 = vmatpush2.bf16.msra.mxu0 0
      %1787 = vmatprep.subr.bf16.mxu0 0
      %1788 = vmatpush2.bf16.msra.mxu0 0
      %1789 = vmatprep.subr.bf16.mxu0 0
      %1790 = vmatpush2.bf16.msra.mxu0 0
      %1791 = vmatprep.subr.bf16.mxu0 0
      %1792 = vmatpush2.bf16.msra.mxu0 0
      %1793 = vmatprep.subr.bf16.mxu0 0
      %1794 = vmatpush2.bf16.msra.mxu0 0
      %1795 = vmatprep.subr.bf16.mxu0 0
      %1796 = vmatpush2.bf16.msra.mxu0 0
      %1797 = vmatprep.mubr.bf16.mxu0 0
      %1798 = vmatmul.mubr.bf16.gmra.mxu0 %v1739
      %v1799 = vpop.f32.mrf.mxu0
      %v1800 = vadd.f32 0.0, %v1799
      %v1801 = vpop.f32.mrf.mxu0
      %v1802 = vpop.f32.mrf.mxu0
      %v1803 = vadd.f32 0.0, %v1802
      %v1804 = vpop.f32.mrf.mxu0
      %1805 = vmatprep.mubr.bf16.mxu0 0
      %1806 = vmatmul.mubr.bf16.gmra.mxu0 %v1742
      %v1807 = vpop.f32.mrf.mxu0
      %v1808 = vadd.f32 0.0, %v1807
      %v1809 = vpop.f32.mrf.mxu0
      %v1810 = vpop.f32.mrf.mxu0
      %v1811 = vadd.f32 0.0, %v1810
      %v1812 = vpop.f32.mrf.mxu0
      %1813 = vmatprep.mubr.bf16.mxu0 0
      %1814 = vmatmul.mubr.bf16.gmra.mxu0 %v1745
      %v1815 = vpop.f32.mrf.mxu0
      %v1816 = vadd.f32 0.0, %v1815
      %v1817 = vpop.f32.mrf.mxu0
      %v1818 = vpop.f32.mrf.mxu0
      %v1819 = vadd.f32 0.0, %v1818
      %v1820 = vpop.f32.mrf.mxu0
      %1821 = vmatprep.mubr.bf16.mxu0 0
      %1822 = vmatmul.mubr.bf16.gmra.mxu0 %v1748
      %v1823 = vpop.f32.mrf.mxu0
      %v1824 = vadd.f32 0.0, %v1823
      %v1825 = vpop.f32.mrf.mxu0
      %v1826 = vpop.f32.mrf.mxu0
      %v1827 = vadd.f32 0.0, %v1826
      %v1828 = vpop.f32.mrf.mxu0
      %1829 = vmatprep.mubr.bf16.mxu0 0
      %1830 = vmatmul.mubr.bf16.gmra.mxu0 %v1751
      %v1831 = vpop.f32.mrf.mxu0
      %v1832 = vadd.f32 0.0, %v1831
      %v1833 = vpop.f32.mrf.mxu0
      %v1834 = vpop.f32.mrf.mxu0
      %v1835 = vadd.f32 0.0, %v1834
      %v1836 = vpop.f32.mrf.mxu0
      %1837 = vmatprep.mubr.bf16.mxu0 0
      %1838 = vmatmul.mubr.bf16.gmra.mxu0 %v1754
      %v1839 = vpop.f32.mrf.mxu0
      %v1840 = vadd.f32 0.0, %v1839
      %v1841 = vpop.f32.mrf.mxu0
      %v1842 = vpop.f32.mrf.mxu0
      %v1843 = vadd.f32 0.0, %v1842
      %v1844 = vpop.f32.mrf.mxu0
      %1845 = vmatprep.mubr.bf16.mxu0 0
      %1846 = vmatmul.mubr.bf16.gmra.mxu0 %v1757
      %v1847 = vpop.f32.mrf.mxu0
      %v1848 = vadd.f32 0.0, %v1847
      %v1849 = vpop.f32.mrf.mxu0
      %v1850 = vpop.f32.mrf.mxu0
      %v1851 = vadd.f32 0.0, %v1850
      %v1852 = vpop.f32.mrf.mxu0
      %1853 = vmatprep.mubr.bf16.mxu0 0
      %1854 = vmatmul.mubr.bf16.gmra.mxu0 %v1760
      %v1855 = vpop.f32.mrf.mxu0
      %v1856 = vadd.f32 0.0, %v1855
      %v1857 = vpop.f32.mrf.mxu0
      %v1858 = vpop.f32.mrf.mxu0
      %v1859 = vadd.f32 0.0, %v1858
      %v1860 = vpop.f32.mrf.mxu0
      %1861 = vdwg.mxu0
      %v1862 = vadd.f32 %v1695, %v1800
      %v1863 = vadd.f32 %v1696, %v1803
      %v1864 = vadd.f32 %v1697, %v1808
      %v1865 = vadd.f32 %v1698, %v1811
      %v1866 = vadd.f32 %v1699, %v1816
      %v1867 = vadd.f32 %v1700, %v1819
      %v1868 = vadd.f32 %v1701, %v1824
      %v1869 = vadd.f32 %v1702, %v1827
      %v1870 = vadd.f32 %v1703, %v1832
      %v1871 = vadd.f32 %v1704, %v1835
      %v1872 = vadd.f32 %v1705, %v1840
      %v1873 = vadd.f32 %v1706, %v1843
      %v1874 = vadd.f32 %v1707, %v1848
      %v1875 = vadd.f32 %v1708, %v1851
      %v1876 = vadd.f32 %v1709, %v1856
      %v1877 = vadd.f32 %v1710, %v1859
      %v1878 = vld [vmem:[%s1711 + $0x1] sm:$0xff]
      %v1879 = vld [vmem:[%s1711 + $0x9] sm:$0xff]
      %v1880 = vld [vmem:[%s1711 + $0x19] sm:$0xff]
      %v1881 = vld [vmem:[%s1711 + $0x21] sm:$0xff]
      %v1882 = vld [vmem:[%s1711 + $0x31] sm:$0xff]
      %v1883 = vld [vmem:[%s1711 + $0x39] sm:$0xff]
      %v1884 = vld [vmem:[%s1711 + $0x49] sm:$0xff]
      %v1885 = vld [vmem:[%s1711 + $0x51] sm:$0xff]
      %v1886 = vld [vmem:[%s1711 + $0x61] sm:$0xff]
      %v1887 = vld [vmem:[%s1711 + $0x69] sm:$0xff]
      %v1888 = vld [vmem:[%s1711 + $0x79] sm:$0xff]
      %v1889 = vld [vmem:[%s1711 + $0x81] sm:$0xff]
      %v1890 = vld [vmem:[%s1711 + $0x91] sm:$0xff]
      %v1891 = vld [vmem:[%s1711 + $0x99] sm:$0xff]
      %v1892 = vld [vmem:[%s1711 + $0xa9] sm:$0xff]
      %v1893 = vld [vmem:[%s1711 + $0xb1] sm:$0xff]
      %v1894 = vpack.c.bf16 %v1879, %v1878
      %v1895 = vpack.c.bf16 %v1881, %v1880
      %v1896 = vpack.c.bf16 %v1883, %v1882
      %v1897 = vpack.c.bf16 %v1885, %v1884
      %v1898 = vpack.c.bf16 %v1887, %v1886
      %v1899 = vpack.c.bf16 %v1889, %v1888
      %v1900 = vpack.c.bf16 %v1891, %v1890
      %v1901 = vpack.c.bf16 %v1893, %v1892
      %v1902 = vld [vmem:[%s1736 + $0x4] sm:$0xf]
      %v1904 = vsel %vm728, %v1894, 0
      %v1907 = vsel %vm728, %v1895, 0
      %v1910 = vsel %vm728, %v1896, 0
      %v1913 = vsel %vm728, %v1897, 0
      %v1916 = vsel %vm728, %v1898, 0
      %v1919 = vsel %vm728, %v1899, 0
      %v1922 = vsel %vm728, %v1900, 0
      %v1925 = vsel %vm728, %v1901, 0
      %v1928 = vsel %vm825, %v1902, 0
      %1930 = vmatprep.subr.bf16.mxu0 0
      %1931 = vmatpush1.bf16.msra.mxu0 0
      %1932 = vmatprep.subr.bf16.mxu0 0
      %1933 = vmatpush1.bf16.msra.mxu0 0
      %1934 = vmatprep.subr.bf16.mxu0 0
      %1935 = vmatpush1.bf16.msra.mxu0 0
      %1936 = vmatprep.subr.bf16.mxu0 0
      %1937 = vmatpush1.bf16.msra.mxu0 0
      %1938 = vmatprep.subr.bf16.mxu0 0
      %1939 = vmatpush1.bf16.msra.mxu0 0
      %1940 = vmatprep.subr.bf16.mxu0 0
      %1941 = vmatpush1.bf16.msra.mxu0 0
      %1942 = vmatprep.subr.bf16.mxu0 0
      %1943 = vmatpush1.bf16.msra.mxu0 0
      %1944 = vmatprep.subr.bf16.mxu0 0
      %1945 = vmatpush1.bf16.msra.mxu0 %v1928
      %1946 = vmatprep.subr.bf16.mxu0 0
      %1947 = vmatpush2.bf16.msra.mxu0 0
      %1948 = vmatprep.subr.bf16.mxu0 0
      %1949 = vmatpush2.bf16.msra.mxu0 0
      %1950 = vmatprep.subr.bf16.mxu0 0
      %1951 = vmatpush2.bf16.msra.mxu0 0
      %1952 = vmatprep.subr.bf16.mxu0 0
      %1953 = vmatpush2.bf16.msra.mxu0 0
      %1954 = vmatprep.subr.bf16.mxu0 0
      %1955 = vmatpush2.bf16.msra.mxu0 0
      %1956 = vmatprep.subr.bf16.mxu0 0
      %1957 = vmatpush2.bf16.msra.mxu0 0
      %1958 = vmatprep.subr.bf16.mxu0 0
      %1959 = vmatpush2.bf16.msra.mxu0 0
      %1960 = vmatprep.subr.bf16.mxu0 0
      %1961 = vmatpush2.bf16.msra.mxu0 0
      %1962 = vmatprep.mubr.bf16.mxu0 0
      %1963 = vmatmul.mubr.bf16.gmra.mxu0 %v1904
      %v1964 = vpop.f32.mrf.mxu0
      %v1965 = vadd.f32 0.0, %v1964
      %v1966 = vpop.f32.mrf.mxu0
      %v1967 = vpop.f32.mrf.mxu0
      %v1968 = vadd.f32 0.0, %v1967
      %v1969 = vpop.f32.mrf.mxu0
      %1970 = vmatprep.mubr.bf16.mxu0 0
      %1971 = vmatmul.mubr.bf16.gmra.mxu0 %v1907
      %v1972 = vpop.f32.mrf.mxu0
      %v1973 = vadd.f32 0.0, %v1972
      %v1974 = vpop.f32.mrf.mxu0
      %v1975 = vpop.f32.mrf.mxu0
      %v1976 = vadd.f32 0.0, %v1975
      %v1977 = vpop.f32.mrf.mxu0
      %1978 = vmatprep.mubr.bf16.mxu0 0
      %1979 = vmatmul.mubr.bf16.gmra.mxu0 %v1910
      %v1980 = vpop.f32.mrf.mxu0
      %v1981 = vadd.f32 0.0, %v1980
      %v1982 = vpop.f32.mrf.mxu0
      %v1983 = vpop.f32.mrf.mxu0
      %v1984 = vadd.f32 0.0, %v1983
      %v1985 = vpop.f32.mrf.mxu0
      %1986 = vmatprep.mubr.bf16.mxu0 0
      %1987 = vmatmul.mubr.bf16.gmra.mxu0 %v1913
      %v1988 = vpop.f32.mrf.mxu0
      %v1989 = vadd.f32 0.0, %v1988
      %v1990 = vpop.f32.mrf.mxu0
      %v1991 = vpop.f32.mrf.mxu0
      %v1992 = vadd.f32 0.0, %v1991
      %v1993 = vpop.f32.mrf.mxu0
      %1994 = vmatprep.mubr.bf16.mxu0 0
      %1995 = vmatmul.mubr.bf16.gmra.mxu0 %v1916
      %v1996 = vpop.f32.mrf.mxu0
      %v1997 = vadd.f32 0.0, %v1996
      %v1998 = vpop.f32.mrf.mxu0
      %v1999 = vpop.f32.mrf.mxu0
      %v2000 = vadd.f32 0.0, %v1999
      %v2001 = vpop.f32.mrf.mxu0
      %2002 = vmatprep.mubr.bf16.mxu0 0
      %2003 = vmatmul.mubr.bf16.gmra.mxu0 %v1919
      %v2004 = vpop.f32.mrf.mxu0
      %v2005 = vadd.f32 0.0, %v2004
      %v2006 = vpop.f32.mrf.mxu0
      %v2007 = vpop.f32.mrf.mxu0
      %v2008 = vadd.f32 0.0, %v2007
      %v2009 = vpop.f32.mrf.mxu0
      %2010 = vmatprep.mubr.bf16.mxu0 0
      %2011 = vmatmul.mubr.bf16.gmra.mxu0 %v1922
      %v2012 = vpop.f32.mrf.mxu0
      %v2013 = vadd.f32 0.0, %v2012
      %v2014 = vpop.f32.mrf.mxu0
      %v2015 = vpop.f32.mrf.mxu0
      %v2016 = vadd.f32 0.0, %v2015
      %v2017 = vpop.f32.mrf.mxu0
      %2018 = vmatprep.mubr.bf16.mxu0 0
      %2019 = vmatmul.mubr.bf16.gmra.mxu0 %v1925
      %v2020 = vpop.f32.mrf.mxu0
      %v2021 = vadd.f32 0.0, %v2020
      %v2022 = vpop.f32.mrf.mxu0
      %v2023 = vpop.f32.mrf.mxu0
      %v2024 = vadd.f32 0.0, %v2023
      %v2025 = vpop.f32.mrf.mxu0
      %2026 = vdwg.mxu0
      %v2027 = vadd.f32 %v1862, %v1965
      %v2028 = vadd.f32 %v1863, %v1968
      %v2029 = vadd.f32 %v1864, %v1973
      %v2030 = vadd.f32 %v1865, %v1976
      %v2031 = vadd.f32 %v1866, %v1981
      %v2032 = vadd.f32 %v1867, %v1984
      %v2033 = vadd.f32 %v1868, %v1989
      %v2034 = vadd.f32 %v1869, %v1992
      %v2035 = vadd.f32 %v1870, %v1997
      %v2036 = vadd.f32 %v1871, %v2000
      %v2037 = vadd.f32 %v1872, %v2005
      %v2038 = vadd.f32 %v1873, %v2008
      %v2039 = vadd.f32 %v1874, %v2013
      %v2040 = vadd.f32 %v1875, %v2016
      %v2041 = vadd.f32 %v1876, %v2021
      %v2042 = vadd.f32 %v1877, %v2024
      %v2043 = vld [vmem:[%s1711 + $0x2] sm:$0xff]
      %v2044 = vld [vmem:[%s1711 + $0xa] sm:$0xff]
      %v2045 = vld [vmem:[%s1711 + $0x1a] sm:$0xff]
      %v2046 = vld [vmem:[%s1711 + $0x22] sm:$0xff]
      %v2047 = vld [vmem:[%s1711 + $0x32] sm:$0xff]
      %v2048 = vld [vmem:[%s1711 + $0x3a] sm:$0xff]
      %v2049 = vld [vmem:[%s1711 + $0x4a] sm:$0xff]
      %v2050 = vld [vmem:[%s1711 + $0x52] sm:$0xff]
      %v2051 = vld [vmem:[%s1711 + $0x62] sm:$0xff]
      %v2052 = vld [vmem:[%s1711 + $0x6a] sm:$0xff]
      %v2053 = vld [vmem:[%s1711 + $0x7a] sm:$0xff]
      %v2054 = vld [vmem:[%s1711 + $0x82] sm:$0xff]
      %v2055 = vld [vmem:[%s1711 + $0x92] sm:$0xff]
      %v2056 = vld [vmem:[%s1711 + $0x9a] sm:$0xff]
      %v2057 = vld [vmem:[%s1711 + $0xaa] sm:$0xff]
      %v2058 = vld [vmem:[%s1711 + $0xb2] sm:$0xff]
      %v2059 = vpack.c.bf16 %v2044, %v2043
      %v2060 = vpack.c.bf16 %v2046, %v2045
      %v2061 = vpack.c.bf16 %v2048, %v2047
      %v2062 = vpack.c.bf16 %v2050, %v2049
      %v2063 = vpack.c.bf16 %v2052, %v2051
      %v2064 = vpack.c.bf16 %v2054, %v2053
      %v2065 = vpack.c.bf16 %v2056, %v2055
      %v2066 = vpack.c.bf16 %v2058, %v2057
      %v2067 = vld [vmem:[%s1736 + $0x8] sm:$0xf]
      %v2069 = vsel %vm728, %v2059, 0
      %v2072 = vsel %vm728, %v2060, 0
      %v2075 = vsel %vm728, %v2061, 0
      %v2078 = vsel %vm728, %v2062, 0
      %v2081 = vsel %vm728, %v2063, 0
      %v2084 = vsel %vm728, %v2064, 0
      %v2087 = vsel %vm728, %v2065, 0
      %v2090 = vsel %vm728, %v2066, 0
      %v2093 = vsel %vm825, %v2067, 0
      %2095 = vmatprep.subr.bf16.mxu0 0
      %2096 = vmatpush1.bf16.msra.mxu0 0
      %2097 = vmatprep.subr.bf16.mxu0 0
      %2098 = vmatpush1.bf16.msra.mxu0 0
      %2099 = vmatprep.subr.bf16.mxu0 0
      %2100 = vmatpush1.bf16.msra.mxu0 0
      %2101 = vmatprep.subr.bf16.mxu0 0
      %2102 = vmatpush1.bf16.msra.mxu0 0
      %2103 = vmatprep.subr.bf16.mxu0 0
      %2104 = vmatpush1.bf16.msra.mxu0 0
      %2105 = vmatprep.subr.bf16.mxu0 0
      %2106 = vmatpush1.bf16.msra.mxu0 0
      %2107 = vmatprep.subr.bf16.mxu0 0
      %2108 = vmatpush1.bf16.msra.mxu0 0
      %2109 = vmatprep.subr.bf16.mxu0 0
      %2110 = vmatpush1.bf16.msra.mxu0 %v2093
      %2111 = vmatprep.subr.bf16.mxu0 0
      %2112 = vmatpush2.bf16.msra.mxu0 0
      %2113 = vmatprep.subr.bf16.mxu0 0
      %2114 = vmatpush2.bf16.msra.mxu0 0
      %2115 = vmatprep.subr.bf16.mxu0 0
      %2116 = vmatpush2.bf16.msra.mxu0 0
      %2117 = vmatprep.subr.bf16.mxu0 0
      %2118 = vmatpush2.bf16.msra.mxu0 0
      %2119 = vmatprep.subr.bf16.mxu0 0
      %2120 = vmatpush2.bf16.msra.mxu0 0
      %2121 = vmatprep.subr.bf16.mxu0 0
      %2122 = vmatpush2.bf16.msra.mxu0 0
      %2123 = vmatprep.subr.bf16.mxu0 0
      %2124 = vmatpush2.bf16.msra.mxu0 0
      %2125 = vmatprep.subr.bf16.mxu0 0
      %2126 = vmatpush2.bf16.msra.mxu0 0
      %2127 = vmatprep.mubr.bf16.mxu0 0
      %2128 = vmatmul.mubr.bf16.gmra.mxu0 %v2069
      %v2129 = vpop.f32.mrf.mxu0
      %v2130 = vadd.f32 0.0, %v2129
      %v2131 = vpop.f32.mrf.mxu0
      %v2132 = vpop.f32.mrf.mxu0
      %v2133 = vadd.f32 0.0, %v2132
      %v2134 = vpop.f32.mrf.mxu0
      %2135 = vmatprep.mubr.bf16.mxu0 0
      %2136 = vmatmul.mubr.bf16.gmra.mxu0 %v2072
      %v2137 = vpop.f32.mrf.mxu0
      %v2138 = vadd.f32 0.0, %v2137
      %v2139 = vpop.f32.mrf.mxu0
      %v2140 = vpop.f32.mrf.mxu0
      %v2141 = vadd.f32 0.0, %v2140
      %v2142 = vpop.f32.mrf.mxu0
      %2143 = vmatprep.mubr.bf16.mxu0 0
      %2144 = vmatmul.mubr.bf16.gmra.mxu0 %v2075
      %v2145 = vpop.f32.mrf.mxu0
      %v2146 = vadd.f32 0.0, %v2145
      %v2147 = vpop.f32.mrf.mxu0
      %v2148 = vpop.f32.mrf.mxu0
      %v2149 = vadd.f32 0.0, %v2148
      %v2150 = vpop.f32.mrf.mxu0
      %2151 = vmatprep.mubr.bf16.mxu0 0
      %2152 = vmatmul.mubr.bf16.gmra.mxu0 %v2078
      %v2153 = vpop.f32.mrf.mxu0
      %v2154 = vadd.f32 0.0, %v2153
      %v2155 = vpop.f32.mrf.mxu0
      %v2156 = vpop.f32.mrf.mxu0
      %v2157 = vadd.f32 0.0, %v2156
      %v2158 = vpop.f32.mrf.mxu0
      %2159 = vmatprep.mubr.bf16.mxu0 0
      %2160 = vmatmul.mubr.bf16.gmra.mxu0 %v2081
      %v2161 = vpop.f32.mrf.mxu0
      %v2162 = vadd.f32 0.0, %v2161
      %v2163 = vpop.f32.mrf.mxu0
      %v2164 = vpop.f32.mrf.mxu0
      %v2165 = vadd.f32 0.0, %v2164
      %v2166 = vpop.f32.mrf.mxu0
      %2167 = vmatprep.mubr.bf16.mxu0 0
      %2168 = vmatmul.mubr.bf16.gmra.mxu0 %v2084
      %v2169 = vpop.f32.mrf.mxu0
      %v2170 = vadd.f32 0.0, %v2169
      %v2171 = vpop.f32.mrf.mxu0
      %v2172 = vpop.f32.mrf.mxu0
      %v2173 = vadd.f32 0.0, %v2172
      %v2174 = vpop.f32.mrf.mxu0
      %2175 = vmatprep.mubr.bf16.mxu0 0
      %2176 = vmatmul.mubr.bf16.gmra.mxu0 %v2087
      %v2177 = vpop.f32.mrf.mxu0
      %v2178 = vadd.f32 0.0, %v2177
      %v2179 = vpop.f32.mrf.mxu0
      %v2180 = vpop.f32.mrf.mxu0
      %v2181 = vadd.f32 0.0, %v2180
      %v2182 = vpop.f32.mrf.mxu0
      %2183 = vmatprep.mubr.bf16.mxu0 0
      %2184 = vmatmul.mubr.bf16.gmra.mxu0 %v2090
      %v2185 = vpop.f32.mrf.mxu0
      %v2186 = vadd.f32 0.0, %v2185
      %v2187 = vpop.f32.mrf.mxu0
      %v2188 = vpop.f32.mrf.mxu0
      %v2189 = vadd.f32 0.0, %v2188
      %v2190 = vpop.f32.mrf.mxu0
      %2191 = vdwg.mxu0
      %v2192 = vadd.f32 %v2027, %v2130
      %v2193 = vadd.f32 %v2028, %v2133
      %v2194 = vadd.f32 %v2029, %v2138
      %v2195 = vadd.f32 %v2030, %v2141
      %v2196 = vadd.f32 %v2031, %v2146
      %v2197 = vadd.f32 %v2032, %v2149
      %v2198 = vadd.f32 %v2033, %v2154
      %v2199 = vadd.f32 %v2034, %v2157
      %v2200 = vadd.f32 %v2035, %v2162
      %v2201 = vadd.f32 %v2036, %v2165
      %v2202 = vadd.f32 %v2037, %v2170
      %v2203 = vadd.f32 %v2038, %v2173
      %v2204 = vadd.f32 %v2039, %v2178
      %v2205 = vadd.f32 %v2040, %v2181
      %v2206 = vadd.f32 %v2041, %v2186
      %v2207 = vadd.f32 %v2042, %v2189
      %v2208 = vld [vmem:[%s527] sm:$0xff]
      %v2209 = vld [vmem:[%s527 + $0x8] sm:$0xff]
      %v2210 = vld [vmem:[%s527 + $0x10] sm:$0xff]
      %v2211 = vld [vmem:[%s527 + $0x18] sm:$0xff]
      %v2212 = vld [vmem:[%s527 + $0x20] sm:$0xff]
      %v2213 = vld [vmem:[%s527 + $0x28] sm:$0xff]
      %v2214 = vld [vmem:[%s527 + $0x30] sm:$0xff]
      %v2215 = vld [vmem:[%s527 + $0x38] sm:$0xff]
      %v2216 = vld [vmem:[%s527 + $0x40] sm:$0xff]
      %v2217 = vld [vmem:[%s527 + $0x48] sm:$0xff]
      %v2218 = vld [vmem:[%s527 + $0x50] sm:$0xff]
      %v2219 = vld [vmem:[%s527 + $0x58] sm:$0xff]
      %v2220 = vld [vmem:[%s527 + $0x60] sm:$0xff]
      %v2221 = vld [vmem:[%s527 + $0x68] sm:$0xff]
      %v2222 = vld [vmem:[%s527 + $0x70] sm:$0xff]
      %v2223 = vld [vmem:[%s527 + $0x78] sm:$0xff]
      %v2224 = vpack.c.bf16 %v2209, %v2208
      %v2225 = vpack.c.bf16 %v2211, %v2210
      %v2226 = vpack.c.bf16 %v2213, %v2212
      %v2227 = vpack.c.bf16 %v2215, %v2214
      %v2228 = vpack.c.bf16 %v2217, %v2216
      %v2229 = vpack.c.bf16 %v2219, %v2218
      %v2230 = vpack.c.bf16 %v2221, %v2220
      %v2231 = vpack.c.bf16 %v2223, %v2222
      %v2232 = vld [vmem:[%s7] sm:$0x3]
      %v2233 = vld [vmem:[%s8] sm:$0x1]
      %v2235 = vlaneseq
      %v2236 = vshrl.u32 %v2235, 7
      %v2237 = vsub.s32 0, %v2236
      %v2238 = vrot.slane %v2233, %v2237
      %vm2240 = vcmask 31744
      %v2242 = vsel %vm2240, %v2224, 0
      %v2245 = vsel %vm2240, %v2225, 0
      %v2248 = vsel %vm2240, %v2226, 0
      %v2251 = vsel %vm2240, %v2227, 0
      %v2254 = vsel %vm2240, %v2228, 0
      %v2257 = vsel %vm2240, %v2229, 0
      %v2260 = vsel %vm2240, %v2230, 0
      %v2263 = vsel %vm2240, %v2231, 0
      %vm2265 = vcmask 1041408
      %v2267 = vsel %vm2265, %v2232, 0
      %2269 = vmatprep.subr.bf16.mxu0 0
      %2270 = vmatpush1.bf16.msra.mxu0 0
      %2271 = vmatprep.subr.bf16.mxu0 0
      %2272 = vmatpush1.bf16.msra.mxu0 0
      %2273 = vmatprep.subr.bf16.mxu0 0
      %2274 = vmatpush1.bf16.msra.mxu0 0
      %2275 = vmatprep.subr.bf16.mxu0 0
      %2276 = vmatpush1.bf16.msra.mxu0 0
      %2277 = vmatprep.subr.bf16.mxu0 0
      %2278 = vmatpush1.bf16.msra.mxu0 0
      %2279 = vmatprep.subr.bf16.mxu0 0
      %2280 = vmatpush1.bf16.msra.mxu0 0
      %2281 = vmatprep.subr.bf16.mxu0 0
      %2282 = vmatpush1.bf16.msra.mxu0 0
      %2283 = vmatprep.subr.bf16.mxu0 0
      %2284 = vmatpush1.bf16.msra.mxu0 %v2267
      %2285 = vmatprep.subr.bf16.mxu0 0
      %2286 = vmatpush2.bf16.msra.mxu0 0
      %2287 = vmatprep.subr.bf16.mxu0 0
      %2288 = vmatpush2.bf16.msra.mxu0 0
      %2289 = vmatprep.subr.bf16.mxu0 0
      %2290 = vmatpush2.bf16.msra.mxu0 0
      %2291 = vmatprep.subr.bf16.mxu0 0
      %2292 = vmatpush2.bf16.msra.mxu0 0
      %2293 = vmatprep.subr.bf16.mxu0 0
      %2294 = vmatpush2.bf16.msra.mxu0 0
      %2295 = vmatprep.subr.bf16.mxu0 0
      %2296 = vmatpush2.bf16.msra.mxu0 0
      %2297 = vmatprep.subr.bf16.mxu0 0
      %2298 = vmatpush2.bf16.msra.mxu0 0
      %2299 = vmatprep.subr.bf16.mxu0 0
      %2300 = vmatpush2.bf16.msra.mxu0 0
      %2301 = vmatprep.mubr.bf16.mxu0 0
      %2302 = vmatmul.mubr.bf16.gmra.mxu0 %v2242
      %v2303 = vpop.f32.mrf.mxu0
      %v2304 = vadd.f32 %v2238, %v2303
      %v2305 = vpop.f32.mrf.mxu0
      %v2306 = vpop.f32.mrf.mxu0
      %v2307 = vadd.f32 %v2238, %v2306
      %v2308 = vpop.f32.mrf.mxu0
      %2309 = vmatprep.mubr.bf16.mxu0 0
      %2310 = vmatmul.mubr.bf16.gmra.mxu0 %v2245
      %v2311 = vpop.f32.mrf.mxu0
      %v2312 = vadd.f32 %v2238, %v2311
      %v2313 = vpop.f32.mrf.mxu0
      %v2314 = vpop.f32.mrf.mxu0
      %v2315 = vadd.f32 %v2238, %v2314
      %v2316 = vpop.f32.mrf.mxu0
      %2317 = vmatprep.mubr.bf16.mxu0 0
      %2318 = vmatmul.mubr.bf16.gmra.mxu0 %v2248
      %v2319 = vpop.f32.mrf.mxu0
      %v2320 = vadd.f32 %v2238, %v2319
      %v2321 = vpop.f32.mrf.mxu0
      %v2322 = vpop.f32.mrf.mxu0
      %v2323 = vadd.f32 %v2238, %v2322
      %v2324 = vpop.f32.mrf.mxu0
      %2325 = vmatprep.mubr.bf16.mxu0 0
      %2326 = vmatmul.mubr.bf16.gmra.mxu0 %v2251
      %v2327 = vpop.f32.mrf.mxu0
      %v2328 = vadd.f32 %v2238, %v2327
      %v2329 = vpop.f32.mrf.mxu0
      %v2330 = vpop.f32.mrf.mxu0
      %v2331 = vadd.f32 %v2238, %v2330
      %v2332 = vpop.f32.mrf.mxu0
      %2333 = vmatprep.mubr.bf16.mxu0 0
      %2334 = vmatmul.mubr.bf16.gmra.mxu0 %v2254
      %v2335 = vpop.f32.mrf.mxu0
      %v2336 = vadd.f32 %v2238, %v2335
      %v2337 = vpop.f32.mrf.mxu0
      %v2338 = vpop.f32.mrf.mxu0
      %v2339 = vadd.f32 %v2238, %v2338
      %v2340 = vpop.f32.mrf.mxu0
      %2341 = vmatprep.mubr.bf16.mxu0 0
      %2342 = vmatmul.mubr.bf16.gmra.mxu0 %v2257
      %v2343 = vpop.f32.mrf.mxu0
      %v2344 = vadd.f32 %v2238, %v2343
      %v2345 = vpop.f32.mrf.mxu0
      %v2346 = vpop.f32.mrf.mxu0
      %v2347 = vadd.f32 %v2238, %v2346
      %v2348 = vpop.f32.mrf.mxu0
      %2349 = vmatprep.mubr.bf16.mxu0 0
      %2350 = vmatmul.mubr.bf16.gmra.mxu0 %v2260
      %v2351 = vpop.f32.mrf.mxu0
      %v2352 = vadd.f32 %v2238, %v2351
      %v2353 = vpop.f32.mrf.mxu0
      %v2354 = vpop.f32.mrf.mxu0
      %v2355 = vadd.f32 %v2238, %v2354
      %v2356 = vpop.f32.mrf.mxu0
      %2357 = vmatprep.mubr.bf16.mxu0 0
      %2358 = vmatmul.mubr.bf16.gmra.mxu0 %v2263
      %v2359 = vpop.f32.mrf.mxu0
      %v2360 = vadd.f32 %v2238, %v2359
      %v2361 = vpop.f32.mrf.mxu0
      %v2362 = vpop.f32.mrf.mxu0
      %v2363 = vadd.f32 %v2238, %v2362
      %v2364 = vpop.f32.mrf.mxu0
      %2365 = vdwg.mxu0
      %v2366 = vadd.f32 %v2192, %v2304
      %v2367 = vadd.f32 %v2193, %v2307
      %v2368 = vadd.f32 %v2194, %v2312
      %v2369 = vadd.f32 %v2195, %v2315
      %v2370 = vadd.f32 %v2196, %v2320
      %v2371 = vadd.f32 %v2197, %v2323
      %v2372 = vadd.f32 %v2198, %v2328
      %v2373 = vadd.f32 %v2199, %v2331
      %v2374 = vadd.f32 %v2200, %v2336
      %v2375 = vadd.f32 %v2201, %v2339
      %v2376 = vadd.f32 %v2202, %v2344
      %v2377 = vadd.f32 %v2203, %v2347
      %v2378 = vadd.f32 %v2204, %v2352
      %v2379 = vadd.f32 %v2205, %v2355
      %v2380 = vadd.f32 %v2206, %v2360
      %v2381 = vadd.f32 %v2207, %v2363
      %2382 = vst.msk [vmem:[%s538] sm:$0xff] %vm728, %v2366
      %2383 = vst.msk [vmem:[%s538 + $0x8] sm:$0xff] %vm728, %v2367
      %2384 = vst.msk [vmem:[%s538 + $0x10] sm:$0xff] %vm728, %v2368
      %2385 = vst.msk [vmem:[%s538 + $0x18] sm:$0xff] %vm728, %v2369
      %2386 = vst.msk [vmem:[%s538 + $0x20] sm:$0xff] %vm728, %v2370
      %2387 = vst.msk [vmem:[%s538 + $0x28] sm:$0xff] %vm728, %v2371
      %2388 = vst.msk [vmem:[%s538 + $0x30] sm:$0xff] %vm728, %v2372
      %2389 = vst.msk [vmem:[%s538 + $0x38] sm:$0xff] %vm728, %v2373
      %2390 = vst.msk [vmem:[%s538 + $0x40] sm:$0xff] %vm728, %v2374
      %2391 = vst.msk [vmem:[%s538 + $0x48] sm:$0xff] %vm728, %v2375
      %2392 = vst.msk [vmem:[%s538 + $0x50] sm:$0xff] %vm728, %v2376
      %2393 = vst.msk [vmem:[%s538 + $0x58] sm:$0xff] %vm728, %v2377
      %2394 = vst.msk [vmem:[%s538 + $0x60] sm:$0xff] %vm728, %v2378
      %2395 = vst.msk [vmem:[%s538 + $0x68] sm:$0xff] %vm728, %v2379
      %2396 = vst.msk [vmem:[%s538 + $0x70] sm:$0xff] %vm728, %v2380
      %2397 = vst.msk [vmem:[%s538 + $0x78] sm:$0xff] %vm728, %v2381
      %s2398 = smul.u32 8, %s25
      %p2399 = scmp.lt.s32.totalorder %s24, 1
      %s2400 = scalar_select %p2399, %s24, 1
      %p2401 = scmp.lt.s32.totalorder %s2398, 15
      %s2402 = scalar_select %p2401, %s2398, 15
      %s2403 = smul.addr %s2402, 2
      %s2404 = smul.addr %s2400, 32
      %s2405 = sadd.s32 %s2403, %s2404
      %s2406 = smul.addr %s2405, 8
      %s2407 = scalar_lea.vmem %s9, %s2406
      // Predicated region
      $region57: #{resblock_forward.5} parent=55 // pred_check
        %p2408 = pneg %p285
      $region58: #{resblock_forward.5} parent=55 // pred_check_branch
        %2410 = sbr.rel (%p2408) target = $region60
      $region59: #{resblock_forward.5} parent=55 // pred_region
        %s2411 = smul.u32 8, %s25
      $region60: #{resblock_forward.5} parent=55 // pred_fallthru
        _
    $region56: #{resblock_forward.5} parent=5 // pred_fallthru
      _
    %p2412 = scmp.le.s32.totalorder 2, %s15
    // Predicated region
    $region61: #{resblock_forward.5} parent=5 // pred_check
      %p2413 = pneg %p2412
    $region62: #{resblock_forward.5} parent=5 // pred_check_branch
      %2415 = sbr.rel (%p2413) target = $region64
    $region63: #{resblock_forward.5} parent=5 // pred_region
      %s2416 = ssub.s32 %s15, 2
      // Predicated region
      $region65: #{resblock_forward.5} parent=63 // pred_check
        %p2417 = pneg %p291
      $region66: #{resblock_forward.5} parent=63 // pred_check_branch
        %2419 = sbr.rel (%p2417) target = $region68
      $region67: #{resblock_forward.5} parent=63 // pred_region
        %s2420 = smul.u32 8, %s27
        %p2421 = scmp.lt.s32.totalorder %s26, 1
        %s2422 = scalar_select %p2421, %s26, 1
        %p2423 = scmp.lt.s32.totalorder %s2420, 15
        %s2424 = scalar_select %p2423, %s2420, 15
        %s2425 = smul.addr %s2424, 2
        %s2426 = smul.addr %s2422, 32
        %s2427 = sadd.s32 %s2425, %s2426
        %s2428 = smul.addr %s2427, 8
        %s2429 = scalar_lea.vmem %s9, %s2428
      $region68: #{resblock_forward.5} parent=63 // pred_fallthru
        _
    $region64: #{resblock_forward.5} parent=5 // pred_fallthru
      _
  $region6: #{resblock_forward.5} parent=0 // loop_footer
    %s19 = sadd.s32 1, %s15
  $region7: #{resblock_forward.5} parent=0 // loop_footer_branch
    %14 = sbr.rel target = $region3
  $region8: #{resblock_forward.5} parent=0 // loop_exit
    _

</llo_original>
